<compile_context>
chip_gen: v7x
topology: tpu7x:2x2x1
jax: 0.10.0
libtpu: 0.0.40
codegen_flags: <defaults>
</compile_context>

<pallas_src>
import functools

import jax
import jax.numpy as jnp
from jax.experimental import pallas as pl
from jax.experimental.pallas import tpu as pltpu

NUM_RECURSIONS = 25


# ----------------------------------------------------------------------------
# In-kernel 3x3 "same" conv reading a zero-halo padded VMEM scratch.
# ----------------------------------------------------------------------------
def _conv3x3(pad_ref, w_ref, H, W):
    """pad_ref: Ref[(H+2, W+2, Cin)] f32 (zero halo, ReLU'd interior).
    w_ref:   Ref[(3, 3*Cin, Cout)] f32, dx-major packed.
    returns: (H, W, Cout) f32."""
    xp = pad_ref[...]                       # (H+2, W+2, Cin)
    cin = xp.shape[-1]
    cout = w_ref.shape[-1]
    acc = jnp.zeros((H * W, cout), jnp.float32)
    if cin >= 128:
        # K-packed path: one K = 3*Cin matmul per dy (full MXU depth, 3 MXU
        # issues + 3 accumulator adds per conv instead of 9).
        for dy in range(3):
            packed = jnp.concatenate(
                [xp[dy:dy + H, dx:dx + W, :] for dx in range(3)], axis=-1)
            acc = acc + jnp.dot(packed.reshape(H * W, 3 * cin), w_ref[dy],
                                preferred_element_type=jnp.float32)
    else:
        # Tiny-Cin path (the 3-channel input conv): 9 taps of K = Cin.
        wv = w_ref[...]
        for dy in range(3):
            for dx in range(3):
                acc = acc + jnp.dot(
                    xp[dy:dy + H, dx:dx + W, :].reshape(H * W, cin),
                    wv[dy, dx * cin:(dx + 1) * cin, :],
                    preferred_element_type=jnp.float32)
    return acc.reshape(H, W, cout)


# ----------------------------------------------------------------------------
# Fused DRRN kernel: one grid step per batch element, recursion in-kernel.
# ----------------------------------------------------------------------------
def drrn_kernel(x_ref, w_in_ref, w1_ref, w2_ref, w_out_ref, o_ref,
                pad_in_ref, pad_ref, inputs_ref, *, num_steps):
    H, W = o_ref.shape[1], o_ref.shape[2]

    # Establish the zero halo once; interiors are overwritten below.
    pad_in_ref[...] = jnp.zeros_like(pad_in_ref)
    pad_ref[...] = jnp.zeros_like(pad_ref)

    x = x_ref[0].astype(jnp.float32)                       # (H, W, 3) = residual

    # inputs = input_conv(relu(x))
    pad_in_ref[pl.ds(1, H), pl.ds(1, W), :] = jnp.maximum(x, 0.0)
    inputs = _conv3x3(pad_in_ref, w_in_ref, H, W)          # (H, W, 128)
    inputs_ref[...] = inputs

    # out = inputs.  Only relu(out) is ever consumed downstream, so keep the
    # padded buffer interior holding relu(out).
    pad_ref[pl.ds(1, H), pl.ds(1, W), :] = jnp.maximum(inputs, 0.0)

    # 25 recursive residual units sharing conv1/conv2 weights (VMEM-resident).
    def recursion_step(_, carry):
        h = _conv3x3(pad_ref, w1_ref, H, W)                # conv1(relu(out))
        pad_ref[pl.ds(1, H), pl.ds(1, W), :] = jnp.maximum(h, 0.0)
        o = _conv3x3(pad_ref, w2_ref, H, W) + inputs_ref[...]   # conv2(relu(.)) + inputs
        pad_ref[pl.ds(1, H), pl.ds(1, W), :] = jnp.maximum(o, 0.0)
        return carry

    jax.lax.fori_loop(0, num_steps, recursion_step, 0)

    # out = output_conv(relu(out)) + residual
    y = _conv3x3(pad_ref, w_out_ref, H, W)                 # (H, W, 3)
    o_ref[0] = (y + x).astype(o_ref.dtype)


# ----------------------------------------------------------------------------
# Wrapper.
# ----------------------------------------------------------------------------
def _pack_weight(w):
    """(3, 3, Cin, Cout) -> (3, 3*Cin, Cout); dx-major to match the kernel concat."""
    kh, kw, cin, cout = w.shape
    return w.reshape(kh, kw * cin, cout)


def _estimate_vmem_bytes(H, W, Cin, Cmid, Cout):
    f32 = 4
    pad_scr = (H + 2) * (W + 2) * (Cin + Cmid) * f32
    inputs_scr = H * W * Cmid * f32
    weights = 3 * 3 * (Cin * Cmid + 2 * Cmid * Cmid + Cmid * Cout) * f32
    io = 2 * H * W * (Cin + Cout) * f32           # double-buffered in/out blocks
    temps = H * W * (3 * Cmid + 2 * Cmid) * f32   # packed-K concat + matmul temporaries
    return pad_scr + inputs_scr + weights + io + temps


def drrn_forward(x_nchw, params, *, num_steps=NUM_RECURSIONS):
    """DRRN forward. x_nchw: (N, 3, H, W) float32 -> (N, 3, H, W) float32."""
    x = jnp.transpose(x_nchw, (0, 2, 3, 1))        # NCHW -> NHWC
    N, H, W, Cin = x.shape

    w_in = _pack_weight(params["w_input"])         # (3,   9, 128)
    w1 = _pack_weight(params["w_conv1"])           # (3, 384, 128)
    w2 = _pack_weight(params["w_conv2"])           # (3, 384, 128)
    w_out = _pack_weight(params["w_output"])       # (3, 384,   3)
    Cmid = w1.shape[-1]
    Cout = w_out.shape[-1]

    # TODO(synk): for images whose fused working set exceeds VMEM (roughly
    # H*W > ~200^2 on v5e/v6e, ~140^2 on v7x) fall back to a per-recursion-step
    # kernel with row-strip (2-row halo) spatial tiling instead of full fusion.
    est = _estimate_vmem_bytes(H, W, Cin, Cmid, Cout)
    vmem_limit = min(int(est * 1.25), 128 * 1024 * 1024) if est > (30 << 20) else None

    out = pl.pallas_call(
        functools.partial(drrn_kernel, num_steps=num_steps),
        out_shape=jax.ShapeDtypeStruct((N, H, W, Cout), x.dtype),
        grid_spec=pltpu.PrefetchScalarGridSpec(
            num_scalar_prefetch=0,
            grid=(N,),
            in_specs=[
                pl.BlockSpec((1, H, W, Cin), lambda n: (n, 0, 0, 0)),
                # Constant index maps: weights are DMA'd into VMEM once and stay
                # resident across all grid steps / all 25 recursions.
                pl.BlockSpec(w_in.shape, lambda n: (0, 0, 0)),
                pl.BlockSpec(w1.shape, lambda n: (0, 0, 0)),
                pl.BlockSpec(w2.shape, lambda n: (0, 0, 0)),
                pl.BlockSpec(w_out.shape, lambda n: (0, 0, 0)),
            ],
            out_specs=pl.BlockSpec((1, H, W, Cout), lambda n: (n, 0, 0, 0)),
            scratch_shapes=[
                pltpu.VMEM((H + 2, W + 2, Cin), jnp.float32),   # padded relu(x)
                pltpu.VMEM((H + 2, W + 2, Cmid), jnp.float32),  # padded relu(out / h)
                pltpu.VMEM((H, W, Cmid), jnp.float32),          # `inputs` skip tensor
            ],
        ),
        compiler_params=pltpu.CompilerParams(
            dimension_semantics=("parallel",),
            vmem_limit_bytes=vmem_limit,
        ),
    )(x, w_in, w1, w2, w_out)

    return jnp.transpose(out, (0, 3, 1, 2))        # NHWC -> NCHW


# ----------------------------------------------------------------------------
# Deterministic parameter init: normal(0, sqrt(2 / (kh*kw*Cout))) as in __init__.
# ----------------------------------------------------------------------------
def init_params(key):
    def make(k, cin, cout):
        std = (2.0 / (3 * 3 * cout)) ** 0.5
        return std * jax.random.normal(k, (3, 3, cin, cout), jnp.float32)

    k1, k2, k3, k4 = jax.random.split(key, 4)
    return {
        "w_input":  make(k1, 3, 128),
        "w_conv1":  make(k2, 128, 128),
        "w_conv2":  make(k3, 128, 128),
        "w_output": make(k4, 128, 3),
    }


# ----------------------------------------------------------------------------
# Pure-JAX reference (functional, non-inplace-aliasing reading of the module).
# ----------------------------------------------------------------------------
def drrn_reference(x_nchw, params, *, num_steps=NUM_RECURSIONS):
    x = jnp.transpose(x_nchw, (0, 2, 3, 1))

    def conv(a, w):
        return jax.lax.conv_general_dilated(
            a, w, window_strides=(1, 1), padding=((1, 1), (1, 1)),
            dimension_numbers=("NHWC", "HWIO", "NHWC"),
            precision=jax.lax.Precision.HIGHEST)

    relu = lambda a: jnp.maximum(a, 0.0)
    inputs = conv(relu(x), params["w_input"])
    out = inputs
    for _ in range(num_steps):
        out = conv(relu(conv(relu(out), params["w_conv1"])), params["w_conv2"]) + inputs
    out = conv(relu(out), params["w_output"]) + x
    return jnp.transpose(out, (0, 3, 1, 2))


if __name__ == "__main__":
    key = jax.random.PRNGKey(0)
    k_x, k_p = jax.random.split(key)

    # Small test shapes consistent with the module: NCHW, 3 input channels.
    x = jax.random.normal(k_x, (2, 3, 16, 16), jnp.float32)
    params = init_params(k_p)

    y = jax.jit(drrn_forward)(x, params)
    jax.block_until_ready(y)

    assert y.shape == (2, 3, 16, 16), y.shape
    assert y.dtype == jnp.float32

    # Sanity-check against a pure-JAX reference.  Loose tolerance: it only needs
    # to catch structural bugs, not summation-order / MXU-pass differences.
    y_ref = jax.jit(drrn_reference)(x, params)
    err = float(jnp.max(jnp.abs(y - y_ref)))
    scale = float(jnp.max(jnp.abs(y_ref)))
    assert err <= 5e-2 * scale + 1e-2, (err, scale)

    print("KERNEL_OK")
</pallas_src>

<mosaic_0001>
module attributes {stable_mosaic.version = 11 : i64} {
  func.func @drrn_kernel(%arg0: i32, %arg1: memref<1x16x16x3xf32, #tpu.memory_space<vmem>>, %arg2: memref<3x9x128xf32, #tpu.memory_space<vmem>>, %arg3: memref<3x384x128xf32, #tpu.memory_space<vmem>>, %arg4: memref<3x384x128xf32, #tpu.memory_space<vmem>>, %arg5: memref<3x384x3xf32, #tpu.memory_space<vmem>>, %arg6: memref<1x16x16x3xf32, #tpu.memory_space<vmem>>, %arg7: memref<18x18x3xf32, #tpu.memory_space<vmem>>, %arg8: memref<18x18x128xf32, #tpu.memory_space<vmem>>, %arg9: memref<16x16x128xf32, #tpu.memory_space<vmem>>) attributes {dimension_semantics = [#tpu.dimension_semantics<parallel>], iteration_bounds = array<i64: 2>, scalar_prefetch = 0 : i64, scratch_operands = 3 : i64, tpu.core_type = #tpu.core_type<tc>, window_params = [{transform_indices = @transform_0, window_bounds = array<i64: 1, 16, 16, 3>}, {pipeline_mode = #tpu.pipeline_mode<synchronous>, transform_indices = @transform_1, window_bounds = array<i64: 3, 9, 128>}, {pipeline_mode = #tpu.pipeline_mode<synchronous>, transform_indices = @transform_2, window_bounds = array<i64: 3, 384, 128>}, {pipeline_mode = #tpu.pipeline_mode<synchronous>, transform_indices = @transform_3, window_bounds = array<i64: 3, 384, 128>}, {pipeline_mode = #tpu.pipeline_mode<synchronous>, transform_indices = @transform_4, window_bounds = array<i64: 3, 384, 3>}, {transform_indices = @transform_5, window_bounds = array<i64: 1, 16, 16, 3>}]} {
    %cst = arith.constant 0.000000e+00 : f32
    %0 = vector.broadcast %cst : f32 to vector<18x18x3xf32>
    %c0 = arith.constant 0 : index
    %c0_0 = arith.constant 0 : index
    %c0_1 = arith.constant 0 : index
    %1 = vector.load %arg7[%c0, %c0_0, %c0_1] : memref<18x18x3xf32, #tpu.memory_space<vmem>>, vector<18x18x3xf32>
    tpu.vector_store %arg7[%c0, %c0_0, %c0_1], %0 {strides = array<i32>} : memref<18x18x3xf32, #tpu.memory_space<vmem>>, vector<18x18x3xf32>,
    %cst_2 = arith.constant 0.000000e+00 : f32
    %2 = vector.broadcast %cst_2 : f32 to vector<18x18x128xf32>
    %c0_3 = arith.constant 0 : index
    %c0_4 = arith.constant 0 : index
    %c0_5 = arith.constant 0 : index
    %3 = vector.load %arg8[%c0_3, %c0_4, %c0_5] : memref<18x18x128xf32, #tpu.memory_space<vmem>>, vector<18x18x128xf32>
    tpu.vector_store %arg8[%c0_3, %c0_4, %c0_5], %2 {strides = array<i32>} : memref<18x18x128xf32, #tpu.memory_space<vmem>>, vector<18x18x128xf32>,
    %c0_6 = arith.constant 0 : index
    %c0_7 = arith.constant 0 : index
    %c0_8 = arith.constant 0 : index
    %c0_9 = arith.constant 0 : index
    %4 = vector.load %arg1[%c0_6, %c0_7, %c0_8, %c0_9] : memref<1x16x16x3xf32, #tpu.memory_space<vmem>>, vector<1x16x16x3xf32>
    %5 = vector.shape_cast %4 : vector<1x16x16x3xf32> to vector<16x16x3xf32>
    %cst_10 = arith.constant 0.000000e+00 : f32
    %6 = vector.broadcast %cst_10 : f32 to vector<16x16x3xf32>
    %7 = arith.maximumf %5, %6 : vector<16x16x3xf32>
    %c1 = arith.constant 1 : index
    %c1_11 = arith.constant 1 : index
    %c0_12 = arith.constant 0 : index
    %8 = vector.load %arg7[%c1, %c1_11, %c0_12] : memref<18x18x3xf32, #tpu.memory_space<vmem>>, vector<16x16x3xf32>
    tpu.vector_store %arg7[%c1, %c1_11, %c0_12], %7 {strides = array<i32>} : memref<18x18x3xf32, #tpu.memory_space<vmem>>, vector<16x16x3xf32>,
    %c0_13 = arith.constant 0 : index
    %c0_14 = arith.constant 0 : index
    %c0_15 = arith.constant 0 : index
    %9 = vector.load %arg7[%c0_13, %c0_14, %c0_15] : memref<18x18x3xf32, #tpu.memory_space<vmem>>, vector<18x18x3xf32>
    %cst_16 = arith.constant 0.000000e+00 : f32
    %10 = vector.broadcast %cst_16 : f32 to vector<256x128xf32>
    %c0_17 = arith.constant 0 : index
    %c0_18 = arith.constant 0 : index
    %c0_19 = arith.constant 0 : index
    %11 = vector.load %arg2[%c0_17, %c0_18, %c0_19] : memref<3x9x128xf32, #tpu.memory_space<vmem>>, vector<3x9x128xf32>
    %12 = vector.extract_strided_slice %9 {offsets = [0, 0, 0], sizes = [16, 16, 3], strides = [1, 1, 1]} : vector<18x18x3xf32> to vector<16x16x3xf32>
    %13 = vector.shape_cast %12 : vector<16x16x3xf32> to vector<256x3xf32>
    %14 = vector.extract_strided_slice %11 {offsets = [0, 0, 0], sizes = [1, 3, 128], strides = [1, 1, 1]} : vector<3x9x128xf32> to vector<1x3x128xf32>
    %15 = vector.shape_cast %14 : vector<1x3x128xf32> to vector<3x128xf32>
    %cst_20 = arith.constant dense<0.000000e+00> : vector<256x128xf32>
    %16 = tpu.matmul %13, %15, %cst_20 {dimension_numbers = #tpu.dot_dimension_numbers<[1], [0], [0], [1], [0, 0, 1, 1], [], []>} : vector<256x3xf32>, vector<3x128xf32>, vector<256x128xf32> -> vector<256x128xf32>
    %17 = arith.addf %10, %16 : vector<256x128xf32>
    %18 = vector.extract_strided_slice %9 {offsets = [0, 1, 0], sizes = [16, 16, 3], strides = [1, 1, 1]} : vector<18x18x3xf32> to vector<16x16x3xf32>
    %19 = vector.shape_cast %18 : vector<16x16x3xf32> to vector<256x3xf32>
    %20 = vector.extract_strided_slice %11 {offsets = [0, 3, 0], sizes = [1, 3, 128], strides = [1, 1, 1]} : vector<3x9x128xf32> to vector<1x3x128xf32>
    %21 = vector.shape_cast %20 : vector<1x3x128xf32> to vector<3x128xf32>
    %cst_21 = arith.constant dense<0.000000e+00> : vector<256x128xf32>
    %22 = tpu.matmul %19, %21, %cst_21 {dimension_numbers = #tpu.dot_dimension_numbers<[1], [0], [0], [1], [0, 0, 1, 1], [], []>} : vector<256x3xf32>, vector<3x128xf32>, vector<256x128xf32> -> vector<256x128xf32>
    %23 = arith.addf %17, %22 : vector<256x128xf32>
    %24 = vector.extract_strided_slice %9 {offsets = [0, 2, 0], sizes = [16, 16, 3], strides = [1, 1, 1]} : vector<18x18x3xf32> to vector<16x16x3xf32>
    %25 = vector.shape_cast %24 : vector<16x16x3xf32> to vector<256x3xf32>
    %26 = vector.extract_strided_slice %11 {offsets = [0, 6, 0], sizes = [1, 3, 128], strides = [1, 1, 1]} : vector<3x9x128xf32> to vector<1x3x128xf32>
    %27 = vector.shape_cast %26 : vector<1x3x128xf32> to vector<3x128xf32>
    %cst_22 = arith.constant dense<0.000000e+00> : vector<256x128xf32>
    %28 = tpu.matmul %25, %27, %cst_22 {dimension_numbers = #tpu.dot_dimension_numbers<[1], [0], [0], [1], [0, 0, 1, 1], [], []>} : vector<256x3xf32>, vector<3x128xf32>, vector<256x128xf32> -> vector<256x128xf32>
    %29 = arith.addf %23, %28 : vector<256x128xf32>
    %30 = vector.extract_strided_slice %9 {offsets = [1, 0, 0], sizes = [16, 16, 3], strides = [1, 1, 1]} : vector<18x18x3xf32> to vector<16x16x3xf32>
    %31 = vector.shape_cast %30 : vector<16x16x3xf32> to vector<256x3xf32>
    %32 = vector.extract_strided_slice %11 {offsets = [1, 0, 0], sizes = [1, 3, 128], strides = [1, 1, 1]} : vector<3x9x128xf32> to vector<1x3x128xf32>
    %33 = vector.shape_cast %32 : vector<1x3x128xf32> to vector<3x128xf32>
    %cst_23 = arith.constant dense<0.000000e+00> : vector<256x128xf32>
    %34 = tpu.matmul %31, %33, %cst_23 {dimension_numbers = #tpu.dot_dimension_numbers<[1], [0], [0], [1], [0, 0, 1, 1], [], []>} : vector<256x3xf32>, vector<3x128xf32>, vector<256x128xf32> -> vector<256x128xf32>
    %35 = arith.addf %29, %34 : vector<256x128xf32>
    %36 = vector.extract_strided_slice %9 {offsets = [1, 1, 0], sizes = [16, 16, 3], strides = [1, 1, 1]} : vector<18x18x3xf32> to vector<16x16x3xf32>
    %37 = vector.shape_cast %36 : vector<16x16x3xf32> to vector<256x3xf32>
    %38 = vector.extract_strided_slice %11 {offsets = [1, 3, 0], sizes = [1, 3, 128], strides = [1, 1, 1]} : vector<3x9x128xf32> to vector<1x3x128xf32>
    %39 = vector.shape_cast %38 : vector<1x3x128xf32> to vector<3x128xf32>
    %cst_24 = arith.constant dense<0.000000e+00> : vector<256x128xf32>
    %40 = tpu.matmul %37, %39, %cst_24 {dimension_numbers = #tpu.dot_dimension_numbers<[1], [0], [0], [1], [0, 0, 1, 1], [], []>} : vector<256x3xf32>, vector<3x128xf32>, vector<256x128xf32> -> vector<256x128xf32>
    %41 = arith.addf %35, %40 : vector<256x128xf32>
    %42 = vector.extract_strided_slice %9 {offsets = [1, 2, 0], sizes = [16, 16, 3], strides = [1, 1, 1]} : vector<18x18x3xf32> to vector<16x16x3xf32>
    %43 = vector.shape_cast %42 : vector<16x16x3xf32> to vector<256x3xf32>
    %44 = vector.extract_strided_slice %11 {offsets = [1, 6, 0], sizes = [1, 3, 128], strides = [1, 1, 1]} : vector<3x9x128xf32> to vector<1x3x128xf32>
    %45 = vector.shape_cast %44 : vector<1x3x128xf32> to vector<3x128xf32>
    %cst_25 = arith.constant dense<0.000000e+00> : vector<256x128xf32>
    %46 = tpu.matmul %43, %45, %cst_25 {dimension_numbers = #tpu.dot_dimension_numbers<[1], [0], [0], [1], [0, 0, 1, 1], [], []>} : vector<256x3xf32>, vector<3x128xf32>, vector<256x128xf32> -> vector<256x128xf32>
    %47 = arith.addf %41, %46 : vector<256x128xf32>
    %48 = vector.extract_strided_slice %9 {offsets = [2, 0, 0], sizes = [16, 16, 3], strides = [1, 1, 1]} : vector<18x18x3xf32> to vector<16x16x3xf32>
    %49 = vector.shape_cast %48 : vector<16x16x3xf32> to vector<256x3xf32>
    %50 = vector.extract_strided_slice %11 {offsets = [2, 0, 0], sizes = [1, 3, 128], strides = [1, 1, 1]} : vector<3x9x128xf32> to vector<1x3x128xf32>
    %51 = vector.shape_cast %50 : vector<1x3x128xf32> to vector<3x128xf32>
    %cst_26 = arith.constant dense<0.000000e+00> : vector<256x128xf32>
    %52 = tpu.matmul %49, %51, %cst_26 {dimension_numbers = #tpu.dot_dimension_numbers<[1], [0], [0], [1], [0, 0, 1, 1], [], []>} : vector<256x3xf32>, vector<3x128xf32>, vector<256x128xf32> -> vector<256x128xf32>
    %53 = arith.addf %47, %52 : vector<256x128xf32>
    %54 = vector.extract_strided_slice %9 {offsets = [2, 1, 0], sizes = [16, 16, 3], strides = [1, 1, 1]} : vector<18x18x3xf32> to vector<16x16x3xf32>
    %55 = vector.shape_cast %54 : vector<16x16x3xf32> to vector<256x3xf32>
    %56 = vector.extract_strided_slice %11 {offsets = [2, 3, 0], sizes = [1, 3, 128], strides = [1, 1, 1]} : vector<3x9x128xf32> to vector<1x3x128xf32>
    %57 = vector.shape_cast %56 : vector<1x3x128xf32> to vector<3x128xf32>
    %cst_27 = arith.constant dense<0.000000e+00> : vector<256x128xf32>
    %58 = tpu.matmul %55, %57, %cst_27 {dimension_numbers = #tpu.dot_dimension_numbers<[1], [0], [0], [1], [0, 0, 1, 1], [], []>} : vector<256x3xf32>, vector<3x128xf32>, vector<256x128xf32> -> vector<256x128xf32>
    %59 = arith.addf %53, %58 : vector<256x128xf32>
    %60 = vector.extract_strided_slice %9 {offsets = [2, 2, 0], sizes = [16, 16, 3], strides = [1, 1, 1]} : vector<18x18x3xf32> to vector<16x16x3xf32>
    %61 = vector.shape_cast %60 : vector<16x16x3xf32> to vector<256x3xf32>
    %62 = vector.extract_strided_slice %11 {offsets = [2, 6, 0], sizes = [1, 3, 128], strides = [1, 1, 1]} : vector<3x9x128xf32> to vector<1x3x128xf32>
    %63 = vector.shape_cast %62 : vector<1x3x128xf32> to vector<3x128xf32>
    %cst_28 = arith.constant dense<0.000000e+00> : vector<256x128xf32>
    %64 = tpu.matmul %61, %63, %cst_28 {dimension_numbers = #tpu.dot_dimension_numbers<[1], [0], [0], [1], [0, 0, 1, 1], [], []>} : vector<256x3xf32>, vector<3x128xf32>, vector<256x128xf32> -> vector<256x128xf32>
    %65 = arith.addf %59, %64 : vector<256x128xf32>
    %66 = vector.shape_cast %65 : vector<256x128xf32> to vector<16x16x128xf32>
    %c0_29 = arith.constant 0 : index
    %c0_30 = arith.constant 0 : index
    %c0_31 = arith.constant 0 : index
    %67 = vector.load %arg9[%c0_29, %c0_30, %c0_31] : memref<16x16x128xf32, #tpu.memory_space<vmem>>, vector<16x16x128xf32>
    tpu.vector_store %arg9[%c0_29, %c0_30, %c0_31], %66 {strides = array<i32>} : memref<16x16x128xf32, #tpu.memory_space<vmem>>, vector<16x16x128xf32>,
    %cst_32 = arith.constant 0.000000e+00 : f32
    %68 = vector.broadcast %cst_32 : f32 to vector<16x16x128xf32>
    %69 = arith.maximumf %66, %68 : vector<16x16x128xf32>
    %c1_33 = arith.constant 1 : index
    %c1_34 = arith.constant 1 : index
    %c0_35 = arith.constant 0 : index
    %70 = vector.load %arg8[%c1_33, %c1_34, %c0_35] : memref<18x18x128xf32, #tpu.memory_space<vmem>>, vector<16x16x128xf32>
    tpu.vector_store %arg8[%c1_33, %c1_34, %c0_35], %69 {strides = array<i32>} : memref<18x18x128xf32, #tpu.memory_space<vmem>>, vector<16x16x128xf32>,
    %c0_i32 = arith.constant 0 : i32
    %c25_i32 = arith.constant 25 : i32
    %71 = arith.addi %c0_i32, %c25_i32 : i32
    %c1_i32 = arith.constant 1 : i32
    scf.for %arg10 = %c0_i32 to %71 step %c1_i32  : i32 {
      %c0_55 = arith.constant 0 : index
      %c0_56 = arith.constant 0 : index
      %c0_57 = arith.constant 0 : index
      %106 = vector.load %arg8[%c0_55, %c0_56, %c0_57] : memref<18x18x128xf32, #tpu.memory_space<vmem>>, vector<18x18x128xf32>
      %cst_58 = arith.constant 0.000000e+00 : f32
      %107 = vector.broadcast %cst_58 : f32 to vector<256x128xf32>
      %108 = vector.extract_strided_slice %106 {offsets = [0, 0, 0], sizes = [16, 16, 128], strides = [1, 1, 1]} : vector<18x18x128xf32> to vector<16x16x128xf32>
      %109 = vector.extract_strided_slice %106 {offsets = [0, 1, 0], sizes = [16, 16, 128], strides = [1, 1, 1]} : vector<18x18x128xf32> to vector<16x16x128xf32>
      %110 = vector.extract_strided_slice %106 {offsets = [0, 2, 0], sizes = [16, 16, 128], strides = [1, 1, 1]} : vector<18x18x128xf32> to vector<16x16x128xf32>
      %111 = tpu.concatenate %108, %109, %110 in 2 : vector<16x16x128xf32>, vector<16x16x128xf32>, vector<16x16x128xf32> -> vector<16x16x384xf32>
      %112 = vector.shape_cast %111 : vector<16x16x384xf32> to vector<256x384xf32>
      %c0_59 = arith.constant 0 : index
      %c0_60 = arith.constant 0 : index
      %c0_61 = arith.constant 0 : index
      %113 = vector.load %arg3[%c0_59, %c0_60, %c0_61] : memref<3x384x128xf32, #tpu.memory_space<vmem>>, vector<1x384x128xf32>
      %114 = vector.shape_cast %113 : vector<1x384x128xf32> to vector<384x128xf32>
      %cst_62 = arith.constant dense<0.000000e+00> : vector<256x128xf32>
      %115 = tpu.matmul %112, %114, %cst_62 {dimension_numbers = #tpu.dot_dimension_numbers<[1], [0], [0], [1], [0, 0, 1, 1], [], []>} : vector<256x384xf32>, vector<384x128xf32>, vector<256x128xf32> -> vector<256x128xf32>
      %116 = arith.addf %107, %115 : vector<256x128xf32>
      %117 = vector.extract_strided_slice %106 {offsets = [1, 0, 0], sizes = [16, 16, 128], strides = [1, 1, 1]} : vector<18x18x128xf32> to vector<16x16x128xf32>
      %118 = vector.extract_strided_slice %106 {offsets = [1, 1, 0], sizes = [16, 16, 128], strides = [1, 1, 1]} : vector<18x18x128xf32> to vector<16x16x128xf32>
      %119 = vector.extract_strided_slice %106 {offsets = [1, 2, 0], sizes = [16, 16, 128], strides = [1, 1, 1]} : vector<18x18x128xf32> to vector<16x16x128xf32>
      %120 = tpu.concatenate %117, %118, %119 in 2 : vector<16x16x128xf32>, vector<16x16x128xf32>, vector<16x16x128xf32> -> vector<16x16x384xf32>
      %121 = vector.shape_cast %120 : vector<16x16x384xf32> to vector<256x384xf32>
      %c1_63 = arith.constant 1 : index
      %c0_64 = arith.constant 0 : index
      %c0_65 = arith.constant 0 : index
      %122 = vector.load %arg3[%c1_63, %c0_64, %c0_65] : memref<3x384x128xf32, #tpu.memory_space<vmem>>, vector<1x384x128xf32>
      %123 = vector.shape_cast %122 : vector<1x384x128xf32> to vector<384x128xf32>
      %cst_66 = arith.constant dense<0.000000e+00> : vector<256x128xf32>
      %124 = tpu.matmul %121, %123, %cst_66 {dimension_numbers = #tpu.dot_dimension_numbers<[1], [0], [0], [1], [0, 0, 1, 1], [], []>} : vector<256x384xf32>, vector<384x128xf32>, vector<256x128xf32> -> vector<256x128xf32>
      %125 = arith.addf %116, %124 : vector<256x128xf32>
      %126 = vector.extract_strided_slice %106 {offsets = [2, 0, 0], sizes = [16, 16, 128], strides = [1, 1, 1]} : vector<18x18x128xf32> to vector<16x16x128xf32>
      %127 = vector.extract_strided_slice %106 {offsets = [2, 1, 0], sizes = [16, 16, 128], strides = [1, 1, 1]} : vector<18x18x128xf32> to vector<16x16x128xf32>
      %128 = vector.extract_strided_slice %106 {offsets = [2, 2, 0], sizes = [16, 16, 128], strides = [1, 1, 1]} : vector<18x18x128xf32> to vector<16x16x128xf32>
      %129 = tpu.concatenate %126, %127, %128 in 2 : vector<16x16x128xf32>, vector<16x16x128xf32>, vector<16x16x128xf32> -> vector<16x16x384xf32>
      %130 = vector.shape_cast %129 : vector<16x16x384xf32> to vector<256x384xf32>
      %c2_67 = arith.constant 2 : index
      %c0_68 = arith.constant 0 : index
      %c0_69 = arith.constant 0 : index
      %131 = vector.load %arg3[%c2_67, %c0_68, %c0_69] : memref<3x384x128xf32, #tpu.memory_space<vmem>>, vector<1x384x128xf32>
      %132 = vector.shape_cast %131 : vector<1x384x128xf32> to vector<384x128xf32>
      %cst_70 = arith.constant dense<0.000000e+00> : vector<256x128xf32>
      %133 = tpu.matmul %130, %132, %cst_70 {dimension_numbers = #tpu.dot_dimension_numbers<[1], [0], [0], [1], [0, 0, 1, 1], [], []>} : vector<256x384xf32>, vector<384x128xf32>, vector<256x128xf32> -> vector<256x128xf32>
      %134 = arith.addf %125, %133 : vector<256x128xf32>
      %135 = vector.shape_cast %134 : vector<256x128xf32> to vector<16x16x128xf32>
      %cst_71 = arith.constant 0.000000e+00 : f32
      %136 = vector.broadcast %cst_71 : f32 to vector<16x16x128xf32>
      %137 = arith.maximumf %135, %136 : vector<16x16x128xf32>
      %c1_72 = arith.constant 1 : index
      %c1_73 = arith.constant 1 : index
      %c0_74 = arith.constant 0 : index
      %138 = vector.load %arg8[%c1_72, %c1_73, %c0_74] : memref<18x18x128xf32, #tpu.memory_space<vmem>>, vector<16x16x128xf32>
      tpu.vector_store %arg8[%c1_72, %c1_73, %c0_74], %137 {strides = array<i32>} : memref<18x18x128xf32, #tpu.memory_space<vmem>>, vector<16x16x128xf32>,
      %c0_75 = arith.constant 0 : index
      %c0_76 = arith.constant 0 : index
      %c0_77 = arith.constant 0 : index
      %139 = vector.load %arg8[%c0_75, %c0_76, %c0_77] : memref<18x18x128xf32, #tpu.memory_space<vmem>>, vector<18x18x128xf32>
      %cst_78 = arith.constant 0.000000e+00 : f32
      %140 = vector.broadcast %cst_78 : f32 to vector<256x128xf32>
      %141 = vector.extract_strided_slice %139 {offsets = [0, 0, 0], sizes = [16, 16, 128], strides = [1, 1, 1]} : vector<18x18x128xf32> to vector<16x16x128xf32>
      %142 = vector.extract_strided_slice %139 {offsets = [0, 1, 0], sizes = [16, 16, 128], strides = [1, 1, 1]} : vector<18x18x128xf32> to vector<16x16x128xf32>
      %143 = vector.extract_strided_slice %139 {offsets = [0, 2, 0], sizes = [16, 16, 128], strides = [1, 1, 1]} : vector<18x18x128xf32> to vector<16x16x128xf32>
      %144 = tpu.concatenate %141, %142, %143 in 2 : vector<16x16x128xf32>, vector<16x16x128xf32>, vector<16x16x128xf32> -> vector<16x16x384xf32>
      %145 = vector.shape_cast %144 : vector<16x16x384xf32> to vector<256x384xf32>
      %c0_79 = arith.constant 0 : index
      %c0_80 = arith.constant 0 : index
      %c0_81 = arith.constant 0 : index
      %146 = vector.load %arg4[%c0_79, %c0_80, %c0_81] : memref<3x384x128xf32, #tpu.memory_space<vmem>>, vector<1x384x128xf32>
      %147 = vector.shape_cast %146 : vector<1x384x128xf32> to vector<384x128xf32>
      %cst_82 = arith.constant dense<0.000000e+00> : vector<256x128xf32>
      %148 = tpu.matmul %145, %147, %cst_82 {dimension_numbers = #tpu.dot_dimension_numbers<[1], [0], [0], [1], [0, 0, 1, 1], [], []>} : vector<256x384xf32>, vector<384x128xf32>, vector<256x128xf32> -> vector<256x128xf32>
      %149 = arith.addf %140, %148 : vector<256x128xf32>
      %150 = vector.extract_strided_slice %139 {offsets = [1, 0, 0], sizes = [16, 16, 128], strides = [1, 1, 1]} : vector<18x18x128xf32> to vector<16x16x128xf32>
      %151 = vector.extract_strided_slice %139 {offsets = [1, 1, 0], sizes = [16, 16, 128], strides = [1, 1, 1]} : vector<18x18x128xf32> to vector<16x16x128xf32>
      %152 = vector.extract_strided_slice %139 {offsets = [1, 2, 0], sizes = [16, 16, 128], strides = [1, 1, 1]} : vector<18x18x128xf32> to vector<16x16x128xf32>
      %153 = tpu.concatenate %150, %151, %152 in 2 : vector<16x16x128xf32>, vector<16x16x128xf32>, vector<16x16x128xf32> -> vector<16x16x384xf32>
      %154 = vector.shape_cast %153 : vector<16x16x384xf32> to vector<256x384xf32>
      %c1_83 = arith.constant 1 : index
      %c0_84 = arith.constant 0 : index
      %c0_85 = arith.constant 0 : index
      %155 = vector.load %arg4[%c1_83, %c0_84, %c0_85] : memref<3x384x128xf32, #tpu.memory_space<vmem>>, vector<1x384x128xf32>
      %156 = vector.shape_cast %155 : vector<1x384x128xf32> to vector<384x128xf32>
      %cst_86 = arith.constant dense<0.000000e+00> : vector<256x128xf32>
      %157 = tpu.matmul %154, %156, %cst_86 {dimension_numbers = #tpu.dot_dimension_numbers<[1], [0], [0], [1], [0, 0, 1, 1], [], []>} : vector<256x384xf32>, vector<384x128xf32>, vector<256x128xf32> -> vector<256x128xf32>
      %158 = arith.addf %149, %157 : vector<256x128xf32>
      %159 = vector.extract_strided_slice %139 {offsets = [2, 0, 0], sizes = [16, 16, 128], strides = [1, 1, 1]} : vector<18x18x128xf32> to vector<16x16x128xf32>
      %160 = vector.extract_strided_slice %139 {offsets = [2, 1, 0], sizes = [16, 16, 128], strides = [1, 1, 1]} : vector<18x18x128xf32> to vector<16x16x128xf32>
      %161 = vector.extract_strided_slice %139 {offsets = [2, 2, 0], sizes = [16, 16, 128], strides = [1, 1, 1]} : vector<18x18x128xf32> to vector<16x16x128xf32>
      %162 = tpu.concatenate %159, %160, %161 in 2 : vector<16x16x128xf32>, vector<16x16x128xf32>, vector<16x16x128xf32> -> vector<16x16x384xf32>
      %163 = vector.shape_cast %162 : vector<16x16x384xf32> to vector<256x384xf32>
      %c2_87 = arith.constant 2 : index
      %c0_88 = arith.constant 0 : index
      %c0_89 = arith.constant 0 : index
      %164 = vector.load %arg4[%c2_87, %c0_88, %c0_89] : memref<3x384x128xf32, #tpu.memory_space<vmem>>, vector<1x384x128xf32>
      %165 = vector.shape_cast %164 : vector<1x384x128xf32> to vector<384x128xf32>
      %cst_90 = arith.constant dense<0.000000e+00> : vector<256x128xf32>
      %166 = tpu.matmul %163, %165, %cst_90 {dimension_numbers = #tpu.dot_dimension_numbers<[1], [0], [0], [1], [0, 0, 1, 1], [], []>} : vector<256x384xf32>, vector<384x128xf32>, vector<256x128xf32> -> vector<256x128xf32>
      %167 = arith.addf %158, %166 : vector<256x128xf32>
      %168 = vector.shape_cast %167 : vector<256x128xf32> to vector<16x16x128xf32>
      %c0_91 = arith.constant 0 : index
      %c0_92 = arith.constant 0 : index
      %c0_93 = arith.constant 0 : index
      %169 = vector.load %arg9[%c0_91, %c0_92, %c0_93] : memref<16x16x128xf32, #tpu.memory_space<vmem>>, vector<16x16x128xf32>
      %170 = arith.addf %168, %169 : vector<16x16x128xf32>
      %cst_94 = arith.constant 0.000000e+00 : f32
      %171 = vector.broadcast %cst_94 : f32 to vector<16x16x128xf32>
      %172 = arith.maximumf %170, %171 : vector<16x16x128xf32>
      %c1_95 = arith.constant 1 : index
      %c1_96 = arith.constant 1 : index
      %c0_97 = arith.constant 0 : index
      %173 = vector.load %arg8[%c1_95, %c1_96, %c0_97] : memref<18x18x128xf32, #tpu.memory_space<vmem>>, vector<16x16x128xf32>
      tpu.vector_store %arg8[%c1_95, %c1_96, %c0_97], %172 {strides = array<i32>} : memref<18x18x128xf32, #tpu.memory_space<vmem>>, vector<16x16x128xf32>,
    }
    %c0_36 = arith.constant 0 : index
    %c0_37 = arith.constant 0 : index
    %c0_38 = arith.constant 0 : index
    %72 = vector.load %arg8[%c0_36, %c0_37, %c0_38] : memref<18x18x128xf32, #tpu.memory_space<vmem>>, vector<18x18x128xf32>
    %cst_39 = arith.constant 0.000000e+00 : f32
    %73 = vector.broadcast %cst_39 : f32 to vector<256x3xf32>
    %74 = vector.extract_strided_slice %72 {offsets = [0, 0, 0], sizes = [16, 16, 128], strides = [1, 1, 1]} : vector<18x18x128xf32> to vector<16x16x128xf32>
    %75 = vector.extract_strided_slice %72 {offsets = [0, 1, 0], sizes = [16, 16, 128], strides = [1, 1, 1]} : vector<18x18x128xf32> to vector<16x16x128xf32>
    %76 = vector.extract_strided_slice %72 {offsets = [0, 2, 0], sizes = [16, 16, 128], strides = [1, 1, 1]} : vector<18x18x128xf32> to vector<16x16x128xf32>
    %77 = tpu.concatenate %74, %75, %76 in 2 : vector<16x16x128xf32>, vector<16x16x128xf32>, vector<16x16x128xf32> -> vector<16x16x384xf32>
    %78 = vector.shape_cast %77 : vector<16x16x384xf32> to vector<256x384xf32>
    %c0_40 = arith.constant 0 : index
    %c0_41 = arith.constant 0 : index
    %c0_42 = arith.constant 0 : index
    %79 = vector.load %arg5[%c0_40, %c0_41, %c0_42] : memref<3x384x3xf32, #tpu.memory_space<vmem>>, vector<1x384x3xf32>
    %80 = vector.shape_cast %79 : vector<1x384x3xf32> to vector<384x3xf32>
    %cst_43 = arith.constant dense<0.000000e+00> : vector<256x3xf32>
    %81 = tpu.matmul %78, %80, %cst_43 {dimension_numbers = #tpu.dot_dimension_numbers<[1], [0], [0], [1], [0, 0, 1, 1], [], []>} : vector<256x384xf32>, vector<384x3xf32>, vector<256x3xf32> -> vector<256x3xf32>
    %82 = arith.addf %73, %81 : vector<256x3xf32>
    %83 = vector.extract_strided_slice %72 {offsets = [1, 0, 0], sizes = [16, 16, 128], strides = [1, 1, 1]} : vector<18x18x128xf32> to vector<16x16x128xf32>
    %84 = vector.extract_strided_slice %72 {offsets = [1, 1, 0], sizes = [16, 16, 128], strides = [1, 1, 1]} : vector<18x18x128xf32> to vector<16x16x128xf32>
    %85 = vector.extract_strided_slice %72 {offsets = [1, 2, 0], sizes = [16, 16, 128], strides = [1, 1, 1]} : vector<18x18x128xf32> to vector<16x16x128xf32>
    %86 = tpu.concatenate %83, %84, %85 in 2 : vector<16x16x128xf32>, vector<16x16x128xf32>, vector<16x16x128xf32> -> vector<16x16x384xf32>
    %87 = vector.shape_cast %86 : vector<16x16x384xf32> to vector<256x384xf32>
    %c1_44 = arith.constant 1 : index
    %c0_45 = arith.constant 0 : index
    %c0_46 = arith.constant 0 : index
    %88 = vector.load %arg5[%c1_44, %c0_45, %c0_46] : memref<3x384x3xf32, #tpu.memory_space<vmem>>, vector<1x384x3xf32>
    %89 = vector.shape_cast %88 : vector<1x384x3xf32> to vector<384x3xf32>
    %cst_47 = arith.constant dense<0.000000e+00> : vector<256x3xf32>
    %90 = tpu.matmul %87, %89, %cst_47 {dimension_numbers = #tpu.dot_dimension_numbers<[1], [0], [0], [1], [0, 0, 1, 1], [], []>} : vector<256x384xf32>, vector<384x3xf32>, vector<256x3xf32> -> vector<256x3xf32>
    %91 = arith.addf %82, %90 : vector<256x3xf32>
    %92 = vector.extract_strided_slice %72 {offsets = [2, 0, 0], sizes = [16, 16, 128], strides = [1, 1, 1]} : vector<18x18x128xf32> to vector<16x16x128xf32>
    %93 = vector.extract_strided_slice %72 {offsets = [2, 1, 0], sizes = [16, 16, 128], strides = [1, 1, 1]} : vector<18x18x128xf32> to vector<16x16x128xf32>
    %94 = vector.extract_strided_slice %72 {offsets = [2, 2, 0], sizes = [16, 16, 128], strides = [1, 1, 1]} : vector<18x18x128xf32> to vector<16x16x128xf32>
    %95 = tpu.concatenate %92, %93, %94 in 2 : vector<16x16x128xf32>, vector<16x16x128xf32>, vector<16x16x128xf32> -> vector<16x16x384xf32>
    %96 = vector.shape_cast %95 : vector<16x16x384xf32> to vector<256x384xf32>
    %c2 = arith.constant 2 : index
    %c0_48 = arith.constant 0 : index
    %c0_49 = arith.constant 0 : index
    %97 = vector.load %arg5[%c2, %c0_48, %c0_49] : memref<3x384x3xf32, #tpu.memory_space<vmem>>, vector<1x384x3xf32>
    %98 = vector.shape_cast %97 : vector<1x384x3xf32> to vector<384x3xf32>
    %cst_50 = arith.constant dense<0.000000e+00> : vector<256x3xf32>
    %99 = tpu.matmul %96, %98, %cst_50 {dimension_numbers = #tpu.dot_dimension_numbers<[1], [0], [0], [1], [0, 0, 1, 1], [], []>} : vector<256x384xf32>, vector<384x3xf32>, vector<256x3xf32> -> vector<256x3xf32>
    %100 = arith.addf %91, %99 : vector<256x3xf32>
    %101 = vector.shape_cast %100 : vector<256x3xf32> to vector<16x16x3xf32>
    %102 = arith.addf %101, %5 : vector<16x16x3xf32>
    %c0_51 = arith.constant 0 : index
    %c0_52 = arith.constant 0 : index
    %c0_53 = arith.constant 0 : index
    %c0_54 = arith.constant 0 : index
    %103 = vector.load %arg6[%c0_51, %c0_52, %c0_53, %c0_54] : memref<1x16x16x3xf32, #tpu.memory_space<vmem>>, vector<1x16x16x3xf32>
    %104 = vector.shape_cast %103 : vector<1x16x16x3xf32> to vector<16x16x3xf32>
    %105 = vector.shape_cast %102 : vector<16x16x3xf32> to vector<1x16x16x3xf32>
    tpu.vector_store %arg6[%c0_51, %c0_52, %c0_53, %c0_54], %105 {strides = array<i32>} : memref<1x16x16x3xf32, #tpu.memory_space<vmem>>, vector<1x16x16x3xf32>,
    return
  }
  func.func @transform_0(%arg0: i32) -> (i32, i32, i32, i32) {
    %c0_i32 = arith.constant 0 : i32
    %c0_i32_0 = arith.constant 0 : i32
    %c0_i32_1 = arith.constant 0 : i32
    %c0_i32_2 = arith.constant 0 : i32
    return %arg0, %c0_i32, %c0_i32_0, %c0_i32_1 : i32, i32, i32, i32
  }
  func.func @transform_1(%arg0: i32) -> (i32, i32, i32) {
    %c0_i32 = arith.constant 0 : i32
    %c0_i32_0 = arith.constant 0 : i32
    %c0_i32_1 = arith.constant 0 : i32
    %c0_i32_2 = arith.constant 0 : i32
    return %c0_i32, %c0_i32_0, %c0_i32_1 : i32, i32, i32
  }
  func.func @transform_2(%arg0: i32) -> (i32, i32, i32) {
    %c0_i32 = arith.constant 0 : i32
    %c0_i32_0 = arith.constant 0 : i32
    %c0_i32_1 = arith.constant 0 : i32
    %c0_i32_2 = arith.constant 0 : i32
    return %c0_i32, %c0_i32_0, %c0_i32_1 : i32, i32, i32
  }
  func.func @transform_3(%arg0: i32) -> (i32, i32, i32) {
    %c0_i32 = arith.constant 0 : i32
    %c0_i32_0 = arith.constant 0 : i32
    %c0_i32_1 = arith.constant 0 : i32
    %c0_i32_2 = arith.constant 0 : i32
    return %c0_i32, %c0_i32_0, %c0_i32_1 : i32, i32, i32
  }
  func.func @transform_4(%arg0: i32) -> (i32, i32, i32) {
    %c0_i32 = arith.constant 0 : i32
    %c0_i32_0 = arith.constant 0 : i32
    %c0_i32_1 = arith.constant 0 : i32
    %c0_i32_2 = arith.constant 0 : i32
    return %c0_i32, %c0_i32_0, %c0_i32_1 : i32, i32, i32
  }
  func.func @transform_5(%arg0: i32) -> (i32, i32, i32, i32) {
    %c0_i32 = arith.constant 0 : i32
    %c0_i32_0 = arith.constant 0 : i32
    %c0_i32_1 = arith.constant 0 : i32
    %c0_i32_2 = arith.constant 0 : i32
    return %arg0, %c0_i32, %c0_i32_0, %c0_i32_1 : i32, i32, i32, i32
  }
}

</mosaic_0001>

<llo_original>
// kernel: drrn_forward.1
$region0: #{drrn_forward.1}
  #allocation0 [shape = 'u32[]', space=smem, size = 0x4, offset = 0x4, fixed_abs, tag = 'smem constant byte address 0x4 - core index']
  #allocation1 [shape = 'u32[144,128]{1,0:T(1,128)}', space=vmem, size = 0x12000, scoped, tag = 'internal scratch']
  #allocation2 [shape = 'f32[18,18,3]{2,1,0:T(8,128)}', space=vmem, size = 0x36000, scoped, tag = 'scratch operand']
  #allocation3 [shape = 'f32[18,18,128]{2,1,0:T(8,128)}', space=vmem, size = 0x36000, scoped, tag = 'scratch operand']
  #allocation4 [shape = 'f32[16,16,128]{2,1,0:T(8,128)}', space=vmem, size = 0x20000, scoped, tag = 'scratch operand']
  %s0 = inlined_call_operand.vmem [shape: f32[2,16,16,3], index: 0, kind: input, shape index: {}]
  %s1 = inlined_call_operand.vmem [shape: f32[3,9,128], index: 1, kind: input, shape index: {}]
  %s2 = inlined_call_operand.vmem [shape: f32[3,384,128], index: 2, kind: input, shape index: {}]
  %s3 = inlined_call_operand.hbm [shape: f32[3,384,128], index: 3, kind: input, shape index: {}]
  %s4 = inlined_call_operand.vmem [shape: f32[3,384,3], index: 4, kind: input, shape index: {}]
  %s5 = inlined_call_operand.vmem [shape: f32[2,16,16,3], index: 5, kind: output, shape index: {}]
  %s6 = sld [smem:[#allocation0]]
  $region64: #{drrn_forward.1} parent=0
    _
  %s8 = ssub.s32 1, %s6
  %s9 = scalar_select 0, %s8, %s6
  $region1: #{drrn_forward.1} parent=0
    #allocation5 [shape = 'u8[589824]{0}', space=vmem, size = 0x90000, scoped, tag = 'input window, operand 3, single buffered']
    #allocation6 [shape = 's32[2]{0}', space=sflag, size = 0x8, scoped, tag = 'scoped memory for drrn_forward.1']
    %10 = vsyncpa [#allocation6], 0
    loop: start=0, step=1, limit=4
    $region2: #{drrn_forward.1} parent=1 // loop_pre_header
      _
    $region3: #{drrn_forward.1} parent=1 // loop_header
      %s12 = sphi 0, %s16
      %p13 = scmp.ge.s32.totalorder %s12, 4
      %s22 = sphi 0, %s24
      %s25 = sphi 0, %s22
      %s26 = sphi 0, %s25
      %s42 = sphi 0, %s26
      %s46 = sphi 0, %s46
      %s48 = sphi 0, %s46
      %s49 = sphi 0, %s48
      %s63 = sphi 0, %s49
      %s67 = sphi 0, %s67
      %s69 = sphi 0, %s67
      %s70 = sphi 0, %s69
      %s84 = sphi 0, %s70
      %s88 = sphi 0, %s88
      %s90 = sphi 0, %s88
      %s91 = sphi 0, %s90
      %s105 = sphi 0, %s91
      %s109 = sphi 0, %s109
      %s111 = sphi 0, %s109
      %s112 = sphi 0, %s111
      %s126 = sphi 0, %s112
      %s132 = sphi 0, %s134
      %s135 = sphi 0, %s132
      %s136 = sphi 0, %s135
      %s152 = sphi 0, %s136
    $region4: #{drrn_forward.1} parent=1 // loop_header_branch
      %15 = sbr.rel (%p13) target = $region8
    $region5: #{drrn_forward.1} parent=1 // loop_body
      %s17 = ssub.s32 %s12, 1
      %s18 = ssub.s32 %s12, 2
      %s19 = sadd.s32 %s12, 1
      %s20 = ssub.s32 %s12, %s19
      %p21 = scmp.eq.s32.totalorder %s20, 0
      %s23 = sadd.s32 %s22, 1
      %s24 = scalar_select %p21, %s22, %s23
      %p27 = pneg %p21
      %p28 = scmp.eq.s32.totalorder %s12, 1
      %p29 = por %p27, %p28
      %p30 = scmp.ne.s32.totalorder %s22, %s25
      %p31 = scmp.eq.s32.totalorder %s12, 0
      %p32 = por %p30, %p31
      %p33 = scmp.ne.s32.totalorder %s22, %s25
      %p34 = scmp.eq.s32.totalorder %s17, 1
      %p35 = por %p33, %p34
      %p36 = scmp.ne.s32.totalorder %s25, %s26
      %p37 = scmp.eq.s32.totalorder %s17, 0
      %p38 = por %p36, %p37
      %p39 = scmp.ne.s32.totalorder %s25, %s26
      %p40 = scmp.eq.s32.totalorder %s18, 1
      %p41 = por %p39, %p40
      %p43 = scmp.ne.s32.totalorder %s26, %s42
      %p44 = scmp.eq.s32.totalorder %s18, 0
      %p45 = por %p43, %p44
      %s47 = sadd.s32 %s46, 1
      %p50 = scmp.eq.s32.totalorder %s12, 1
      %p51 = scmp.ne.s32.totalorder %s46, %s48
      %p52 = scmp.eq.s32.totalorder %s12, 0
      %p53 = por %p51, %p52
      %p54 = scmp.ne.s32.totalorder %s46, %s48
      %p55 = scmp.eq.s32.totalorder %s17, 1
      %p56 = por %p54, %p55
      %p57 = scmp.ne.s32.totalorder %s48, %s49
      %p58 = scmp.eq.s32.totalorder %s17, 0
      %p59 = por %p57, %p58
      %p60 = scmp.ne.s32.totalorder %s48, %s49
      %p61 = scmp.eq.s32.totalorder %s18, 1
      %p62 = por %p60, %p61
      %p64 = scmp.ne.s32.totalorder %s49, %s63
      %p65 = scmp.eq.s32.totalorder %s18, 0
      %p66 = por %p64, %p65
      %s68 = sadd.s32 %s67, 1
      %p71 = scmp.eq.s32.totalorder %s12, 1
      %p72 = scmp.ne.s32.totalorder %s67, %s69
      %p73 = scmp.eq.s32.totalorder %s12, 0
      %p74 = por %p72, %p73
      %p75 = scmp.ne.s32.totalorder %s67, %s69
      %p76 = scmp.eq.s32.totalorder %s17, 1
      %p77 = por %p75, %p76
      %p78 = scmp.ne.s32.totalorder %s69, %s70
      %p79 = scmp.eq.s32.totalorder %s17, 0
      %p80 = por %p78, %p79
      %p81 = scmp.ne.s32.totalorder %s69, %s70
      %p82 = scmp.eq.s32.totalorder %s18, 1
      %p83 = por %p81, %p82
      %p85 = scmp.ne.s32.totalorder %s70, %s84
      %p86 = scmp.eq.s32.totalorder %s18, 0
      %p87 = por %p85, %p86
      %s89 = sadd.s32 %s88, 1
      %p92 = scmp.eq.s32.totalorder %s12, 1
      %p93 = scmp.ne.s32.totalorder %s88, %s90
      %p94 = scmp.eq.s32.totalorder %s12, 0
      %p95 = por %p93, %p94
      %p96 = scmp.ne.s32.totalorder %s88, %s90
      %p97 = scmp.eq.s32.totalorder %s17, 1
      %p98 = por %p96, %p97
      %p99 = scmp.ne.s32.totalorder %s90, %s91
      %p100 = scmp.eq.s32.totalorder %s17, 0
      %p101 = por %p99, %p100
      %p102 = scmp.ne.s32.totalorder %s90, %s91
      %p103 = scmp.eq.s32.totalorder %s18, 1
      %p104 = por %p102, %p103
      %p106 = scmp.ne.s32.totalorder %s91, %s105
      %p107 = scmp.eq.s32.totalorder %s18, 0
      %p108 = por %p106, %p107
      %s110 = sadd.s32 %s109, 1
      %p113 = scmp.eq.s32.totalorder %s12, 1
      %p114 = scmp.ne.s32.totalorder %s109, %s111
      %p115 = scmp.eq.s32.totalorder %s12, 0
      %p116 = por %p114, %p115
      %p117 = scmp.ne.s32.totalorder %s109, %s111
      %p118 = scmp.eq.s32.totalorder %s17, 1
      %p119 = por %p117, %p118
      %p120 = scmp.ne.s32.totalorder %s111, %s112
      %p121 = scmp.eq.s32.totalorder %s17, 0
      %p122 = por %p120, %p121
      %p123 = scmp.ne.s32.totalorder %s111, %s112
      %p124 = scmp.eq.s32.totalorder %s18, 1
      %p125 = por %p123, %p124
      %p127 = scmp.ne.s32.totalorder %s112, %s126
      %p128 = scmp.eq.s32.totalorder %s18, 0
      %p129 = por %p127, %p128
      %s130 = ssub.s32 %s12, %s19
      %p131 = scmp.eq.s32.totalorder %s130, 0
      %s133 = sadd.s32 %s132, 1
      %s134 = scalar_select %p131, %s132, %s133
      %p137 = pneg %p131
      %p138 = scmp.eq.s32.totalorder %s12, 1
      %p139 = por %p137, %p138
      %p140 = scmp.ne.s32.totalorder %s132, %s135
      %p141 = scmp.eq.s32.totalorder %s12, 0
      %p142 = por %p140, %p141
      %p143 = scmp.ne.s32.totalorder %s132, %s135
      %p144 = scmp.eq.s32.totalorder %s17, 1
      %p145 = por %p143, %p144
      %p146 = scmp.ne.s32.totalorder %s135, %s136
      %p147 = scmp.eq.s32.totalorder %s17, 0
      %p148 = por %p146, %p147
      %p149 = scmp.ne.s32.totalorder %s135, %s136
      %p150 = scmp.eq.s32.totalorder %s18, 1
      %p151 = por %p149, %p150
      %p153 = scmp.ne.s32.totalorder %s136, %s152
      %p154 = scmp.eq.s32.totalorder %s18, 0
      %p155 = por %p153, %p154
      %p156 = scmp.le.s32.totalorder 1, %s12
      %p157 = scmp.lt.s32.totalorder %s12, 3
      %p158 = pnand %p156, %p157
      %p159 = pneg %p158
      // Predicated region
      $region9: #{drrn_forward.1} parent=5 // pred_check
        _
      $region10: #{drrn_forward.1} parent=5 // pred_check_branch
        %161 = sbr.rel (%p158) target = $region12
      $region11: #{drrn_forward.1} parent=5 // pred_region
        %s162 = ssub.s32 %s12, 1
        // Predicated region
        $region13: #{drrn_forward.1} parent=11 // pred_check
          %p163 = pneg %p59
        $region14: #{drrn_forward.1} parent=11 // pred_check_branch
          %165 = sbr.rel (%p163) target = $region16
        $region15: #{drrn_forward.1} parent=11 // pred_region
          _
        $region16: #{drrn_forward.1} parent=11 // pred_fallthru
          _
        // Predicated region
        $region17: #{drrn_forward.1} parent=11 // pred_check
          %p166 = pneg %p80
        $region18: #{drrn_forward.1} parent=11 // pred_check_branch
          %168 = sbr.rel (%p166) target = $region20
        $region19: #{drrn_forward.1} parent=11 // pred_region
          _
        $region20: #{drrn_forward.1} parent=11 // pred_fallthru
          _
        // Predicated region
        $region21: #{drrn_forward.1} parent=11 // pred_check
          %p169 = pneg %p101
        $region22: #{drrn_forward.1} parent=11 // pred_check_branch
          %171 = sbr.rel (%p169) target = $region24
        $region23: #{drrn_forward.1} parent=11 // pred_region
          %s173 = ssub.s32 18432, 18432
          %174 = vsyncadd [#allocation6], %s173
          %s175 = sshll.u32 [#allocation5], 4
          %s176 = int_to_ptr.vmem [resolvable:$true] %s175
          %181 = dma.hbm_to_vmem [thread:$0]  %s3, 18432, %s176, [#allocation6], 128, 128, 8
        $region24: #{drrn_forward.1} parent=11 // pred_fallthru
          _
        // Predicated region
        $region25: #{drrn_forward.1} parent=11 // pred_check
          %p182 = pneg %p122
        $region26: #{drrn_forward.1} parent=11 // pred_check_branch
          %184 = sbr.rel (%p182) target = $region28
        $region27: #{drrn_forward.1} parent=11 // pred_region
          _
        $region28: #{drrn_forward.1} parent=11 // pred_fallthru
          _
      $region12: #{drrn_forward.1} parent=5 // pred_fallthru
        _
      %p185 = scmp.lt.s32.totalorder %s12, 2
      // Predicated region
      $region29: #{drrn_forward.1} parent=5 // pred_check
        %p186 = pneg %p185
      $region30: #{drrn_forward.1} parent=5 // pred_check_branch
        %188 = sbr.rel (%p186) target = $region32
      $region31: #{drrn_forward.1} parent=5 // pred_region
        // Predicated region
        $region33: #{drrn_forward.1} parent=31 // pred_check
          %p189 = pneg %p32
        $region34: #{drrn_forward.1} parent=31 // pred_check_branch
          %191 = sbr.rel (%p189) target = $region36
        $region35: #{drrn_forward.1} parent=31 // pred_region
          %p192 = scmp.lt.s32.totalorder %s12, 1
          %s193 = scalar_select %p192, %s12, 1
          %s194 = smul.addr %s193, 32
          %s195 = smul.addr %s194, 8
          %s196 = scalar_lea.vmem %s0, %s195
        $region36: #{drrn_forward.1} parent=31 // pred_fallthru
          _
      $region32: #{drrn_forward.1} parent=5 // pred_fallthru
        _
      %p197 = scmp.le.s32.totalorder 1, %s12
      %p198 = scmp.lt.s32.totalorder %s12, 3
      %p199 = pnand %p197, %p198
      %p200 = pneg %p199
      // Predicated region
      $region37: #{drrn_forward.1} parent=5 // pred_check
        _
      $region38: #{drrn_forward.1} parent=5 // pred_check_branch
        %202 = sbr.rel (%p199) target = $region40
      $region39: #{drrn_forward.1} parent=5 // pred_region
        %s203 = ssub.s32 %s12, 1
        // Predicated region
        $region41: #{drrn_forward.1} parent=39 // pred_check
          %p204 = pneg %p101
        $region42: #{drrn_forward.1} parent=39 // pred_check_branch
          %206 = sbr.rel (%p204) target = $region44
        $region43: #{drrn_forward.1} parent=39 // pred_region
          %207 = dma.done [#allocation6], 18432
        $region44: #{drrn_forward.1} parent=39 // pred_fallthru
          _
        %p208 = scmp.lt.s32.totalorder %s17, 1
        %s209 = scalar_select %p208, %s17, 1
        %s210 = smul.addr %s209, 32
        %s211 = smul.addr %s210, 8
        %s212 = scalar_lea.vmem %s0, %s211
        %p213 = pneg %p38
        %p214 = pneg %p35
        %p215 = pneg %p59
        %p216 = pneg %p56
        %p217 = pneg %p80
        %p218 = pneg %p77
        %p219 = pneg %p101
        %p220 = pneg %p98
        %p221 = pneg %p122
        %p222 = pneg %p119
        %p223 = pneg %p148
        %p224 = pneg %p145
        %p225 = scmp.lt.s32.totalorder %s17, 1
        %s226 = scalar_select %p225, %s17, 1
        %s227 = smul.addr %s226, 32
        %s228 = smul.addr %s227, 8
        %s229 = scalar_lea.vmem %s5, %s228
        %p230 = scmp.lt.s32.totalorder %s17, 1
        %s231 = scalar_select %p230, %s17, 1
        %s232 = smul.addr %s231, 32
        %s233 = smul.addr %s232, 8
        %s234 = scalar_lea.vmem %s0, %s233
        %p235 = scmp.lt.s32.totalorder %s17, 1
        %s236 = scalar_select %p235, %s17, 1
        %s237 = smul.addr %s236, 32
        %s238 = smul.addr %s237, 8
        %s239 = scalar_lea.vmem %s5, %s238
        %vm240 = vcmask 23552
        %241 = vst.msk [vmem:[#allocation2] sm:$0xff] %vm240, 0.0
        %242 = vst.msk [vmem:[#allocation2 + $0x8] sm:$0xff] %vm240, 0.0
        %vm243 = vcmask 17408
        %244 = vst.msk [vmem:[#allocation2 + $0x10] sm:$0x3] %vm243, 0.0
        %245 = vst.msk [vmem:[#allocation2 + $0x18] sm:$0xff] %vm240, 0.0
        %246 = vst.msk [vmem:[#allocation2 + $0x20] sm:$0xff] %vm240, 0.0
        %247 = vst.msk [vmem:[#allocation2 + $0x28] sm:$0x3] %vm243, 0.0
        %248 = vst.msk [vmem:[#allocation2 + $0x30] sm:$0xff] %vm240, 0.0
        %249 = vst.msk [vmem:[#allocation2 + $0x38] sm:$0xff] %vm240, 0.0
        %250 = vst.msk [vmem:[#allocation2 + $0x40] sm:$0x3] %vm243, 0.0
        %251 = vst.msk [vmem:[#allocation2 + $0x48] sm:$0xff] %vm240, 0.0
        %252 = vst.msk [vmem:[#allocation2 + $0x50] sm:$0xff] %vm240, 0.0
        %253 = vst.msk [vmem:[#allocation2 + $0x58] sm:$0x3] %vm243, 0.0
        %254 = vst.msk [vmem:[#allocation2 + $0x60] sm:$0xff] %vm240, 0.0
        %255 = vst.msk [vmem:[#allocation2 + $0x68] sm:$0xff] %vm240, 0.0
        %256 = vst.msk [vmem:[#allocation2 + $0x70] sm:$0x3] %vm243, 0.0
        %257 = vst.msk [vmem:[#allocation2 + $0x78] sm:$0xff] %vm240, 0.0
        %258 = vst.msk [vmem:[#allocation2 + $0x80] sm:$0xff] %vm240, 0.0
        %259 = vst.msk [vmem:[#allocation2 + $0x88] sm:$0x3] %vm243, 0.0
        %260 = vst.msk [vmem:[#allocation2 + $0x90] sm:$0xff] %vm240, 0.0
        %261 = vst.msk [vmem:[#allocation2 + $0x98] sm:$0xff] %vm240, 0.0
        %262 = vst.msk [vmem:[#allocation2 + $0xa0] sm:$0x3] %vm243, 0.0
        %263 = vst.msk [vmem:[#allocation2 + $0xa8] sm:$0xff] %vm240, 0.0
        %264 = vst.msk [vmem:[#allocation2 + $0xb0] sm:$0xff] %vm240, 0.0
        %265 = vst.msk [vmem:[#allocation2 + $0xb8] sm:$0x3] %vm243, 0.0
        %266 = vst.msk [vmem:[#allocation2 + $0xc0] sm:$0xff] %vm240, 0.0
        %267 = vst.msk [vmem:[#allocation2 + $0xc8] sm:$0xff] %vm240, 0.0
        %268 = vst.msk [vmem:[#allocation2 + $0xd0] sm:$0x3] %vm243, 0.0
        %269 = vst.msk [vmem:[#allocation2 + $0xd8] sm:$0xff] %vm240, 0.0
        %270 = vst.msk [vmem:[#allocation2 + $0xe0] sm:$0xff] %vm240, 0.0
        %271 = vst.msk [vmem:[#allocation2 + $0xe8] sm:$0x3] %vm243, 0.0
        %272 = vst.msk [vmem:[#allocation2 + $0xf0] sm:$0xff] %vm240, 0.0
        %273 = vst.msk [vmem:[#allocation2 + $0xf8] sm:$0xff] %vm240, 0.0
        %274 = vst.msk [vmem:[#allocation2 + $0x100] sm:$0x3] %vm243, 0.0
        %275 = vst.msk [vmem:[#allocation2 + $0x108] sm:$0xff] %vm240, 0.0
        %276 = vst.msk [vmem:[#allocation2 + $0x110] sm:$0xff] %vm240, 0.0
        %277 = vst.msk [vmem:[#allocation2 + $0x118] sm:$0x3] %vm243, 0.0
        %278 = vst.msk [vmem:[#allocation2 + $0x120] sm:$0xff] %vm240, 0.0
        %279 = vst.msk [vmem:[#allocation2 + $0x128] sm:$0xff] %vm240, 0.0
        %280 = vst.msk [vmem:[#allocation2 + $0x130] sm:$0x3] %vm243, 0.0
        %281 = vst.msk [vmem:[#allocation2 + $0x138] sm:$0xff] %vm240, 0.0
        %282 = vst.msk [vmem:[#allocation2 + $0x140] sm:$0xff] %vm240, 0.0
        %283 = vst.msk [vmem:[#allocation2 + $0x148] sm:$0x3] %vm243, 0.0
        %284 = vst.msk [vmem:[#allocation2 + $0x150] sm:$0xff] %vm240, 0.0
        %285 = vst.msk [vmem:[#allocation2 + $0x158] sm:$0xff] %vm240, 0.0
        %286 = vst.msk [vmem:[#allocation2 + $0x160] sm:$0x3] %vm243, 0.0
        %287 = vst.msk [vmem:[#allocation2 + $0x168] sm:$0xff] %vm240, 0.0
        %288 = vst.msk [vmem:[#allocation2 + $0x170] sm:$0xff] %vm240, 0.0
        %289 = vst.msk [vmem:[#allocation2 + $0x178] sm:$0x3] %vm243, 0.0
        %290 = vst.msk [vmem:[#allocation2 + $0x180] sm:$0xff] %vm240, 0.0
        %291 = vst.msk [vmem:[#allocation2 + $0x188] sm:$0xff] %vm240, 0.0
        %292 = vst.msk [vmem:[#allocation2 + $0x190] sm:$0x3] %vm243, 0.0
        %293 = vst.msk [vmem:[#allocation2 + $0x198] sm:$0xff] %vm240, 0.0
        %294 = vst.msk [vmem:[#allocation2 + $0x1a0] sm:$0xff] %vm240, 0.0
        %295 = vst.msk [vmem:[#allocation2 + $0x1a8] sm:$0x3] %vm243, 0.0
        %296 = vst [vmem:[#allocation3] sm:$0xff] 0.0
        %297 = vst [vmem:[#allocation3 + $0x8] sm:$0xff] 0.0
        %298 = vst [vmem:[#allocation3 + $0x10] sm:$0x3] 0.0
        %299 = vst [vmem:[#allocation3 + $0x18] sm:$0xff] 0.0
        %300 = vst [vmem:[#allocation3 + $0x20] sm:$0xff] 0.0
        %301 = vst [vmem:[#allocation3 + $0x28] sm:$0x3] 0.0
        %302 = vst [vmem:[#allocation3 + $0x30] sm:$0xff] 0.0
        %303 = vst [vmem:[#allocation3 + $0x38] sm:$0xff] 0.0
        %304 = vst [vmem:[#allocation3 + $0x40] sm:$0x3] 0.0
        %305 = vst [vmem:[#allocation3 + $0x48] sm:$0xff] 0.0
        %306 = vst [vmem:[#allocation3 + $0x50] sm:$0xff] 0.0
        %307 = vst [vmem:[#allocation3 + $0x58] sm:$0x3] 0.0
        %308 = vst [vmem:[#allocation3 + $0x60] sm:$0xff] 0.0
        %309 = vst [vmem:[#allocation3 + $0x68] sm:$0xff] 0.0
        %310 = vst [vmem:[#allocation3 + $0x70] sm:$0x3] 0.0
        %311 = vst [vmem:[#allocation3 + $0x78] sm:$0xff] 0.0
        %312 = vst [vmem:[#allocation3 + $0x80] sm:$0xff] 0.0
        %313 = vst [vmem:[#allocation3 + $0x88] sm:$0x3] 0.0
        %314 = vst [vmem:[#allocation3 + $0x90] sm:$0xff] 0.0
        %315 = vst [vmem:[#allocation3 + $0x98] sm:$0xff] 0.0
        %316 = vst [vmem:[#allocation3 + $0xa0] sm:$0x3] 0.0
        %317 = vst [vmem:[#allocation3 + $0xa8] sm:$0xff] 0.0
        %318 = vst [vmem:[#allocation3 + $0xb0] sm:$0xff] 0.0
        %319 = vst [vmem:[#allocation3 + $0xb8] sm:$0x3] 0.0
        %320 = vst [vmem:[#allocation3 + $0xc0] sm:$0xff] 0.0
        %321 = vst [vmem:[#allocation3 + $0xc8] sm:$0xff] 0.0
        %322 = vst [vmem:[#allocation3 + $0xd0] sm:$0x3] 0.0
        %323 = vst [vmem:[#allocation3 + $0xd8] sm:$0xff] 0.0
        %324 = vst [vmem:[#allocation3 + $0xe0] sm:$0xff] 0.0
        %325 = vst [vmem:[#allocation3 + $0xe8] sm:$0x3] 0.0
        %326 = vst [vmem:[#allocation3 + $0xf0] sm:$0xff] 0.0
        %327 = vst [vmem:[#allocation3 + $0xf8] sm:$0xff] 0.0
        %328 = vst [vmem:[#allocation3 + $0x100] sm:$0x3] 0.0
        %329 = vst [vmem:[#allocation3 + $0x108] sm:$0xff] 0.0
        %330 = vst [vmem:[#allocation3 + $0x110] sm:$0xff] 0.0
        %331 = vst [vmem:[#allocation3 + $0x118] sm:$0x3] 0.0
        %332 = vst [vmem:[#allocation3 + $0x120] sm:$0xff] 0.0
        %333 = vst [vmem:[#allocation3 + $0x128] sm:$0xff] 0.0
        %334 = vst [vmem:[#allocation3 + $0x130] sm:$0x3] 0.0
        %335 = vst [vmem:[#allocation3 + $0x138] sm:$0xff] 0.0
        %336 = vst [vmem:[#allocation3 + $0x140] sm:$0xff] 0.0
        %337 = vst [vmem:[#allocation3 + $0x148] sm:$0x3] 0.0
        %338 = vst [vmem:[#allocation3 + $0x150] sm:$0xff] 0.0
        %339 = vst [vmem:[#allocation3 + $0x158] sm:$0xff] 0.0
        %340 = vst [vmem:[#allocation3 + $0x160] sm:$0x3] 0.0
        %341 = vst [vmem:[#allocation3 + $0x168] sm:$0xff] 0.0
        %342 = vst [vmem:[#allocation3 + $0x170] sm:$0xff] 0.0
        %343 = vst [vmem:[#allocation3 + $0x178] sm:$0x3] 0.0
        %344 = vst [vmem:[#allocation3 + $0x180] sm:$0xff] 0.0
        %345 = vst [vmem:[#allocation3 + $0x188] sm:$0xff] 0.0
        %346 = vst [vmem:[#allocation3 + $0x190] sm:$0x3] 0.0
        %347 = vst [vmem:[#allocation3 + $0x198] sm:$0xff] 0.0
        %348 = vst [vmem:[#allocation3 + $0x1a0] sm:$0xff] 0.0
        %349 = vst [vmem:[#allocation3 + $0x1a8] sm:$0x3] 0.0
        %v350 = vld [vmem:[%s234] sm:$0xff]
        %v351 = vld [vmem:[%s234 + $0x8] sm:$0xff]
        %v352 = vld [vmem:[%s234 + $0x10] sm:$0xff]
        %v353 = vld [vmem:[%s234 + $0x18] sm:$0xff]
        %v354 = vld [vmem:[%s234 + $0x20] sm:$0xff]
        %v355 = vld [vmem:[%s234 + $0x28] sm:$0xff]
        %v356 = vld [vmem:[%s234 + $0x30] sm:$0xff]
        %v357 = vld [vmem:[%s234 + $0x38] sm:$0xff]
        %v358 = vld [vmem:[%s234 + $0x40] sm:$0xff]
        %v359 = vld [vmem:[%s234 + $0x48] sm:$0xff]
        %v360 = vld [vmem:[%s234 + $0x50] sm:$0xff]
        %v361 = vld [vmem:[%s234 + $0x58] sm:$0xff]
        %v362 = vld [vmem:[%s234 + $0x60] sm:$0xff]
        %v363 = vld [vmem:[%s234 + $0x68] sm:$0xff]
        %v364 = vld [vmem:[%s234 + $0x70] sm:$0xff]
        %v365 = vld [vmem:[%s234 + $0x78] sm:$0xff]
        %v366 = vld [vmem:[%s234 + $0x80] sm:$0xff]
        %v367 = vld [vmem:[%s234 + $0x88] sm:$0xff]
        %v368 = vld [vmem:[%s234 + $0x90] sm:$0xff]
        %v369 = vld [vmem:[%s234 + $0x98] sm:$0xff]
        %v370 = vld [vmem:[%s234 + $0xa0] sm:$0xff]
        %v371 = vld [vmem:[%s234 + $0xa8] sm:$0xff]
        %v372 = vld [vmem:[%s234 + $0xb0] sm:$0xff]
        %v373 = vld [vmem:[%s234 + $0xb8] sm:$0xff]
        %v374 = vld [vmem:[%s234 + $0xc0] sm:$0xff]
        %v375 = vld [vmem:[%s234 + $0xc8] sm:$0xff]
        %v376 = vld [vmem:[%s234 + $0xd0] sm:$0xff]
        %v377 = vld [vmem:[%s234 + $0xd8] sm:$0xff]
        %v378 = vld [vmem:[%s234 + $0xe0] sm:$0xff]
        %v379 = vld [vmem:[%s234 + $0xe8] sm:$0xff]
        %v380 = vld [vmem:[%s234 + $0xf0] sm:$0xff]
        %v381 = vld [vmem:[%s234 + $0xf8] sm:$0xff]
        %v382 = vmax.f32 %v350, 0.0
        %v383 = vmax.f32 %v351, 0.0
        %v384 = vmax.f32 %v352, 0.0
        %v385 = vmax.f32 %v353, 0.0
        %v386 = vmax.f32 %v354, 0.0
        %v387 = vmax.f32 %v355, 0.0
        %v388 = vmax.f32 %v356, 0.0
        %v389 = vmax.f32 %v357, 0.0
        %v390 = vmax.f32 %v358, 0.0
        %v391 = vmax.f32 %v359, 0.0
        %v392 = vmax.f32 %v360, 0.0
        %v393 = vmax.f32 %v361, 0.0
        %v394 = vmax.f32 %v362, 0.0
        %v395 = vmax.f32 %v363, 0.0
        %v396 = vmax.f32 %v364, 0.0
        %v397 = vmax.f32 %v365, 0.0
        %v398 = vmax.f32 %v366, 0.0
        %v399 = vmax.f32 %v367, 0.0
        %v400 = vmax.f32 %v368, 0.0
        %v401 = vmax.f32 %v369, 0.0
        %v402 = vmax.f32 %v370, 0.0
        %v403 = vmax.f32 %v371, 0.0
        %v404 = vmax.f32 %v372, 0.0
        %v405 = vmax.f32 %v373, 0.0
        %v406 = vmax.f32 %v374, 0.0
        %v407 = vmax.f32 %v375, 0.0
        %v408 = vmax.f32 %v376, 0.0
        %v409 = vmax.f32 %v377, 0.0
        %v410 = vmax.f32 %v378, 0.0
        %v411 = vmax.f32 %v379, 0.0
        %v412 = vmax.f32 %v380, 0.0
        %v413 = vmax.f32 %v381, 0.0
        %s414 = scalar_lea.vmem [#allocation2], 24
        %415 = vst.msk [vmem:[%s414 + $0x1] sm:$0xff] %vm240, %v382
        %416 = vst.msk [vmem:[%s414 + $0x9] sm:$0xff] %vm240, %v383
        %417 = vst.msk [vmem:[%s414 + $0x19] sm:$0xff] %vm240, %v384
        %418 = vst.msk [vmem:[%s414 + $0x21] sm:$0xff] %vm240, %v385
        %419 = vst.msk [vmem:[%s414 + $0x31] sm:$0xff] %vm240, %v386
        %420 = vst.msk [vmem:[%s414 + $0x39] sm:$0xff] %vm240, %v387
        %421 = vst.msk [vmem:[%s414 + $0x49] sm:$0xff] %vm240, %v388
        %422 = vst.msk [vmem:[%s414 + $0x51] sm:$0xff] %vm240, %v389
        %423 = vst.msk [vmem:[%s414 + $0x61] sm:$0xff] %vm240, %v390
        %424 = vst.msk [vmem:[%s414 + $0x69] sm:$0xff] %vm240, %v391
        %425 = vst.msk [vmem:[%s414 + $0x79] sm:$0xff] %vm240, %v392
        %426 = vst.msk [vmem:[%s414 + $0x81] sm:$0xff] %vm240, %v393
        %427 = vst.msk [vmem:[%s414 + $0x91] sm:$0xff] %vm240, %v394
        %428 = vst.msk [vmem:[%s414 + $0x99] sm:$0xff] %vm240, %v395
        %429 = vst.msk [vmem:[%s414 + $0xa9] sm:$0xff] %vm240, %v396
        %430 = vst.msk [vmem:[%s414 + $0xb1] sm:$0xff] %vm240, %v397
        %431 = vst.msk [vmem:[%s414 + $0xc1] sm:$0xff] %vm240, %v398
        %432 = vst.msk [vmem:[%s414 + $0xc9] sm:$0xff] %vm240, %v399
        %433 = vst.msk [vmem:[%s414 + $0xd9] sm:$0xff] %vm240, %v400
        %434 = vst.msk [vmem:[%s414 + $0xe1] sm:$0xff] %vm240, %v401
        %435 = vst.msk [vmem:[%s414 + $0xf1] sm:$0xff] %vm240, %v402
        %436 = vst.msk [vmem:[%s414 + $0xf9] sm:$0xff] %vm240, %v403
        %437 = vst.msk [vmem:[%s414 + $0x109] sm:$0xff] %vm240, %v404
        %438 = vst.msk [vmem:[%s414 + $0x111] sm:$0xff] %vm240, %v405
        %439 = vst.msk [vmem:[%s414 + $0x121] sm:$0xff] %vm240, %v406
        %440 = vst.msk [vmem:[%s414 + $0x129] sm:$0xff] %vm240, %v407
        %441 = vst.msk [vmem:[%s414 + $0x139] sm:$0xff] %vm240, %v408
        %442 = vst.msk [vmem:[%s414 + $0x141] sm:$0xff] %vm240, %v409
        %443 = vst.msk [vmem:[%s414 + $0x151] sm:$0xff] %vm240, %v410
        %444 = vst.msk [vmem:[%s414 + $0x159] sm:$0xff] %vm240, %v411
        %445 = vst.msk [vmem:[%s414 + $0x169] sm:$0xff] %vm240, %v412
        %446 = vst.msk [vmem:[%s414 + $0x171] sm:$0xff] %vm240, %v413
        %v447 = vld [vmem:[#allocation2] sm:$0xff]
        %v448 = vld [vmem:[#allocation2 + $0x8] sm:$0xff]
        %v449 = vld [vmem:[#allocation2 + $0x10] sm:$0x3]
        %v450 = vld [vmem:[#allocation2 + $0x18] sm:$0xff]
        %v451 = vld [vmem:[#allocation2 + $0x20] sm:$0xff]
        %v452 = vld [vmem:[#allocation2 + $0x28] sm:$0x3]
        %v453 = vld [vmem:[#allocation2 + $0x30] sm:$0xff]
        %v454 = vld [vmem:[#allocation2 + $0x38] sm:$0xff]
        %v455 = vld [vmem:[#allocation2 + $0x40] sm:$0x3]
        %v456 = vld [vmem:[#allocation2 + $0x48] sm:$0xff]
        %v457 = vld [vmem:[#allocation2 + $0x50] sm:$0xff]
        %v458 = vld [vmem:[#allocation2 + $0x58] sm:$0x3]
        %v459 = vld [vmem:[#allocation2 + $0x60] sm:$0xff]
        %v460 = vld [vmem:[#allocation2 + $0x68] sm:$0xff]
        %v461 = vld [vmem:[#allocation2 + $0x70] sm:$0x3]
        %v462 = vld [vmem:[#allocation2 + $0x78] sm:$0xff]
        %v463 = vld [vmem:[#allocation2 + $0x80] sm:$0xff]
        %v464 = vld [vmem:[#allocation2 + $0x88] sm:$0x3]
        %v465 = vld [vmem:[#allocation2 + $0x90] sm:$0xff]
        %v466 = vld [vmem:[#allocation2 + $0x98] sm:$0xff]
        %v467 = vld [vmem:[#allocation2 + $0xa0] sm:$0x3]
        %v468 = vld [vmem:[#allocation2 + $0xa8] sm:$0xff]
        %v469 = vld [vmem:[#allocation2 + $0xb0] sm:$0xff]
        %v470 = vld [vmem:[#allocation2 + $0xb8] sm:$0x3]
        %v471 = vld [vmem:[#allocation2 + $0xc0] sm:$0xff]
        %v472 = vld [vmem:[#allocation2 + $0xc8] sm:$0xff]
        %v473 = vld [vmem:[#allocation2 + $0xd0] sm:$0x3]
        %v474 = vld [vmem:[#allocation2 + $0xd8] sm:$0xff]
        %v475 = vld [vmem:[#allocation2 + $0xe0] sm:$0xff]
        %v476 = vld [vmem:[#allocation2 + $0xe8] sm:$0x3]
        %v477 = vld [vmem:[#allocation2 + $0xf0] sm:$0xff]
        %v478 = vld [vmem:[#allocation2 + $0xf8] sm:$0xff]
        %v479 = vld [vmem:[#allocation2 + $0x100] sm:$0x3]
        %v480 = vld [vmem:[#allocation2 + $0x108] sm:$0xff]
        %v481 = vld [vmem:[#allocation2 + $0x110] sm:$0xff]
        %v482 = vld [vmem:[#allocation2 + $0x118] sm:$0x3]
        %v483 = vld [vmem:[#allocation2 + $0x120] sm:$0xff]
        %v484 = vld [vmem:[#allocation2 + $0x128] sm:$0xff]
        %v485 = vld [vmem:[#allocation2 + $0x130] sm:$0x3]
        %v486 = vld [vmem:[#allocation2 + $0x138] sm:$0xff]
        %v487 = vld [vmem:[#allocation2 + $0x140] sm:$0xff]
        %v488 = vld [vmem:[#allocation2 + $0x148] sm:$0x3]
        %v489 = vld [vmem:[#allocation2 + $0x150] sm:$0xff]
        %v490 = vld [vmem:[#allocation2 + $0x158] sm:$0xff]
        %v491 = vld [vmem:[#allocation2 + $0x160] sm:$0x3]
        %v492 = vld [vmem:[#allocation2 + $0x168] sm:$0xff]
        %v493 = vld [vmem:[#allocation2 + $0x170] sm:$0xff]
        %v494 = vld [vmem:[#allocation2 + $0x178] sm:$0x3]
        %v495 = vld [vmem:[#allocation2 + $0x180] sm:$0xff]
        %v496 = vld [vmem:[#allocation2 + $0x188] sm:$0xff]
        %v497 = vld [vmem:[#allocation2 + $0x190] sm:$0x3]
        %v498 = vld [vmem:[#allocation2 + $0x198] sm:$0xff]
        %v499 = vld [vmem:[#allocation2 + $0x1a0] sm:$0xff]
        %v500 = vld [vmem:[#allocation2 + $0x1a8] sm:$0x3]
        %v501 = vld [vmem:[%s1] sm:$0xff]
        %v502 = vld [vmem:[%s1 + $0x8] sm:$0x1]
        %v503 = vld [vmem:[%s1 + $0x10] sm:$0xff]
        %v504 = vld [vmem:[%s1 + $0x18] sm:$0x1]
        %v505 = vld [vmem:[%s1 + $0x20] sm:$0xff]
        %v506 = vld [vmem:[%s1 + $0x28] sm:$0x1]
        %vm555 = vcmask 1046528
        %v556 = vrot.slane %v447, 1
        %v557 = vrot.slane %v448, 1
        %v558 = vsel %vm555, %v556, %v557
        %v559 = vrot.slane %v449, 1
        %v560 = vsel %vm555, %v557, %v559
        %v561 = vrot.slane %v450, 1
        %v562 = vrot.slane %v451, 1
        %v563 = vsel %vm555, %v561, %v562
        %v564 = vrot.slane %v452, 1
        %v565 = vsel %vm555, %v562, %v564
        %v566 = vrot.slane %v453, 1
        %v567 = vrot.slane %v454, 1
        %v568 = vsel %vm555, %v566, %v567
        %v569 = vrot.slane %v455, 1
        %v570 = vsel %vm555, %v567, %v569
        %v571 = vrot.slane %v456, 1
        %v572 = vrot.slane %v457, 1
        %v573 = vsel %vm555, %v571, %v572
        %v574 = vrot.slane %v458, 1
        %v575 = vsel %vm555, %v572, %v574
        %v576 = vrot.slane %v459, 1
        %v577 = vrot.slane %v460, 1
        %v578 = vsel %vm555, %v576, %v577
        %v579 = vrot.slane %v461, 1
        %v580 = vsel %vm555, %v577, %v579
        %v581 = vrot.slane %v462, 1
        %v582 = vrot.slane %v463, 1
        %v583 = vsel %vm555, %v581, %v582
        %v584 = vrot.slane %v464, 1
        %v585 = vsel %vm555, %v582, %v584
        %v586 = vrot.slane %v465, 1
        %v587 = vrot.slane %v466, 1
        %v588 = vsel %vm555, %v586, %v587
        %v589 = vrot.slane %v467, 1
        %v590 = vsel %vm555, %v587, %v589
        %v591 = vrot.slane %v468, 1
        %v592 = vrot.slane %v469, 1
        %v593 = vsel %vm555, %v591, %v592
        %v594 = vrot.slane %v470, 1
        %v595 = vsel %vm555, %v592, %v594
        %v596 = vrot.slane %v471, 1
        %v597 = vrot.slane %v472, 1
        %v598 = vsel %vm555, %v596, %v597
        %v599 = vrot.slane %v473, 1
        %v600 = vsel %vm555, %v597, %v599
        %v601 = vrot.slane %v474, 1
        %v602 = vrot.slane %v475, 1
        %v603 = vsel %vm555, %v601, %v602
        %v604 = vrot.slane %v476, 1
        %v605 = vsel %vm555, %v602, %v604
        %v606 = vrot.slane %v477, 1
        %v607 = vrot.slane %v478, 1
        %v608 = vsel %vm555, %v606, %v607
        %v609 = vrot.slane %v479, 1
        %v610 = vsel %vm555, %v607, %v609
        %v611 = vrot.slane %v480, 1
        %v612 = vrot.slane %v481, 1
        %v613 = vsel %vm555, %v611, %v612
        %v614 = vrot.slane %v482, 1
        %v615 = vsel %vm555, %v612, %v614
        %v616 = vrot.slane %v483, 1
        %v617 = vrot.slane %v484, 1
        %v618 = vsel %vm555, %v616, %v617
        %v619 = vrot.slane %v485, 1
        %v620 = vsel %vm555, %v617, %v619
        %v621 = vrot.slane %v486, 1
        %v622 = vrot.slane %v487, 1
        %v623 = vsel %vm555, %v621, %v622
        %v624 = vrot.slane %v488, 1
        %v625 = vsel %vm555, %v622, %v624
        %v626 = vrot.slane %v489, 1
        %v627 = vrot.slane %v490, 1
        %v628 = vsel %vm555, %v626, %v627
        %v629 = vrot.slane %v491, 1
        %v630 = vsel %vm555, %v627, %v629
        %v631 = vrot.slane %v492, 1
        %v632 = vrot.slane %v493, 1
        %v633 = vsel %vm555, %v631, %v632
        %v634 = vrot.slane %v494, 1
        %v635 = vsel %vm555, %v632, %v634
        %v637 = vrot.slane %v501, 3
        %v638 = vsel %vm240, %v558, 0
        %v640 = vsel %vm240, %v560, 0
        %v642 = vsel %vm240, %v563, 0
        %v644 = vsel %vm240, %v565, 0
        %v646 = vsel %vm240, %v568, 0
        %v648 = vsel %vm240, %v570, 0
        %v650 = vsel %vm240, %v573, 0
        %v652 = vsel %vm240, %v575, 0
        %v654 = vsel %vm240, %v578, 0
        %v656 = vsel %vm240, %v580, 0
        %v658 = vsel %vm240, %v583, 0
        %v660 = vsel %vm240, %v585, 0
        %v662 = vsel %vm240, %v588, 0
        %v664 = vsel %vm240, %v590, 0
        %v666 = vsel %vm240, %v593, 0
        %v668 = vsel %vm240, %v595, 0
        %v670 = vsel %vm240, %v598, 0
        %v672 = vsel %vm240, %v600, 0
        %v674 = vsel %vm240, %v603, 0
        %v676 = vsel %vm240, %v605, 0
        %v678 = vsel %vm240, %v608, 0
        %v680 = vsel %vm240, %v610, 0
        %v682 = vsel %vm240, %v613, 0
        %v684 = vsel %vm240, %v615, 0
        %v686 = vsel %vm240, %v618, 0
        %v688 = vsel %vm240, %v620, 0
        %v690 = vsel %vm240, %v623, 0
        %v692 = vsel %vm240, %v625, 0
        %v694 = vsel %vm240, %v628, 0
        %v696 = vsel %vm240, %v630, 0
        %v698 = vsel %vm240, %v633, 0
        %v700 = vsel %vm240, %v635, 0
        %vm702 = vcmask 1042432
        %v703 = vsel %vm702, %v637, 0
        %705 = vmatprep.subr.mxu0 0.0
        %706 = vmatpush1.msra.mxu0 %v703
        %707 = vmatprep.subr.mxu0 0.0
        %708 = vmatpush1.msra.mxu0 0.0
        %709 = vmatprep.subr.mxu0 0.0
        %710 = vmatpush1.msra.mxu0 0.0
        %711 = vmatprep.subr.mxu0 0.0
        %712 = vmatpush1.msra.mxu0 0.0
        %713 = vmatprep.subr.mxu0 0.0
        %714 = vmatpush1.msra.mxu0 0.0
        %715 = vmatprep.subr.mxu0 0.0
        %716 = vmatpush1.msra.mxu0 0.0
        %717 = vmatprep.subr.mxu0 0.0
        %718 = vmatpush1.msra.mxu0 0.0
        %719 = vmatprep.subr.mxu0 0.0
        %720 = vmatpush1.msra.mxu0 0.0
        %721 = vmatprep.subr.mxu0 0.0
        %722 = vmatpush1.msra.mxu0 0.0
        %723 = vmatprep.subr.mxu0 0.0
        %724 = vmatpush1.msra.mxu0 0.0
        %725 = vmatprep.subr.mxu0 0.0
        %726 = vmatpush1.msra.mxu0 0.0
        %727 = vmatprep.subr.mxu0 0.0
        %728 = vmatpush1.msra.mxu0 0.0
        %729 = vmatprep.subr.mxu0 0.0
        %730 = vmatpush1.msra.mxu0 0.0
        %731 = vmatprep.subr.mxu0 0.0
        %732 = vmatpush1.msra.mxu0 0.0
        %733 = vmatprep.subr.mxu0 0.0
        %734 = vmatpush1.msra.mxu0 0.0
        %735 = vmatprep.subr.mxu0 0.0
        %736 = vmatpush1.msra.mxu0 0.0
        %737 = vmatprep.subr.mxu0 0.0
        %738 = vmatpush1.msra.mxu0 0.0
        %739 = vmatprep.subr.mxu0 0.0
        %740 = vmatpush1.msra.mxu0 0.0
        %741 = vmatprep.subr.mxu0 0.0
        %742 = vmatpush1.msra.mxu0 0.0
        %743 = vmatprep.subr.mxu0 0.0
        %744 = vmatpush1.msra.mxu0 0.0
        %745 = vmatprep.subr.mxu0 0.0
        %746 = vmatpush1.msra.mxu0 0.0
        %747 = vmatprep.subr.mxu0 0.0
        %748 = vmatpush1.msra.mxu0 0.0
        %749 = vmatprep.subr.mxu0 0.0
        %750 = vmatpush1.msra.mxu0 0.0
        %751 = vmatprep.subr.mxu0 0.0
        %752 = vmatpush1.msra.mxu0 0.0
        %753 = vmatprep.subr.mxu0 0.0
        %754 = vmatpush1.msra.mxu0 0.0
        %755 = vmatprep.subr.mxu0 0.0
        %756 = vmatpush1.msra.mxu0 0.0
        %757 = vmatprep.subr.mxu0 0.0
        %758 = vmatpush1.msra.mxu0 0.0
        %759 = vmatprep.subr.mxu0 0.0
        %760 = vmatpush1.msra.mxu0 0.0
        %761 = vmatprep.subr.mxu0 0.0
        %762 = vmatpush1.msra.mxu0 0.0
        %763 = vmatprep.subr.mxu0 0.0
        %764 = vmatpush1.msra.mxu0 0.0
        %765 = vmatprep.subr.mxu0 0.0
        %766 = vmatpush1.msra.mxu0 0.0
        %767 = vmatprep.subr.mxu0 0.0
        %768 = vmatpush1.msra.mxu0 0.0
        %769 = vmatprep.mubr.f32.mxu0 0.0
        %770 = vmatmul.mubr.f32.gmra.mrb[0].mxu0 %v638
        %v771 = vpop.f32.mrb[0].mxu0
        %v772 = vadd.f32 0.0, %v771
        %v773 = vpop.f32.mrb[0].mxu0
        %774 = vmatprep.mubr.f32.mxu0 0.0
        %775 = vmatmul.mubr.f32.gmra.mrb[0].mxu0 %v640
        %v776 = vpop.f32.mrb[0].mxu0
        %v777 = vadd.f32 0.0, %v776
        %v778 = vpop.f32.mrb[0].mxu0
        %779 = vmatprep.mubr.f32.mxu0 0.0
        %780 = vmatmul.mubr.f32.gmra.mrb[0].mxu0 %v642
        %v781 = vpop.f32.mrb[0].mxu0
        %v782 = vadd.f32 0.0, %v781
        %v783 = vpop.f32.mrb[0].mxu0
        %784 = vmatprep.mubr.f32.mxu0 0.0
        %785 = vmatmul.mubr.f32.gmra.mrb[0].mxu0 %v644
        %v786 = vpop.f32.mrb[0].mxu0
        %v787 = vadd.f32 0.0, %v786
        %v788 = vpop.f32.mrb[0].mxu0
        %789 = vmatprep.mubr.f32.mxu0 0.0
        %790 = vmatmul.mubr.f32.gmra.mrb[0].mxu0 %v646
        %v791 = vpop.f32.mrb[0].mxu0
        %v792 = vadd.f32 0.0, %v791
        %v793 = vpop.f32.mrb[0].mxu0
        %794 = vmatprep.mubr.f32.mxu0 0.0
        %795 = vmatmul.mubr.f32.gmra.mrb[0].mxu0 %v648
        %v796 = vpop.f32.mrb[0].mxu0
        %v797 = vadd.f32 0.0, %v796
        %v798 = vpop.f32.mrb[0].mxu0
        %799 = vmatprep.mubr.f32.mxu0 0.0
        %800 = vmatmul.mubr.f32.gmra.mrb[0].mxu0 %v650
        %v801 = vpop.f32.mrb[0].mxu0
        %v802 = vadd.f32 0.0, %v801
        %v803 = vpop.f32.mrb[0].mxu0
        %804 = vmatprep.mubr.f32.mxu0 0.0
        %805 = vmatmul.mubr.f32.gmra.mrb[0].mxu0 %v652
        %v806 = vpop.f32.mrb[0].mxu0
        %v807 = vadd.f32 0.0, %v806
        %v808 = vpop.f32.mrb[0].mxu0
        %809 = vmatprep.mubr.f32.mxu0 0.0
        %810 = vmatmul.mubr.f32.gmra.mrb[0].mxu0 %v654
        %v811 = vpop.f32.mrb[0].mxu0
        %v812 = vadd.f32 0.0, %v811
        %v813 = vpop.f32.mrb[0].mxu0
        %814 = vmatprep.mubr.f32.mxu0 0.0
        %815 = vmatmul.mubr.f32.gmra.mrb[0].mxu0 %v656
        %v816 = vpop.f32.mrb[0].mxu0
        %v817 = vadd.f32 0.0, %v816
        %v818 = vpop.f32.mrb[0].mxu0
        %819 = vmatprep.mubr.f32.mxu0 0.0
        %820 = vmatmul.mubr.f32.gmra.mrb[0].mxu0 %v658
        %v821 = vpop.f32.mrb[0].mxu0
        %v822 = vadd.f32 0.0, %v821
        %v823 = vpop.f32.mrb[0].mxu0
        %824 = vmatprep.mubr.f32.mxu0 0.0
        %825 = vmatmul.mubr.f32.gmra.mrb[0].mxu0 %v660
        %v826 = vpop.f32.mrb[0].mxu0
        %v827 = vadd.f32 0.0, %v826
        %v828 = vpop.f32.mrb[0].mxu0
        %829 = vmatprep.mubr.f32.mxu0 0.0
        %830 = vmatmul.mubr.f32.gmra.mrb[0].mxu0 %v662
        %v831 = vpop.f32.mrb[0].mxu0
        %v832 = vadd.f32 0.0, %v831
        %v833 = vpop.f32.mrb[0].mxu0
        %834 = vmatprep.mubr.f32.mxu0 0.0
        %835 = vmatmul.mubr.f32.gmra.mrb[0].mxu0 %v664
        %v836 = vpop.f32.mrb[0].mxu0
        %v837 = vadd.f32 0.0, %v836
        %v838 = vpop.f32.mrb[0].mxu0
        %839 = vmatprep.mubr.f32.mxu0 0.0
        %840 = vmatmul.mubr.f32.gmra.mrb[0].mxu0 %v666
        %v841 = vpop.f32.mrb[0].mxu0
        %v842 = vadd.f32 0.0, %v841
        %v843 = vpop.f32.mrb[0].mxu0
        %844 = vmatprep.mubr.f32.mxu0 0.0
        %845 = vmatmul.mubr.f32.gmra.mrb[0].mxu0 %v668
        %v846 = vpop.f32.mrb[0].mxu0
        %v847 = vadd.f32 0.0, %v846
        %v848 = vpop.f32.mrb[0].mxu0
        %849 = vmatprep.mubr.f32.mxu0 0.0
        %850 = vmatmul.mubr.f32.gmra.mrb[0].mxu0 %v670
        %v851 = vpop.f32.mrb[0].mxu0
        %v852 = vadd.f32 0.0, %v851
        %v853 = vpop.f32.mrb[0].mxu0
        %854 = vmatprep.mubr.f32.mxu0 0.0
        %855 = vmatmul.mubr.f32.gmra.mrb[0].mxu0 %v672
        %v856 = vpop.f32.mrb[0].mxu0
        %v857 = vadd.f32 0.0, %v856
        %v858 = vpop.f32.mrb[0].mxu0
        %859 = vmatprep.mubr.f32.mxu0 0.0
        %860 = vmatmul.mubr.f32.gmra.mrb[0].mxu0 %v674
        %v861 = vpop.f32.mrb[0].mxu0
        %v862 = vadd.f32 0.0, %v861
        %v863 = vpop.f32.mrb[0].mxu0
        %864 = vmatprep.mubr.f32.mxu0 0.0
        %865 = vmatmul.mubr.f32.gmra.mrb[0].mxu0 %v676
        %v866 = vpop.f32.mrb[0].mxu0
        %v867 = vadd.f32 0.0, %v866
        %v868 = vpop.f32.mrb[0].mxu0
        %869 = vmatprep.mubr.f32.mxu0 0.0
        %870 = vmatmul.mubr.f32.gmra.mrb[0].mxu0 %v678
        %v871 = vpop.f32.mrb[0].mxu0
        %v872 = vadd.f32 0.0, %v871
        %v873 = vpop.f32.mrb[0].mxu0
        %874 = vmatprep.mubr.f32.mxu0 0.0
        %875 = vmatmul.mubr.f32.gmra.mrb[0].mxu0 %v680
        %v876 = vpop.f32.mrb[0].mxu0
        %v877 = vadd.f32 0.0, %v876
        %v878 = vpop.f32.mrb[0].mxu0
        %879 = vmatprep.mubr.f32.mxu0 0.0
        %880 = vmatmul.mubr.f32.gmra.mrb[0].mxu0 %v682
        %v881 = vpop.f32.mrb[0].mxu0
        %v882 = vadd.f32 0.0, %v881
        %v883 = vpop.f32.mrb[0].mxu0
        %884 = vmatprep.mubr.f32.mxu0 0.0
        %885 = vmatmul.mubr.f32.gmra.mrb[0].mxu0 %v684
        %v886 = vpop.f32.mrb[0].mxu0
        %v887 = vadd.f32 0.0, %v886
        %v888 = vpop.f32.mrb[0].mxu0
        %889 = vmatprep.mubr.f32.mxu0 0.0
        %890 = vmatmul.mubr.f32.gmra.mrb[0].mxu0 %v686
        %v891 = vpop.f32.mrb[0].mxu0
        %v892 = vadd.f32 0.0, %v891
        %v893 = vpop.f32.mrb[0].mxu0
        %894 = vmatprep.mubr.f32.mxu0 0.0
        %895 = vmatmul.mubr.f32.gmra.mrb[0].mxu0 %v688
        %v896 = vpop.f32.mrb[0].mxu0
        %v897 = vadd.f32 0.0, %v896
        %v898 = vpop.f32.mrb[0].mxu0
        %899 = vmatprep.mubr.f32.mxu0 0.0
        %900 = vmatmul.mubr.f32.gmra.mrb[0].mxu0 %v690
        %v901 = vpop.f32.mrb[0].mxu0
        %v902 = vadd.f32 0.0, %v901
        %v903 = vpop.f32.mrb[0].mxu0
        %904 = vmatprep.mubr.f32.mxu0 0.0
        %905 = vmatmul.mubr.f32.gmra.mrb[0].mxu0 %v692
        %v906 = vpop.f32.mrb[0].mxu0
        %v907 = vadd.f32 0.0, %v906
        %v908 = vpop.f32.mrb[0].mxu0
        %909 = vmatprep.mubr.f32.mxu0 0.0
        %910 = vmatmul.mubr.f32.gmra.mrb[0].mxu0 %v694
        %v911 = vpop.f32.mrb[0].mxu0
        %v912 = vadd.f32 0.0, %v911
        %v913 = vpop.f32.mrb[0].mxu0
        %914 = vmatprep.mubr.f32.mxu0 0.0
        %915 = vmatmul.mubr.f32.gmra.mrb[0].mxu0 %v696
        %v916 = vpop.f32.mrb[0].mxu0
        %v917 = vadd.f32 0.0, %v916
        %v918 = vpop.f32.mrb[0].mxu0
        %919 = vmatprep.mubr.f32.mxu0 0.0
        %920 = vmatmul.mubr.f32.gmra.mrb[0].mxu0 %v698
        %v921 = vpop.f32.mrb[0].mxu0
        %v922 = vadd.f32 0.0, %v921
        %v923 = vpop.f32.mrb[0].mxu0
        %924 = vmatprep.mubr.f32.mxu0 0.0
        %925 = vmatmul.mubr.f32.gmra.mrb[0].mxu0 %v700
        %v926 = vpop.f32.mrb[0].mxu0
        %v927 = vadd.f32 0.0, %v926
        %v928 = vpop.f32.mrb[0].mxu0
        %929 = vdwg.mxu0
        %v930 = vsel %vm240, %v447, 0
        %v932 = vsel %vm240, %v448, 0
        %v934 = vsel %vm240, %v450, 0
        %v936 = vsel %vm240, %v451, 0
        %v938 = vsel %vm240, %v453, 0
        %v940 = vsel %vm240, %v454, 0
        %v942 = vsel %vm240, %v456, 0
        %v944 = vsel %vm240, %v457, 0
        %v946 = vsel %vm240, %v459, 0
        %v948 = vsel %vm240, %v460, 0
        %v950 = vsel %vm240, %v462, 0
        %v952 = vsel %vm240, %v463, 0
        %v954 = vsel %vm240, %v465, 0
        %v956 = vsel %vm240, %v466, 0
        %v958 = vsel %vm240, %v468, 0
        %v960 = vsel %vm240, %v469, 0
        %v962 = vsel %vm240, %v471, 0
        %v964 = vsel %vm240, %v472, 0
        %v966 = vsel %vm240, %v474, 0
        %v968 = vsel %vm240, %v475, 0
        %v970 = vsel %vm240, %v477, 0
        %v972 = vsel %vm240, %v478, 0
        %v974 = vsel %vm240, %v480, 0
        %v976 = vsel %vm240, %v481, 0
        %v978 = vsel %vm240, %v483, 0
        %v980 = vsel %vm240, %v484, 0
        %v982 = vsel %vm240, %v486, 0
        %v984 = vsel %vm240, %v487, 0
        %v986 = vsel %vm240, %v489, 0
        %v988 = vsel %vm240, %v490, 0
        %v990 = vsel %vm240, %v492, 0
        %v992 = vsel %vm240, %v493, 0
        %v994 = vsel %vm702, %v501, 0
        %996 = vmatprep.subr.mxu0 0.0
        %997 = vmatpush1.msra.mxu0 %v994
        %998 = vmatprep.subr.mxu0 0.0
        %999 = vmatpush1.msra.mxu0 0.0
        %1000 = vmatprep.subr.mxu0 0.0
        %1001 = vmatpush1.msra.mxu0 0.0
        %1002 = vmatprep.subr.mxu0 0.0
        %1003 = vmatpush1.msra.mxu0 0.0
        %1004 = vmatprep.subr.mxu0 0.0
        %1005 = vmatpush1.msra.mxu0 0.0
        %1006 = vmatprep.subr.mxu0 0.0
        %1007 = vmatpush1.msra.mxu0 0.0
        %1008 = vmatprep.subr.mxu0 0.0
        %1009 = vmatpush1.msra.mxu0 0.0
        %1010 = vmatprep.subr.mxu0 0.0
        %1011 = vmatpush1.msra.mxu0 0.0
        %1012 = vmatprep.subr.mxu0 0.0
        %1013 = vmatpush1.msra.mxu0 0.0
        %1014 = vmatprep.subr.mxu0 0.0
        %1015 = vmatpush1.msra.mxu0 0.0
        %1016 = vmatprep.subr.mxu0 0.0
        %1017 = vmatpush1.msra.mxu0 0.0
        %1018 = vmatprep.subr.mxu0 0.0
        %1019 = vmatpush1.msra.mxu0 0.0
        %1020 = vmatprep.subr.mxu0 0.0
        %1021 = vmatpush1.msra.mxu0 0.0
        %1022 = vmatprep.subr.mxu0 0.0
        %1023 = vmatpush1.msra.mxu0 0.0
        %1024 = vmatprep.subr.mxu0 0.0
        %1025 = vmatpush1.msra.mxu0 0.0
        %1026 = vmatprep.subr.mxu0 0.0
        %1027 = vmatpush1.msra.mxu0 0.0
        %1028 = vmatprep.subr.mxu0 0.0
        %1029 = vmatpush1.msra.mxu0 0.0
        %1030 = vmatprep.subr.mxu0 0.0
        %1031 = vmatpush1.msra.mxu0 0.0
        %1032 = vmatprep.subr.mxu0 0.0
        %1033 = vmatpush1.msra.mxu0 0.0
        %1034 = vmatprep.subr.mxu0 0.0
        %1035 = vmatpush1.msra.mxu0 0.0
        %1036 = vmatprep.subr.mxu0 0.0
        %1037 = vmatpush1.msra.mxu0 0.0
        %1038 = vmatprep.subr.mxu0 0.0
        %1039 = vmatpush1.msra.mxu0 0.0
        %1040 = vmatprep.subr.mxu0 0.0
        %1041 = vmatpush1.msra.mxu0 0.0
        %1042 = vmatprep.subr.mxu0 0.0
        %1043 = vmatpush1.msra.mxu0 0.0
        %1044 = vmatprep.subr.mxu0 0.0
        %1045 = vmatpush1.msra.mxu0 0.0
        %1046 = vmatprep.subr.mxu0 0.0
        %1047 = vmatpush1.msra.mxu0 0.0
        %1048 = vmatprep.subr.mxu0 0.0
        %1049 = vmatpush1.msra.mxu0 0.0
        %1050 = vmatprep.subr.mxu0 0.0
        %1051 = vmatpush1.msra.mxu0 0.0
        %1052 = vmatprep.subr.mxu0 0.0
        %1053 = vmatpush1.msra.mxu0 0.0
        %1054 = vmatprep.subr.mxu0 0.0
        %1055 = vmatpush1.msra.mxu0 0.0
        %1056 = vmatprep.subr.mxu0 0.0
        %1057 = vmatpush1.msra.mxu0 0.0
        %1058 = vmatprep.subr.mxu0 0.0
        %1059 = vmatpush1.msra.mxu0 0.0
        %1060 = vmatprep.mubr.f32.mxu0 0.0
        %1061 = vmatmul.mubr.f32.gmra.mrb[0].mxu0 %v930
        %v1062 = vpop.f32.mrb[0].mxu0
        %v1063 = vadd.f32 %v772, %v1062
        %v1064 = vpop.f32.mrb[0].mxu0
        %1065 = vmatprep.mubr.f32.mxu0 0.0
        %1066 = vmatmul.mubr.f32.gmra.mrb[0].mxu0 %v932
        %v1067 = vpop.f32.mrb[0].mxu0
        %v1068 = vadd.f32 %v777, %v1067
        %v1069 = vpop.f32.mrb[0].mxu0
        %1070 = vmatprep.mubr.f32.mxu0 0.0
        %1071 = vmatmul.mubr.f32.gmra.mrb[0].mxu0 %v934
        %v1072 = vpop.f32.mrb[0].mxu0
        %v1073 = vadd.f32 %v782, %v1072
        %v1074 = vpop.f32.mrb[0].mxu0
        %1075 = vmatprep.mubr.f32.mxu0 0.0
        %1076 = vmatmul.mubr.f32.gmra.mrb[0].mxu0 %v936
        %v1077 = vpop.f32.mrb[0].mxu0
        %v1078 = vadd.f32 %v787, %v1077
        %v1079 = vpop.f32.mrb[0].mxu0
        %1080 = vmatprep.mubr.f32.mxu0 0.0
        %1081 = vmatmul.mubr.f32.gmra.mrb[0].mxu0 %v938
        %v1082 = vpop.f32.mrb[0].mxu0
        %v1083 = vadd.f32 %v792, %v1082
        %v1084 = vpop.f32.mrb[0].mxu0
        %1085 = vmatprep.mubr.f32.mxu0 0.0
        %1086 = vmatmul.mubr.f32.gmra.mrb[0].mxu0 %v940
        %v1087 = vpop.f32.mrb[0].mxu0
        %v1088 = vadd.f32 %v797, %v1087
        %v1089 = vpop.f32.mrb[0].mxu0
        %1090 = vmatprep.mubr.f32.mxu0 0.0
        %1091 = vmatmul.mubr.f32.gmra.mrb[0].mxu0 %v942
        %v1092 = vpop.f32.mrb[0].mxu0
        %v1093 = vadd.f32 %v802, %v1092
        %v1094 = vpop.f32.mrb[0].mxu0
        %1095 = vmatprep.mubr.f32.mxu0 0.0
        %1096 = vmatmul.mubr.f32.gmra.mrb[0].mxu0 %v944
        %v1097 = vpop.f32.mrb[0].mxu0
        %v1098 = vadd.f32 %v807, %v1097
        %v1099 = vpop.f32.mrb[0].mxu0
        %1100 = vmatprep.mubr.f32.mxu0 0.0
        %1101 = vmatmul.mubr.f32.gmra.mrb[0].mxu0 %v946
        %v1102 = vpop.f32.mrb[0].mxu0
        %v1103 = vadd.f32 %v812, %v1102
        %v1104 = vpop.f32.mrb[0].mxu0
        %1105 = vmatprep.mubr.f32.mxu0 0.0
        %1106 = vmatmul.mubr.f32.gmra.mrb[0].mxu0 %v948
        %v1107 = vpop.f32.mrb[0].mxu0
        %v1108 = vadd.f32 %v817, %v1107
        %v1109 = vpop.f32.mrb[0].mxu0
        %1110 = vmatprep.mubr.f32.mxu0 0.0
        %1111 = vmatmul.mubr.f32.gmra.mrb[0].mxu0 %v950
        %v1112 = vpop.f32.mrb[0].mxu0
        %v1113 = vadd.f32 %v822, %v1112
        %v1114 = vpop.f32.mrb[0].mxu0
        %1115 = vmatprep.mubr.f32.mxu0 0.0
        %1116 = vmatmul.mubr.f32.gmra.mrb[0].mxu0 %v952
        %v1117 = vpop.f32.mrb[0].mxu0
        %v1118 = vadd.f32 %v827, %v1117
        %v1119 = vpop.f32.mrb[0].mxu0
        %1120 = vmatprep.mubr.f32.mxu0 0.0
        %1121 = vmatmul.mubr.f32.gmra.mrb[0].mxu0 %v954
        %v1122 = vpop.f32.mrb[0].mxu0
        %v1123 = vadd.f32 %v832, %v1122
        %v1124 = vpop.f32.mrb[0].mxu0
        %1125 = vmatprep.mubr.f32.mxu0 0.0
        %1126 = vmatmul.mubr.f32.gmra.mrb[0].mxu0 %v956
        %v1127 = vpop.f32.mrb[0].mxu0
        %v1128 = vadd.f32 %v837, %v1127
        %v1129 = vpop.f32.mrb[0].mxu0
        %1130 = vmatprep.mubr.f32.mxu0 0.0
        %1131 = vmatmul.mubr.f32.gmra.mrb[0].mxu0 %v958
        %v1132 = vpop.f32.mrb[0].mxu0
        %v1133 = vadd.f32 %v842, %v1132
        %v1134 = vpop.f32.mrb[0].mxu0
        %1135 = vmatprep.mubr.f32.mxu0 0.0
        %1136 = vmatmul.mubr.f32.gmra.mrb[0].mxu0 %v960
        %v1137 = vpop.f32.mrb[0].mxu0
        %v1138 = vadd.f32 %v847, %v1137
        %v1139 = vpop.f32.mrb[0].mxu0
        %1140 = vmatprep.mubr.f32.mxu0 0.0
        %1141 = vmatmul.mubr.f32.gmra.mrb[0].mxu0 %v962
        %v1142 = vpop.f32.mrb[0].mxu0
        %v1143 = vadd.f32 %v852, %v1142
        %v1144 = vpop.f32.mrb[0].mxu0
        %1145 = vmatprep.mubr.f32.mxu0 0.0
        %1146 = vmatmul.mubr.f32.gmra.mrb[0].mxu0 %v964
        %v1147 = vpop.f32.mrb[0].mxu0
        %v1148 = vadd.f32 %v857, %v1147
        %v1149 = vpop.f32.mrb[0].mxu0
        %1150 = vmatprep.mubr.f32.mxu0 0.0
        %1151 = vmatmul.mubr.f32.gmra.mrb[0].mxu0 %v966
        %v1152 = vpop.f32.mrb[0].mxu0
        %v1153 = vadd.f32 %v862, %v1152
        %v1154 = vpop.f32.mrb[0].mxu0
        %1155 = vmatprep.mubr.f32.mxu0 0.0
        %1156 = vmatmul.mubr.f32.gmra.mrb[0].mxu0 %v968
        %v1157 = vpop.f32.mrb[0].mxu0
        %v1158 = vadd.f32 %v867, %v1157
        %v1159 = vpop.f32.mrb[0].mxu0
        %1160 = vmatprep.mubr.f32.mxu0 0.0
        %1161 = vmatmul.mubr.f32.gmra.mrb[0].mxu0 %v970
        %v1162 = vpop.f32.mrb[0].mxu0
        %v1163 = vadd.f32 %v872, %v1162
        %v1164 = vpop.f32.mrb[0].mxu0
        %1165 = vmatprep.mubr.f32.mxu0 0.0
        %1166 = vmatmul.mubr.f32.gmra.mrb[0].mxu0 %v972
        %v1167 = vpop.f32.mrb[0].mxu0
        %v1168 = vadd.f32 %v877, %v1167
        %v1169 = vpop.f32.mrb[0].mxu0
        %1170 = vmatprep.mubr.f32.mxu0 0.0
        %1171 = vmatmul.mubr.f32.gmra.mrb[0].mxu0 %v974
        %v1172 = vpop.f32.mrb[0].mxu0
        %v1173 = vadd.f32 %v882, %v1172
        %v1174 = vpop.f32.mrb[0].mxu0
        %1175 = vmatprep.mubr.f32.mxu0 0.0
        %1176 = vmatmul.mubr.f32.gmra.mrb[0].mxu0 %v976
        %v1177 = vpop.f32.mrb[0].mxu0
        %v1178 = vadd.f32 %v887, %v1177
        %v1179 = vpop.f32.mrb[0].mxu0
        %1180 = vmatprep.mubr.f32.mxu0 0.0
        %1181 = vmatmul.mubr.f32.gmra.mrb[0].mxu0 %v978
        %v1182 = vpop.f32.mrb[0].mxu0
        %v1183 = vadd.f32 %v892, %v1182
        %v1184 = vpop.f32.mrb[0].mxu0
        %1185 = vmatprep.mubr.f32.mxu0 0.0
        %1186 = vmatmul.mubr.f32.gmra.mrb[0].mxu0 %v980
        %v1187 = vpop.f32.mrb[0].mxu0
        %v1188 = vadd.f32 %v897, %v1187
        %v1189 = vpop.f32.mrb[0].mxu0
        %1190 = vmatprep.mubr.f32.mxu0 0.0
        %1191 = vmatmul.mubr.f32.gmra.mrb[0].mxu0 %v982
        %v1192 = vpop.f32.mrb[0].mxu0
        %v1193 = vadd.f32 %v902, %v1192
        %v1194 = vpop.f32.mrb[0].mxu0
        %1195 = vmatprep.mubr.f32.mxu0 0.0
        %1196 = vmatmul.mubr.f32.gmra.mrb[0].mxu0 %v984
        %v1197 = vpop.f32.mrb[0].mxu0
        %v1198 = vadd.f32 %v907, %v1197
        %v1199 = vpop.f32.mrb[0].mxu0
        %1200 = vmatprep.mubr.f32.mxu0 0.0
        %1201 = vmatmul.mubr.f32.gmra.mrb[0].mxu0 %v986
        %v1202 = vpop.f32.mrb[0].mxu0
        %v1203 = vadd.f32 %v912, %v1202
        %v1204 = vpop.f32.mrb[0].mxu0
        %1205 = vmatprep.mubr.f32.mxu0 0.0
        %1206 = vmatmul.mubr.f32.gmra.mrb[0].mxu0 %v988
        %v1207 = vpop.f32.mrb[0].mxu0
        %v1208 = vadd.f32 %v917, %v1207
        %v1209 = vpop.f32.mrb[0].mxu0
        %1210 = vmatprep.mubr.f32.mxu0 0.0
        %1211 = vmatmul.mubr.f32.gmra.mrb[0].mxu0 %v990
        %v1212 = vpop.f32.mrb[0].mxu0
        %v1213 = vadd.f32 %v922, %v1212
        %v1214 = vpop.f32.mrb[0].mxu0
        %1215 = vmatprep.mubr.f32.mxu0 0.0
        %1216 = vmatmul.mubr.f32.gmra.mrb[0].mxu0 %v992
        %v1217 = vpop.f32.mrb[0].mxu0
        %v1218 = vadd.f32 %v927, %v1217
        %v1219 = vpop.f32.mrb[0].mxu0
        %1220 = vdwg.mxu0
        %vm1221 = vcmask 1045504
        %v1222 = vrot.slane %v447, 2
        %v1223 = vrot.slane %v448, 2
        %v1224 = vsel %vm1221, %v1222, %v1223
        %v1225 = vrot.slane %v449, 2
        %v1226 = vsel %vm1221, %v1223, %v1225
        %v1227 = vrot.slane %v450, 2
        %v1228 = vrot.slane %v451, 2
        %v1229 = vsel %vm1221, %v1227, %v1228
        %v1230 = vrot.slane %v452, 2
        %v1231 = vsel %vm1221, %v1228, %v1230
        %v1232 = vrot.slane %v453, 2
        %v1233 = vrot.slane %v454, 2
        %v1234 = vsel %vm1221, %v1232, %v1233
        %v1235 = vrot.slane %v455, 2
        %v1236 = vsel %vm1221, %v1233, %v1235
        %v1237 = vrot.slane %v456, 2
        %v1238 = vrot.slane %v457, 2
        %v1239 = vsel %vm1221, %v1237, %v1238
        %v1240 = vrot.slane %v458, 2
        %v1241 = vsel %vm1221, %v1238, %v1240
        %v1242 = vrot.slane %v459, 2
        %v1243 = vrot.slane %v460, 2
        %v1244 = vsel %vm1221, %v1242, %v1243
        %v1245 = vrot.slane %v461, 2
        %v1246 = vsel %vm1221, %v1243, %v1245
        %v1247 = vrot.slane %v462, 2
        %v1248 = vrot.slane %v463, 2
        %v1249 = vsel %vm1221, %v1247, %v1248
        %v1250 = vrot.slane %v464, 2
        %v1251 = vsel %vm1221, %v1248, %v1250
        %v1252 = vrot.slane %v465, 2
        %v1253 = vrot.slane %v466, 2
        %v1254 = vsel %vm1221, %v1252, %v1253
        %v1255 = vrot.slane %v467, 2
        %v1256 = vsel %vm1221, %v1253, %v1255
        %v1257 = vrot.slane %v468, 2
        %v1258 = vrot.slane %v469, 2
        %v1259 = vsel %vm1221, %v1257, %v1258
        %v1260 = vrot.slane %v470, 2
        %v1261 = vsel %vm1221, %v1258, %v1260
        %v1262 = vrot.slane %v471, 2
        %v1263 = vrot.slane %v472, 2
        %v1264 = vsel %vm1221, %v1262, %v1263
        %v1265 = vrot.slane %v473, 2
        %v1266 = vsel %vm1221, %v1263, %v1265
        %v1267 = vrot.slane %v474, 2
        %v1268 = vrot.slane %v475, 2
        %v1269 = vsel %vm1221, %v1267, %v1268
        %v1270 = vrot.slane %v476, 2
        %v1271 = vsel %vm1221, %v1268, %v1270
        %v1272 = vrot.slane %v477, 2
        %v1273 = vrot.slane %v478, 2
        %v1274 = vsel %vm1221, %v1272, %v1273
        %v1275 = vrot.slane %v479, 2
        %v1276 = vsel %vm1221, %v1273, %v1275
        %v1277 = vrot.slane %v480, 2
        %v1278 = vrot.slane %v481, 2
        %v1279 = vsel %vm1221, %v1277, %v1278
        %v1280 = vrot.slane %v482, 2
        %v1281 = vsel %vm1221, %v1278, %v1280
        %v1282 = vrot.slane %v483, 2
        %v1283 = vrot.slane %v484, 2
        %v1284 = vsel %vm1221, %v1282, %v1283
        %v1285 = vrot.slane %v485, 2
        %v1286 = vsel %vm1221, %v1283, %v1285
        %v1287 = vrot.slane %v486, 2
        %v1288 = vrot.slane %v487, 2
        %v1289 = vsel %vm1221, %v1287, %v1288
        %v1290 = vrot.slane %v488, 2
        %v1291 = vsel %vm1221, %v1288, %v1290
        %v1292 = vrot.slane %v489, 2
        %v1293 = vrot.slane %v490, 2
        %v1294 = vsel %vm1221, %v1292, %v1293
        %v1295 = vrot.slane %v491, 2
        %v1296 = vsel %vm1221, %v1293, %v1295
        %v1297 = vrot.slane %v492, 2
        %v1298 = vrot.slane %v493, 2
        %v1299 = vsel %vm1221, %v1297, %v1298
        %v1300 = vrot.slane %v494, 2
        %v1301 = vsel %vm1221, %v1298, %v1300
        %vm1303 = vcmask 1041408
        %v1304 = vrot.slane %v501, 6
        %v1305 = vrot.slane %v502, 6
        %v1306 = vsel %vm1303, %v1304, %v1305
        %v1307 = vsel %vm240, %v1224, 0
        %v1309 = vsel %vm240, %v1226, 0
        %v1311 = vsel %vm240, %v1229, 0
        %v1313 = vsel %vm240, %v1231, 0
        %v1315 = vsel %vm240, %v1234, 0
        %v1317 = vsel %vm240, %v1236, 0
        %v1319 = vsel %vm240, %v1239, 0
        %v1321 = vsel %vm240, %v1241, 0
        %v1323 = vsel %vm240, %v1244, 0
        %v1325 = vsel %vm240, %v1246, 0
        %v1327 = vsel %vm240, %v1249, 0
        %v1329 = vsel %vm240, %v1251, 0
        %v1331 = vsel %vm240, %v1254, 0
        %v1333 = vsel %vm240, %v1256, 0
        %v1335 = vsel %vm240, %v1259, 0
        %v1337 = vsel %vm240, %v1261, 0
        %v1339 = vsel %vm240, %v1264, 0
        %v1341 = vsel %vm240, %v1266, 0
        %v1343 = vsel %vm240, %v1269, 0
        %v1345 = vsel %vm240, %v1271, 0
        %v1347 = vsel %vm240, %v1274, 0
        %v1349 = vsel %vm240, %v1276, 0
        %v1351 = vsel %vm240, %v1279, 0
        %v1353 = vsel %vm240, %v1281, 0
        %v1355 = vsel %vm240, %v1284, 0
        %v1357 = vsel %vm240, %v1286, 0
        %v1359 = vsel %vm240, %v1289, 0
        %v1361 = vsel %vm240, %v1291, 0
        %v1363 = vsel %vm240, %v1294, 0
        %v1365 = vsel %vm240, %v1296, 0
        %v1367 = vsel %vm240, %v1299, 0
        %v1369 = vsel %vm240, %v1301, 0
        %v1371 = vsel %vm702, %v1306, 0
        %1373 = vmatprep.subr.mxu0 0.0
        %1374 = vmatpush1.msra.mxu0 %v1371
        %1375 = vmatprep.subr.mxu0 0.0
        %1376 = vmatpush1.msra.mxu0 0.0
        %1377 = vmatprep.subr.mxu0 0.0
        %1378 = vmatpush1.msra.mxu0 0.0
        %1379 = vmatprep.subr.mxu0 0.0
        %1380 = vmatpush1.msra.mxu0 0.0
        %1381 = vmatprep.subr.mxu0 0.0
        %1382 = vmatpush1.msra.mxu0 0.0
        %1383 = vmatprep.subr.mxu0 0.0
        %1384 = vmatpush1.msra.mxu0 0.0
        %1385 = vmatprep.subr.mxu0 0.0
        %1386 = vmatpush1.msra.mxu0 0.0
        %1387 = vmatprep.subr.mxu0 0.0
        %1388 = vmatpush1.msra.mxu0 0.0
        %1389 = vmatprep.subr.mxu0 0.0
        %1390 = vmatpush1.msra.mxu0 0.0
        %1391 = vmatprep.subr.mxu0 0.0
        %1392 = vmatpush1.msra.mxu0 0.0
        %1393 = vmatprep.subr.mxu0 0.0
        %1394 = vmatpush1.msra.mxu0 0.0
        %1395 = vmatprep.subr.mxu0 0.0
        %1396 = vmatpush1.msra.mxu0 0.0
        %1397 = vmatprep.subr.mxu0 0.0
        %1398 = vmatpush1.msra.mxu0 0.0
        %1399 = vmatprep.subr.mxu0 0.0
        %1400 = vmatpush1.msra.mxu0 0.0
        %1401 = vmatprep.subr.mxu0 0.0
        %1402 = vmatpush1.msra.mxu0 0.0
        %1403 = vmatprep.subr.mxu0 0.0
        %1404 = vmatpush1.msra.mxu0 0.0
        %1405 = vmatprep.subr.mxu0 0.0
        %1406 = vmatpush1.msra.mxu0 0.0
        %1407 = vmatprep.subr.mxu0 0.0
        %1408 = vmatpush1.msra.mxu0 0.0
        %1409 = vmatprep.subr.mxu0 0.0
        %1410 = vmatpush1.msra.mxu0 0.0
        %1411 = vmatprep.subr.mxu0 0.0
        %1412 = vmatpush1.msra.mxu0 0.0
        %1413 = vmatprep.subr.mxu0 0.0
        %1414 = vmatpush1.msra.mxu0 0.0
        %1415 = vmatprep.subr.mxu0 0.0
        %1416 = vmatpush1.msra.mxu0 0.0
        %1417 = vmatprep.subr.mxu0 0.0
        %1418 = vmatpush1.msra.mxu0 0.0
        %1419 = vmatprep.subr.mxu0 0.0
        %1420 = vmatpush1.msra.mxu0 0.0
        %1421 = vmatprep.subr.mxu0 0.0
        %1422 = vmatpush1.msra.mxu0 0.0
        %1423 = vmatprep.subr.mxu0 0.0
        %1424 = vmatpush1.msra.mxu0 0.0
        %1425 = vmatprep.subr.mxu0 0.0
        %1426 = vmatpush1.msra.mxu0 0.0
        %1427 = vmatprep.subr.mxu0 0.0
        %1428 = vmatpush1.msra.mxu0 0.0
        %1429 = vmatprep.subr.mxu0 0.0
        %1430 = vmatpush1.msra.mxu0 0.0
        %1431 = vmatprep.subr.mxu0 0.0
        %1432 = vmatpush1.msra.mxu0 0.0
        %1433 = vmatprep.subr.mxu0 0.0
        %1434 = vmatpush1.msra.mxu0 0.0
        %1435 = vmatprep.subr.mxu0 0.0
        %1436 = vmatpush1.msra.mxu0 0.0
        %1437 = vmatprep.mubr.f32.mxu0 0.0
        %1438 = vmatmul.mubr.f32.gmra.mrb[0].mxu0 %v1307
        %v1439 = vpop.f32.mrb[0].mxu0
        %v1440 = vadd.f32 0.0, %v1439
        %v1441 = vpop.f32.mrb[0].mxu0
        %1442 = vmatprep.mubr.f32.mxu0 0.0
        %1443 = vmatmul.mubr.f32.gmra.mrb[0].mxu0 %v1309
        %v1444 = vpop.f32.mrb[0].mxu0
        %v1445 = vadd.f32 0.0, %v1444
        %v1446 = vpop.f32.mrb[0].mxu0
        %1447 = vmatprep.mubr.f32.mxu0 0.0
        %1448 = vmatmul.mubr.f32.gmra.mrb[0].mxu0 %v1311
        %v1449 = vpop.f32.mrb[0].mxu0
        %v1450 = vadd.f32 0.0, %v1449
        %v1451 = vpop.f32.mrb[0].mxu0
        %1452 = vmatprep.mubr.f32.mxu0 0.0
        %1453 = vmatmul.mubr.f32.gmra.mrb[0].mxu0 %v1313
        %v1454 = vpop.f32.mrb[0].mxu0
        %v1455 = vadd.f32 0.0, %v1454
        %v1456 = vpop.f32.mrb[0].mxu0
        %1457 = vmatprep.mubr.f32.mxu0 0.0
        %1458 = vmatmul.mubr.f32.gmra.mrb[0].mxu0 %v1315
        %v1459 = vpop.f32.mrb[0].mxu0
        %v1460 = vadd.f32 0.0, %v1459
        %v1461 = vpop.f32.mrb[0].mxu0
        %1462 = vmatprep.mubr.f32.mxu0 0.0
        %1463 = vmatmul.mubr.f32.gmra.mrb[0].mxu0 %v1317
        %v1464 = vpop.f32.mrb[0].mxu0
        %v1465 = vadd.f32 0.0, %v1464
        %v1466 = vpop.f32.mrb[0].mxu0
        %1467 = vmatprep.mubr.f32.mxu0 0.0
        %1468 = vmatmul.mubr.f32.gmra.mrb[0].mxu0 %v1319
        %v1469 = vpop.f32.mrb[0].mxu0
        %v1470 = vadd.f32 0.0, %v1469
        %v1471 = vpop.f32.mrb[0].mxu0
        %1472 = vmatprep.mubr.f32.mxu0 0.0
        %1473 = vmatmul.mubr.f32.gmra.mrb[0].mxu0 %v1321
        %v1474 = vpop.f32.mrb[0].mxu0
        %v1475 = vadd.f32 0.0, %v1474
        %v1476 = vpop.f32.mrb[0].mxu0
        %1477 = vmatprep.mubr.f32.mxu0 0.0
        %1478 = vmatmul.mubr.f32.gmra.mrb[0].mxu0 %v1323
        %v1479 = vpop.f32.mrb[0].mxu0
        %v1480 = vadd.f32 0.0, %v1479
        %v1481 = vpop.f32.mrb[0].mxu0
        %1482 = vmatprep.mubr.f32.mxu0 0.0
        %1483 = vmatmul.mubr.f32.gmra.mrb[0].mxu0 %v1325
        %v1484 = vpop.f32.mrb[0].mxu0
        %v1485 = vadd.f32 0.0, %v1484
        %v1486 = vpop.f32.mrb[0].mxu0
        %1487 = vmatprep.mubr.f32.mxu0 0.0
        %1488 = vmatmul.mubr.f32.gmra.mrb[0].mxu0 %v1327
        %v1489 = vpop.f32.mrb[0].mxu0
        %v1490 = vadd.f32 0.0, %v1489
        %v1491 = vpop.f32.mrb[0].mxu0
        %1492 = vmatprep.mubr.f32.mxu0 0.0
        %1493 = vmatmul.mubr.f32.gmra.mrb[0].mxu0 %v1329
        %v1494 = vpop.f32.mrb[0].mxu0
        %v1495 = vadd.f32 0.0, %v1494
        %v1496 = vpop.f32.mrb[0].mxu0
        %1497 = vmatprep.mubr.f32.mxu0 0.0
        %1498 = vmatmul.mubr.f32.gmra.mrb[0].mxu0 %v1331
        %v1499 = vpop.f32.mrb[0].mxu0
        %v1500 = vadd.f32 0.0, %v1499
        %v1501 = vpop.f32.mrb[0].mxu0
        %1502 = vmatprep.mubr.f32.mxu0 0.0
        %1503 = vmatmul.mubr.f32.gmra.mrb[0].mxu0 %v1333
        %v1504 = vpop.f32.mrb[0].mxu0
        %v1505 = vadd.f32 0.0, %v1504
        %v1506 = vpop.f32.mrb[0].mxu0
        %1507 = vmatprep.mubr.f32.mxu0 0.0
        %1508 = vmatmul.mubr.f32.gmra.mrb[0].mxu0 %v1335
        %v1509 = vpop.f32.mrb[0].mxu0
        %v1510 = vadd.f32 0.0, %v1509
        %v1511 = vpop.f32.mrb[0].mxu0
        %1512 = vmatprep.mubr.f32.mxu0 0.0
        %1513 = vmatmul.mubr.f32.gmra.mrb[0].mxu0 %v1337
        %v1514 = vpop.f32.mrb[0].mxu0
        %v1515 = vadd.f32 0.0, %v1514
        %v1516 = vpop.f32.mrb[0].mxu0
        %1517 = vmatprep.mubr.f32.mxu0 0.0
        %1518 = vmatmul.mubr.f32.gmra.mrb[0].mxu0 %v1339
        %v1519 = vpop.f32.mrb[0].mxu0
        %v1520 = vadd.f32 0.0, %v1519
        %v1521 = vpop.f32.mrb[0].mxu0
        %1522 = vmatprep.mubr.f32.mxu0 0.0
        %1523 = vmatmul.mubr.f32.gmra.mrb[0].mxu0 %v1341
        %v1524 = vpop.f32.mrb[0].mxu0
        %v1525 = vadd.f32 0.0, %v1524
        %v1526 = vpop.f32.mrb[0].mxu0
        %1527 = vmatprep.mubr.f32.mxu0 0.0
        %1528 = vmatmul.mubr.f32.gmra.mrb[0].mxu0 %v1343
        %v1529 = vpop.f32.mrb[0].mxu0
        %v1530 = vadd.f32 0.0, %v1529
        %v1531 = vpop.f32.mrb[0].mxu0
        %1532 = vmatprep.mubr.f32.mxu0 0.0
        %1533 = vmatmul.mubr.f32.gmra.mrb[0].mxu0 %v1345
        %v1534 = vpop.f32.mrb[0].mxu0
        %v1535 = vadd.f32 0.0, %v1534
        %v1536 = vpop.f32.mrb[0].mxu0
        %1537 = vmatprep.mubr.f32.mxu0 0.0
        %1538 = vmatmul.mubr.f32.gmra.mrb[0].mxu0 %v1347
        %v1539 = vpop.f32.mrb[0].mxu0
        %v1540 = vadd.f32 0.0, %v1539
        %v1541 = vpop.f32.mrb[0].mxu0
        %1542 = vmatprep.mubr.f32.mxu0 0.0
        %1543 = vmatmul.mubr.f32.gmra.mrb[0].mxu0 %v1349
        %v1544 = vpop.f32.mrb[0].mxu0
        %v1545 = vadd.f32 0.0, %v1544
        %v1546 = vpop.f32.mrb[0].mxu0
        %1547 = vmatprep.mubr.f32.mxu0 0.0
        %1548 = vmatmul.mubr.f32.gmra.mrb[0].mxu0 %v1351
        %v1549 = vpop.f32.mrb[0].mxu0
        %v1550 = vadd.f32 0.0, %v1549
        %v1551 = vpop.f32.mrb[0].mxu0
        %1552 = vmatprep.mubr.f32.mxu0 0.0
        %1553 = vmatmul.mubr.f32.gmra.mrb[0].mxu0 %v1353
        %v1554 = vpop.f32.mrb[0].mxu0
        %v1555 = vadd.f32 0.0, %v1554
        %v1556 = vpop.f32.mrb[0].mxu0
        %1557 = vmatprep.mubr.f32.mxu0 0.0
        %1558 = vmatmul.mubr.f32.gmra.mrb[0].mxu0 %v1355
        %v1559 = vpop.f32.mrb[0].mxu0
        %v1560 = vadd.f32 0.0, %v1559
        %v1561 = vpop.f32.mrb[0].mxu0
        %1562 = vmatprep.mubr.f32.mxu0 0.0
        %1563 = vmatmul.mubr.f32.gmra.mrb[0].mxu0 %v1357
        %v1564 = vpop.f32.mrb[0].mxu0
        %v1565 = vadd.f32 0.0, %v1564
        %v1566 = vpop.f32.mrb[0].mxu0
        %1567 = vmatprep.mubr.f32.mxu0 0.0
        %1568 = vmatmul.mubr.f32.gmra.mrb[0].mxu0 %v1359
        %v1569 = vpop.f32.mrb[0].mxu0
        %v1570 = vadd.f32 0.0, %v1569
        %v1571 = vpop.f32.mrb[0].mxu0
        %1572 = vmatprep.mubr.f32.mxu0 0.0
        %1573 = vmatmul.mubr.f32.gmra.mrb[0].mxu0 %v1361
        %v1574 = vpop.f32.mrb[0].mxu0
        %v1575 = vadd.f32 0.0, %v1574
        %v1576 = vpop.f32.mrb[0].mxu0
        %1577 = vmatprep.mubr.f32.mxu0 0.0
        %1578 = vmatmul.mubr.f32.gmra.mrb[0].mxu0 %v1363
        %v1579 = vpop.f32.mrb[0].mxu0
        %v1580 = vadd.f32 0.0, %v1579
        %v1581 = vpop.f32.mrb[0].mxu0
        %1582 = vmatprep.mubr.f32.mxu0 0.0
        %1583 = vmatmul.mubr.f32.gmra.mrb[0].mxu0 %v1365
        %v1584 = vpop.f32.mrb[0].mxu0
        %v1585 = vadd.f32 0.0, %v1584
        %v1586 = vpop.f32.mrb[0].mxu0
        %1587 = vmatprep.mubr.f32.mxu0 0.0
        %1588 = vmatmul.mubr.f32.gmra.mrb[0].mxu0 %v1367
        %v1589 = vpop.f32.mrb[0].mxu0
        %v1590 = vadd.f32 0.0, %v1589
        %v1591 = vpop.f32.mrb[0].mxu0
        %1592 = vmatprep.mubr.f32.mxu0 0.0
        %1593 = vmatmul.mubr.f32.gmra.mrb[0].mxu0 %v1369
        %v1594 = vpop.f32.mrb[0].mxu0
        %v1595 = vadd.f32 0.0, %v1594
        %v1596 = vpop.f32.mrb[0].mxu0
        %1597 = vdwg.mxu0
        %v1598 = vadd.f32 %v1063, %v1440
        %v1599 = vadd.f32 %v1068, %v1445
        %v1600 = vadd.f32 %v1073, %v1450
        %v1601 = vadd.f32 %v1078, %v1455
        %v1602 = vadd.f32 %v1083, %v1460
        %v1603 = vadd.f32 %v1088, %v1465
        %v1604 = vadd.f32 %v1093, %v1470
        %v1605 = vadd.f32 %v1098, %v1475
        %v1606 = vadd.f32 %v1103, %v1480
        %v1607 = vadd.f32 %v1108, %v1485
        %v1608 = vadd.f32 %v1113, %v1490
        %v1609 = vadd.f32 %v1118, %v1495
        %v1610 = vadd.f32 %v1123, %v1500
        %v1611 = vadd.f32 %v1128, %v1505
        %v1612 = vadd.f32 %v1133, %v1510
        %v1613 = vadd.f32 %v1138, %v1515
        %v1614 = vadd.f32 %v1143, %v1520
        %v1615 = vadd.f32 %v1148, %v1525
        %v1616 = vadd.f32 %v1153, %v1530
        %v1617 = vadd.f32 %v1158, %v1535
        %v1618 = vadd.f32 %v1163, %v1540
        %v1619 = vadd.f32 %v1168, %v1545
        %v1620 = vadd.f32 %v1173, %v1550
        %v1621 = vadd.f32 %v1178, %v1555
        %v1622 = vadd.f32 %v1183, %v1560
        %v1623 = vadd.f32 %v1188, %v1565
        %v1624 = vadd.f32 %v1193, %v1570
        %v1625 = vadd.f32 %v1198, %v1575
        %v1626 = vadd.f32 %v1203, %v1580
        %v1627 = vadd.f32 %v1208, %v1585
        %v1628 = vadd.f32 %v1213, %v1590
        %v1629 = vadd.f32 %v1218, %v1595
        %v1631 = vsel %vm240, %v495, 0
        %v1634 = vsel %vm240, %v496, 0
        %v1637 = vsel %vm702, %v503, 0
        %1639 = vmatprep.subr.mxu0 0.0
        %1640 = vmatpush1.msra.mxu0 %v1637
        %1641 = vmatprep.subr.mxu0 0.0
        %1642 = vmatpush1.msra.mxu0 0.0
        %1643 = vmatprep.subr.mxu0 0.0
        %1644 = vmatpush1.msra.mxu0 0.0
        %1645 = vmatprep.subr.mxu0 0.0
        %1646 = vmatpush1.msra.mxu0 0.0
        %1647 = vmatprep.subr.mxu0 0.0
        %1648 = vmatpush1.msra.mxu0 0.0
        %1649 = vmatprep.subr.mxu0 0.0
        %1650 = vmatpush1.msra.mxu0 0.0
        %1651 = vmatprep.subr.mxu0 0.0
        %1652 = vmatpush1.msra.mxu0 0.0
        %1653 = vmatprep.subr.mxu0 0.0
        %1654 = vmatpush1.msra.mxu0 0.0
        %1655 = vmatprep.subr.mxu0 0.0
        %1656 = vmatpush1.msra.mxu0 0.0
        %1657 = vmatprep.subr.mxu0 0.0
        %1658 = vmatpush1.msra.mxu0 0.0
        %1659 = vmatprep.subr.mxu0 0.0
        %1660 = vmatpush1.msra.mxu0 0.0
        %1661 = vmatprep.subr.mxu0 0.0
        %1662 = vmatpush1.msra.mxu0 0.0
        %1663 = vmatprep.subr.mxu0 0.0
        %1664 = vmatpush1.msra.mxu0 0.0
        %1665 = vmatprep.subr.mxu0 0.0
        %1666 = vmatpush1.msra.mxu0 0.0
        %1667 = vmatprep.subr.mxu0 0.0
        %1668 = vmatpush1.msra.mxu0 0.0
        %1669 = vmatprep.subr.mxu0 0.0
        %1670 = vmatpush1.msra.mxu0 0.0
        %1671 = vmatprep.subr.mxu0 0.0
        %1672 = vmatpush1.msra.mxu0 0.0
        %1673 = vmatprep.subr.mxu0 0.0
        %1674 = vmatpush1.msra.mxu0 0.0
        %1675 = vmatprep.subr.mxu0 0.0
        %1676 = vmatpush1.msra.mxu0 0.0
        %1677 = vmatprep.subr.mxu0 0.0
        %1678 = vmatpush1.msra.mxu0 0.0
        %1679 = vmatprep.subr.mxu0 0.0
        %1680 = vmatpush1.msra.mxu0 0.0
        %1681 = vmatprep.subr.mxu0 0.0
        %1682 = vmatpush1.msra.mxu0 0.0
        %1683 = vmatprep.subr.mxu0 0.0
        %1684 = vmatpush1.msra.mxu0 0.0
        %1685 = vmatprep.subr.mxu0 0.0
        %1686 = vmatpush1.msra.mxu0 0.0
        %1687 = vmatprep.subr.mxu0 0.0
        %1688 = vmatpush1.msra.mxu0 0.0
        %1689 = vmatprep.subr.mxu0 0.0
        %1690 = vmatpush1.msra.mxu0 0.0
        %1691 = vmatprep.subr.mxu0 0.0
        %1692 = vmatpush1.msra.mxu0 0.0
        %1693 = vmatprep.subr.mxu0 0.0
        %1694 = vmatpush1.msra.mxu0 0.0
        %1695 = vmatprep.subr.mxu0 0.0
        %1696 = vmatpush1.msra.mxu0 0.0
        %1697 = vmatprep.subr.mxu0 0.0
        %1698 = vmatpush1.msra.mxu0 0.0
        %1699 = vmatprep.subr.mxu0 0.0
        %1700 = vmatpush1.msra.mxu0 0.0
        %1701 = vmatprep.subr.mxu0 0.0
        %1702 = vmatpush1.msra.mxu0 0.0
        %1703 = vmatprep.mubr.f32.mxu0 0.0
        %1704 = vmatmul.mubr.f32.gmra.mrb[0].mxu0 %v934
        %v1705 = vpop.f32.mrb[0].mxu0
        %v1706 = vadd.f32 0.0, %v1705
        %v1707 = vpop.f32.mrb[0].mxu0
        %1708 = vmatprep.mubr.f32.mxu0 0.0
        %1709 = vmatmul.mubr.f32.gmra.mrb[0].mxu0 %v936
        %v1710 = vpop.f32.mrb[0].mxu0
        %v1711 = vadd.f32 0.0, %v1710
        %v1712 = vpop.f32.mrb[0].mxu0
        %1713 = vmatprep.mubr.f32.mxu0 0.0
        %1714 = vmatmul.mubr.f32.gmra.mrb[0].mxu0 %v938
        %v1715 = vpop.f32.mrb[0].mxu0
        %v1716 = vadd.f32 0.0, %v1715
        %v1717 = vpop.f32.mrb[0].mxu0
        %1718 = vmatprep.mubr.f32.mxu0 0.0
        %1719 = vmatmul.mubr.f32.gmra.mrb[0].mxu0 %v940
        %v1720 = vpop.f32.mrb[0].mxu0
        %v1721 = vadd.f32 0.0, %v1720
        %v1722 = vpop.f32.mrb[0].mxu0
        %1723 = vmatprep.mubr.f32.mxu0 0.0
        %1724 = vmatmul.mubr.f32.gmra.mrb[0].mxu0 %v942
        %v1725 = vpop.f32.mrb[0].mxu0
        %v1726 = vadd.f32 0.0, %v1725
        %v1727 = vpop.f32.mrb[0].mxu0
        %1728 = vmatprep.mubr.f32.mxu0 0.0
        %1729 = vmatmul.mubr.f32.gmra.mrb[0].mxu0 %v944
        %v1730 = vpop.f32.mrb[0].mxu0
        %v1731 = vadd.f32 0.0, %v1730
        %v1732 = vpop.f32.mrb[0].mxu0
        %1733 = vmatprep.mubr.f32.mxu0 0.0
        %1734 = vmatmul.mubr.f32.gmra.mrb[0].mxu0 %v946
        %v1735 = vpop.f32.mrb[0].mxu0
        %v1736 = vadd.f32 0.0, %v1735
        %v1737 = vpop.f32.mrb[0].mxu0
        %1738 = vmatprep.mubr.f32.mxu0 0.0
        %1739 = vmatmul.mubr.f32.gmra.mrb[0].mxu0 %v948
        %v1740 = vpop.f32.mrb[0].mxu0
        %v1741 = vadd.f32 0.0, %v1740
        %v1742 = vpop.f32.mrb[0].mxu0
        %1743 = vmatprep.mubr.f32.mxu0 0.0
        %1744 = vmatmul.mubr.f32.gmra.mrb[0].mxu0 %v950
        %v1745 = vpop.f32.mrb[0].mxu0
        %v1746 = vadd.f32 0.0, %v1745
        %v1747 = vpop.f32.mrb[0].mxu0
        %1748 = vmatprep.mubr.f32.mxu0 0.0
        %1749 = vmatmul.mubr.f32.gmra.mrb[0].mxu0 %v952
        %v1750 = vpop.f32.mrb[0].mxu0
        %v1751 = vadd.f32 0.0, %v1750
        %v1752 = vpop.f32.mrb[0].mxu0
        %1753 = vmatprep.mubr.f32.mxu0 0.0
        %1754 = vmatmul.mubr.f32.gmra.mrb[0].mxu0 %v954
        %v1755 = vpop.f32.mrb[0].mxu0
        %v1756 = vadd.f32 0.0, %v1755
        %v1757 = vpop.f32.mrb[0].mxu0
        %1758 = vmatprep.mubr.f32.mxu0 0.0
        %1759 = vmatmul.mubr.f32.gmra.mrb[0].mxu0 %v956
        %v1760 = vpop.f32.mrb[0].mxu0
        %v1761 = vadd.f32 0.0, %v1760
        %v1762 = vpop.f32.mrb[0].mxu0
        %1763 = vmatprep.mubr.f32.mxu0 0.0
        %1764 = vmatmul.mubr.f32.gmra.mrb[0].mxu0 %v958
        %v1765 = vpop.f32.mrb[0].mxu0
        %v1766 = vadd.f32 0.0, %v1765
        %v1767 = vpop.f32.mrb[0].mxu0
        %1768 = vmatprep.mubr.f32.mxu0 0.0
        %1769 = vmatmul.mubr.f32.gmra.mrb[0].mxu0 %v960
        %v1770 = vpop.f32.mrb[0].mxu0
        %v1771 = vadd.f32 0.0, %v1770
        %v1772 = vpop.f32.mrb[0].mxu0
        %1773 = vmatprep.mubr.f32.mxu0 0.0
        %1774 = vmatmul.mubr.f32.gmra.mrb[0].mxu0 %v962
        %v1775 = vpop.f32.mrb[0].mxu0
        %v1776 = vadd.f32 0.0, %v1775
        %v1777 = vpop.f32.mrb[0].mxu0
        %1778 = vmatprep.mubr.f32.mxu0 0.0
        %1779 = vmatmul.mubr.f32.gmra.mrb[0].mxu0 %v964
        %v1780 = vpop.f32.mrb[0].mxu0
        %v1781 = vadd.f32 0.0, %v1780
        %v1782 = vpop.f32.mrb[0].mxu0
        %1783 = vmatprep.mubr.f32.mxu0 0.0
        %1784 = vmatmul.mubr.f32.gmra.mrb[0].mxu0 %v966
        %v1785 = vpop.f32.mrb[0].mxu0
        %v1786 = vadd.f32 0.0, %v1785
        %v1787 = vpop.f32.mrb[0].mxu0
        %1788 = vmatprep.mubr.f32.mxu0 0.0
        %1789 = vmatmul.mubr.f32.gmra.mrb[0].mxu0 %v968
        %v1790 = vpop.f32.mrb[0].mxu0
        %v1791 = vadd.f32 0.0, %v1790
        %v1792 = vpop.f32.mrb[0].mxu0
        %1793 = vmatprep.mubr.f32.mxu0 0.0
        %1794 = vmatmul.mubr.f32.gmra.mrb[0].mxu0 %v970
        %v1795 = vpop.f32.mrb[0].mxu0
        %v1796 = vadd.f32 0.0, %v1795
        %v1797 = vpop.f32.mrb[0].mxu0
        %1798 = vmatprep.mubr.f32.mxu0 0.0
        %1799 = vmatmul.mubr.f32.gmra.mrb[0].mxu0 %v972
        %v1800 = vpop.f32.mrb[0].mxu0
        %v1801 = vadd.f32 0.0, %v1800
        %v1802 = vpop.f32.mrb[0].mxu0
        %1803 = vmatprep.mubr.f32.mxu0 0.0
        %1804 = vmatmul.mubr.f32.gmra.mrb[0].mxu0 %v974
        %v1805 = vpop.f32.mrb[0].mxu0
        %v1806 = vadd.f32 0.0, %v1805
        %v1807 = vpop.f32.mrb[0].mxu0
        %1808 = vmatprep.mubr.f32.mxu0 0.0
        %1809 = vmatmul.mubr.f32.gmra.mrb[0].mxu0 %v976
        %v1810 = vpop.f32.mrb[0].mxu0
        %v1811 = vadd.f32 0.0, %v1810
        %v1812 = vpop.f32.mrb[0].mxu0
        %1813 = vmatprep.mubr.f32.mxu0 0.0
        %1814 = vmatmul.mubr.f32.gmra.mrb[0].mxu0 %v978
        %v1815 = vpop.f32.mrb[0].mxu0
        %v1816 = vadd.f32 0.0, %v1815
        %v1817 = vpop.f32.mrb[0].mxu0
        %1818 = vmatprep.mubr.f32.mxu0 0.0
        %1819 = vmatmul.mubr.f32.gmra.mrb[0].mxu0 %v980
        %v1820 = vpop.f32.mrb[0].mxu0
        %v1821 = vadd.f32 0.0, %v1820
        %v1822 = vpop.f32.mrb[0].mxu0
        %1823 = vmatprep.mubr.f32.mxu0 0.0
        %1824 = vmatmul.mubr.f32.gmra.mrb[0].mxu0 %v982
        %v1825 = vpop.f32.mrb[0].mxu0
        %v1826 = vadd.f32 0.0, %v1825
        %v1827 = vpop.f32.mrb[0].mxu0
        %1828 = vmatprep.mubr.f32.mxu0 0.0
        %1829 = vmatmul.mubr.f32.gmra.mrb[0].mxu0 %v984
        %v1830 = vpop.f32.mrb[0].mxu0
        %v1831 = vadd.f32 0.0, %v1830
        %v1832 = vpop.f32.mrb[0].mxu0
        %1833 = vmatprep.mubr.f32.mxu0 0.0
        %1834 = vmatmul.mubr.f32.gmra.mrb[0].mxu0 %v986
        %v1835 = vpop.f32.mrb[0].mxu0
        %v1836 = vadd.f32 0.0, %v1835
        %v1837 = vpop.f32.mrb[0].mxu0
        %1838 = vmatprep.mubr.f32.mxu0 0.0
        %1839 = vmatmul.mubr.f32.gmra.mrb[0].mxu0 %v988
        %v1840 = vpop.f32.mrb[0].mxu0
        %v1841 = vadd.f32 0.0, %v1840
        %v1842 = vpop.f32.mrb[0].mxu0
        %1843 = vmatprep.mubr.f32.mxu0 0.0
        %1844 = vmatmul.mubr.f32.gmra.mrb[0].mxu0 %v990
        %v1845 = vpop.f32.mrb[0].mxu0
        %v1846 = vadd.f32 0.0, %v1845
        %v1847 = vpop.f32.mrb[0].mxu0
        %1848 = vmatprep.mubr.f32.mxu0 0.0
        %1849 = vmatmul.mubr.f32.gmra.mrb[0].mxu0 %v992
        %v1850 = vpop.f32.mrb[0].mxu0
        %v1851 = vadd.f32 0.0, %v1850
        %v1852 = vpop.f32.mrb[0].mxu0
        %1853 = vmatprep.mubr.f32.mxu0 0.0
        %1854 = vmatmul.mubr.f32.gmra.mrb[0].mxu0 %v1631
        %v1855 = vpop.f32.mrb[0].mxu0
        %v1856 = vadd.f32 0.0, %v1855
        %v1857 = vpop.f32.mrb[0].mxu0
        %1858 = vmatprep.mubr.f32.mxu0 0.0
        %1859 = vmatmul.mubr.f32.gmra.mrb[0].mxu0 %v1634
        %v1860 = vpop.f32.mrb[0].mxu0
        %v1861 = vadd.f32 0.0, %v1860
        %v1862 = vpop.f32.mrb[0].mxu0
        %1863 = vdwg.mxu0
        %v1864 = vadd.f32 %v1598, %v1706
        %v1865 = vadd.f32 %v1599, %v1711
        %v1866 = vadd.f32 %v1600, %v1716
        %v1867 = vadd.f32 %v1601, %v1721
        %v1868 = vadd.f32 %v1602, %v1726
        %v1869 = vadd.f32 %v1603, %v1731
        %v1870 = vadd.f32 %v1604, %v1736
        %v1871 = vadd.f32 %v1605, %v1741
        %v1872 = vadd.f32 %v1606, %v1746
        %v1873 = vadd.f32 %v1607, %v1751
        %v1874 = vadd.f32 %v1608, %v1756
        %v1875 = vadd.f32 %v1609, %v1761
        %v1876 = vadd.f32 %v1610, %v1766
        %v1877 = vadd.f32 %v1611, %v1771
        %v1878 = vadd.f32 %v1612, %v1776
        %v1879 = vadd.f32 %v1613, %v1781
        %v1880 = vadd.f32 %v1614, %v1786
        %v1881 = vadd.f32 %v1615, %v1791
        %v1882 = vadd.f32 %v1616, %v1796
        %v1883 = vadd.f32 %v1617, %v1801
        %v1884 = vadd.f32 %v1618, %v1806
        %v1885 = vadd.f32 %v1619, %v1811
        %v1886 = vadd.f32 %v1620, %v1816
        %v1887 = vadd.f32 %v1621, %v1821
        %v1888 = vadd.f32 %v1622, %v1826
        %v1889 = vadd.f32 %v1623, %v1831
        %v1890 = vadd.f32 %v1624, %v1836
        %v1891 = vadd.f32 %v1625, %v1841
        %v1892 = vadd.f32 %v1626, %v1846
        %v1893 = vadd.f32 %v1627, %v1851
        %v1894 = vadd.f32 %v1628, %v1856
        %v1895 = vadd.f32 %v1629, %v1861
        %v1897 = vrot.slane %v495, 1
        %v1898 = vrot.slane %v496, 1
        %v1899 = vsel %vm555, %v1897, %v1898
        %v1900 = vrot.slane %v497, 1
        %v1901 = vsel %vm555, %v1898, %v1900
        %v1902 = vrot.slane %v503, 3
        %v1903 = vsel %vm240, %v1899, 0
        %v1905 = vsel %vm240, %v1901, 0
        %v1907 = vsel %vm702, %v1902, 0
        %1909 = vmatprep.subr.mxu0 0.0
        %1910 = vmatpush1.msra.mxu0 %v1907
        %1911 = vmatprep.subr.mxu0 0.0
        %1912 = vmatpush1.msra.mxu0 0.0
        %1913 = vmatprep.subr.mxu0 0.0
        %1914 = vmatpush1.msra.mxu0 0.0
        %1915 = vmatprep.subr.mxu0 0.0
        %1916 = vmatpush1.msra.mxu0 0.0
        %1917 = vmatprep.subr.mxu0 0.0
        %1918 = vmatpush1.msra.mxu0 0.0
        %1919 = vmatprep.subr.mxu0 0.0
        %1920 = vmatpush1.msra.mxu0 0.0
        %1921 = vmatprep.subr.mxu0 0.0
        %1922 = vmatpush1.msra.mxu0 0.0
        %1923 = vmatprep.subr.mxu0 0.0
        %1924 = vmatpush1.msra.mxu0 0.0
        %1925 = vmatprep.subr.mxu0 0.0
        %1926 = vmatpush1.msra.mxu0 0.0
        %1927 = vmatprep.subr.mxu0 0.0
        %1928 = vmatpush1.msra.mxu0 0.0
        %1929 = vmatprep.subr.mxu0 0.0
        %1930 = vmatpush1.msra.mxu0 0.0
        %1931 = vmatprep.subr.mxu0 0.0
        %1932 = vmatpush1.msra.mxu0 0.0
        %1933 = vmatprep.subr.mxu0 0.0
        %1934 = vmatpush1.msra.mxu0 0.0
        %1935 = vmatprep.subr.mxu0 0.0
        %1936 = vmatpush1.msra.mxu0 0.0
        %1937 = vmatprep.subr.mxu0 0.0
        %1938 = vmatpush1.msra.mxu0 0.0
        %1939 = vmatprep.subr.mxu0 0.0
        %1940 = vmatpush1.msra.mxu0 0.0
        %1941 = vmatprep.subr.mxu0 0.0
        %1942 = vmatpush1.msra.mxu0 0.0
        %1943 = vmatprep.subr.mxu0 0.0
        %1944 = vmatpush1.msra.mxu0 0.0
        %1945 = vmatprep.subr.mxu0 0.0
        %1946 = vmatpush1.msra.mxu0 0.0
        %1947 = vmatprep.subr.mxu0 0.0
        %1948 = vmatpush1.msra.mxu0 0.0
        %1949 = vmatprep.subr.mxu0 0.0
        %1950 = vmatpush1.msra.mxu0 0.0
        %1951 = vmatprep.subr.mxu0 0.0
        %1952 = vmatpush1.msra.mxu0 0.0
        %1953 = vmatprep.subr.mxu0 0.0
        %1954 = vmatpush1.msra.mxu0 0.0
        %1955 = vmatprep.subr.mxu0 0.0
        %1956 = vmatpush1.msra.mxu0 0.0
        %1957 = vmatprep.subr.mxu0 0.0
        %1958 = vmatpush1.msra.mxu0 0.0
        %1959 = vmatprep.subr.mxu0 0.0
        %1960 = vmatpush1.msra.mxu0 0.0
        %1961 = vmatprep.subr.mxu0 0.0
        %1962 = vmatpush1.msra.mxu0 0.0
        %1963 = vmatprep.subr.mxu0 0.0
        %1964 = vmatpush1.msra.mxu0 0.0
        %1965 = vmatprep.subr.mxu0 0.0
        %1966 = vmatpush1.msra.mxu0 0.0
        %1967 = vmatprep.subr.mxu0 0.0
        %1968 = vmatpush1.msra.mxu0 0.0
        %1969 = vmatprep.subr.mxu0 0.0
        %1970 = vmatpush1.msra.mxu0 0.0
        %1971 = vmatprep.subr.mxu0 0.0
        %1972 = vmatpush1.msra.mxu0 0.0
        %1973 = vmatprep.mubr.f32.mxu0 0.0
        %1974 = vmatmul.mubr.f32.gmra.mrb[0].mxu0 %v642
        %v1975 = vpop.f32.mrb[0].mxu0
        %v1976 = vadd.f32 0.0, %v1975
        %v1977 = vpop.f32.mrb[0].mxu0
        %1978 = vmatprep.mubr.f32.mxu0 0.0
        %1979 = vmatmul.mubr.f32.gmra.mrb[0].mxu0 %v644
        %v1980 = vpop.f32.mrb[0].mxu0
        %v1981 = vadd.f32 0.0, %v1980
        %v1982 = vpop.f32.mrb[0].mxu0
        %1983 = vmatprep.mubr.f32.mxu0 0.0
        %1984 = vmatmul.mubr.f32.gmra.mrb[0].mxu0 %v646
        %v1985 = vpop.f32.mrb[0].mxu0
        %v1986 = vadd.f32 0.0, %v1985
        %v1987 = vpop.f32.mrb[0].mxu0
        %1988 = vmatprep.mubr.f32.mxu0 0.0
        %1989 = vmatmul.mubr.f32.gmra.mrb[0].mxu0 %v648
        %v1990 = vpop.f32.mrb[0].mxu0
        %v1991 = vadd.f32 0.0, %v1990
        %v1992 = vpop.f32.mrb[0].mxu0
        %1993 = vmatprep.mubr.f32.mxu0 0.0
        %1994 = vmatmul.mubr.f32.gmra.mrb[0].mxu0 %v650
        %v1995 = vpop.f32.mrb[0].mxu0
        %v1996 = vadd.f32 0.0, %v1995
        %v1997 = vpop.f32.mrb[0].mxu0
        %1998 = vmatprep.mubr.f32.mxu0 0.0
        %1999 = vmatmul.mubr.f32.gmra.mrb[0].mxu0 %v652
        %v2000 = vpop.f32.mrb[0].mxu0
        %v2001 = vadd.f32 0.0, %v2000
        %v2002 = vpop.f32.mrb[0].mxu0
        %2003 = vmatprep.mubr.f32.mxu0 0.0
        %2004 = vmatmul.mubr.f32.gmra.mrb[0].mxu0 %v654
        %v2005 = vpop.f32.mrb[0].mxu0
        %v2006 = vadd.f32 0.0, %v2005
        %v2007 = vpop.f32.mrb[0].mxu0
        %2008 = vmatprep.mubr.f32.mxu0 0.0
        %2009 = vmatmul.mubr.f32.gmra.mrb[0].mxu0 %v656
        %v2010 = vpop.f32.mrb[0].mxu0
        %v2011 = vadd.f32 0.0, %v2010
        %v2012 = vpop.f32.mrb[0].mxu0
        %2013 = vmatprep.mubr.f32.mxu0 0.0
        %2014 = vmatmul.mubr.f32.gmra.mrb[0].mxu0 %v658
        %v2015 = vpop.f32.mrb[0].mxu0
        %v2016 = vadd.f32 0.0, %v2015
        %v2017 = vpop.f32.mrb[0].mxu0
        %2018 = vmatprep.mubr.f32.mxu0 0.0
        %2019 = vmatmul.mubr.f32.gmra.mrb[0].mxu0 %v660
        %v2020 = vpop.f32.mrb[0].mxu0
        %v2021 = vadd.f32 0.0, %v2020
        %v2022 = vpop.f32.mrb[0].mxu0
        %2023 = vmatprep.mubr.f32.mxu0 0.0
        %2024 = vmatmul.mubr.f32.gmra.mrb[0].mxu0 %v662
        %v2025 = vpop.f32.mrb[0].mxu0
        %v2026 = vadd.f32 0.0, %v2025
        %v2027 = vpop.f32.mrb[0].mxu0
        %2028 = vmatprep.mubr.f32.mxu0 0.0
        %2029 = vmatmul.mubr.f32.gmra.mrb[0].mxu0 %v664
        %v2030 = vpop.f32.mrb[0].mxu0
        %v2031 = vadd.f32 0.0, %v2030
        %v2032 = vpop.f32.mrb[0].mxu0
        %2033 = vmatprep.mubr.f32.mxu0 0.0
        %2034 = vmatmul.mubr.f32.gmra.mrb[0].mxu0 %v666
        %v2035 = vpop.f32.mrb[0].mxu0
        %v2036 = vadd.f32 0.0, %v2035
        %v2037 = vpop.f32.mrb[0].mxu0
        %2038 = vmatprep.mubr.f32.mxu0 0.0
        %2039 = vmatmul.mubr.f32.gmra.mrb[0].mxu0 %v668
        %v2040 = vpop.f32.mrb[0].mxu0
        %v2041 = vadd.f32 0.0, %v2040
        %v2042 = vpop.f32.mrb[0].mxu0
        %2043 = vmatprep.mubr.f32.mxu0 0.0
        %2044 = vmatmul.mubr.f32.gmra.mrb[0].mxu0 %v670
        %v2045 = vpop.f32.mrb[0].mxu0
        %v2046 = vadd.f32 0.0, %v2045
        %v2047 = vpop.f32.mrb[0].mxu0
        %2048 = vmatprep.mubr.f32.mxu0 0.0
        %2049 = vmatmul.mubr.f32.gmra.mrb[0].mxu0 %v672
        %v2050 = vpop.f32.mrb[0].mxu0
        %v2051 = vadd.f32 0.0, %v2050
        %v2052 = vpop.f32.mrb[0].mxu0
        %2053 = vmatprep.mubr.f32.mxu0 0.0
        %2054 = vmatmul.mubr.f32.gmra.mrb[0].mxu0 %v674
        %v2055 = vpop.f32.mrb[0].mxu0
        %v2056 = vadd.f32 0.0, %v2055
        %v2057 = vpop.f32.mrb[0].mxu0
        %2058 = vmatprep.mubr.f32.mxu0 0.0
        %2059 = vmatmul.mubr.f32.gmra.mrb[0].mxu0 %v676
        %v2060 = vpop.f32.mrb[0].mxu0
        %v2061 = vadd.f32 0.0, %v2060
        %v2062 = vpop.f32.mrb[0].mxu0
        %2063 = vmatprep.mubr.f32.mxu0 0.0
        %2064 = vmatmul.mubr.f32.gmra.mrb[0].mxu0 %v678
        %v2065 = vpop.f32.mrb[0].mxu0
        %v2066 = vadd.f32 0.0, %v2065
        %v2067 = vpop.f32.mrb[0].mxu0
        %2068 = vmatprep.mubr.f32.mxu0 0.0
        %2069 = vmatmul.mubr.f32.gmra.mrb[0].mxu0 %v680
        %v2070 = vpop.f32.mrb[0].mxu0
        %v2071 = vadd.f32 0.0, %v2070
        %v2072 = vpop.f32.mrb[0].mxu0
        %2073 = vmatprep.mubr.f32.mxu0 0.0
        %2074 = vmatmul.mubr.f32.gmra.mrb[0].mxu0 %v682
        %v2075 = vpop.f32.mrb[0].mxu0
        %v2076 = vadd.f32 0.0, %v2075
        %v2077 = vpop.f32.mrb[0].mxu0
        %2078 = vmatprep.mubr.f32.mxu0 0.0
        %2079 = vmatmul.mubr.f32.gmra.mrb[0].mxu0 %v684
        %v2080 = vpop.f32.mrb[0].mxu0
        %v2081 = vadd.f32 0.0, %v2080
        %v2082 = vpop.f32.mrb[0].mxu0
        %2083 = vmatprep.mubr.f32.mxu0 0.0
        %2084 = vmatmul.mubr.f32.gmra.mrb[0].mxu0 %v686
        %v2085 = vpop.f32.mrb[0].mxu0
        %v2086 = vadd.f32 0.0, %v2085
        %v2087 = vpop.f32.mrb[0].mxu0
        %2088 = vmatprep.mubr.f32.mxu0 0.0
        %2089 = vmatmul.mubr.f32.gmra.mrb[0].mxu0 %v688
        %v2090 = vpop.f32.mrb[0].mxu0
        %v2091 = vadd.f32 0.0, %v2090
        %v2092 = vpop.f32.mrb[0].mxu0
        %2093 = vmatprep.mubr.f32.mxu0 0.0
        %2094 = vmatmul.mubr.f32.gmra.mrb[0].mxu0 %v690
        %v2095 = vpop.f32.mrb[0].mxu0
        %v2096 = vadd.f32 0.0, %v2095
        %v2097 = vpop.f32.mrb[0].mxu0
        %2098 = vmatprep.mubr.f32.mxu0 0.0
        %2099 = vmatmul.mubr.f32.gmra.mrb[0].mxu0 %v692
        %v2100 = vpop.f32.mrb[0].mxu0
        %v2101 = vadd.f32 0.0, %v2100
        %v2102 = vpop.f32.mrb[0].mxu0
        %2103 = vmatprep.mubr.f32.mxu0 0.0
        %2104 = vmatmul.mubr.f32.gmra.mrb[0].mxu0 %v694
        %v2105 = vpop.f32.mrb[0].mxu0
        %v2106 = vadd.f32 0.0, %v2105
        %v2107 = vpop.f32.mrb[0].mxu0
        %2108 = vmatprep.mubr.f32.mxu0 0.0
        %2109 = vmatmul.mubr.f32.gmra.mrb[0].mxu0 %v696
        %v2110 = vpop.f32.mrb[0].mxu0
        %v2111 = vadd.f32 0.0, %v2110
        %v2112 = vpop.f32.mrb[0].mxu0
        %2113 = vmatprep.mubr.f32.mxu0 0.0
        %2114 = vmatmul.mubr.f32.gmra.mrb[0].mxu0 %v698
        %v2115 = vpop.f32.mrb[0].mxu0
        %v2116 = vadd.f32 0.0, %v2115
        %v2117 = vpop.f32.mrb[0].mxu0
        %2118 = vmatprep.mubr.f32.mxu0 0.0
        %2119 = vmatmul.mubr.f32.gmra.mrb[0].mxu0 %v700
        %v2120 = vpop.f32.mrb[0].mxu0
        %v2121 = vadd.f32 0.0, %v2120
        %v2122 = vpop.f32.mrb[0].mxu0
        %2123 = vmatprep.mubr.f32.mxu0 0.0
        %2124 = vmatmul.mubr.f32.gmra.mrb[0].mxu0 %v1903
        %v2125 = vpop.f32.mrb[0].mxu0
        %v2126 = vadd.f32 0.0, %v2125
        %v2127 = vpop.f32.mrb[0].mxu0
        %2128 = vmatprep.mubr.f32.mxu0 0.0
        %2129 = vmatmul.mubr.f32.gmra.mrb[0].mxu0 %v1905
        %v2130 = vpop.f32.mrb[0].mxu0
        %v2131 = vadd.f32 0.0, %v2130
        %v2132 = vpop.f32.mrb[0].mxu0
        %2133 = vdwg.mxu0
        %v2134 = vadd.f32 %v1864, %v1976
        %v2135 = vadd.f32 %v1865, %v1981
        %v2136 = vadd.f32 %v1866, %v1986
        %v2137 = vadd.f32 %v1867, %v1991
        %v2138 = vadd.f32 %v1868, %v1996
        %v2139 = vadd.f32 %v1869, %v2001
        %v2140 = vadd.f32 %v1870, %v2006
        %v2141 = vadd.f32 %v1871, %v2011
        %v2142 = vadd.f32 %v1872, %v2016
        %v2143 = vadd.f32 %v1873, %v2021
        %v2144 = vadd.f32 %v1874, %v2026
        %v2145 = vadd.f32 %v1875, %v2031
        %v2146 = vadd.f32 %v1876, %v2036
        %v2147 = vadd.f32 %v1877, %v2041
        %v2148 = vadd.f32 %v1878, %v2046
        %v2149 = vadd.f32 %v1879, %v2051
        %v2150 = vadd.f32 %v1880, %v2056
        %v2151 = vadd.f32 %v1881, %v2061
        %v2152 = vadd.f32 %v1882, %v2066
        %v2153 = vadd.f32 %v1883, %v2071
        %v2154 = vadd.f32 %v1884, %v2076
        %v2155 = vadd.f32 %v1885, %v2081
        %v2156 = vadd.f32 %v1886, %v2086
        %v2157 = vadd.f32 %v1887, %v2091
        %v2158 = vadd.f32 %v1888, %v2096
        %v2159 = vadd.f32 %v1889, %v2101
        %v2160 = vadd.f32 %v1890, %v2106
        %v2161 = vadd.f32 %v1891, %v2111
        %v2162 = vadd.f32 %v1892, %v2116
        %v2163 = vadd.f32 %v1893, %v2121
        %v2164 = vadd.f32 %v1894, %v2126
        %v2165 = vadd.f32 %v1895, %v2131
        %v2166 = vrot.slane %v495, 2
        %v2167 = vrot.slane %v496, 2
        %v2168 = vsel %vm1221, %v2166, %v2167
        %v2169 = vrot.slane %v497, 2
        %v2170 = vsel %vm1221, %v2167, %v2169
        %v2172 = vrot.slane %v503, 6
        %v2173 = vrot.slane %v504, 6
        %v2174 = vsel %vm1303, %v2172, %v2173
        %v2175 = vsel %vm240, %v2168, 0
        %v2177 = vsel %vm240, %v2170, 0
        %v2179 = vsel %vm702, %v2174, 0
        %2181 = vmatprep.subr.mxu0 0.0
        %2182 = vmatpush1.msra.mxu0 %v2179
        %2183 = vmatprep.subr.mxu0 0.0
        %2184 = vmatpush1.msra.mxu0 0.0
        %2185 = vmatprep.subr.mxu0 0.0
        %2186 = vmatpush1.msra.mxu0 0.0
        %2187 = vmatprep.subr.mxu0 0.0
        %2188 = vmatpush1.msra.mxu0 0.0
        %2189 = vmatprep.subr.mxu0 0.0
        %2190 = vmatpush1.msra.mxu0 0.0
        %2191 = vmatprep.subr.mxu0 0.0
        %2192 = vmatpush1.msra.mxu0 0.0
        %2193 = vmatprep.subr.mxu0 0.0
        %2194 = vmatpush1.msra.mxu0 0.0
        %2195 = vmatprep.subr.mxu0 0.0
        %2196 = vmatpush1.msra.mxu0 0.0
        %2197 = vmatprep.subr.mxu0 0.0
        %2198 = vmatpush1.msra.mxu0 0.0
        %2199 = vmatprep.subr.mxu0 0.0
        %2200 = vmatpush1.msra.mxu0 0.0
        %2201 = vmatprep.subr.mxu0 0.0
        %2202 = vmatpush1.msra.mxu0 0.0
        %2203 = vmatprep.subr.mxu0 0.0
        %2204 = vmatpush1.msra.mxu0 0.0
        %2205 = vmatprep.subr.mxu0 0.0
        %2206 = vmatpush1.msra.mxu0 0.0
        %2207 = vmatprep.subr.mxu0 0.0
        %2208 = vmatpush1.msra.mxu0 0.0
        %2209 = vmatprep.subr.mxu0 0.0
        %2210 = vmatpush1.msra.mxu0 0.0
        %2211 = vmatprep.subr.mxu0 0.0
        %2212 = vmatpush1.msra.mxu0 0.0
        %2213 = vmatprep.subr.mxu0 0.0
        %2214 = vmatpush1.msra.mxu0 0.0
        %2215 = vmatprep.subr.mxu0 0.0
        %2216 = vmatpush1.msra.mxu0 0.0
        %2217 = vmatprep.subr.mxu0 0.0
        %2218 = vmatpush1.msra.mxu0 0.0
        %2219 = vmatprep.subr.mxu0 0.0
        %2220 = vmatpush1.msra.mxu0 0.0
        %2221 = vmatprep.subr.mxu0 0.0
        %2222 = vmatpush1.msra.mxu0 0.0
        %2223 = vmatprep.subr.mxu0 0.0
        %2224 = vmatpush1.msra.mxu0 0.0
        %2225 = vmatprep.subr.mxu0 0.0
        %2226 = vmatpush1.msra.mxu0 0.0
        %2227 = vmatprep.subr.mxu0 0.0
        %2228 = vmatpush1.msra.mxu0 0.0
        %2229 = vmatprep.subr.mxu0 0.0
        %2230 = vmatpush1.msra.mxu0 0.0
        %2231 = vmatprep.subr.mxu0 0.0
        %2232 = vmatpush1.msra.mxu0 0.0
        %2233 = vmatprep.subr.mxu0 0.0
        %2234 = vmatpush1.msra.mxu0 0.0
        %2235 = vmatprep.subr.mxu0 0.0
        %2236 = vmatpush1.msra.mxu0 0.0
        %2237 = vmatprep.subr.mxu0 0.0
        %2238 = vmatpush1.msra.mxu0 0.0
        %2239 = vmatprep.subr.mxu0 0.0
        %2240 = vmatpush1.msra.mxu0 0.0
        %2241 = vmatprep.subr.mxu0 0.0
        %2242 = vmatpush1.msra.mxu0 0.0
        %2243 = vmatprep.subr.mxu0 0.0
        %2244 = vmatpush1.msra.mxu0 0.0
        %2245 = vmatprep.mubr.f32.mxu0 0.0
        %2246 = vmatmul.mubr.f32.gmra.mrb[0].mxu0 %v1311
        %v2247 = vpop.f32.mrb[0].mxu0
        %v2248 = vadd.f32 0.0, %v2247
        %v2249 = vpop.f32.mrb[0].mxu0
        %2250 = vmatprep.mubr.f32.mxu0 0.0
        %2251 = vmatmul.mubr.f32.gmra.mrb[0].mxu0 %v1313
        %v2252 = vpop.f32.mrb[0].mxu0
        %v2253 = vadd.f32 0.0, %v2252
        %v2254 = vpop.f32.mrb[0].mxu0
        %2255 = vmatprep.mubr.f32.mxu0 0.0
        %2256 = vmatmul.mubr.f32.gmra.mrb[0].mxu0 %v1315
        %v2257 = vpop.f32.mrb[0].mxu0
        %v2258 = vadd.f32 0.0, %v2257
        %v2259 = vpop.f32.mrb[0].mxu0
        %2260 = vmatprep.mubr.f32.mxu0 0.0
        %2261 = vmatmul.mubr.f32.gmra.mrb[0].mxu0 %v1317
        %v2262 = vpop.f32.mrb[0].mxu0
        %v2263 = vadd.f32 0.0, %v2262
        %v2264 = vpop.f32.mrb[0].mxu0
        %2265 = vmatprep.mubr.f32.mxu0 0.0
        %2266 = vmatmul.mubr.f32.gmra.mrb[0].mxu0 %v1319
        %v2267 = vpop.f32.mrb[0].mxu0
        %v2268 = vadd.f32 0.0, %v2267
        %v2269 = vpop.f32.mrb[0].mxu0
        %2270 = vmatprep.mubr.f32.mxu0 0.0
        %2271 = vmatmul.mubr.f32.gmra.mrb[0].mxu0 %v1321
        %v2272 = vpop.f32.mrb[0].mxu0
        %v2273 = vadd.f32 0.0, %v2272
        %v2274 = vpop.f32.mrb[0].mxu0
        %2275 = vmatprep.mubr.f32.mxu0 0.0
        %2276 = vmatmul.mubr.f32.gmra.mrb[0].mxu0 %v1323
        %v2277 = vpop.f32.mrb[0].mxu0
        %v2278 = vadd.f32 0.0, %v2277
        %v2279 = vpop.f32.mrb[0].mxu0
        %2280 = vmatprep.mubr.f32.mxu0 0.0
        %2281 = vmatmul.mubr.f32.gmra.mrb[0].mxu0 %v1325
        %v2282 = vpop.f32.mrb[0].mxu0
        %v2283 = vadd.f32 0.0, %v2282
        %v2284 = vpop.f32.mrb[0].mxu0
        %2285 = vmatprep.mubr.f32.mxu0 0.0
        %2286 = vmatmul.mubr.f32.gmra.mrb[0].mxu0 %v1327
        %v2287 = vpop.f32.mrb[0].mxu0
        %v2288 = vadd.f32 0.0, %v2287
        %v2289 = vpop.f32.mrb[0].mxu0
        %2290 = vmatprep.mubr.f32.mxu0 0.0
        %2291 = vmatmul.mubr.f32.gmra.mrb[0].mxu0 %v1329
        %v2292 = vpop.f32.mrb[0].mxu0
        %v2293 = vadd.f32 0.0, %v2292
        %v2294 = vpop.f32.mrb[0].mxu0
        %2295 = vmatprep.mubr.f32.mxu0 0.0
        %2296 = vmatmul.mubr.f32.gmra.mrb[0].mxu0 %v1331
        %v2297 = vpop.f32.mrb[0].mxu0
        %v2298 = vadd.f32 0.0, %v2297
        %v2299 = vpop.f32.mrb[0].mxu0
        %2300 = vmatprep.mubr.f32.mxu0 0.0
        %2301 = vmatmul.mubr.f32.gmra.mrb[0].mxu0 %v1333
        %v2302 = vpop.f32.mrb[0].mxu0
        %v2303 = vadd.f32 0.0, %v2302
        %v2304 = vpop.f32.mrb[0].mxu0
        %2305 = vmatprep.mubr.f32.mxu0 0.0
        %2306 = vmatmul.mubr.f32.gmra.mrb[0].mxu0 %v1335
        %v2307 = vpop.f32.mrb[0].mxu0
        %v2308 = vadd.f32 0.0, %v2307
        %v2309 = vpop.f32.mrb[0].mxu0
        %2310 = vmatprep.mubr.f32.mxu0 0.0
        %2311 = vmatmul.mubr.f32.gmra.mrb[0].mxu0 %v1337
        %v2312 = vpop.f32.mrb[0].mxu0
        %v2313 = vadd.f32 0.0, %v2312
        %v2314 = vpop.f32.mrb[0].mxu0
        %2315 = vmatprep.mubr.f32.mxu0 0.0
        %2316 = vmatmul.mubr.f32.gmra.mrb[0].mxu0 %v1339
        %v2317 = vpop.f32.mrb[0].mxu0
        %v2318 = vadd.f32 0.0, %v2317
        %v2319 = vpop.f32.mrb[0].mxu0
        %2320 = vmatprep.mubr.f32.mxu0 0.0
        %2321 = vmatmul.mubr.f32.gmra.mrb[0].mxu0 %v1341
        %v2322 = vpop.f32.mrb[0].mxu0
        %v2323 = vadd.f32 0.0, %v2322
        %v2324 = vpop.f32.mrb[0].mxu0
        %2325 = vmatprep.mubr.f32.mxu0 0.0
        %2326 = vmatmul.mubr.f32.gmra.mrb[0].mxu0 %v1343
        %v2327 = vpop.f32.mrb[0].mxu0
        %v2328 = vadd.f32 0.0, %v2327
        %v2329 = vpop.f32.mrb[0].mxu0
        %2330 = vmatprep.mubr.f32.mxu0 0.0
        %2331 = vmatmul.mubr.f32.gmra.mrb[0].mxu0 %v1345
        %v2332 = vpop.f32.mrb[0].mxu0
        %v2333 = vadd.f32 0.0, %v2332
        %v2334 = vpop.f32.mrb[0].mxu0
        %2335 = vmatprep.mubr.f32.mxu0 0.0
        %2336 = vmatmul.mubr.f32.gmra.mrb[0].mxu0 %v1347
        %v2337 = vpop.f32.mrb[0].mxu0
        %v2338 = vadd.f32 0.0, %v2337
        %v2339 = vpop.f32.mrb[0].mxu0
        %2340 = vmatprep.mubr.f32.mxu0 0.0
        %2341 = vmatmul.mubr.f32.gmra.mrb[0].mxu0 %v1349
        %v2342 = vpop.f32.mrb[0].mxu0
        %v2343 = vadd.f32 0.0, %v2342
        %v2344 = vpop.f32.mrb[0].mxu0
        %2345 = vmatprep.mubr.f32.mxu0 0.0
        %2346 = vmatmul.mubr.f32.gmra.mrb[0].mxu0 %v1351
        %v2347 = vpop.f32.mrb[0].mxu0
        %v2348 = vadd.f32 0.0, %v2347
        %v2349 = vpop.f32.mrb[0].mxu0
        %2350 = vmatprep.mubr.f32.mxu0 0.0
        %2351 = vmatmul.mubr.f32.gmra.mrb[0].mxu0 %v1353
        %v2352 = vpop.f32.mrb[0].mxu0
        %v2353 = vadd.f32 0.0, %v2352
        %v2354 = vpop.f32.mrb[0].mxu0
        %2355 = vmatprep.mubr.f32.mxu0 0.0
        %2356 = vmatmul.mubr.f32.gmra.mrb[0].mxu0 %v1355
        %v2357 = vpop.f32.mrb[0].mxu0
        %v2358 = vadd.f32 0.0, %v2357
        %v2359 = vpop.f32.mrb[0].mxu0
        %2360 = vmatprep.mubr.f32.mxu0 0.0
        %2361 = vmatmul.mubr.f32.gmra.mrb[0].mxu0 %v1357
        %v2362 = vpop.f32.mrb[0].mxu0
        %v2363 = vadd.f32 0.0, %v2362
        %v2364 = vpop.f32.mrb[0].mxu0
        %2365 = vmatprep.mubr.f32.mxu0 0.0
        %2366 = vmatmul.mubr.f32.gmra.mrb[0].mxu0 %v1359
        %v2367 = vpop.f32.mrb[0].mxu0
        %v2368 = vadd.f32 0.0, %v2367
        %v2369 = vpop.f32.mrb[0].mxu0
        %2370 = vmatprep.mubr.f32.mxu0 0.0
        %2371 = vmatmul.mubr.f32.gmra.mrb[0].mxu0 %v1361
        %v2372 = vpop.f32.mrb[0].mxu0
        %v2373 = vadd.f32 0.0, %v2372
        %v2374 = vpop.f32.mrb[0].mxu0
        %2375 = vmatprep.mubr.f32.mxu0 0.0
        %2376 = vmatmul.mubr.f32.gmra.mrb[0].mxu0 %v1363
        %v2377 = vpop.f32.mrb[0].mxu0
        %v2378 = vadd.f32 0.0, %v2377
        %v2379 = vpop.f32.mrb[0].mxu0
        %2380 = vmatprep.mubr.f32.mxu0 0.0
        %2381 = vmatmul.mubr.f32.gmra.mrb[0].mxu0 %v1365
        %v2382 = vpop.f32.mrb[0].mxu0
        %v2383 = vadd.f32 0.0, %v2382
        %v2384 = vpop.f32.mrb[0].mxu0
        %2385 = vmatprep.mubr.f32.mxu0 0.0
        %2386 = vmatmul.mubr.f32.gmra.mrb[0].mxu0 %v1367
        %v2387 = vpop.f32.mrb[0].mxu0
        %v2388 = vadd.f32 0.0, %v2387
        %v2389 = vpop.f32.mrb[0].mxu0
        %2390 = vmatprep.mubr.f32.mxu0 0.0
        %2391 = vmatmul.mubr.f32.gmra.mrb[0].mxu0 %v1369
        %v2392 = vpop.f32.mrb[0].mxu0
        %v2393 = vadd.f32 0.0, %v2392
        %v2394 = vpop.f32.mrb[0].mxu0
        %2395 = vmatprep.mubr.f32.mxu0 0.0
        %2396 = vmatmul.mubr.f32.gmra.mrb[0].mxu0 %v2175
        %v2397 = vpop.f32.mrb[0].mxu0
        %v2398 = vadd.f32 0.0, %v2397
        %v2399 = vpop.f32.mrb[0].mxu0
        %2400 = vmatprep.mubr.f32.mxu0 0.0
        %2401 = vmatmul.mubr.f32.gmra.mrb[0].mxu0 %v2177
        %v2402 = vpop.f32.mrb[0].mxu0
        %v2403 = vadd.f32 0.0, %v2402
        %v2404 = vpop.f32.mrb[0].mxu0
        %2405 = vdwg.mxu0
        %v2406 = vadd.f32 %v2134, %v2248
        %v2407 = vadd.f32 %v2135, %v2253
        %v2408 = vadd.f32 %v2136, %v2258
        %v2409 = vadd.f32 %v2137, %v2263
        %v2410 = vadd.f32 %v2138, %v2268
        %v2411 = vadd.f32 %v2139, %v2273
        %v2412 = vadd.f32 %v2140, %v2278
        %v2413 = vadd.f32 %v2141, %v2283
        %v2414 = vadd.f32 %v2142, %v2288
        %v2415 = vadd.f32 %v2143, %v2293
        %v2416 = vadd.f32 %v2144, %v2298
        %v2417 = vadd.f32 %v2145, %v2303
        %v2418 = vadd.f32 %v2146, %v2308
        %v2419 = vadd.f32 %v2147, %v2313
        %v2420 = vadd.f32 %v2148, %v2318
        %v2421 = vadd.f32 %v2149, %v2323
        %v2422 = vadd.f32 %v2150, %v2328
        %v2423 = vadd.f32 %v2151, %v2333
        %v2424 = vadd.f32 %v2152, %v2338
        %v2425 = vadd.f32 %v2153, %v2343
        %v2426 = vadd.f32 %v2154, %v2348
        %v2427 = vadd.f32 %v2155, %v2353
        %v2428 = vadd.f32 %v2156, %v2358
        %v2429 = vadd.f32 %v2157, %v2363
        %v2430 = vadd.f32 %v2158, %v2368
        %v2431 = vadd.f32 %v2159, %v2373
        %v2432 = vadd.f32 %v2160, %v2378
        %v2433 = vadd.f32 %v2161, %v2383
        %v2434 = vadd.f32 %v2162, %v2388
        %v2435 = vadd.f32 %v2163, %v2393
        %v2436 = vadd.f32 %v2164, %v2398
        %v2437 = vadd.f32 %v2165, %v2403
        %v2439 = vsel %vm240, %v498, 0
        %v2442 = vsel %vm240, %v499, 0
        %v2445 = vsel %vm702, %v505, 0
        %2447 = vmatprep.subr.mxu0 0.0
        %2448 = vmatpush1.msra.mxu0 %v2445
        %2449 = vmatprep.subr.mxu0 0.0
        %2450 = vmatpush1.msra.mxu0 0.0
        %2451 = vmatprep.subr.mxu0 0.0
        %2452 = vmatpush1.msra.mxu0 0.0
        %2453 = vmatprep.subr.mxu0 0.0
        %2454 = vmatpush1.msra.mxu0 0.0
        %2455 = vmatprep.subr.mxu0 0.0
        %2456 = vmatpush1.msra.mxu0 0.0
        %2457 = vmatprep.subr.mxu0 0.0
        %2458 = vmatpush1.msra.mxu0 0.0
        %2459 = vmatprep.subr.mxu0 0.0
        %2460 = vmatpush1.msra.mxu0 0.0
        %2461 = vmatprep.subr.mxu0 0.0
        %2462 = vmatpush1.msra.mxu0 0.0
        %2463 = vmatprep.subr.mxu0 0.0
        %2464 = vmatpush1.msra.mxu0 0.0
        %2465 = vmatprep.subr.mxu0 0.0
        %2466 = vmatpush1.msra.mxu0 0.0
        %2467 = vmatprep.subr.mxu0 0.0
        %2468 = vmatpush1.msra.mxu0 0.0
        %2469 = vmatprep.subr.mxu0 0.0
        %2470 = vmatpush1.msra.mxu0 0.0
        %2471 = vmatprep.subr.mxu0 0.0
        %2472 = vmatpush1.msra.mxu0 0.0
        %2473 = vmatprep.subr.mxu0 0.0
        %2474 = vmatpush1.msra.mxu0 0.0
        %2475 = vmatprep.subr.mxu0 0.0
        %2476 = vmatpush1.msra.mxu0 0.0
        %2477 = vmatprep.subr.mxu0 0.0
        %2478 = vmatpush1.msra.mxu0 0.0
        %2479 = vmatprep.subr.mxu0 0.0
        %2480 = vmatpush1.msra.mxu0 0.0
        %2481 = vmatprep.subr.mxu0 0.0
        %2482 = vmatpush1.msra.mxu0 0.0
        %2483 = vmatprep.subr.mxu0 0.0
        %2484 = vmatpush1.msra.mxu0 0.0
        %2485 = vmatprep.subr.mxu0 0.0
        %2486 = vmatpush1.msra.mxu0 0.0
        %2487 = vmatprep.subr.mxu0 0.0
        %2488 = vmatpush1.msra.mxu0 0.0
        %2489 = vmatprep.subr.mxu0 0.0
        %2490 = vmatpush1.msra.mxu0 0.0
        %2491 = vmatprep.subr.mxu0 0.0
        %2492 = vmatpush1.msra.mxu0 0.0
        %2493 = vmatprep.subr.mxu0 0.0
        %2494 = vmatpush1.msra.mxu0 0.0
        %2495 = vmatprep.subr.mxu0 0.0
        %2496 = vmatpush1.msra.mxu0 0.0
        %2497 = vmatprep.subr.mxu0 0.0
        %2498 = vmatpush1.msra.mxu0 0.0
        %2499 = vmatprep.subr.mxu0 0.0
        %2500 = vmatpush1.msra.mxu0 0.0
        %2501 = vmatprep.subr.mxu0 0.0
        %2502 = vmatpush1.msra.mxu0 0.0
        %2503 = vmatprep.subr.mxu0 0.0
        %2504 = vmatpush1.msra.mxu0 0.0
        %2505 = vmatprep.subr.mxu0 0.0
        %2506 = vmatpush1.msra.mxu0 0.0
        %2507 = vmatprep.subr.mxu0 0.0
        %2508 = vmatpush1.msra.mxu0 0.0
        %2509 = vmatprep.subr.mxu0 0.0
        %2510 = vmatpush1.msra.mxu0 0.0
        %2511 = vmatprep.mubr.f32.mxu0 0.0
        %2512 = vmatmul.mubr.f32.gmra.mrb[0].mxu0 %v938
        %v2513 = vpop.f32.mrb[0].mxu0
        %v2514 = vadd.f32 0.0, %v2513
        %v2515 = vpop.f32.mrb[0].mxu0
        %2516 = vmatprep.mubr.f32.mxu0 0.0
        %2517 = vmatmul.mubr.f32.gmra.mrb[0].mxu0 %v940
        %v2518 = vpop.f32.mrb[0].mxu0
        %v2519 = vadd.f32 0.0, %v2518
        %v2520 = vpop.f32.mrb[0].mxu0
        %2521 = vmatprep.mubr.f32.mxu0 0.0
        %2522 = vmatmul.mubr.f32.gmra.mrb[0].mxu0 %v942
        %v2523 = vpop.f32.mrb[0].mxu0
        %v2524 = vadd.f32 0.0, %v2523
        %v2525 = vpop.f32.mrb[0].mxu0
        %2526 = vmatprep.mubr.f32.mxu0 0.0
        %2527 = vmatmul.mubr.f32.gmra.mrb[0].mxu0 %v944
        %v2528 = vpop.f32.mrb[0].mxu0
        %v2529 = vadd.f32 0.0, %v2528
        %v2530 = vpop.f32.mrb[0].mxu0
        %2531 = vmatprep.mubr.f32.mxu0 0.0
        %2532 = vmatmul.mubr.f32.gmra.mrb[0].mxu0 %v946
        %v2533 = vpop.f32.mrb[0].mxu0
        %v2534 = vadd.f32 0.0, %v2533
        %v2535 = vpop.f32.mrb[0].mxu0
        %2536 = vmatprep.mubr.f32.mxu0 0.0
        %2537 = vmatmul.mubr.f32.gmra.mrb[0].mxu0 %v948
        %v2538 = vpop.f32.mrb[0].mxu0
        %v2539 = vadd.f32 0.0, %v2538
        %v2540 = vpop.f32.mrb[0].mxu0
        %2541 = vmatprep.mubr.f32.mxu0 0.0
        %2542 = vmatmul.mubr.f32.gmra.mrb[0].mxu0 %v950
        %v2543 = vpop.f32.mrb[0].mxu0
        %v2544 = vadd.f32 0.0, %v2543
        %v2545 = vpop.f32.mrb[0].mxu0
        %2546 = vmatprep.mubr.f32.mxu0 0.0
        %2547 = vmatmul.mubr.f32.gmra.mrb[0].mxu0 %v952
        %v2548 = vpop.f32.mrb[0].mxu0
        %v2549 = vadd.f32 0.0, %v2548
        %v2550 = vpop.f32.mrb[0].mxu0
        %2551 = vmatprep.mubr.f32.mxu0 0.0
        %2552 = vmatmul.mubr.f32.gmra.mrb[0].mxu0 %v954
        %v2553 = vpop.f32.mrb[0].mxu0
        %v2554 = vadd.f32 0.0, %v2553
        %v2555 = vpop.f32.mrb[0].mxu0
        %2556 = vmatprep.mubr.f32.mxu0 0.0
        %2557 = vmatmul.mubr.f32.gmra.mrb[0].mxu0 %v956
        %v2558 = vpop.f32.mrb[0].mxu0
        %v2559 = vadd.f32 0.0, %v2558
        %v2560 = vpop.f32.mrb[0].mxu0
        %2561 = vmatprep.mubr.f32.mxu0 0.0
        %2562 = vmatmul.mubr.f32.gmra.mrb[0].mxu0 %v958
        %v2563 = vpop.f32.mrb[0].mxu0
        %v2564 = vadd.f32 0.0, %v2563
        %v2565 = vpop.f32.mrb[0].mxu0
        %2566 = vmatprep.mubr.f32.mxu0 0.0
        %2567 = vmatmul.mubr.f32.gmra.mrb[0].mxu0 %v960
        %v2568 = vpop.f32.mrb[0].mxu0
        %v2569 = vadd.f32 0.0, %v2568
        %v2570 = vpop.f32.mrb[0].mxu0
        %2571 = vmatprep.mubr.f32.mxu0 0.0
        %2572 = vmatmul.mubr.f32.gmra.mrb[0].mxu0 %v962
        %v2573 = vpop.f32.mrb[0].mxu0
        %v2574 = vadd.f32 0.0, %v2573
        %v2575 = vpop.f32.mrb[0].mxu0
        %2576 = vmatprep.mubr.f32.mxu0 0.0
        %2577 = vmatmul.mubr.f32.gmra.mrb[0].mxu0 %v964
        %v2578 = vpop.f32.mrb[0].mxu0
        %v2579 = vadd.f32 0.0, %v2578
        %v2580 = vpop.f32.mrb[0].mxu0
        %2581 = vmatprep.mubr.f32.mxu0 0.0
        %2582 = vmatmul.mubr.f32.gmra.mrb[0].mxu0 %v966
        %v2583 = vpop.f32.mrb[0].mxu0
        %v2584 = vadd.f32 0.0, %v2583
        %v2585 = vpop.f32.mrb[0].mxu0
        %2586 = vmatprep.mubr.f32.mxu0 0.0
        %2587 = vmatmul.mubr.f32.gmra.mrb[0].mxu0 %v968
        %v2588 = vpop.f32.mrb[0].mxu0
        %v2589 = vadd.f32 0.0, %v2588
        %v2590 = vpop.f32.mrb[0].mxu0
        %2591 = vmatprep.mubr.f32.mxu0 0.0
        %2592 = vmatmul.mubr.f32.gmra.mrb[0].mxu0 %v970
        %v2593 = vpop.f32.mrb[0].mxu0
        %v2594 = vadd.f32 0.0, %v2593
        %v2595 = vpop.f32.mrb[0].mxu0
        %2596 = vmatprep.mubr.f32.mxu0 0.0
        %2597 = vmatmul.mubr.f32.gmra.mrb[0].mxu0 %v972
        %v2598 = vpop.f32.mrb[0].mxu0
        %v2599 = vadd.f32 0.0, %v2598
        %v2600 = vpop.f32.mrb[0].mxu0
        %2601 = vmatprep.mubr.f32.mxu0 0.0
        %2602 = vmatmul.mubr.f32.gmra.mrb[0].mxu0 %v974
        %v2603 = vpop.f32.mrb[0].mxu0
        %v2604 = vadd.f32 0.0, %v2603
        %v2605 = vpop.f32.mrb[0].mxu0
        %2606 = vmatprep.mubr.f32.mxu0 0.0
        %2607 = vmatmul.mubr.f32.gmra.mrb[0].mxu0 %v976
        %v2608 = vpop.f32.mrb[0].mxu0
        %v2609 = vadd.f32 0.0, %v2608
        %v2610 = vpop.f32.mrb[0].mxu0
        %2611 = vmatprep.mubr.f32.mxu0 0.0
        %2612 = vmatmul.mubr.f32.gmra.mrb[0].mxu0 %v978
        %v2613 = vpop.f32.mrb[0].mxu0
        %v2614 = vadd.f32 0.0, %v2613
        %v2615 = vpop.f32.mrb[0].mxu0
        %2616 = vmatprep.mubr.f32.mxu0 0.0
        %2617 = vmatmul.mubr.f32.gmra.mrb[0].mxu0 %v980
        %v2618 = vpop.f32.mrb[0].mxu0
        %v2619 = vadd.f32 0.0, %v2618
        %v2620 = vpop.f32.mrb[0].mxu0
        %2621 = vmatprep.mubr.f32.mxu0 0.0
        %2622 = vmatmul.mubr.f32.gmra.mrb[0].mxu0 %v982
        %v2623 = vpop.f32.mrb[0].mxu0
        %v2624 = vadd.f32 0.0, %v2623
        %v2625 = vpop.f32.mrb[0].mxu0
        %2626 = vmatprep.mubr.f32.mxu0 0.0
        %2627 = vmatmul.mubr.f32.gmra.mrb[0].mxu0 %v984
        %v2628 = vpop.f32.mrb[0].mxu0
        %v2629 = vadd.f32 0.0, %v2628
        %v2630 = vpop.f32.mrb[0].mxu0
        %2631 = vmatprep.mubr.f32.mxu0 0.0
        %2632 = vmatmul.mubr.f32.gmra.mrb[0].mxu0 %v986
        %v2633 = vpop.f32.mrb[0].mxu0
        %v2634 = vadd.f32 0.0, %v2633
        %v2635 = vpop.f32.mrb[0].mxu0
        %2636 = vmatprep.mubr.f32.mxu0 0.0
        %2637 = vmatmul.mubr.f32.gmra.mrb[0].mxu0 %v988
        %v2638 = vpop.f32.mrb[0].mxu0
        %v2639 = vadd.f32 0.0, %v2638
        %v2640 = vpop.f32.mrb[0].mxu0
        %2641 = vmatprep.mubr.f32.mxu0 0.0
        %2642 = vmatmul.mubr.f32.gmra.mrb[0].mxu0 %v990
        %v2643 = vpop.f32.mrb[0].mxu0
        %v2644 = vadd.f32 0.0, %v2643
        %v2645 = vpop.f32.mrb[0].mxu0
        %2646 = vmatprep.mubr.f32.mxu0 0.0
        %2647 = vmatmul.mubr.f32.gmra.mrb[0].mxu0 %v992
        %v2648 = vpop.f32.mrb[0].mxu0
        %v2649 = vadd.f32 0.0, %v2648
        %v2650 = vpop.f32.mrb[0].mxu0
        %2651 = vmatprep.mubr.f32.mxu0 0.0
        %2652 = vmatmul.mubr.f32.gmra.mrb[0].mxu0 %v1631
        %v2653 = vpop.f32.mrb[0].mxu0
        %v2654 = vadd.f32 0.0, %v2653
        %v2655 = vpop.f32.mrb[0].mxu0
        %2656 = vmatprep.mubr.f32.mxu0 0.0
        %2657 = vmatmul.mubr.f32.gmra.mrb[0].mxu0 %v1634
        %v2658 = vpop.f32.mrb[0].mxu0
        %v2659 = vadd.f32 0.0, %v2658
        %v2660 = vpop.f32.mrb[0].mxu0
        %2661 = vmatprep.mubr.f32.mxu0 0.0
        %2662 = vmatmul.mubr.f32.gmra.mrb[0].mxu0 %v2439
        %v2663 = vpop.f32.mrb[0].mxu0
        %v2664 = vadd.f32 0.0, %v2663
        %v2665 = vpop.f32.mrb[0].mxu0
        %2666 = vmatprep.mubr.f32.mxu0 0.0
        %2667 = vmatmul.mubr.f32.gmra.mrb[0].mxu0 %v2442
        %v2668 = vpop.f32.mrb[0].mxu0
        %v2669 = vadd.f32 0.0, %v2668
        %v2670 = vpop.f32.mrb[0].mxu0
        %2671 = vdwg.mxu0
        %v2672 = vadd.f32 %v2406, %v2514
        %v2673 = vadd.f32 %v2407, %v2519
        %v2674 = vadd.f32 %v2408, %v2524
        %v2675 = vadd.f32 %v2409, %v2529
        %v2676 = vadd.f32 %v2410, %v2534
        %v2677 = vadd.f32 %v2411, %v2539
        %v2678 = vadd.f32 %v2412, %v2544
        %v2679 = vadd.f32 %v2413, %v2549
        %v2680 = vadd.f32 %v2414, %v2554
        %v2681 = vadd.f32 %v2415, %v2559
        %v2682 = vadd.f32 %v2416, %v2564
        %v2683 = vadd.f32 %v2417, %v2569
        %v2684 = vadd.f32 %v2418, %v2574
        %v2685 = vadd.f32 %v2419, %v2579
        %v2686 = vadd.f32 %v2420, %v2584
        %v2687 = vadd.f32 %v2421, %v2589
        %v2688 = vadd.f32 %v2422, %v2594
        %v2689 = vadd.f32 %v2423, %v2599
        %v2690 = vadd.f32 %v2424, %v2604
        %v2691 = vadd.f32 %v2425, %v2609
        %v2692 = vadd.f32 %v2426, %v2614
        %v2693 = vadd.f32 %v2427, %v2619
        %v2694 = vadd.f32 %v2428, %v2624
        %v2695 = vadd.f32 %v2429, %v2629
        %v2696 = vadd.f32 %v2430, %v2634
        %v2697 = vadd.f32 %v2431, %v2639
        %v2698 = vadd.f32 %v2432, %v2644
        %v2699 = vadd.f32 %v2433, %v2649
        %v2700 = vadd.f32 %v2434, %v2654
        %v2701 = vadd.f32 %v2435, %v2659
        %v2702 = vadd.f32 %v2436, %v2664
        %v2703 = vadd.f32 %v2437, %v2669
        %v2705 = vrot.slane %v498, 1
        %v2706 = vrot.slane %v499, 1
        %v2707 = vsel %vm555, %v2705, %v2706
        %v2708 = vrot.slane %v500, 1
        %v2709 = vsel %vm555, %v2706, %v2708
        %v2710 = vrot.slane %v505, 3
        %v2711 = vsel %vm240, %v2707, 0
        %v2713 = vsel %vm240, %v2709, 0
        %v2715 = vsel %vm702, %v2710, 0
        %2717 = vmatprep.subr.mxu0 0.0
        %2718 = vmatpush1.msra.mxu0 %v2715
        %2719 = vmatprep.subr.mxu0 0.0
        %2720 = vmatpush1.msra.mxu0 0.0
        %2721 = vmatprep.subr.mxu0 0.0
        %2722 = vmatpush1.msra.mxu0 0.0
        %2723 = vmatprep.subr.mxu0 0.0
        %2724 = vmatpush1.msra.mxu0 0.0
        %2725 = vmatprep.subr.mxu0 0.0
        %2726 = vmatpush1.msra.mxu0 0.0
        %2727 = vmatprep.subr.mxu0 0.0
        %2728 = vmatpush1.msra.mxu0 0.0
        %2729 = vmatprep.subr.mxu0 0.0
        %2730 = vmatpush1.msra.mxu0 0.0
        %2731 = vmatprep.subr.mxu0 0.0
        %2732 = vmatpush1.msra.mxu0 0.0
        %2733 = vmatprep.subr.mxu0 0.0
        %2734 = vmatpush1.msra.mxu0 0.0
        %2735 = vmatprep.subr.mxu0 0.0
        %2736 = vmatpush1.msra.mxu0 0.0
        %2737 = vmatprep.subr.mxu0 0.0
        %2738 = vmatpush1.msra.mxu0 0.0
        %2739 = vmatprep.subr.mxu0 0.0
        %2740 = vmatpush1.msra.mxu0 0.0
        %2741 = vmatprep.subr.mxu0 0.0
        %2742 = vmatpush1.msra.mxu0 0.0
        %2743 = vmatprep.subr.mxu0 0.0
        %2744 = vmatpush1.msra.mxu0 0.0
        %2745 = vmatprep.subr.mxu0 0.0
        %2746 = vmatpush1.msra.mxu0 0.0
        %2747 = vmatprep.subr.mxu0 0.0
        %2748 = vmatpush1.msra.mxu0 0.0
        %2749 = vmatprep.subr.mxu0 0.0
        %2750 = vmatpush1.msra.mxu0 0.0
        %2751 = vmatprep.subr.mxu0 0.0
        %2752 = vmatpush1.msra.mxu0 0.0
        %2753 = vmatprep.subr.mxu0 0.0
        %2754 = vmatpush1.msra.mxu0 0.0
        %2755 = vmatprep.subr.mxu0 0.0
        %2756 = vmatpush1.msra.mxu0 0.0
        %2757 = vmatprep.subr.mxu0 0.0
        %2758 = vmatpush1.msra.mxu0 0.0
        %2759 = vmatprep.subr.mxu0 0.0
        %2760 = vmatpush1.msra.mxu0 0.0
        %2761 = vmatprep.subr.mxu0 0.0
        %2762 = vmatpush1.msra.mxu0 0.0
        %2763 = vmatprep.subr.mxu0 0.0
        %2764 = vmatpush1.msra.mxu0 0.0
        %2765 = vmatprep.subr.mxu0 0.0
        %2766 = vmatpush1.msra.mxu0 0.0
        %2767 = vmatprep.subr.mxu0 0.0
        %2768 = vmatpush1.msra.mxu0 0.0
        %2769 = vmatprep.subr.mxu0 0.0
        %2770 = vmatpush1.msra.mxu0 0.0
        %2771 = vmatprep.subr.mxu0 0.0
        %2772 = vmatpush1.msra.mxu0 0.0
        %2773 = vmatprep.subr.mxu0 0.0
        %2774 = vmatpush1.msra.mxu0 0.0
        %2775 = vmatprep.subr.mxu0 0.0
        %2776 = vmatpush1.msra.mxu0 0.0
        %2777 = vmatprep.subr.mxu0 0.0
        %2778 = vmatpush1.msra.mxu0 0.0
        %2779 = vmatprep.subr.mxu0 0.0
        %2780 = vmatpush1.msra.mxu0 0.0
        %2781 = vmatprep.mubr.f32.mxu0 0.0
        %2782 = vmatmul.mubr.f32.gmra.mrb[0].mxu0 %v646
        %v2783 = vpop.f32.mrb[0].mxu0
        %v2784 = vadd.f32 0.0, %v2783
        %v2785 = vpop.f32.mrb[0].mxu0
        %2786 = vmatprep.mubr.f32.mxu0 0.0
        %2787 = vmatmul.mubr.f32.gmra.mrb[0].mxu0 %v648
        %v2788 = vpop.f32.mrb[0].mxu0
        %v2789 = vadd.f32 0.0, %v2788
        %v2790 = vpop.f32.mrb[0].mxu0
        %2791 = vmatprep.mubr.f32.mxu0 0.0
        %2792 = vmatmul.mubr.f32.gmra.mrb[0].mxu0 %v650
        %v2793 = vpop.f32.mrb[0].mxu0
        %v2794 = vadd.f32 0.0, %v2793
        %v2795 = vpop.f32.mrb[0].mxu0
        %2796 = vmatprep.mubr.f32.mxu0 0.0
        %2797 = vmatmul.mubr.f32.gmra.mrb[0].mxu0 %v652
        %v2798 = vpop.f32.mrb[0].mxu0
        %v2799 = vadd.f32 0.0, %v2798
        %v2800 = vpop.f32.mrb[0].mxu0
        %2801 = vmatprep.mubr.f32.mxu0 0.0
        %2802 = vmatmul.mubr.f32.gmra.mrb[0].mxu0 %v654
        %v2803 = vpop.f32.mrb[0].mxu0
        %v2804 = vadd.f32 0.0, %v2803
        %v2805 = vpop.f32.mrb[0].mxu0
        %2806 = vmatprep.mubr.f32.mxu0 0.0
        %2807 = vmatmul.mubr.f32.gmra.mrb[0].mxu0 %v656
        %v2808 = vpop.f32.mrb[0].mxu0
        %v2809 = vadd.f32 0.0, %v2808
        %v2810 = vpop.f32.mrb[0].mxu0
        %2811 = vmatprep.mubr.f32.mxu0 0.0
        %2812 = vmatmul.mubr.f32.gmra.mrb[0].mxu0 %v658
        %v2813 = vpop.f32.mrb[0].mxu0
        %v2814 = vadd.f32 0.0, %v2813
        %v2815 = vpop.f32.mrb[0].mxu0
        %2816 = vmatprep.mubr.f32.mxu0 0.0
        %2817 = vmatmul.mubr.f32.gmra.mrb[0].mxu0 %v660
        %v2818 = vpop.f32.mrb[0].mxu0
        %v2819 = vadd.f32 0.0, %v2818
        %v2820 = vpop.f32.mrb[0].mxu0
        %2821 = vmatprep.mubr.f32.mxu0 0.0
        %2822 = vmatmul.mubr.f32.gmra.mrb[0].mxu0 %v662
        %v2823 = vpop.f32.mrb[0].mxu0
        %v2824 = vadd.f32 0.0, %v2823
        %v2825 = vpop.f32.mrb[0].mxu0
        %2826 = vmatprep.mubr.f32.mxu0 0.0
        %2827 = vmatmul.mubr.f32.gmra.mrb[0].mxu0 %v664
        %v2828 = vpop.f32.mrb[0].mxu0
        %v2829 = vadd.f32 0.0, %v2828
        %v2830 = vpop.f32.mrb[0].mxu0
        %2831 = vmatprep.mubr.f32.mxu0 0.0
        %2832 = vmatmul.mubr.f32.gmra.mrb[0].mxu0 %v666
        %v2833 = vpop.f32.mrb[0].mxu0
        %v2834 = vadd.f32 0.0, %v2833
        %v2835 = vpop.f32.mrb[0].mxu0
        %2836 = vmatprep.mubr.f32.mxu0 0.0
        %2837 = vmatmul.mubr.f32.gmra.mrb[0].mxu0 %v668
        %v2838 = vpop.f32.mrb[0].mxu0
        %v2839 = vadd.f32 0.0, %v2838
        %v2840 = vpop.f32.mrb[0].mxu0
        %2841 = vmatprep.mubr.f32.mxu0 0.0
        %2842 = vmatmul.mubr.f32.gmra.mrb[0].mxu0 %v670
        %v2843 = vpop.f32.mrb[0].mxu0
        %v2844 = vadd.f32 0.0, %v2843
        %v2845 = vpop.f32.mrb[0].mxu0
        %2846 = vmatprep.mubr.f32.mxu0 0.0
        %2847 = vmatmul.mubr.f32.gmra.mrb[0].mxu0 %v672
        %v2848 = vpop.f32.mrb[0].mxu0
        %v2849 = vadd.f32 0.0, %v2848
        %v2850 = vpop.f32.mrb[0].mxu0
        %2851 = vmatprep.mubr.f32.mxu0 0.0
        %2852 = vmatmul.mubr.f32.gmra.mrb[0].mxu0 %v674
        %v2853 = vpop.f32.mrb[0].mxu0
        %v2854 = vadd.f32 0.0, %v2853
        %v2855 = vpop.f32.mrb[0].mxu0
        %2856 = vmatprep.mubr.f32.mxu0 0.0
        %2857 = vmatmul.mubr.f32.gmra.mrb[0].mxu0 %v676
        %v2858 = vpop.f32.mrb[0].mxu0
        %v2859 = vadd.f32 0.0, %v2858
        %v2860 = vpop.f32.mrb[0].mxu0
        %2861 = vmatprep.mubr.f32.mxu0 0.0
        %2862 = vmatmul.mubr.f32.gmra.mrb[0].mxu0 %v678
        %v2863 = vpop.f32.mrb[0].mxu0
        %v2864 = vadd.f32 0.0, %v2863
        %v2865 = vpop.f32.mrb[0].mxu0
        %2866 = vmatprep.mubr.f32.mxu0 0.0
        %2867 = vmatmul.mubr.f32.gmra.mrb[0].mxu0 %v680
        %v2868 = vpop.f32.mrb[0].mxu0
        %v2869 = vadd.f32 0.0, %v2868
        %v2870 = vpop.f32.mrb[0].mxu0
        %2871 = vmatprep.mubr.f32.mxu0 0.0
        %2872 = vmatmul.mubr.f32.gmra.mrb[0].mxu0 %v682
        %v2873 = vpop.f32.mrb[0].mxu0
        %v2874 = vadd.f32 0.0, %v2873
        %v2875 = vpop.f32.mrb[0].mxu0
        %2876 = vmatprep.mubr.f32.mxu0 0.0
        %2877 = vmatmul.mubr.f32.gmra.mrb[0].mxu0 %v684
        %v2878 = vpop.f32.mrb[0].mxu0
        %v2879 = vadd.f32 0.0, %v2878
        %v2880 = vpop.f32.mrb[0].mxu0
        %2881 = vmatprep.mubr.f32.mxu0 0.0
        %2882 = vmatmul.mubr.f32.gmra.mrb[0].mxu0 %v686
        %v2883 = vpop.f32.mrb[0].mxu0
        %v2884 = vadd.f32 0.0, %v2883
        %v2885 = vpop.f32.mrb[0].mxu0
        %2886 = vmatprep.mubr.f32.mxu0 0.0
        %2887 = vmatmul.mubr.f32.gmra.mrb[0].mxu0 %v688
        %v2888 = vpop.f32.mrb[0].mxu0
        %v2889 = vadd.f32 0.0, %v2888
        %v2890 = vpop.f32.mrb[0].mxu0
        %2891 = vmatprep.mubr.f32.mxu0 0.0
        %2892 = vmatmul.mubr.f32.gmra.mrb[0].mxu0 %v690
        %v2893 = vpop.f32.mrb[0].mxu0
        %v2894 = vadd.f32 0.0, %v2893
        %v2895 = vpop.f32.mrb[0].mxu0
        %2896 = vmatprep.mubr.f32.mxu0 0.0
        %2897 = vmatmul.mubr.f32.gmra.mrb[0].mxu0 %v692
        %v2898 = vpop.f32.mrb[0].mxu0
        %v2899 = vadd.f32 0.0, %v2898
        %v2900 = vpop.f32.mrb[0].mxu0
        %2901 = vmatprep.mubr.f32.mxu0 0.0
        %2902 = vmatmul.mubr.f32.gmra.mrb[0].mxu0 %v694
        %v2903 = vpop.f32.mrb[0].mxu0
        %v2904 = vadd.f32 0.0, %v2903
        %v2905 = vpop.f32.mrb[0].mxu0
        %2906 = vmatprep.mubr.f32.mxu0 0.0
        %2907 = vmatmul.mubr.f32.gmra.mrb[0].mxu0 %v696
        %v2908 = vpop.f32.mrb[0].mxu0
        %v2909 = vadd.f32 0.0, %v2908
        %v2910 = vpop.f32.mrb[0].mxu0
        %2911 = vmatprep.mubr.f32.mxu0 0.0
        %2912 = vmatmul.mubr.f32.gmra.mrb[0].mxu0 %v698
        %v2913 = vpop.f32.mrb[0].mxu0
        %v2914 = vadd.f32 0.0, %v2913
        %v2915 = vpop.f32.mrb[0].mxu0
        %2916 = vmatprep.mubr.f32.mxu0 0.0
        %2917 = vmatmul.mubr.f32.gmra.mrb[0].mxu0 %v700
        %v2918 = vpop.f32.mrb[0].mxu0
        %v2919 = vadd.f32 0.0, %v2918
        %v2920 = vpop.f32.mrb[0].mxu0
        %2921 = vmatprep.mubr.f32.mxu0 0.0
        %2922 = vmatmul.mubr.f32.gmra.mrb[0].mxu0 %v1903
        %v2923 = vpop.f32.mrb[0].mxu0
        %v2924 = vadd.f32 0.0, %v2923
        %v2925 = vpop.f32.mrb[0].mxu0
        %2926 = vmatprep.mubr.f32.mxu0 0.0
        %2927 = vmatmul.mubr.f32.gmra.mrb[0].mxu0 %v1905
        %v2928 = vpop.f32.mrb[0].mxu0
        %v2929 = vadd.f32 0.0, %v2928
        %v2930 = vpop.f32.mrb[0].mxu0
        %2931 = vmatprep.mubr.f32.mxu0 0.0
        %2932 = vmatmul.mubr.f32.gmra.mrb[0].mxu0 %v2711
        %v2933 = vpop.f32.mrb[0].mxu0
        %v2934 = vadd.f32 0.0, %v2933
        %v2935 = vpop.f32.mrb[0].mxu0
        %2936 = vmatprep.mubr.f32.mxu0 0.0
        %2937 = vmatmul.mubr.f32.gmra.mrb[0].mxu0 %v2713
        %v2938 = vpop.f32.mrb[0].mxu0
        %v2939 = vadd.f32 0.0, %v2938
        %v2940 = vpop.f32.mrb[0].mxu0
        %2941 = vdwg.mxu0
        %v2942 = vadd.f32 %v2672, %v2784
        %v2943 = vadd.f32 %v2673, %v2789
        %v2944 = vadd.f32 %v2674, %v2794
        %v2945 = vadd.f32 %v2675, %v2799
        %v2946 = vadd.f32 %v2676, %v2804
        %v2947 = vadd.f32 %v2677, %v2809
        %v2948 = vadd.f32 %v2678, %v2814
        %v2949 = vadd.f32 %v2679, %v2819
        %v2950 = vadd.f32 %v2680, %v2824
        %v2951 = vadd.f32 %v2681, %v2829
        %v2952 = vadd.f32 %v2682, %v2834
        %v2953 = vadd.f32 %v2683, %v2839
        %v2954 = vadd.f32 %v2684, %v2844
        %v2955 = vadd.f32 %v2685, %v2849
        %v2956 = vadd.f32 %v2686, %v2854
        %v2957 = vadd.f32 %v2687, %v2859
        %v2958 = vadd.f32 %v2688, %v2864
        %v2959 = vadd.f32 %v2689, %v2869
        %v2960 = vadd.f32 %v2690, %v2874
        %v2961 = vadd.f32 %v2691, %v2879
        %v2962 = vadd.f32 %v2692, %v2884
        %v2963 = vadd.f32 %v2693, %v2889
        %v2964 = vadd.f32 %v2694, %v2894
        %v2965 = vadd.f32 %v2695, %v2899
        %v2966 = vadd.f32 %v2696, %v2904
        %v2967 = vadd.f32 %v2697, %v2909
        %v2968 = vadd.f32 %v2698, %v2914
        %v2969 = vadd.f32 %v2699, %v2919
        %v2970 = vadd.f32 %v2700, %v2924
        %v2971 = vadd.f32 %v2701, %v2929
        %v2972 = vadd.f32 %v2702, %v2934
        %v2973 = vadd.f32 %v2703, %v2939
        %v2974 = vrot.slane %v498, 2
        %v2975 = vrot.slane %v499, 2
        %v2976 = vsel %vm1221, %v2974, %v2975
        %v2977 = vrot.slane %v500, 2
        %v2978 = vsel %vm1221, %v2975, %v2977
        %v2980 = vrot.slane %v505, 6
        %v2981 = vrot.slane %v506, 6
        %v2982 = vsel %vm1303, %v2980, %v2981
        %v2983 = vsel %vm240, %v2976, 0
        %v2985 = vsel %vm240, %v2978, 0
        %v2987 = vsel %vm702, %v2982, 0
        %2989 = vmatprep.subr.mxu0 0.0
        %2990 = vmatpush1.msra.mxu0 %v2987
        %2991 = vmatprep.subr.mxu0 0.0
        %2992 = vmatpush1.msra.mxu0 0.0
        %2993 = vmatprep.subr.mxu0 0.0
        %2994 = vmatpush1.msra.mxu0 0.0
        %2995 = vmatprep.subr.mxu0 0.0
        %2996 = vmatpush1.msra.mxu0 0.0
        %2997 = vmatprep.subr.mxu0 0.0
        %2998 = vmatpush1.msra.mxu0 0.0
        %2999 = vmatprep.subr.mxu0 0.0
        %3000 = vmatpush1.msra.mxu0 0.0
        %3001 = vmatprep.subr.mxu0 0.0
        %3002 = vmatpush1.msra.mxu0 0.0
        %3003 = vmatprep.subr.mxu0 0.0
        %3004 = vmatpush1.msra.mxu0 0.0
        %3005 = vmatprep.subr.mxu0 0.0
        %3006 = vmatpush1.msra.mxu0 0.0
        %3007 = vmatprep.subr.mxu0 0.0
        %3008 = vmatpush1.msra.mxu0 0.0
        %3009 = vmatprep.subr.mxu0 0.0
        %3010 = vmatpush1.msra.mxu0 0.0
        %3011 = vmatprep.subr.mxu0 0.0
        %3012 = vmatpush1.msra.mxu0 0.0
        %3013 = vmatprep.subr.mxu0 0.0
        %3014 = vmatpush1.msra.mxu0 0.0
        %3015 = vmatprep.subr.mxu0 0.0
        %3016 = vmatpush1.msra.mxu0 0.0
        %3017 = vmatprep.subr.mxu0 0.0
        %3018 = vmatpush1.msra.mxu0 0.0
        %3019 = vmatprep.subr.mxu0 0.0
        %3020 = vmatpush1.msra.mxu0 0.0
        %3021 = vmatprep.subr.mxu0 0.0
        %3022 = vmatpush1.msra.mxu0 0.0
        %3023 = vmatprep.subr.mxu0 0.0
        %3024 = vmatpush1.msra.mxu0 0.0
        %3025 = vmatprep.subr.mxu0 0.0
        %3026 = vmatpush1.msra.mxu0 0.0
        %3027 = vmatprep.subr.mxu0 0.0
        %3028 = vmatpush1.msra.mxu0 0.0
        %3029 = vmatprep.subr.mxu0 0.0
        %3030 = vmatpush1.msra.mxu0 0.0
        %3031 = vmatprep.subr.mxu0 0.0
        %3032 = vmatpush1.msra.mxu0 0.0
        %3033 = vmatprep.subr.mxu0 0.0
        %3034 = vmatpush1.msra.mxu0 0.0
        %3035 = vmatprep.subr.mxu0 0.0
        %3036 = vmatpush1.msra.mxu0 0.0
        %3037 = vmatprep.subr.mxu0 0.0
        %3038 = vmatpush1.msra.mxu0 0.0
        %3039 = vmatprep.subr.mxu0 0.0
        %3040 = vmatpush1.msra.mxu0 0.0
        %3041 = vmatprep.subr.mxu0 0.0
        %3042 = vmatpush1.msra.mxu0 0.0
        %3043 = vmatprep.subr.mxu0 0.0
        %3044 = vmatpush1.msra.mxu0 0.0
        %3045 = vmatprep.subr.mxu0 0.0
        %3046 = vmatpush1.msra.mxu0 0.0
        %3047 = vmatprep.subr.mxu0 0.0
        %3048 = vmatpush1.msra.mxu0 0.0
        %3049 = vmatprep.subr.mxu0 0.0
        %3050 = vmatpush1.msra.mxu0 0.0
        %3051 = vmatprep.subr.mxu0 0.0
        %3052 = vmatpush1.msra.mxu0 0.0
        %3053 = vmatprep.mubr.f32.mxu0 0.0
        %3054 = vmatmul.mubr.f32.gmra.mrb[0].mxu0 %v1315
        %v3055 = vpop.f32.mrb[0].mxu0
        %v3056 = vadd.f32 0.0, %v3055
        %v3057 = vpop.f32.mrb[0].mxu0
        %3058 = vmatprep.mubr.f32.mxu0 0.0
        %3059 = vmatmul.mubr.f32.gmra.mrb[0].mxu0 %v1317
        %v3060 = vpop.f32.mrb[0].mxu0
        %v3061 = vadd.f32 0.0, %v3060
        %v3062 = vpop.f32.mrb[0].mxu0
        %3063 = vmatprep.mubr.f32.mxu0 0.0
        %3064 = vmatmul.mubr.f32.gmra.mrb[0].mxu0 %v1319
        %v3065 = vpop.f32.mrb[0].mxu0
        %v3066 = vadd.f32 0.0, %v3065
        %v3067 = vpop.f32.mrb[0].mxu0
        %3068 = vmatprep.mubr.f32.mxu0 0.0
        %3069 = vmatmul.mubr.f32.gmra.mrb[0].mxu0 %v1321
        %v3070 = vpop.f32.mrb[0].mxu0
        %v3071 = vadd.f32 0.0, %v3070
        %v3072 = vpop.f32.mrb[0].mxu0
        %3073 = vmatprep.mubr.f32.mxu0 0.0
        %3074 = vmatmul.mubr.f32.gmra.mrb[0].mxu0 %v1323
        %v3075 = vpop.f32.mrb[0].mxu0
        %v3076 = vadd.f32 0.0, %v3075
        %v3077 = vpop.f32.mrb[0].mxu0
        %3078 = vmatprep.mubr.f32.mxu0 0.0
        %3079 = vmatmul.mubr.f32.gmra.mrb[0].mxu0 %v1325
        %v3080 = vpop.f32.mrb[0].mxu0
        %v3081 = vadd.f32 0.0, %v3080
        %v3082 = vpop.f32.mrb[0].mxu0
        %3083 = vmatprep.mubr.f32.mxu0 0.0
        %3084 = vmatmul.mubr.f32.gmra.mrb[0].mxu0 %v1327
        %v3085 = vpop.f32.mrb[0].mxu0
        %v3086 = vadd.f32 0.0, %v3085
        %v3087 = vpop.f32.mrb[0].mxu0
        %3088 = vmatprep.mubr.f32.mxu0 0.0
        %3089 = vmatmul.mubr.f32.gmra.mrb[0].mxu0 %v1329
        %v3090 = vpop.f32.mrb[0].mxu0
        %v3091 = vadd.f32 0.0, %v3090
        %v3092 = vpop.f32.mrb[0].mxu0
        %3093 = vmatprep.mubr.f32.mxu0 0.0
        %3094 = vmatmul.mubr.f32.gmra.mrb[0].mxu0 %v1331
        %v3095 = vpop.f32.mrb[0].mxu0
        %v3096 = vadd.f32 0.0, %v3095
        %v3097 = vpop.f32.mrb[0].mxu0
        %3098 = vmatprep.mubr.f32.mxu0 0.0
        %3099 = vmatmul.mubr.f32.gmra.mrb[0].mxu0 %v1333
        %v3100 = vpop.f32.mrb[0].mxu0
        %v3101 = vadd.f32 0.0, %v3100
        %v3102 = vpop.f32.mrb[0].mxu0
        %3103 = vmatprep.mubr.f32.mxu0 0.0
        %3104 = vmatmul.mubr.f32.gmra.mrb[0].mxu0 %v1335
        %v3105 = vpop.f32.mrb[0].mxu0
        %v3106 = vadd.f32 0.0, %v3105
        %v3107 = vpop.f32.mrb[0].mxu0
        %3108 = vmatprep.mubr.f32.mxu0 0.0
        %3109 = vmatmul.mubr.f32.gmra.mrb[0].mxu0 %v1337
        %v3110 = vpop.f32.mrb[0].mxu0
        %v3111 = vadd.f32 0.0, %v3110
        %v3112 = vpop.f32.mrb[0].mxu0
        %3113 = vmatprep.mubr.f32.mxu0 0.0
        %3114 = vmatmul.mubr.f32.gmra.mrb[0].mxu0 %v1339
        %v3115 = vpop.f32.mrb[0].mxu0
        %v3116 = vadd.f32 0.0, %v3115
        %v3117 = vpop.f32.mrb[0].mxu0
        %3118 = vmatprep.mubr.f32.mxu0 0.0
        %3119 = vmatmul.mubr.f32.gmra.mrb[0].mxu0 %v1341
        %v3120 = vpop.f32.mrb[0].mxu0
        %v3121 = vadd.f32 0.0, %v3120
        %v3122 = vpop.f32.mrb[0].mxu0
        %3123 = vmatprep.mubr.f32.mxu0 0.0
        %3124 = vmatmul.mubr.f32.gmra.mrb[0].mxu0 %v1343
        %v3125 = vpop.f32.mrb[0].mxu0
        %v3126 = vadd.f32 0.0, %v3125
        %v3127 = vpop.f32.mrb[0].mxu0
        %3128 = vmatprep.mubr.f32.mxu0 0.0
        %3129 = vmatmul.mubr.f32.gmra.mrb[0].mxu0 %v1345
        %v3130 = vpop.f32.mrb[0].mxu0
        %v3131 = vadd.f32 0.0, %v3130
        %v3132 = vpop.f32.mrb[0].mxu0
        %3133 = vmatprep.mubr.f32.mxu0 0.0
        %3134 = vmatmul.mubr.f32.gmra.mrb[0].mxu0 %v1347
        %v3135 = vpop.f32.mrb[0].mxu0
        %v3136 = vadd.f32 0.0, %v3135
        %v3137 = vpop.f32.mrb[0].mxu0
        %3138 = vmatprep.mubr.f32.mxu0 0.0
        %3139 = vmatmul.mubr.f32.gmra.mrb[0].mxu0 %v1349
        %v3140 = vpop.f32.mrb[0].mxu0
        %v3141 = vadd.f32 0.0, %v3140
        %v3142 = vpop.f32.mrb[0].mxu0
        %3143 = vmatprep.mubr.f32.mxu0 0.0
        %3144 = vmatmul.mubr.f32.gmra.mrb[0].mxu0 %v1351
        %v3145 = vpop.f32.mrb[0].mxu0
        %v3146 = vadd.f32 0.0, %v3145
        %v3147 = vpop.f32.mrb[0].mxu0
        %3148 = vmatprep.mubr.f32.mxu0 0.0
        %3149 = vmatmul.mubr.f32.gmra.mrb[0].mxu0 %v1353
        %v3150 = vpop.f32.mrb[0].mxu0
        %v3151 = vadd.f32 0.0, %v3150
        %v3152 = vpop.f32.mrb[0].mxu0
        %3153 = vmatprep.mubr.f32.mxu0 0.0
        %3154 = vmatmul.mubr.f32.gmra.mrb[0].mxu0 %v1355
        %v3155 = vpop.f32.mrb[0].mxu0
        %v3156 = vadd.f32 0.0, %v3155
        %v3157 = vpop.f32.mrb[0].mxu0
        %3158 = vmatprep.mubr.f32.mxu0 0.0
        %3159 = vmatmul.mubr.f32.gmra.mrb[0].mxu0 %v1357
        %v3160 = vpop.f32.mrb[0].mxu0
        %v3161 = vadd.f32 0.0, %v3160
        %v3162 = vpop.f32.mrb[0].mxu0
        %3163 = vmatprep.mubr.f32.mxu0 0.0
        %3164 = vmatmul.mubr.f32.gmra.mrb[0].mxu0 %v1359
        %v3165 = vpop.f32.mrb[0].mxu0
        %v3166 = vadd.f32 0.0, %v3165
        %v3167 = vpop.f32.mrb[0].mxu0
        %3168 = vmatprep.mubr.f32.mxu0 0.0
        %3169 = vmatmul.mubr.f32.gmra.mrb[0].mxu0 %v1361
        %v3170 = vpop.f32.mrb[0].mxu0
        %v3171 = vadd.f32 0.0, %v3170
        %v3172 = vpop.f32.mrb[0].mxu0
        %3173 = vmatprep.mubr.f32.mxu0 0.0
        %3174 = vmatmul.mubr.f32.gmra.mrb[0].mxu0 %v1363
        %v3175 = vpop.f32.mrb[0].mxu0
        %v3176 = vadd.f32 0.0, %v3175
        %v3177 = vpop.f32.mrb[0].mxu0
        %3178 = vmatprep.mubr.f32.mxu0 0.0
        %3179 = vmatmul.mubr.f32.gmra.mrb[0].mxu0 %v1365
        %v3180 = vpop.f32.mrb[0].mxu0
        %v3181 = vadd.f32 0.0, %v3180
        %v3182 = vpop.f32.mrb[0].mxu0
        %3183 = vmatprep.mubr.f32.mxu0 0.0
        %3184 = vmatmul.mubr.f32.gmra.mrb[0].mxu0 %v1367
        %v3185 = vpop.f32.mrb[0].mxu0
        %v3186 = vadd.f32 0.0, %v3185
        %v3187 = vpop.f32.mrb[0].mxu0
        %3188 = vmatprep.mubr.f32.mxu0 0.0
        %3189 = vmatmul.mubr.f32.gmra.mrb[0].mxu0 %v1369
        %v3190 = vpop.f32.mrb[0].mxu0
        %v3191 = vadd.f32 0.0, %v3190
        %v3192 = vpop.f32.mrb[0].mxu0
        %3193 = vmatprep.mubr.f32.mxu0 0.0
        %3194 = vmatmul.mubr.f32.gmra.mrb[0].mxu0 %v2175
        %v3195 = vpop.f32.mrb[0].mxu0
        %v3196 = vadd.f32 0.0, %v3195
        %v3197 = vpop.f32.mrb[0].mxu0
        %3198 = vmatprep.mubr.f32.mxu0 0.0
        %3199 = vmatmul.mubr.f32.gmra.mrb[0].mxu0 %v2177
        %v3200 = vpop.f32.mrb[0].mxu0
        %v3201 = vadd.f32 0.0, %v3200
        %v3202 = vpop.f32.mrb[0].mxu0
        %3203 = vmatprep.mubr.f32.mxu0 0.0
        %3204 = vmatmul.mubr.f32.gmra.mrb[0].mxu0 %v2983
        %v3205 = vpop.f32.mrb[0].mxu0
        %v3206 = vadd.f32 0.0, %v3205
        %v3207 = vpop.f32.mrb[0].mxu0
        %3208 = vmatprep.mubr.f32.mxu0 0.0
        %3209 = vmatmul.mubr.f32.gmra.mrb[0].mxu0 %v2985
        %v3210 = vpop.f32.mrb[0].mxu0
        %v3211 = vadd.f32 0.0, %v3210
        %v3212 = vpop.f32.mrb[0].mxu0
        %3213 = vdwg.mxu0
        %v3214 = vadd.f32 %v2942, %v3056
        %v3215 = vadd.f32 %v2943, %v3061
        %v3216 = vadd.f32 %v2944, %v3066
        %v3217 = vadd.f32 %v2945, %v3071
        %v3218 = vadd.f32 %v2946, %v3076
        %v3219 = vadd.f32 %v2947, %v3081
        %v3220 = vadd.f32 %v2948, %v3086
        %v3221 = vadd.f32 %v2949, %v3091
        %v3222 = vadd.f32 %v2950, %v3096
        %v3223 = vadd.f32 %v2951, %v3101
        %v3224 = vadd.f32 %v2952, %v3106
        %v3225 = vadd.f32 %v2953, %v3111
        %v3226 = vadd.f32 %v2954, %v3116
        %v3227 = vadd.f32 %v2955, %v3121
        %v3228 = vadd.f32 %v2956, %v3126
        %v3229 = vadd.f32 %v2957, %v3131
        %v3230 = vadd.f32 %v2958, %v3136
        %v3231 = vadd.f32 %v2959, %v3141
        %v3232 = vadd.f32 %v2960, %v3146
        %v3233 = vadd.f32 %v2961, %v3151
        %v3234 = vadd.f32 %v2962, %v3156
        %v3235 = vadd.f32 %v2963, %v3161
        %v3236 = vadd.f32 %v2964, %v3166
        %v3237 = vadd.f32 %v2965, %v3171
        %v3238 = vadd.f32 %v2966, %v3176
        %v3239 = vadd.f32 %v2967, %v3181
        %v3240 = vadd.f32 %v2968, %v3186
        %v3241 = vadd.f32 %v2969, %v3191
        %v3242 = vadd.f32 %v2970, %v3196
        %v3243 = vadd.f32 %v2971, %v3201
        %v3244 = vadd.f32 %v2972, %v3206
        %v3245 = vadd.f32 %v2973, %v3211
        %3246 = vst [vmem:[#allocation4] sm:$0xff] %v3214
        %3247 = vst [vmem:[#allocation4 + $0x8] sm:$0xff] %v3215
        %3248 = vst [vmem:[#allocation4 + $0x10] sm:$0xff] %v3216
        %3249 = vst [vmem:[#allocation4 + $0x18] sm:$0xff] %v3217
        %3250 = vst [vmem:[#allocation4 + $0x20] sm:$0xff] %v3218
        %3251 = vst [vmem:[#allocation4 + $0x28] sm:$0xff] %v3219
        %3252 = vst [vmem:[#allocation4 + $0x30] sm:$0xff] %v3220
        %3253 = vst [vmem:[#allocation4 + $0x38] sm:$0xff] %v3221
        %3254 = vst [vmem:[#allocation4 + $0x40] sm:$0xff] %v3222
        %3255 = vst [vmem:[#allocation4 + $0x48] sm:$0xff] %v3223
        %3256 = vst [vmem:[#allocation4 + $0x50] sm:$0xff] %v3224
        %3257 = vst [vmem:[#allocation4 + $0x58] sm:$0xff] %v3225
        %3258 = vst [vmem:[#allocation4 + $0x60] sm:$0xff] %v3226
        %3259 = vst [vmem:[#allocation4 + $0x68] sm:$0xff] %v3227
        %3260 = vst [vmem:[#allocation4 + $0x70] sm:$0xff] %v3228
        %3261 = vst [vmem:[#allocation4 + $0x78] sm:$0xff] %v3229
        %3262 = vst [vmem:[#allocation4 + $0x80] sm:$0xff] %v3230
        %3263 = vst [vmem:[#allocation4 + $0x88] sm:$0xff] %v3231
        %3264 = vst [vmem:[#allocation4 + $0x90] sm:$0xff] %v3232
        %3265 = vst [vmem:[#allocation4 + $0x98] sm:$0xff] %v3233
        %3266 = vst [vmem:[#allocation4 + $0xa0] sm:$0xff] %v3234
        %3267 = vst [vmem:[#allocation4 + $0xa8] sm:$0xff] %v3235
        %3268 = vst [vmem:[#allocation4 + $0xb0] sm:$0xff] %v3236
        %3269 = vst [vmem:[#allocation4 + $0xb8] sm:$0xff] %v3237
        %3270 = vst [vmem:[#allocation4 + $0xc0] sm:$0xff] %v3238
        %3271 = vst [vmem:[#allocation4 + $0xc8] sm:$0xff] %v3239
        %3272 = vst [vmem:[#allocation4 + $0xd0] sm:$0xff] %v3240
        %3273 = vst [vmem:[#allocation4 + $0xd8] sm:$0xff] %v3241
        %3274 = vst [vmem:[#allocation4 + $0xe0] sm:$0xff] %v3242
        %3275 = vst [vmem:[#allocation4 + $0xe8] sm:$0xff] %v3243
        %3276 = vst [vmem:[#allocation4 + $0xf0] sm:$0xff] %v3244
        %3277 = vst [vmem:[#allocation4 + $0xf8] sm:$0xff] %v3245
        %v3278 = vmax.f32 %v3214, 0.0
        %v3279 = vmax.f32 %v3215, 0.0
        %v3280 = vmax.f32 %v3216, 0.0
        %v3281 = vmax.f32 %v3217, 0.0
        %v3282 = vmax.f32 %v3218, 0.0
        %v3283 = vmax.f32 %v3219, 0.0
        %v3284 = vmax.f32 %v3220, 0.0
        %v3285 = vmax.f32 %v3221, 0.0
        %v3286 = vmax.f32 %v3222, 0.0
        %v3287 = vmax.f32 %v3223, 0.0
        %v3288 = vmax.f32 %v3224, 0.0
        %v3289 = vmax.f32 %v3225, 0.0
        %v3290 = vmax.f32 %v3226, 0.0
        %v3291 = vmax.f32 %v3227, 0.0
        %v3292 = vmax.f32 %v3228, 0.0
        %v3293 = vmax.f32 %v3229, 0.0
        %v3294 = vmax.f32 %v3230, 0.0
        %v3295 = vmax.f32 %v3231, 0.0
        %v3296 = vmax.f32 %v3232, 0.0
        %v3297 = vmax.f32 %v3233, 0.0
        %v3298 = vmax.f32 %v3234, 0.0
        %v3299 = vmax.f32 %v3235, 0.0
        %v3300 = vmax.f32 %v3236, 0.0
        %v3301 = vmax.f32 %v3237, 0.0
        %v3302 = vmax.f32 %v3238, 0.0
        %v3303 = vmax.f32 %v3239, 0.0
        %v3304 = vmax.f32 %v3240, 0.0
        %v3305 = vmax.f32 %v3241, 0.0
        %v3306 = vmax.f32 %v3242, 0.0
        %v3307 = vmax.f32 %v3243, 0.0
        %v3308 = vmax.f32 %v3244, 0.0
        %v3309 = vmax.f32 %v3245, 0.0
        %s3310 = scalar_lea.vmem [#allocation3], 24
        %3311 = vst [vmem:[%s3310 + $0x1] sm:$0xff] %v3278
        %3312 = vst [vmem:[%s3310 + $0x9] sm:$0xff] %v3279
        %3313 = vst [vmem:[%s3310 + $0x19] sm:$0xff] %v3280
        %3314 = vst [vmem:[%s3310 + $0x21] sm:$0xff] %v3281
        %3315 = vst [vmem:[%s3310 + $0x31] sm:$0xff] %v3282
        %3316 = vst [vmem:[%s3310 + $0x39] sm:$0xff] %v3283
        %3317 = vst [vmem:[%s3310 + $0x49] sm:$0xff] %v3284
        %3318 = vst [vmem:[%s3310 + $0x51] sm:$0xff] %v3285
        %3319 = vst [vmem:[%s3310 + $0x61] sm:$0xff] %v3286
        %3320 = vst [vmem:[%s3310 + $0x69] sm:$0xff] %v3287
        %3321 = vst [vmem:[%s3310 + $0x79] sm:$0xff] %v3288
        %3322 = vst [vmem:[%s3310 + $0x81] sm:$0xff] %v3289
        %3323 = vst [vmem:[%s3310 + $0x91] sm:$0xff] %v3290
        %3324 = vst [vmem:[%s3310 + $0x99] sm:$0xff] %v3291
        %3325 = vst [vmem:[%s3310 + $0xa9] sm:$0xff] %v3292
        %3326 = vst [vmem:[%s3310 + $0xb1] sm:$0xff] %v3293
        %3327 = vst [vmem:[%s3310 + $0xc1] sm:$0xff] %v3294
        %3328 = vst [vmem:[%s3310 + $0xc9] sm:$0xff] %v3295
        %3329 = vst [vmem:[%s3310 + $0xd9] sm:$0xff] %v3296
        %3330 = vst [vmem:[%s3310 + $0xe1] sm:$0xff] %v3297
        %3331 = vst [vmem:[%s3310 + $0xf1] sm:$0xff] %v3298
        %3332 = vst [vmem:[%s3310 + $0xf9] sm:$0xff] %v3299
        %3333 = vst [vmem:[%s3310 + $0x109] sm:$0xff] %v3300
        %3334 = vst [vmem:[%s3310 + $0x111] sm:$0xff] %v3301
        %3335 = vst [vmem:[%s3310 + $0x121] sm:$0xff] %v3302
        %3336 = vst [vmem:[%s3310 + $0x129] sm:$0xff] %v3303
        %3337 = vst [vmem:[%s3310 + $0x139] sm:$0xff] %v3304
        %3338 = vst [vmem:[%s3310 + $0x141] sm:$0xff] %v3305
        %3339 = vst [vmem:[%s3310 + $0x151] sm:$0xff] %v3306
        %3340 = vst [vmem:[%s3310 + $0x159] sm:$0xff] %v3307
        %3341 = vst [vmem:[%s3310 + $0x169] sm:$0xff] %v3308
        %3342 = vst [vmem:[%s3310 + $0x171] sm:$0xff] %v3309
        loop: start=0, step=1, limit=25
        $region45: #{drrn_forward.1} parent=39 // loop_pre_header
          _
        $region46: #{drrn_forward.1} parent=39 // loop_header
          %s3344 = sphi 0, %s3348
          %p3345 = scmp.ge.s32.totalorder %s3344, 25
        $region47: #{drrn_forward.1} parent=39 // loop_header_branch
          %3347 = sbr.rel (%p3345) target = $region51
        $region48: #{drrn_forward.1} parent=39 // loop_body
          %v3349 = vld [vmem:[#allocation3] sm:$0xff]
          %v3350 = vld [vmem:[#allocation3 + $0x8] sm:$0xff]
          %v3351 = vld [vmem:[#allocation3 + $0x10] sm:$0x3]
          %v3352 = vld [vmem:[#allocation3 + $0x18] sm:$0xff]
          %v3353 = vld [vmem:[#allocation3 + $0x20] sm:$0xff]
          %v3354 = vld [vmem:[#allocation3 + $0x28] sm:$0x3]
          %v3355 = vld [vmem:[#allocation3 + $0x30] sm:$0xff]
          %v3356 = vld [vmem:[#allocation3 + $0x38] sm:$0xff]
          %v3357 = vld [vmem:[#allocation3 + $0x40] sm:$0x3]
          %v3358 = vld [vmem:[#allocation3 + $0x48] sm:$0xff]
          %v3359 = vld [vmem:[#allocation3 + $0x50] sm:$0xff]
          %v3360 = vld [vmem:[#allocation3 + $0x58] sm:$0x3]
          %v3361 = vld [vmem:[#allocation3 + $0x60] sm:$0xff]
          %v3362 = vld [vmem:[#allocation3 + $0x68] sm:$0xff]
          %v3363 = vld [vmem:[#allocation3 + $0x70] sm:$0x3]
          %v3364 = vld [vmem:[#allocation3 + $0x78] sm:$0xff]
          %v3365 = vld [vmem:[#allocation3 + $0x80] sm:$0xff]
          %v3366 = vld [vmem:[#allocation3 + $0x88] sm:$0x3]
          %v3367 = vld [vmem:[#allocation3 + $0x90] sm:$0xff]
          %v3368 = vld [vmem:[#allocation3 + $0x98] sm:$0xff]
          %v3369 = vld [vmem:[#allocation3 + $0xa0] sm:$0x3]
          %v3370 = vld [vmem:[#allocation3 + $0xa8] sm:$0xff]
          %v3371 = vld [vmem:[#allocation3 + $0xb0] sm:$0xff]
          %v3372 = vld [vmem:[#allocation3 + $0xb8] sm:$0x3]
          %v3373 = vld [vmem:[#allocation3 + $0xc0] sm:$0xff]
          %v3374 = vld [vmem:[#allocation3 + $0xc8] sm:$0xff]
          %v3375 = vld [vmem:[#allocation3 + $0xd0] sm:$0x3]
          %v3376 = vld [vmem:[#allocation3 + $0xd8] sm:$0xff]
          %v3377 = vld [vmem:[#allocation3 + $0xe0] sm:$0xff]
          %v3378 = vld [vmem:[#allocation3 + $0xe8] sm:$0x3]
          %v3379 = vld [vmem:[#allocation3 + $0xf0] sm:$0xff]
          %v3380 = vld [vmem:[#allocation3 + $0xf8] sm:$0xff]
          %v3381 = vld [vmem:[#allocation3 + $0x100] sm:$0x3]
          %v3382 = vld [vmem:[#allocation3 + $0x108] sm:$0xff]
          %v3383 = vld [vmem:[#allocation3 + $0x110] sm:$0xff]
          %v3384 = vld [vmem:[#allocation3 + $0x118] sm:$0x3]
          %v3385 = vld [vmem:[#allocation3 + $0x120] sm:$0xff]
          %v3386 = vld [vmem:[#allocation3 + $0x128] sm:$0xff]
          %v3387 = vld [vmem:[#allocation3 + $0x130] sm:$0x3]
          %v3388 = vld [vmem:[#allocation3 + $0x138] sm:$0xff]
          %v3389 = vld [vmem:[#allocation3 + $0x140] sm:$0xff]
          %v3390 = vld [vmem:[#allocation3 + $0x148] sm:$0x3]
          %v3391 = vld [vmem:[#allocation3 + $0x150] sm:$0xff]
          %v3392 = vld [vmem:[#allocation3 + $0x158] sm:$0xff]
          %v3393 = vld [vmem:[#allocation3 + $0x160] sm:$0x3]
          %v3394 = vld [vmem:[#allocation3 + $0x168] sm:$0xff]
          %v3395 = vld [vmem:[#allocation3 + $0x170] sm:$0xff]
          %v3396 = vld [vmem:[#allocation3 + $0x178] sm:$0x3]
          %v3397 = vld [vmem:[#allocation3 + $0x180] sm:$0xff]
          %v3398 = vld [vmem:[#allocation3 + $0x188] sm:$0xff]
          %v3399 = vld [vmem:[#allocation3 + $0x190] sm:$0x3]
          %v3400 = vld [vmem:[#allocation3 + $0x198] sm:$0xff]
          %v3401 = vld [vmem:[#allocation3 + $0x1a0] sm:$0xff]
          %v3402 = vld [vmem:[#allocation3 + $0x1a8] sm:$0x3]
          %v3451 = vrot.slane %v3349, 1
          %v3452 = vrot.slane %v3350, 1
          %v3453 = vsel %vm555, %v3451, %v3452
          %v3454 = vrot.slane %v3351, 1
          %v3455 = vsel %vm555, %v3452, %v3454
          %v3456 = vrot.slane %v3352, 1
          %v3457 = vrot.slane %v3353, 1
          %v3458 = vsel %vm555, %v3456, %v3457
          %v3459 = vrot.slane %v3354, 1
          %v3460 = vsel %vm555, %v3457, %v3459
          %v3461 = vrot.slane %v3355, 1
          %v3462 = vrot.slane %v3356, 1
          %v3463 = vsel %vm555, %v3461, %v3462
          %v3464 = vrot.slane %v3357, 1
          %v3465 = vsel %vm555, %v3462, %v3464
          %v3466 = vrot.slane %v3358, 1
          %v3467 = vrot.slane %v3359, 1
          %v3468 = vsel %vm555, %v3466, %v3467
          %v3469 = vrot.slane %v3360, 1
          %v3470 = vsel %vm555, %v3467, %v3469
          %v3471 = vrot.slane %v3361, 1
          %v3472 = vrot.slane %v3362, 1
          %v3473 = vsel %vm555, %v3471, %v3472
          %v3474 = vrot.slane %v3363, 1
          %v3475 = vsel %vm555, %v3472, %v3474
          %v3476 = vrot.slane %v3364, 1
          %v3477 = vrot.slane %v3365, 1
          %v3478 = vsel %vm555, %v3476, %v3477
          %v3479 = vrot.slane %v3366, 1
          %v3480 = vsel %vm555, %v3477, %v3479
          %v3481 = vrot.slane %v3367, 1
          %v3482 = vrot.slane %v3368, 1
          %v3483 = vsel %vm555, %v3481, %v3482
          %v3484 = vrot.slane %v3369, 1
          %v3485 = vsel %vm555, %v3482, %v3484
          %v3486 = vrot.slane %v3370, 1
          %v3487 = vrot.slane %v3371, 1
          %v3488 = vsel %vm555, %v3486, %v3487
          %v3489 = vrot.slane %v3372, 1
          %v3490 = vsel %vm555, %v3487, %v3489
          %v3491 = vrot.slane %v3373, 1
          %v3492 = vrot.slane %v3374, 1
          %v3493 = vsel %vm555, %v3491, %v3492
          %v3494 = vrot.slane %v3375, 1
          %v3495 = vsel %vm555, %v3492, %v3494
          %v3496 = vrot.slane %v3376, 1
          %v3497 = vrot.slane %v3377, 1
          %v3498 = vsel %vm555, %v3496, %v3497
          %v3499 = vrot.slane %v3378, 1
          %v3500 = vsel %vm555, %v3497, %v3499
          %v3501 = vrot.slane %v3379, 1
          %v3502 = vrot.slane %v3380, 1
          %v3503 = vsel %vm555, %v3501, %v3502
          %v3504 = vrot.slane %v3381, 1
          %v3505 = vsel %vm555, %v3502, %v3504
          %v3506 = vrot.slane %v3382, 1
          %v3507 = vrot.slane %v3383, 1
          %v3508 = vsel %vm555, %v3506, %v3507
          %v3509 = vrot.slane %v3384, 1
          %v3510 = vsel %vm555, %v3507, %v3509
          %v3511 = vrot.slane %v3385, 1
          %v3512 = vrot.slane %v3386, 1
          %v3513 = vsel %vm555, %v3511, %v3512
          %v3514 = vrot.slane %v3387, 1
          %v3515 = vsel %vm555, %v3512, %v3514
          %v3516 = vrot.slane %v3388, 1
          %v3517 = vrot.slane %v3389, 1
          %v3518 = vsel %vm555, %v3516, %v3517
          %v3519 = vrot.slane %v3390, 1
          %v3520 = vsel %vm555, %v3517, %v3519
          %v3521 = vrot.slane %v3391, 1
          %v3522 = vrot.slane %v3392, 1
          %v3523 = vsel %vm555, %v3521, %v3522
          %v3524 = vrot.slane %v3393, 1
          %v3525 = vsel %vm555, %v3522, %v3524
          %v3526 = vrot.slane %v3394, 1
          %v3527 = vrot.slane %v3395, 1
          %v3528 = vsel %vm555, %v3526, %v3527
          %v3529 = vrot.slane %v3396, 1
          %v3530 = vsel %vm555, %v3527, %v3529
          %v3563 = vrot.slane %v3349, 2
          %v3564 = vrot.slane %v3350, 2
          %v3565 = vsel %vm1221, %v3563, %v3564
          %v3566 = vrot.slane %v3351, 2
          %v3567 = vsel %vm1221, %v3564, %v3566
          %v3568 = vrot.slane %v3352, 2
          %v3569 = vrot.slane %v3353, 2
          %v3570 = vsel %vm1221, %v3568, %v3569
          %v3571 = vrot.slane %v3354, 2
          %v3572 = vsel %vm1221, %v3569, %v3571
          %v3573 = vrot.slane %v3355, 2
          %v3574 = vrot.slane %v3356, 2
          %v3575 = vsel %vm1221, %v3573, %v3574
          %v3576 = vrot.slane %v3357, 2
          %v3577 = vsel %vm1221, %v3574, %v3576
          %v3578 = vrot.slane %v3358, 2
          %v3579 = vrot.slane %v3359, 2
          %v3580 = vsel %vm1221, %v3578, %v3579
          %v3581 = vrot.slane %v3360, 2
          %v3582 = vsel %vm1221, %v3579, %v3581
          %v3583 = vrot.slane %v3361, 2
          %v3584 = vrot.slane %v3362, 2
          %v3585 = vsel %vm1221, %v3583, %v3584
          %v3586 = vrot.slane %v3363, 2
          %v3587 = vsel %vm1221, %v3584, %v3586
          %v3588 = vrot.slane %v3364, 2
          %v3589 = vrot.slane %v3365, 2
          %v3590 = vsel %vm1221, %v3588, %v3589
          %v3591 = vrot.slane %v3366, 2
          %v3592 = vsel %vm1221, %v3589, %v3591
          %v3593 = vrot.slane %v3367, 2
          %v3594 = vrot.slane %v3368, 2
          %v3595 = vsel %vm1221, %v3593, %v3594
          %v3596 = vrot.slane %v3369, 2
          %v3597 = vsel %vm1221, %v3594, %v3596
          %v3598 = vrot.slane %v3370, 2
          %v3599 = vrot.slane %v3371, 2
          %v3600 = vsel %vm1221, %v3598, %v3599
          %v3601 = vrot.slane %v3372, 2
          %v3602 = vsel %vm1221, %v3599, %v3601
          %v3603 = vrot.slane %v3373, 2
          %v3604 = vrot.slane %v3374, 2
          %v3605 = vsel %vm1221, %v3603, %v3604
          %v3606 = vrot.slane %v3375, 2
          %v3607 = vsel %vm1221, %v3604, %v3606
          %v3608 = vrot.slane %v3376, 2
          %v3609 = vrot.slane %v3377, 2
          %v3610 = vsel %vm1221, %v3608, %v3609
          %v3611 = vrot.slane %v3378, 2
          %v3612 = vsel %vm1221, %v3609, %v3611
          %v3613 = vrot.slane %v3379, 2
          %v3614 = vrot.slane %v3380, 2
          %v3615 = vsel %vm1221, %v3613, %v3614
          %v3616 = vrot.slane %v3381, 2
          %v3617 = vsel %vm1221, %v3614, %v3616
          %v3618 = vrot.slane %v3382, 2
          %v3619 = vrot.slane %v3383, 2
          %v3620 = vsel %vm1221, %v3618, %v3619
          %v3621 = vrot.slane %v3384, 2
          %v3622 = vsel %vm1221, %v3619, %v3621
          %v3623 = vrot.slane %v3385, 2
          %v3624 = vrot.slane %v3386, 2
          %v3625 = vsel %vm1221, %v3623, %v3624
          %v3626 = vrot.slane %v3387, 2
          %v3627 = vsel %vm1221, %v3624, %v3626
          %v3628 = vrot.slane %v3388, 2
          %v3629 = vrot.slane %v3389, 2
          %v3630 = vsel %vm1221, %v3628, %v3629
          %v3631 = vrot.slane %v3390, 2
          %v3632 = vsel %vm1221, %v3629, %v3631
          %v3633 = vrot.slane %v3391, 2
          %v3634 = vrot.slane %v3392, 2
          %v3635 = vsel %vm1221, %v3633, %v3634
          %v3636 = vrot.slane %v3393, 2
          %v3637 = vsel %vm1221, %v3634, %v3636
          %v3638 = vrot.slane %v3394, 2
          %v3639 = vrot.slane %v3395, 2
          %v3640 = vsel %vm1221, %v3638, %v3639
          %v3641 = vrot.slane %v3396, 2
          %v3642 = vsel %vm1221, %v3639, %v3641
          %v3675 = vld [vmem:[%s2] sm:$0xff]
          %v3676 = vld [vmem:[%s2 + $0x8] sm:$0xff]
          %v3677 = vld [vmem:[%s2 + $0x10] sm:$0xff]
          %v3678 = vld [vmem:[%s2 + $0x18] sm:$0xff]
          %v3679 = vld [vmem:[%s2 + $0x20] sm:$0xff]
          %v3680 = vld [vmem:[%s2 + $0x28] sm:$0xff]
          %v3681 = vld [vmem:[%s2 + $0x30] sm:$0xff]
          %v3682 = vld [vmem:[%s2 + $0x38] sm:$0xff]
          %v3683 = vld [vmem:[%s2 + $0x40] sm:$0xff]
          %v3684 = vld [vmem:[%s2 + $0x48] sm:$0xff]
          %v3685 = vld [vmem:[%s2 + $0x50] sm:$0xff]
          %v3686 = vld [vmem:[%s2 + $0x58] sm:$0xff]
          %v3687 = vld [vmem:[%s2 + $0x60] sm:$0xff]
          %v3688 = vld [vmem:[%s2 + $0x68] sm:$0xff]
          %v3689 = vld [vmem:[%s2 + $0x70] sm:$0xff]
          %v3690 = vld [vmem:[%s2 + $0x78] sm:$0xff]
          %v3691 = vld [vmem:[%s2 + $0x80] sm:$0xff]
          %v3692 = vld [vmem:[%s2 + $0x88] sm:$0xff]
          %v3693 = vld [vmem:[%s2 + $0x90] sm:$0xff]
          %v3694 = vld [vmem:[%s2 + $0x98] sm:$0xff]
          %v3695 = vld [vmem:[%s2 + $0xa0] sm:$0xff]
          %v3696 = vld [vmem:[%s2 + $0xa8] sm:$0xff]
          %v3697 = vld [vmem:[%s2 + $0xb0] sm:$0xff]
          %v3698 = vld [vmem:[%s2 + $0xb8] sm:$0xff]
          %v3699 = vld [vmem:[%s2 + $0xc0] sm:$0xff]
          %v3700 = vld [vmem:[%s2 + $0xc8] sm:$0xff]
          %v3701 = vld [vmem:[%s2 + $0xd0] sm:$0xff]
          %v3702 = vld [vmem:[%s2 + $0xd8] sm:$0xff]
          %v3703 = vld [vmem:[%s2 + $0xe0] sm:$0xff]
          %v3704 = vld [vmem:[%s2 + $0xe8] sm:$0xff]
          %v3705 = vld [vmem:[%s2 + $0xf0] sm:$0xff]
          %v3706 = vld [vmem:[%s2 + $0xf8] sm:$0xff]
          %v3707 = vld [vmem:[%s2 + $0x100] sm:$0xff]
          %v3708 = vld [vmem:[%s2 + $0x108] sm:$0xff]
          %v3709 = vld [vmem:[%s2 + $0x110] sm:$0xff]
          %v3710 = vld [vmem:[%s2 + $0x118] sm:$0xff]
          %v3711 = vld [vmem:[%s2 + $0x120] sm:$0xff]
          %v3712 = vld [vmem:[%s2 + $0x128] sm:$0xff]
          %v3713 = vld [vmem:[%s2 + $0x130] sm:$0xff]
          %v3714 = vld [vmem:[%s2 + $0x138] sm:$0xff]
          %v3715 = vld [vmem:[%s2 + $0x140] sm:$0xff]
          %v3716 = vld [vmem:[%s2 + $0x148] sm:$0xff]
          %v3717 = vld [vmem:[%s2 + $0x150] sm:$0xff]
          %v3718 = vld [vmem:[%s2 + $0x158] sm:$0xff]
          %v3719 = vld [vmem:[%s2 + $0x160] sm:$0xff]
          %v3720 = vld [vmem:[%s2 + $0x168] sm:$0xff]
          %v3721 = vld [vmem:[%s2 + $0x170] sm:$0xff]
          %v3722 = vld [vmem:[%s2 + $0x178] sm:$0xff]
          %v3726 = vrot.slane %v3397, 1
          %v3727 = vrot.slane %v3398, 1
          %v3728 = vsel %vm555, %v3726, %v3727
          %v3729 = vrot.slane %v3399, 1
          %v3730 = vsel %vm555, %v3727, %v3729
          %v3733 = vrot.slane %v3397, 2
          %v3734 = vrot.slane %v3398, 2
          %v3735 = vsel %vm1221, %v3733, %v3734
          %v3736 = vrot.slane %v3399, 2
          %v3737 = vsel %vm1221, %v3734, %v3736
          %s3740 = scalar_lea.vmem %s2, 384
          %v3741 = vld [vmem:[%s3740] sm:$0xff]
          %v3742 = vld [vmem:[%s3740 + $0x8] sm:$0xff]
          %v3743 = vld [vmem:[%s3740 + $0x10] sm:$0xff]
          %v3744 = vld [vmem:[%s3740 + $0x18] sm:$0xff]
          %v3745 = vld [vmem:[%s3740 + $0x20] sm:$0xff]
          %v3746 = vld [vmem:[%s3740 + $0x28] sm:$0xff]
          %v3747 = vld [vmem:[%s3740 + $0x30] sm:$0xff]
          %v3748 = vld [vmem:[%s3740 + $0x38] sm:$0xff]
          %v3749 = vld [vmem:[%s3740 + $0x40] sm:$0xff]
          %v3750 = vld [vmem:[%s3740 + $0x48] sm:$0xff]
          %v3751 = vld [vmem:[%s3740 + $0x50] sm:$0xff]
          %v3752 = vld [vmem:[%s3740 + $0x58] sm:$0xff]
          %v3753 = vld [vmem:[%s3740 + $0x60] sm:$0xff]
          %v3754 = vld [vmem:[%s3740 + $0x68] sm:$0xff]
          %v3755 = vld [vmem:[%s3740 + $0x70] sm:$0xff]
          %v3756 = vld [vmem:[%s3740 + $0x78] sm:$0xff]
          %v3757 = vld [vmem:[%s3740 + $0x80] sm:$0xff]
          %v3758 = vld [vmem:[%s3740 + $0x88] sm:$0xff]
          %v3759 = vld [vmem:[%s3740 + $0x90] sm:$0xff]
          %v3760 = vld [vmem:[%s3740 + $0x98] sm:$0xff]
          %v3761 = vld [vmem:[%s3740 + $0xa0] sm:$0xff]
          %v3762 = vld [vmem:[%s3740 + $0xa8] sm:$0xff]
          %v3763 = vld [vmem:[%s3740 + $0xb0] sm:$0xff]
          %v3764 = vld [vmem:[%s3740 + $0xb8] sm:$0xff]
          %v3765 = vld [vmem:[%s3740 + $0xc0] sm:$0xff]
          %v3766 = vld [vmem:[%s3740 + $0xc8] sm:$0xff]
          %v3767 = vld [vmem:[%s3740 + $0xd0] sm:$0xff]
          %v3768 = vld [vmem:[%s3740 + $0xd8] sm:$0xff]
          %v3769 = vld [vmem:[%s3740 + $0xe0] sm:$0xff]
          %v3770 = vld [vmem:[%s3740 + $0xe8] sm:$0xff]
          %v3771 = vld [vmem:[%s3740 + $0xf0] sm:$0xff]
          %v3772 = vld [vmem:[%s3740 + $0xf8] sm:$0xff]
          %v3773 = vld [vmem:[%s3740 + $0x100] sm:$0xff]
          %v3774 = vld [vmem:[%s3740 + $0x108] sm:$0xff]
          %v3775 = vld [vmem:[%s3740 + $0x110] sm:$0xff]
          %v3776 = vld [vmem:[%s3740 + $0x118] sm:$0xff]
          %v3777 = vld [vmem:[%s3740 + $0x120] sm:$0xff]
          %v3778 = vld [vmem:[%s3740 + $0x128] sm:$0xff]
          %v3779 = vld [vmem:[%s3740 + $0x130] sm:$0xff]
          %v3780 = vld [vmem:[%s3740 + $0x138] sm:$0xff]
          %v3781 = vld [vmem:[%s3740 + $0x140] sm:$0xff]
          %v3782 = vld [vmem:[%s3740 + $0x148] sm:$0xff]
          %v3783 = vld [vmem:[%s3740 + $0x150] sm:$0xff]
          %v3784 = vld [vmem:[%s3740 + $0x158] sm:$0xff]
          %v3785 = vld [vmem:[%s3740 + $0x160] sm:$0xff]
          %v3786 = vld [vmem:[%s3740 + $0x168] sm:$0xff]
          %v3787 = vld [vmem:[%s3740 + $0x170] sm:$0xff]
          %v3788 = vld [vmem:[%s3740 + $0x178] sm:$0xff]
          %3789 = vmatprep.subr.mxu0 0.0
          %3790 = vmatpush1.msra.mxu0 %v3741
          %3791 = vmatprep.subr.mxu0 0.0
          %3792 = vmatpush1.msra.mxu0 %v3742
          %3793 = vmatprep.subr.mxu0 0.0
          %3794 = vmatpush1.msra.mxu0 %v3743
          %3795 = vmatprep.subr.mxu0 0.0
          %3796 = vmatpush1.msra.mxu0 %v3744
          %3797 = vmatprep.subr.mxu0 0.0
          %3798 = vmatpush1.msra.mxu0 %v3745
          %3799 = vmatprep.subr.mxu0 0.0
          %3800 = vmatpush1.msra.mxu0 %v3746
          %3801 = vmatprep.subr.mxu0 0.0
          %3802 = vmatpush1.msra.mxu0 %v3747
          %3803 = vmatprep.subr.mxu0 0.0
          %3804 = vmatpush1.msra.mxu0 %v3748
          %3805 = vmatprep.subr.mxu0 0.0
          %3806 = vmatpush1.msra.mxu0 %v3749
          %3807 = vmatprep.subr.mxu0 0.0
          %3808 = vmatpush1.msra.mxu0 %v3750
          %3809 = vmatprep.subr.mxu0 0.0
          %3810 = vmatpush1.msra.mxu0 %v3751
          %3811 = vmatprep.subr.mxu0 0.0
          %3812 = vmatpush1.msra.mxu0 %v3752
          %3813 = vmatprep.subr.mxu0 0.0
          %3814 = vmatpush1.msra.mxu0 %v3753
          %3815 = vmatprep.subr.mxu0 0.0
          %3816 = vmatpush1.msra.mxu0 %v3754
          %3817 = vmatprep.subr.mxu0 0.0
          %3818 = vmatpush1.msra.mxu0 %v3755
          %3819 = vmatprep.subr.mxu0 0.0
          %3820 = vmatpush1.msra.mxu0 %v3756
          %3821 = vmatprep.subr.mxu0 0.0
          %3822 = vmatpush1.msra.mxu0 %v3757
          %3823 = vmatprep.subr.mxu0 0.0
          %3824 = vmatpush1.msra.mxu0 %v3758
          %3825 = vmatprep.subr.mxu0 0.0
          %3826 = vmatpush1.msra.mxu0 %v3759
          %3827 = vmatprep.subr.mxu0 0.0
          %3828 = vmatpush1.msra.mxu0 %v3760
          %3829 = vmatprep.subr.mxu0 0.0
          %3830 = vmatpush1.msra.mxu0 %v3761
          %3831 = vmatprep.subr.mxu0 0.0
          %3832 = vmatpush1.msra.mxu0 %v3762
          %3833 = vmatprep.subr.mxu0 0.0
          %3834 = vmatpush1.msra.mxu0 %v3763
          %3835 = vmatprep.subr.mxu0 0.0
          %3836 = vmatpush1.msra.mxu0 %v3764
          %3837 = vmatprep.subr.mxu0 0.0
          %3838 = vmatpush1.msra.mxu0 %v3765
          %3839 = vmatprep.subr.mxu0 0.0
          %3840 = vmatpush1.msra.mxu0 %v3766
          %3841 = vmatprep.subr.mxu0 0.0
          %3842 = vmatpush1.msra.mxu0 %v3767
          %3843 = vmatprep.subr.mxu0 0.0
          %3844 = vmatpush1.msra.mxu0 %v3768
          %3845 = vmatprep.subr.mxu0 0.0
          %3846 = vmatpush1.msra.mxu0 %v3769
          %3847 = vmatprep.subr.mxu0 0.0
          %3848 = vmatpush1.msra.mxu0 %v3770
          %3849 = vmatprep.subr.mxu0 0.0
          %3850 = vmatpush1.msra.mxu0 %v3771
          %3851 = vmatprep.subr.mxu0 0.0
          %3852 = vmatpush1.msra.mxu0 %v3772
          %3853 = vmatprep.mubr.f32.mxu0 %v3458
          %3854 = vmatmul.mubr.f32.gmra.mrb[0].mxu0 %v3352
          %v3855 = vpop.f32.mrb[0].mxu0
          %v3856 = vadd.f32 0.0, %v3855
          %v3857 = vpop.f32.mrb[0].mxu0
          %3858 = vmatprep.mubr.f32.mxu0 %v3460
          %3859 = vmatmul.mubr.f32.gmra.mrb[0].mxu0 %v3353
          %v3860 = vpop.f32.mrb[0].mxu0
          %v3861 = vadd.f32 0.0, %v3860
          %v3862 = vpop.f32.mrb[0].mxu0
          %3863 = vmatprep.mubr.f32.mxu0 %v3463
          %3864 = vmatmul.mubr.f32.gmra.mrb[0].mxu0 %v3355
          %v3865 = vpop.f32.mrb[0].mxu0
          %v3866 = vadd.f32 0.0, %v3865
          %v3867 = vpop.f32.mrb[0].mxu0
          %3868 = vmatprep.mubr.f32.mxu0 %v3465
          %3869 = vmatmul.mubr.f32.gmra.mrb[0].mxu0 %v3356
          %v3870 = vpop.f32.mrb[0].mxu0
          %v3871 = vadd.f32 0.0, %v3870
          %v3872 = vpop.f32.mrb[0].mxu0
          %3873 = vmatprep.mubr.f32.mxu0 %v3468
          %3874 = vmatmul.mubr.f32.gmra.mrb[0].mxu0 %v3358
          %v3875 = vpop.f32.mrb[0].mxu0
          %v3876 = vadd.f32 0.0, %v3875
          %v3877 = vpop.f32.mrb[0].mxu0
          %3878 = vmatprep.mubr.f32.mxu0 %v3470
          %3879 = vmatmul.mubr.f32.gmra.mrb[0].mxu0 %v3359
          %v3880 = vpop.f32.mrb[0].mxu0
          %v3881 = vadd.f32 0.0, %v3880
          %v3882 = vpop.f32.mrb[0].mxu0
          %3883 = vmatprep.mubr.f32.mxu0 %v3473
          %3884 = vmatmul.mubr.f32.gmra.mrb[0].mxu0 %v3361
          %v3885 = vpop.f32.mrb[0].mxu0
          %v3886 = vadd.f32 0.0, %v3885
          %v3887 = vpop.f32.mrb[0].mxu0
          %3888 = vmatprep.mubr.f32.mxu0 %v3475
          %3889 = vmatmul.mubr.f32.gmra.mrb[0].mxu0 %v3362
          %v3890 = vpop.f32.mrb[0].mxu0
          %v3891 = vadd.f32 0.0, %v3890
          %v3892 = vpop.f32.mrb[0].mxu0
          %3893 = vmatprep.mubr.f32.mxu0 %v3478
          %3894 = vmatmul.mubr.f32.gmra.mrb[0].mxu0 %v3364
          %v3895 = vpop.f32.mrb[0].mxu0
          %v3896 = vadd.f32 0.0, %v3895
          %v3897 = vpop.f32.mrb[0].mxu0
          %3898 = vmatprep.mubr.f32.mxu0 %v3480
          %3899 = vmatmul.mubr.f32.gmra.mrb[0].mxu0 %v3365
          %v3900 = vpop.f32.mrb[0].mxu0
          %v3901 = vadd.f32 0.0, %v3900
          %v3902 = vpop.f32.mrb[0].mxu0
          %3903 = vmatprep.mubr.f32.mxu0 %v3483
          %3904 = vmatmul.mubr.f32.gmra.mrb[0].mxu0 %v3367
          %v3905 = vpop.f32.mrb[0].mxu0
          %v3906 = vadd.f32 0.0, %v3905
          %v3907 = vpop.f32.mrb[0].mxu0
          %3908 = vmatprep.mubr.f32.mxu0 %v3485
          %3909 = vmatmul.mubr.f32.gmra.mrb[0].mxu0 %v3368
          %v3910 = vpop.f32.mrb[0].mxu0
          %v3911 = vadd.f32 0.0, %v3910
          %v3912 = vpop.f32.mrb[0].mxu0
          %3913 = vmatprep.mubr.f32.mxu0 %v3488
          %3914 = vmatmul.mubr.f32.gmra.mrb[0].mxu0 %v3370
          %v3915 = vpop.f32.mrb[0].mxu0
          %v3916 = vadd.f32 0.0, %v3915
          %v3917 = vpop.f32.mrb[0].mxu0
          %3918 = vmatprep.mubr.f32.mxu0 %v3490
          %3919 = vmatmul.mubr.f32.gmra.mrb[0].mxu0 %v3371
          %v3920 = vpop.f32.mrb[0].mxu0
          %v3921 = vadd.f32 0.0, %v3920
          %v3922 = vpop.f32.mrb[0].mxu0
          %3923 = vmatprep.mubr.f32.mxu0 %v3493
          %3924 = vmatmul.mubr.f32.gmra.mrb[0].mxu0 %v3373
          %v3925 = vpop.f32.mrb[0].mxu0
          %v3926 = vadd.f32 0.0, %v3925
          %v3927 = vpop.f32.mrb[0].mxu0
          %3928 = vmatprep.mubr.f32.mxu0 %v3495
          %3929 = vmatmul.mubr.f32.gmra.mrb[0].mxu0 %v3374
          %v3930 = vpop.f32.mrb[0].mxu0
          %v3931 = vadd.f32 0.0, %v3930
          %v3932 = vpop.f32.mrb[0].mxu0
          %3933 = vmatprep.mubr.f32.mxu0 %v3498
          %3934 = vmatmul.mubr.f32.gmra.mrb[0].mxu0 %v3376
          %v3935 = vpop.f32.mrb[0].mxu0
          %v3936 = vadd.f32 0.0, %v3935
          %v3937 = vpop.f32.mrb[0].mxu0
          %3938 = vmatprep.mubr.f32.mxu0 %v3500
          %3939 = vmatmul.mubr.f32.gmra.mrb[0].mxu0 %v3377
          %v3940 = vpop.f32.mrb[0].mxu0
          %v3941 = vadd.f32 0.0, %v3940
          %v3942 = vpop.f32.mrb[0].mxu0
          %3943 = vmatprep.mubr.f32.mxu0 %v3503
          %3944 = vmatmul.mubr.f32.gmra.mrb[0].mxu0 %v3379
          %v3945 = vpop.f32.mrb[0].mxu0
          %v3946 = vadd.f32 0.0, %v3945
          %v3947 = vpop.f32.mrb[0].mxu0
          %3948 = vmatprep.mubr.f32.mxu0 %v3505
          %3949 = vmatmul.mubr.f32.gmra.mrb[0].mxu0 %v3380
          %v3950 = vpop.f32.mrb[0].mxu0
          %v3951 = vadd.f32 0.0, %v3950
          %v3952 = vpop.f32.mrb[0].mxu0
          %3953 = vmatprep.mubr.f32.mxu0 %v3508
          %3954 = vmatmul.mubr.f32.gmra.mrb[0].mxu0 %v3382
          %v3955 = vpop.f32.mrb[0].mxu0
          %v3956 = vadd.f32 0.0, %v3955
          %v3957 = vpop.f32.mrb[0].mxu0
          %3958 = vmatprep.mubr.f32.mxu0 %v3510
          %3959 = vmatmul.mubr.f32.gmra.mrb[0].mxu0 %v3383
          %v3960 = vpop.f32.mrb[0].mxu0
          %v3961 = vadd.f32 0.0, %v3960
          %v3962 = vpop.f32.mrb[0].mxu0
          %3963 = vmatprep.mubr.f32.mxu0 %v3513
          %3964 = vmatmul.mubr.f32.gmra.mrb[0].mxu0 %v3385
          %v3965 = vpop.f32.mrb[0].mxu0
          %v3966 = vadd.f32 0.0, %v3965
          %v3967 = vpop.f32.mrb[0].mxu0
          %3968 = vmatprep.mubr.f32.mxu0 %v3515
          %3969 = vmatmul.mubr.f32.gmra.mrb[0].mxu0 %v3386
          %v3970 = vpop.f32.mrb[0].mxu0
          %v3971 = vadd.f32 0.0, %v3970
          %v3972 = vpop.f32.mrb[0].mxu0
          %3973 = vmatprep.mubr.f32.mxu0 %v3518
          %3974 = vmatmul.mubr.f32.gmra.mrb[0].mxu0 %v3388
          %v3975 = vpop.f32.mrb[0].mxu0
          %v3976 = vadd.f32 0.0, %v3975
          %v3977 = vpop.f32.mrb[0].mxu0
          %3978 = vmatprep.mubr.f32.mxu0 %v3520
          %3979 = vmatmul.mubr.f32.gmra.mrb[0].mxu0 %v3389
          %v3980 = vpop.f32.mrb[0].mxu0
          %v3981 = vadd.f32 0.0, %v3980
          %v3982 = vpop.f32.mrb[0].mxu0
          %3983 = vmatprep.mubr.f32.mxu0 %v3523
          %3984 = vmatmul.mubr.f32.gmra.mrb[0].mxu0 %v3391
          %v3985 = vpop.f32.mrb[0].mxu0
          %v3986 = vadd.f32 0.0, %v3985
          %v3987 = vpop.f32.mrb[0].mxu0
          %3988 = vmatprep.mubr.f32.mxu0 %v3525
          %3989 = vmatmul.mubr.f32.gmra.mrb[0].mxu0 %v3392
          %v3990 = vpop.f32.mrb[0].mxu0
          %v3991 = vadd.f32 0.0, %v3990
          %v3992 = vpop.f32.mrb[0].mxu0
          %3993 = vmatprep.mubr.f32.mxu0 %v3528
          %3994 = vmatmul.mubr.f32.gmra.mrb[0].mxu0 %v3394
          %v3995 = vpop.f32.mrb[0].mxu0
          %v3996 = vadd.f32 0.0, %v3995
          %v3997 = vpop.f32.mrb[0].mxu0
          %3998 = vmatprep.mubr.f32.mxu0 %v3530
          %3999 = vmatmul.mubr.f32.gmra.mrb[0].mxu0 %v3395
          %v4000 = vpop.f32.mrb[0].mxu0
          %v4001 = vadd.f32 0.0, %v4000
          %v4002 = vpop.f32.mrb[0].mxu0
          %4003 = vmatprep.mubr.f32.mxu0 %v3728
          %4004 = vmatmul.mubr.f32.gmra.mrb[0].mxu0 %v3397
          %v4005 = vpop.f32.mrb[0].mxu0
          %v4006 = vadd.f32 0.0, %v4005
          %v4007 = vpop.f32.mrb[0].mxu0
          %4008 = vmatprep.mubr.f32.mxu0 %v3730
          %4009 = vmatmul.mubr.f32.gmra.mrb[0].mxu0 %v3398
          %v4010 = vpop.f32.mrb[0].mxu0
          %v4011 = vadd.f32 0.0, %v4010
          %v4012 = vpop.f32.mrb[0].mxu0
          %4013 = vdwg.mxu0
          %4014 = vmatprep.subr.mxu0 0.0
          %4015 = vmatpush1.msra.mxu0 %v3773
          %4016 = vmatprep.subr.mxu0 0.0
          %4017 = vmatpush1.msra.mxu0 %v3774
          %4018 = vmatprep.subr.mxu0 0.0
          %4019 = vmatpush1.msra.mxu0 %v3775
          %4020 = vmatprep.subr.mxu0 0.0
          %4021 = vmatpush1.msra.mxu0 %v3776
          %4022 = vmatprep.subr.mxu0 0.0
          %4023 = vmatpush1.msra.mxu0 %v3777
          %4024 = vmatprep.subr.mxu0 0.0
          %4025 = vmatpush1.msra.mxu0 %v3778
          %4026 = vmatprep.subr.mxu0 0.0
          %4027 = vmatpush1.msra.mxu0 %v3779
          %4028 = vmatprep.subr.mxu0 0.0
          %4029 = vmatpush1.msra.mxu0 %v3780
          %4030 = vmatprep.subr.mxu0 0.0
          %4031 = vmatpush1.msra.mxu0 %v3781
          %4032 = vmatprep.subr.mxu0 0.0
          %4033 = vmatpush1.msra.mxu0 %v3782
          %4034 = vmatprep.subr.mxu0 0.0
          %4035 = vmatpush1.msra.mxu0 %v3783
          %4036 = vmatprep.subr.mxu0 0.0
          %4037 = vmatpush1.msra.mxu0 %v3784
          %4038 = vmatprep.subr.mxu0 0.0
          %4039 = vmatpush1.msra.mxu0 %v3785
          %4040 = vmatprep.subr.mxu0 0.0
          %4041 = vmatpush1.msra.mxu0 %v3786
          %4042 = vmatprep.subr.mxu0 0.0
          %4043 = vmatpush1.msra.mxu0 %v3787
          %4044 = vmatprep.subr.mxu0 0.0
          %4045 = vmatpush1.msra.mxu0 %v3788
          %4046 = vmatprep.subr.mxu0 0.0
          %4047 = vmatpush1.msra.mxu0 0.0
          %4048 = vmatprep.subr.mxu0 0.0
          %4049 = vmatpush1.msra.mxu0 0.0
          %4050 = vmatprep.subr.mxu0 0.0
          %4051 = vmatpush1.msra.mxu0 0.0
          %4052 = vmatprep.subr.mxu0 0.0
          %4053 = vmatpush1.msra.mxu0 0.0
          %4054 = vmatprep.subr.mxu0 0.0
          %4055 = vmatpush1.msra.mxu0 0.0
          %4056 = vmatprep.subr.mxu0 0.0
          %4057 = vmatpush1.msra.mxu0 0.0
          %4058 = vmatprep.subr.mxu0 0.0
          %4059 = vmatpush1.msra.mxu0 0.0
          %4060 = vmatprep.subr.mxu0 0.0
          %4061 = vmatpush1.msra.mxu0 0.0
          %4062 = vmatprep.subr.mxu0 0.0
          %4063 = vmatpush1.msra.mxu0 0.0
          %4064 = vmatprep.subr.mxu0 0.0
          %4065 = vmatpush1.msra.mxu0 0.0
          %4066 = vmatprep.subr.mxu0 0.0
          %4067 = vmatpush1.msra.mxu0 0.0
          %4068 = vmatprep.subr.mxu0 0.0
          %4069 = vmatpush1.msra.mxu0 0.0
          %4070 = vmatprep.subr.mxu0 0.0
          %4071 = vmatpush1.msra.mxu0 0.0
          %4072 = vmatprep.subr.mxu0 0.0
          %4073 = vmatpush1.msra.mxu0 0.0
          %4074 = vmatprep.subr.mxu0 0.0
          %4075 = vmatpush1.msra.mxu0 0.0
          %4076 = vmatprep.subr.mxu0 0.0
          %4077 = vmatpush1.msra.mxu0 0.0
          %4078 = vmatprep.mubr.f32.mxu0 0.0
          %4079 = vmatmul.mubr.f32.gmra.mrb[0].mxu0 %v3570
          %v4080 = vpop.f32.mrb[0].mxu0
          %v4081 = vadd.f32 %v3856, %v4080
          %v4082 = vpop.f32.mrb[0].mxu0
          %4083 = vmatprep.mubr.f32.mxu0 0.0
          %4084 = vmatmul.mubr.f32.gmra.mrb[0].mxu0 %v3572
          %v4085 = vpop.f32.mrb[0].mxu0
          %v4086 = vadd.f32 %v3861, %v4085
          %v4087 = vpop.f32.mrb[0].mxu0
          %4088 = vmatprep.mubr.f32.mxu0 0.0
          %4089 = vmatmul.mubr.f32.gmra.mrb[0].mxu0 %v3575
          %v4090 = vpop.f32.mrb[0].mxu0
          %v4091 = vadd.f32 %v3866, %v4090
          %v4092 = vpop.f32.mrb[0].mxu0
          %4093 = vmatprep.mubr.f32.mxu0 0.0
          %4094 = vmatmul.mubr.f32.gmra.mrb[0].mxu0 %v3577
          %v4095 = vpop.f32.mrb[0].mxu0
          %v4096 = vadd.f32 %v3871, %v4095
          %v4097 = vpop.f32.mrb[0].mxu0
          %4098 = vmatprep.mubr.f32.mxu0 0.0
          %4099 = vmatmul.mubr.f32.gmra.mrb[0].mxu0 %v3580
          %v4100 = vpop.f32.mrb[0].mxu0
          %v4101 = vadd.f32 %v3876, %v4100
          %v4102 = vpop.f32.mrb[0].mxu0
          %4103 = vmatprep.mubr.f32.mxu0 0.0
          %4104 = vmatmul.mubr.f32.gmra.mrb[0].mxu0 %v3582
          %v4105 = vpop.f32.mrb[0].mxu0
          %v4106 = vadd.f32 %v3881, %v4105
          %v4107 = vpop.f32.mrb[0].mxu0
          %4108 = vmatprep.mubr.f32.mxu0 0.0
          %4109 = vmatmul.mubr.f32.gmra.mrb[0].mxu0 %v3585
          %v4110 = vpop.f32.mrb[0].mxu0
          %v4111 = vadd.f32 %v3886, %v4110
          %v4112 = vpop.f32.mrb[0].mxu0
          %4113 = vmatprep.mubr.f32.mxu0 0.0
          %4114 = vmatmul.mubr.f32.gmra.mrb[0].mxu0 %v3587
          %v4115 = vpop.f32.mrb[0].mxu0
          %v4116 = vadd.f32 %v3891, %v4115
          %v4117 = vpop.f32.mrb[0].mxu0
          %4118 = vmatprep.mubr.f32.mxu0 0.0
          %4119 = vmatmul.mubr.f32.gmra.mrb[0].mxu0 %v3590
          %v4120 = vpop.f32.mrb[0].mxu0
          %v4121 = vadd.f32 %v3896, %v4120
          %v4122 = vpop.f32.mrb[0].mxu0
          %4123 = vmatprep.mubr.f32.mxu0 0.0
          %4124 = vmatmul.mubr.f32.gmra.mrb[0].mxu0 %v3592
          %v4125 = vpop.f32.mrb[0].mxu0
          %v4126 = vadd.f32 %v3901, %v4125
          %v4127 = vpop.f32.mrb[0].mxu0
          %4128 = vmatprep.mubr.f32.mxu0 0.0
          %4129 = vmatmul.mubr.f32.gmra.mrb[0].mxu0 %v3595
          %v4130 = vpop.f32.mrb[0].mxu0
          %v4131 = vadd.f32 %v3906, %v4130
          %v4132 = vpop.f32.mrb[0].mxu0
          %4133 = vmatprep.mubr.f32.mxu0 0.0
          %4134 = vmatmul.mubr.f32.gmra.mrb[0].mxu0 %v3597
          %v4135 = vpop.f32.mrb[0].mxu0
          %v4136 = vadd.f32 %v3911, %v4135
          %v4137 = vpop.f32.mrb[0].mxu0
          %4138 = vmatprep.mubr.f32.mxu0 0.0
          %4139 = vmatmul.mubr.f32.gmra.mrb[0].mxu0 %v3600
          %v4140 = vpop.f32.mrb[0].mxu0
          %v4141 = vadd.f32 %v3916, %v4140
          %v4142 = vpop.f32.mrb[0].mxu0
          %4143 = vmatprep.mubr.f32.mxu0 0.0
          %4144 = vmatmul.mubr.f32.gmra.mrb[0].mxu0 %v3602
          %v4145 = vpop.f32.mrb[0].mxu0
          %v4146 = vadd.f32 %v3921, %v4145
          %v4147 = vpop.f32.mrb[0].mxu0
          %4148 = vmatprep.mubr.f32.mxu0 0.0
          %4149 = vmatmul.mubr.f32.gmra.mrb[0].mxu0 %v3605
          %v4150 = vpop.f32.mrb[0].mxu0
          %v4151 = vadd.f32 %v3926, %v4150
          %v4152 = vpop.f32.mrb[0].mxu0
          %4153 = vmatprep.mubr.f32.mxu0 0.0
          %4154 = vmatmul.mubr.f32.gmra.mrb[0].mxu0 %v3607
          %v4155 = vpop.f32.mrb[0].mxu0
          %v4156 = vadd.f32 %v3931, %v4155
          %v4157 = vpop.f32.mrb[0].mxu0
          %4158 = vmatprep.mubr.f32.mxu0 0.0
          %4159 = vmatmul.mubr.f32.gmra.mrb[0].mxu0 %v3610
          %v4160 = vpop.f32.mrb[0].mxu0
          %v4161 = vadd.f32 %v3936, %v4160
          %v4162 = vpop.f32.mrb[0].mxu0
          %4163 = vmatprep.mubr.f32.mxu0 0.0
          %4164 = vmatmul.mubr.f32.gmra.mrb[0].mxu0 %v3612
          %v4165 = vpop.f32.mrb[0].mxu0
          %v4166 = vadd.f32 %v3941, %v4165
          %v4167 = vpop.f32.mrb[0].mxu0
          %4168 = vmatprep.mubr.f32.mxu0 0.0
          %4169 = vmatmul.mubr.f32.gmra.mrb[0].mxu0 %v3615
          %v4170 = vpop.f32.mrb[0].mxu0
          %v4171 = vadd.f32 %v3946, %v4170
          %v4172 = vpop.f32.mrb[0].mxu0
          %4173 = vmatprep.mubr.f32.mxu0 0.0
          %4174 = vmatmul.mubr.f32.gmra.mrb[0].mxu0 %v3617
          %v4175 = vpop.f32.mrb[0].mxu0
          %v4176 = vadd.f32 %v3951, %v4175
          %v4177 = vpop.f32.mrb[0].mxu0
          %4178 = vmatprep.mubr.f32.mxu0 0.0
          %4179 = vmatmul.mubr.f32.gmra.mrb[0].mxu0 %v3620
          %v4180 = vpop.f32.mrb[0].mxu0
          %v4181 = vadd.f32 %v3956, %v4180
          %v4182 = vpop.f32.mrb[0].mxu0
          %4183 = vmatprep.mubr.f32.mxu0 0.0
          %4184 = vmatmul.mubr.f32.gmra.mrb[0].mxu0 %v3622
          %v4185 = vpop.f32.mrb[0].mxu0
          %v4186 = vadd.f32 %v3961, %v4185
          %v4187 = vpop.f32.mrb[0].mxu0
          %4188 = vmatprep.mubr.f32.mxu0 0.0
          %4189 = vmatmul.mubr.f32.gmra.mrb[0].mxu0 %v3625
          %v4190 = vpop.f32.mrb[0].mxu0
          %v4191 = vadd.f32 %v3966, %v4190
          %v4192 = vpop.f32.mrb[0].mxu0
          %4193 = vmatprep.mubr.f32.mxu0 0.0
          %4194 = vmatmul.mubr.f32.gmra.mrb[0].mxu0 %v3627
          %v4195 = vpop.f32.mrb[0].mxu0
          %v4196 = vadd.f32 %v3971, %v4195
          %v4197 = vpop.f32.mrb[0].mxu0
          %4198 = vmatprep.mubr.f32.mxu0 0.0
          %4199 = vmatmul.mubr.f32.gmra.mrb[0].mxu0 %v3630
          %v4200 = vpop.f32.mrb[0].mxu0
          %v4201 = vadd.f32 %v3976, %v4200
          %v4202 = vpop.f32.mrb[0].mxu0
          %4203 = vmatprep.mubr.f32.mxu0 0.0
          %4204 = vmatmul.mubr.f32.gmra.mrb[0].mxu0 %v3632
          %v4205 = vpop.f32.mrb[0].mxu0
          %v4206 = vadd.f32 %v3981, %v4205
          %v4207 = vpop.f32.mrb[0].mxu0
          %4208 = vmatprep.mubr.f32.mxu0 0.0
          %4209 = vmatmul.mubr.f32.gmra.mrb[0].mxu0 %v3635
          %v4210 = vpop.f32.mrb[0].mxu0
          %v4211 = vadd.f32 %v3986, %v4210
          %v4212 = vpop.f32.mrb[0].mxu0
          %4213 = vmatprep.mubr.f32.mxu0 0.0
          %4214 = vmatmul.mubr.f32.gmra.mrb[0].mxu0 %v3637
          %v4215 = vpop.f32.mrb[0].mxu0
          %v4216 = vadd.f32 %v3991, %v4215
          %v4217 = vpop.f32.mrb[0].mxu0
          %4218 = vmatprep.mubr.f32.mxu0 0.0
          %4219 = vmatmul.mubr.f32.gmra.mrb[0].mxu0 %v3640
          %v4220 = vpop.f32.mrb[0].mxu0
          %v4221 = vadd.f32 %v3996, %v4220
          %v4222 = vpop.f32.mrb[0].mxu0
          %4223 = vmatprep.mubr.f32.mxu0 0.0
          %4224 = vmatmul.mubr.f32.gmra.mrb[0].mxu0 %v3642
          %v4225 = vpop.f32.mrb[0].mxu0
          %v4226 = vadd.f32 %v4001, %v4225
          %v4227 = vpop.f32.mrb[0].mxu0
          %4228 = vmatprep.mubr.f32.mxu0 0.0
          %4229 = vmatmul.mubr.f32.gmra.mrb[0].mxu0 %v3735
          %v4230 = vpop.f32.mrb[0].mxu0
          %v4231 = vadd.f32 %v4006, %v4230
          %v4232 = vpop.f32.mrb[0].mxu0
          %4233 = vmatprep.mubr.f32.mxu0 0.0
          %4234 = vmatmul.mubr.f32.gmra.mrb[0].mxu0 %v3737
          %v4235 = vpop.f32.mrb[0].mxu0
          %v4236 = vadd.f32 %v4011, %v4235
          %v4237 = vpop.f32.mrb[0].mxu0
          %4238 = vdwg.mxu0
          %4239 = vmatprep.subr.mxu0 0.0
          %4240 = vmatpush1.msra.mxu0 %v3675
          %4241 = vmatprep.subr.mxu0 0.0
          %4242 = vmatpush1.msra.mxu0 %v3676
          %4243 = vmatprep.subr.mxu0 0.0
          %4244 = vmatpush1.msra.mxu0 %v3677
          %4245 = vmatprep.subr.mxu0 0.0
          %4246 = vmatpush1.msra.mxu0 %v3678
          %4247 = vmatprep.subr.mxu0 0.0
          %4248 = vmatpush1.msra.mxu0 %v3679
          %4249 = vmatprep.subr.mxu0 0.0
          %4250 = vmatpush1.msra.mxu0 %v3680
          %4251 = vmatprep.subr.mxu0 0.0
          %4252 = vmatpush1.msra.mxu0 %v3681
          %4253 = vmatprep.subr.mxu0 0.0
          %4254 = vmatpush1.msra.mxu0 %v3682
          %4255 = vmatprep.subr.mxu0 0.0
          %4256 = vmatpush1.msra.mxu0 %v3683
          %4257 = vmatprep.subr.mxu0 0.0
          %4258 = vmatpush1.msra.mxu0 %v3684
          %4259 = vmatprep.subr.mxu0 0.0
          %4260 = vmatpush1.msra.mxu0 %v3685
          %4261 = vmatprep.subr.mxu0 0.0
          %4262 = vmatpush1.msra.mxu0 %v3686
          %4263 = vmatprep.subr.mxu0 0.0
          %4264 = vmatpush1.msra.mxu0 %v3687
          %4265 = vmatprep.subr.mxu0 0.0
          %4266 = vmatpush1.msra.mxu0 %v3688
          %4267 = vmatprep.subr.mxu0 0.0
          %4268 = vmatpush1.msra.mxu0 %v3689
          %4269 = vmatprep.subr.mxu0 0.0
          %4270 = vmatpush1.msra.mxu0 %v3690
          %4271 = vmatprep.subr.mxu0 0.0
          %4272 = vmatpush1.msra.mxu0 %v3691
          %4273 = vmatprep.subr.mxu0 0.0
          %4274 = vmatpush1.msra.mxu0 %v3692
          %4275 = vmatprep.subr.mxu0 0.0
          %4276 = vmatpush1.msra.mxu0 %v3693
          %4277 = vmatprep.subr.mxu0 0.0
          %4278 = vmatpush1.msra.mxu0 %v3694
          %4279 = vmatprep.subr.mxu0 0.0
          %4280 = vmatpush1.msra.mxu0 %v3695
          %4281 = vmatprep.subr.mxu0 0.0
          %4282 = vmatpush1.msra.mxu0 %v3696
          %4283 = vmatprep.subr.mxu0 0.0
          %4284 = vmatpush1.msra.mxu0 %v3697
          %4285 = vmatprep.subr.mxu0 0.0
          %4286 = vmatpush1.msra.mxu0 %v3698
          %4287 = vmatprep.subr.mxu0 0.0
          %4288 = vmatpush1.msra.mxu0 %v3699
          %4289 = vmatprep.subr.mxu0 0.0
          %4290 = vmatpush1.msra.mxu0 %v3700
          %4291 = vmatprep.subr.mxu0 0.0
          %4292 = vmatpush1.msra.mxu0 %v3701
          %4293 = vmatprep.subr.mxu0 0.0
          %4294 = vmatpush1.msra.mxu0 %v3702
          %4295 = vmatprep.subr.mxu0 0.0
          %4296 = vmatpush1.msra.mxu0 %v3703
          %4297 = vmatprep.subr.mxu0 0.0
          %4298 = vmatpush1.msra.mxu0 %v3704
          %4299 = vmatprep.subr.mxu0 0.0
          %4300 = vmatpush1.msra.mxu0 %v3705
          %4301 = vmatprep.subr.mxu0 0.0
          %4302 = vmatpush1.msra.mxu0 %v3706
          %4303 = vmatprep.mubr.f32.mxu0 %v3453
          %4304 = vmatmul.mubr.f32.gmra.mrb[0].mxu0 %v3349
          %v4305 = vpop.f32.mrb[0].mxu0
          %v4306 = vadd.f32 %v4081, %v4305
          %v4307 = vpop.f32.mrb[0].mxu0
          %4308 = vmatprep.mubr.f32.mxu0 %v3455
          %4309 = vmatmul.mubr.f32.gmra.mrb[0].mxu0 %v3350
          %v4310 = vpop.f32.mrb[0].mxu0
          %v4311 = vadd.f32 %v4086, %v4310
          %v4312 = vpop.f32.mrb[0].mxu0
          %4313 = vmatprep.mubr.f32.mxu0 %v3458
          %4314 = vmatmul.mubr.f32.gmra.mrb[0].mxu0 %v3352
          %v4315 = vpop.f32.mrb[0].mxu0
          %v4316 = vadd.f32 %v4091, %v4315
          %v4317 = vpop.f32.mrb[0].mxu0
          %4318 = vmatprep.mubr.f32.mxu0 %v3460
          %4319 = vmatmul.mubr.f32.gmra.mrb[0].mxu0 %v3353
          %v4320 = vpop.f32.mrb[0].mxu0
          %v4321 = vadd.f32 %v4096, %v4320
          %v4322 = vpop.f32.mrb[0].mxu0
          %4323 = vmatprep.mubr.f32.mxu0 %v3463
          %4324 = vmatmul.mubr.f32.gmra.mrb[0].mxu0 %v3355
          %v4325 = vpop.f32.mrb[0].mxu0
          %v4326 = vadd.f32 %v4101, %v4325
          %v4327 = vpop.f32.mrb[0].mxu0
          %4328 = vmatprep.mubr.f32.mxu0 %v3465
          %4329 = vmatmul.mubr.f32.gmra.mrb[0].mxu0 %v3356
          %v4330 = vpop.f32.mrb[0].mxu0
          %v4331 = vadd.f32 %v4106, %v4330
          %v4332 = vpop.f32.mrb[0].mxu0
          %4333 = vmatprep.mubr.f32.mxu0 %v3468
          %4334 = vmatmul.mubr.f32.gmra.mrb[0].mxu0 %v3358
          %v4335 = vpop.f32.mrb[0].mxu0
          %v4336 = vadd.f32 %v4111, %v4335
          %v4337 = vpop.f32.mrb[0].mxu0
          %4338 = vmatprep.mubr.f32.mxu0 %v3470
          %4339 = vmatmul.mubr.f32.gmra.mrb[0].mxu0 %v3359
          %v4340 = vpop.f32.mrb[0].mxu0
          %v4341 = vadd.f32 %v4116, %v4340
          %v4342 = vpop.f32.mrb[0].mxu0
          %4343 = vmatprep.mubr.f32.mxu0 %v3473
          %4344 = vmatmul.mubr.f32.gmra.mrb[0].mxu0 %v3361
          %v4345 = vpop.f32.mrb[0].mxu0
          %v4346 = vadd.f32 %v4121, %v4345
          %v4347 = vpop.f32.mrb[0].mxu0
          %4348 = vmatprep.mubr.f32.mxu0 %v3475
          %4349 = vmatmul.mubr.f32.gmra.mrb[0].mxu0 %v3362
          %v4350 = vpop.f32.mrb[0].mxu0
          %v4351 = vadd.f32 %v4126, %v4350
          %v4352 = vpop.f32.mrb[0].mxu0
          %4353 = vmatprep.mubr.f32.mxu0 %v3478
          %4354 = vmatmul.mubr.f32.gmra.mrb[0].mxu0 %v3364
          %v4355 = vpop.f32.mrb[0].mxu0
          %v4356 = vadd.f32 %v4131, %v4355
          %v4357 = vpop.f32.mrb[0].mxu0
          %4358 = vmatprep.mubr.f32.mxu0 %v3480
          %4359 = vmatmul.mubr.f32.gmra.mrb[0].mxu0 %v3365
          %v4360 = vpop.f32.mrb[0].mxu0
          %v4361 = vadd.f32 %v4136, %v4360
          %v4362 = vpop.f32.mrb[0].mxu0
          %4363 = vmatprep.mubr.f32.mxu0 %v3483
          %4364 = vmatmul.mubr.f32.gmra.mrb[0].mxu0 %v3367
          %v4365 = vpop.f32.mrb[0].mxu0
          %v4366 = vadd.f32 %v4141, %v4365
          %v4367 = vpop.f32.mrb[0].mxu0
          %4368 = vmatprep.mubr.f32.mxu0 %v3485
          %4369 = vmatmul.mubr.f32.gmra.mrb[0].mxu0 %v3368
          %v4370 = vpop.f32.mrb[0].mxu0
          %v4371 = vadd.f32 %v4146, %v4370
          %v4372 = vpop.f32.mrb[0].mxu0
          %4373 = vmatprep.mubr.f32.mxu0 %v3488
          %4374 = vmatmul.mubr.f32.gmra.mrb[0].mxu0 %v3370
          %v4375 = vpop.f32.mrb[0].mxu0
          %v4376 = vadd.f32 %v4151, %v4375
          %v4377 = vpop.f32.mrb[0].mxu0
          %4378 = vmatprep.mubr.f32.mxu0 %v3490
          %4379 = vmatmul.mubr.f32.gmra.mrb[0].mxu0 %v3371
          %v4380 = vpop.f32.mrb[0].mxu0
          %v4381 = vadd.f32 %v4156, %v4380
          %v4382 = vpop.f32.mrb[0].mxu0
          %4383 = vmatprep.mubr.f32.mxu0 %v3493
          %4384 = vmatmul.mubr.f32.gmra.mrb[0].mxu0 %v3373
          %v4385 = vpop.f32.mrb[0].mxu0
          %v4386 = vadd.f32 %v4161, %v4385
          %v4387 = vpop.f32.mrb[0].mxu0
          %4388 = vmatprep.mubr.f32.mxu0 %v3495
          %4389 = vmatmul.mubr.f32.gmra.mrb[0].mxu0 %v3374
          %v4390 = vpop.f32.mrb[0].mxu0
          %v4391 = vadd.f32 %v4166, %v4390
          %v4392 = vpop.f32.mrb[0].mxu0
          %4393 = vmatprep.mubr.f32.mxu0 %v3498
          %4394 = vmatmul.mubr.f32.gmra.mrb[0].mxu0 %v3376
          %v4395 = vpop.f32.mrb[0].mxu0
          %v4396 = vadd.f32 %v4171, %v4395
          %v4397 = vpop.f32.mrb[0].mxu0
          %4398 = vmatprep.mubr.f32.mxu0 %v3500
          %4399 = vmatmul.mubr.f32.gmra.mrb[0].mxu0 %v3377
          %v4400 = vpop.f32.mrb[0].mxu0
          %v4401 = vadd.f32 %v4176, %v4400
          %v4402 = vpop.f32.mrb[0].mxu0
          %4403 = vmatprep.mubr.f32.mxu0 %v3503
          %4404 = vmatmul.mubr.f32.gmra.mrb[0].mxu0 %v3379
          %v4405 = vpop.f32.mrb[0].mxu0
          %v4406 = vadd.f32 %v4181, %v4405
          %v4407 = vpop.f32.mrb[0].mxu0
          %4408 = vmatprep.mubr.f32.mxu0 %v3505
          %4409 = vmatmul.mubr.f32.gmra.mrb[0].mxu0 %v3380
          %v4410 = vpop.f32.mrb[0].mxu0
          %v4411 = vadd.f32 %v4186, %v4410
          %v4412 = vpop.f32.mrb[0].mxu0
          %4413 = vmatprep.mubr.f32.mxu0 %v3508
          %4414 = vmatmul.mubr.f32.gmra.mrb[0].mxu0 %v3382
          %v4415 = vpop.f32.mrb[0].mxu0
          %v4416 = vadd.f32 %v4191, %v4415
          %v4417 = vpop.f32.mrb[0].mxu0
          %4418 = vmatprep.mubr.f32.mxu0 %v3510
          %4419 = vmatmul.mubr.f32.gmra.mrb[0].mxu0 %v3383
          %v4420 = vpop.f32.mrb[0].mxu0
          %v4421 = vadd.f32 %v4196, %v4420
          %v4422 = vpop.f32.mrb[0].mxu0
          %4423 = vmatprep.mubr.f32.mxu0 %v3513
          %4424 = vmatmul.mubr.f32.gmra.mrb[0].mxu0 %v3385
          %v4425 = vpop.f32.mrb[0].mxu0
          %v4426 = vadd.f32 %v4201, %v4425
          %v4427 = vpop.f32.mrb[0].mxu0
          %4428 = vmatprep.mubr.f32.mxu0 %v3515
          %4429 = vmatmul.mubr.f32.gmra.mrb[0].mxu0 %v3386
          %v4430 = vpop.f32.mrb[0].mxu0
          %v4431 = vadd.f32 %v4206, %v4430
          %v4432 = vpop.f32.mrb[0].mxu0
          %4433 = vmatprep.mubr.f32.mxu0 %v3518
          %4434 = vmatmul.mubr.f32.gmra.mrb[0].mxu0 %v3388
          %v4435 = vpop.f32.mrb[0].mxu0
          %v4436 = vadd.f32 %v4211, %v4435
          %v4437 = vpop.f32.mrb[0].mxu0
          %4438 = vmatprep.mubr.f32.mxu0 %v3520
          %4439 = vmatmul.mubr.f32.gmra.mrb[0].mxu0 %v3389
          %v4440 = vpop.f32.mrb[0].mxu0
          %v4441 = vadd.f32 %v4216, %v4440
          %v4442 = vpop.f32.mrb[0].mxu0
          %4443 = vmatprep.mubr.f32.mxu0 %v3523
          %4444 = vmatmul.mubr.f32.gmra.mrb[0].mxu0 %v3391
          %v4445 = vpop.f32.mrb[0].mxu0
          %v4446 = vadd.f32 %v4221, %v4445
          %v4447 = vpop.f32.mrb[0].mxu0
          %4448 = vmatprep.mubr.f32.mxu0 %v3525
          %4449 = vmatmul.mubr.f32.gmra.mrb[0].mxu0 %v3392
          %v4450 = vpop.f32.mrb[0].mxu0
          %v4451 = vadd.f32 %v4226, %v4450
          %v4452 = vpop.f32.mrb[0].mxu0
          %4453 = vmatprep.mubr.f32.mxu0 %v3528
          %4454 = vmatmul.mubr.f32.gmra.mrb[0].mxu0 %v3394
          %v4455 = vpop.f32.mrb[0].mxu0
          %v4456 = vadd.f32 %v4231, %v4455
          %v4457 = vpop.f32.mrb[0].mxu0
          %4458 = vmatprep.mubr.f32.mxu0 %v3530
          %4459 = vmatmul.mubr.f32.gmra.mrb[0].mxu0 %v3395
          %v4460 = vpop.f32.mrb[0].mxu0
          %v4461 = vadd.f32 %v4236, %v4460
          %v4462 = vpop.f32.mrb[0].mxu0
          %4463 = vdwg.mxu0
          %4464 = vmatprep.subr.mxu0 0.0
          %4465 = vmatpush1.msra.mxu0 %v3707
          %4466 = vmatprep.subr.mxu0 0.0
          %4467 = vmatpush1.msra.mxu0 %v3708
          %4468 = vmatprep.subr.mxu0 0.0
          %4469 = vmatpush1.msra.mxu0 %v3709
          %4470 = vmatprep.subr.mxu0 0.0
          %4471 = vmatpush1.msra.mxu0 %v3710
          %4472 = vmatprep.subr.mxu0 0.0
          %4473 = vmatpush1.msra.mxu0 %v3711
          %4474 = vmatprep.subr.mxu0 0.0
          %4475 = vmatpush1.msra.mxu0 %v3712
          %4476 = vmatprep.subr.mxu0 0.0
          %4477 = vmatpush1.msra.mxu0 %v3713
          %4478 = vmatprep.subr.mxu0 0.0
          %4479 = vmatpush1.msra.mxu0 %v3714
          %4480 = vmatprep.subr.mxu0 0.0
          %4481 = vmatpush1.msra.mxu0 %v3715
          %4482 = vmatprep.subr.mxu0 0.0
          %4483 = vmatpush1.msra.mxu0 %v3716
          %4484 = vmatprep.subr.mxu0 0.0
          %4485 = vmatpush1.msra.mxu0 %v3717
          %4486 = vmatprep.subr.mxu0 0.0
          %4487 = vmatpush1.msra.mxu0 %v3718
          %4488 = vmatprep.subr.mxu0 0.0
          %4489 = vmatpush1.msra.mxu0 %v3719
          %4490 = vmatprep.subr.mxu0 0.0
          %4491 = vmatpush1.msra.mxu0 %v3720
          %4492 = vmatprep.subr.mxu0 0.0
          %4493 = vmatpush1.msra.mxu0 %v3721
          %4494 = vmatprep.subr.mxu0 0.0
          %4495 = vmatpush1.msra.mxu0 %v3722
          %4496 = vmatprep.subr.mxu0 0.0
          %4497 = vmatpush1.msra.mxu0 0.0
          %4498 = vmatprep.subr.mxu0 0.0
          %4499 = vmatpush1.msra.mxu0 0.0
          %4500 = vmatprep.subr.mxu0 0.0
          %4501 = vmatpush1.msra.mxu0 0.0
          %4502 = vmatprep.subr.mxu0 0.0
          %4503 = vmatpush1.msra.mxu0 0.0
          %4504 = vmatprep.subr.mxu0 0.0
          %4505 = vmatpush1.msra.mxu0 0.0
          %4506 = vmatprep.subr.mxu0 0.0
          %4507 = vmatpush1.msra.mxu0 0.0
          %4508 = vmatprep.subr.mxu0 0.0
          %4509 = vmatpush1.msra.mxu0 0.0
          %4510 = vmatprep.subr.mxu0 0.0
          %4511 = vmatpush1.msra.mxu0 0.0
          %4512 = vmatprep.subr.mxu0 0.0
          %4513 = vmatpush1.msra.mxu0 0.0
          %4514 = vmatprep.subr.mxu0 0.0
          %4515 = vmatpush1.msra.mxu0 0.0
          %4516 = vmatprep.subr.mxu0 0.0
          %4517 = vmatpush1.msra.mxu0 0.0
          %4518 = vmatprep.subr.mxu0 0.0
          %4519 = vmatpush1.msra.mxu0 0.0
          %4520 = vmatprep.subr.mxu0 0.0
          %4521 = vmatpush1.msra.mxu0 0.0
          %4522 = vmatprep.subr.mxu0 0.0
          %4523 = vmatpush1.msra.mxu0 0.0
          %4524 = vmatprep.subr.mxu0 0.0
          %4525 = vmatpush1.msra.mxu0 0.0
          %4526 = vmatprep.subr.mxu0 0.0
          %4527 = vmatpush1.msra.mxu0 0.0
          %4528 = vmatprep.mubr.f32.mxu0 0.0
          %4529 = vmatmul.mubr.f32.gmra.mrb[0].mxu0 %v3565
          %v4530 = vpop.f32.mrb[0].mxu0
          %v4531 = vadd.f32 %v4306, %v4530
          %v4532 = vpop.f32.mrb[0].mxu0
          %4533 = vmatprep.mubr.f32.mxu0 0.0
          %4534 = vmatmul.mubr.f32.gmra.mrb[0].mxu0 %v3567
          %v4535 = vpop.f32.mrb[0].mxu0
          %v4536 = vadd.f32 %v4311, %v4535
          %v4537 = vpop.f32.mrb[0].mxu0
          %4538 = vmatprep.mubr.f32.mxu0 0.0
          %4539 = vmatmul.mubr.f32.gmra.mrb[0].mxu0 %v3570
          %v4540 = vpop.f32.mrb[0].mxu0
          %v4541 = vadd.f32 %v4316, %v4540
          %v4542 = vpop.f32.mrb[0].mxu0
          %4543 = vmatprep.mubr.f32.mxu0 0.0
          %4544 = vmatmul.mubr.f32.gmra.mrb[0].mxu0 %v3572
          %v4545 = vpop.f32.mrb[0].mxu0
          %v4546 = vadd.f32 %v4321, %v4545
          %v4547 = vpop.f32.mrb[0].mxu0
          %4548 = vmatprep.mubr.f32.mxu0 0.0
          %4549 = vmatmul.mubr.f32.gmra.mrb[0].mxu0 %v3575
          %v4550 = vpop.f32.mrb[0].mxu0
          %v4551 = vadd.f32 %v4326, %v4550
          %v4552 = vpop.f32.mrb[0].mxu0
          %4553 = vmatprep.mubr.f32.mxu0 0.0
          %4554 = vmatmul.mubr.f32.gmra.mrb[0].mxu0 %v3577
          %v4555 = vpop.f32.mrb[0].mxu0
          %v4556 = vadd.f32 %v4331, %v4555
          %v4557 = vpop.f32.mrb[0].mxu0
          %4558 = vmatprep.mubr.f32.mxu0 0.0
          %4559 = vmatmul.mubr.f32.gmra.mrb[0].mxu0 %v3580
          %v4560 = vpop.f32.mrb[0].mxu0
          %v4561 = vadd.f32 %v4336, %v4560
          %v4562 = vpop.f32.mrb[0].mxu0
          %4563 = vmatprep.mubr.f32.mxu0 0.0
          %4564 = vmatmul.mubr.f32.gmra.mrb[0].mxu0 %v3582
          %v4565 = vpop.f32.mrb[0].mxu0
          %v4566 = vadd.f32 %v4341, %v4565
          %v4567 = vpop.f32.mrb[0].mxu0
          %4568 = vmatprep.mubr.f32.mxu0 0.0
          %4569 = vmatmul.mubr.f32.gmra.mrb[0].mxu0 %v3585
          %v4570 = vpop.f32.mrb[0].mxu0
          %v4571 = vadd.f32 %v4346, %v4570
          %v4572 = vpop.f32.mrb[0].mxu0
          %4573 = vmatprep.mubr.f32.mxu0 0.0
          %4574 = vmatmul.mubr.f32.gmra.mrb[0].mxu0 %v3587
          %v4575 = vpop.f32.mrb[0].mxu0
          %v4576 = vadd.f32 %v4351, %v4575
          %v4577 = vpop.f32.mrb[0].mxu0
          %4578 = vmatprep.mubr.f32.mxu0 0.0
          %4579 = vmatmul.mubr.f32.gmra.mrb[0].mxu0 %v3590
          %v4580 = vpop.f32.mrb[0].mxu0
          %v4581 = vadd.f32 %v4356, %v4580
          %v4582 = vpop.f32.mrb[0].mxu0
          %4583 = vmatprep.mubr.f32.mxu0 0.0
          %4584 = vmatmul.mubr.f32.gmra.mrb[0].mxu0 %v3592
          %v4585 = vpop.f32.mrb[0].mxu0
          %v4586 = vadd.f32 %v4361, %v4585
          %v4587 = vpop.f32.mrb[0].mxu0
          %4588 = vmatprep.mubr.f32.mxu0 0.0
          %4589 = vmatmul.mubr.f32.gmra.mrb[0].mxu0 %v3595
          %v4590 = vpop.f32.mrb[0].mxu0
          %v4591 = vadd.f32 %v4366, %v4590
          %v4592 = vpop.f32.mrb[0].mxu0
          %4593 = vmatprep.mubr.f32.mxu0 0.0
          %4594 = vmatmul.mubr.f32.gmra.mrb[0].mxu0 %v3597
          %v4595 = vpop.f32.mrb[0].mxu0
          %v4596 = vadd.f32 %v4371, %v4595
          %v4597 = vpop.f32.mrb[0].mxu0
          %4598 = vmatprep.mubr.f32.mxu0 0.0
          %4599 = vmatmul.mubr.f32.gmra.mrb[0].mxu0 %v3600
          %v4600 = vpop.f32.mrb[0].mxu0
          %v4601 = vadd.f32 %v4376, %v4600
          %v4602 = vpop.f32.mrb[0].mxu0
          %4603 = vmatprep.mubr.f32.mxu0 0.0
          %4604 = vmatmul.mubr.f32.gmra.mrb[0].mxu0 %v3602
          %v4605 = vpop.f32.mrb[0].mxu0
          %v4606 = vadd.f32 %v4381, %v4605
          %v4607 = vpop.f32.mrb[0].mxu0
          %4608 = vmatprep.mubr.f32.mxu0 0.0
          %4609 = vmatmul.mubr.f32.gmra.mrb[0].mxu0 %v3605
          %v4610 = vpop.f32.mrb[0].mxu0
          %v4611 = vadd.f32 %v4386, %v4610
          %v4612 = vpop.f32.mrb[0].mxu0
          %4613 = vmatprep.mubr.f32.mxu0 0.0
          %4614 = vmatmul.mubr.f32.gmra.mrb[0].mxu0 %v3607
          %v4615 = vpop.f32.mrb[0].mxu0
          %v4616 = vadd.f32 %v4391, %v4615
          %v4617 = vpop.f32.mrb[0].mxu0
          %4618 = vmatprep.mubr.f32.mxu0 0.0
          %4619 = vmatmul.mubr.f32.gmra.mrb[0].mxu0 %v3610
          %v4620 = vpop.f32.mrb[0].mxu0
          %v4621 = vadd.f32 %v4396, %v4620
          %v4622 = vpop.f32.mrb[0].mxu0
          %4623 = vmatprep.mubr.f32.mxu0 0.0
          %4624 = vmatmul.mubr.f32.gmra.mrb[0].mxu0 %v3612
          %v4625 = vpop.f32.mrb[0].mxu0
          %v4626 = vadd.f32 %v4401, %v4625
          %v4627 = vpop.f32.mrb[0].mxu0
          %4628 = vmatprep.mubr.f32.mxu0 0.0
          %4629 = vmatmul.mubr.f32.gmra.mrb[0].mxu0 %v3615
          %v4630 = vpop.f32.mrb[0].mxu0
          %v4631 = vadd.f32 %v4406, %v4630
          %v4632 = vpop.f32.mrb[0].mxu0
          %4633 = vmatprep.mubr.f32.mxu0 0.0
          %4634 = vmatmul.mubr.f32.gmra.mrb[0].mxu0 %v3617
          %v4635 = vpop.f32.mrb[0].mxu0
          %v4636 = vadd.f32 %v4411, %v4635
          %v4637 = vpop.f32.mrb[0].mxu0
          %4638 = vmatprep.mubr.f32.mxu0 0.0
          %4639 = vmatmul.mubr.f32.gmra.mrb[0].mxu0 %v3620
          %v4640 = vpop.f32.mrb[0].mxu0
          %v4641 = vadd.f32 %v4416, %v4640
          %v4642 = vpop.f32.mrb[0].mxu0
          %4643 = vmatprep.mubr.f32.mxu0 0.0
          %4644 = vmatmul.mubr.f32.gmra.mrb[0].mxu0 %v3622
          %v4645 = vpop.f32.mrb[0].mxu0
          %v4646 = vadd.f32 %v4421, %v4645
          %v4647 = vpop.f32.mrb[0].mxu0
          %4648 = vmatprep.mubr.f32.mxu0 0.0
          %4649 = vmatmul.mubr.f32.gmra.mrb[0].mxu0 %v3625
          %v4650 = vpop.f32.mrb[0].mxu0
          %v4651 = vadd.f32 %v4426, %v4650
          %v4652 = vpop.f32.mrb[0].mxu0
          %4653 = vmatprep.mubr.f32.mxu0 0.0
          %4654 = vmatmul.mubr.f32.gmra.mrb[0].mxu0 %v3627
          %v4655 = vpop.f32.mrb[0].mxu0
          %v4656 = vadd.f32 %v4431, %v4655
          %v4657 = vpop.f32.mrb[0].mxu0
          %4658 = vmatprep.mubr.f32.mxu0 0.0
          %4659 = vmatmul.mubr.f32.gmra.mrb[0].mxu0 %v3630
          %v4660 = vpop.f32.mrb[0].mxu0
          %v4661 = vadd.f32 %v4436, %v4660
          %v4662 = vpop.f32.mrb[0].mxu0
          %4663 = vmatprep.mubr.f32.mxu0 0.0
          %4664 = vmatmul.mubr.f32.gmra.mrb[0].mxu0 %v3632
          %v4665 = vpop.f32.mrb[0].mxu0
          %v4666 = vadd.f32 %v4441, %v4665
          %v4667 = vpop.f32.mrb[0].mxu0
          %4668 = vmatprep.mubr.f32.mxu0 0.0
          %4669 = vmatmul.mubr.f32.gmra.mrb[0].mxu0 %v3635
          %v4670 = vpop.f32.mrb[0].mxu0
          %v4671 = vadd.f32 %v4446, %v4670
          %v4672 = vpop.f32.mrb[0].mxu0
          %4673 = vmatprep.mubr.f32.mxu0 0.0
          %4674 = vmatmul.mubr.f32.gmra.mrb[0].mxu0 %v3637
          %v4675 = vpop.f32.mrb[0].mxu0
          %v4676 = vadd.f32 %v4451, %v4675
          %v4677 = vpop.f32.mrb[0].mxu0
          %4678 = vmatprep.mubr.f32.mxu0 0.0
          %4679 = vmatmul.mubr.f32.gmra.mrb[0].mxu0 %v3640
          %v4680 = vpop.f32.mrb[0].mxu0
          %v4681 = vadd.f32 %v4456, %v4680
          %v4682 = vpop.f32.mrb[0].mxu0
          %4683 = vmatprep.mubr.f32.mxu0 0.0
          %4684 = vmatmul.mubr.f32.gmra.mrb[0].mxu0 %v3642
          %v4685 = vpop.f32.mrb[0].mxu0
          %v4686 = vadd.f32 %v4461, %v4685
          %v4687 = vpop.f32.mrb[0].mxu0
          %4688 = vdwg.mxu0
          %v4692 = vrot.slane %v3400, 1
          %v4693 = vrot.slane %v3401, 1
          %v4694 = vsel %vm555, %v4692, %v4693
          %v4695 = vrot.slane %v3402, 1
          %v4696 = vsel %vm555, %v4693, %v4695
          %v4699 = vrot.slane %v3400, 2
          %v4700 = vrot.slane %v3401, 2
          %v4701 = vsel %vm1221, %v4699, %v4700
          %v4702 = vrot.slane %v3402, 2
          %v4703 = vsel %vm1221, %v4700, %v4702
          %s4706 = scalar_lea.vmem %s2, 768
          %v4707 = vld [vmem:[%s4706] sm:$0xff]
          %v4708 = vld [vmem:[%s4706 + $0x8] sm:$0xff]
          %v4709 = vld [vmem:[%s4706 + $0x10] sm:$0xff]
          %v4710 = vld [vmem:[%s4706 + $0x18] sm:$0xff]
          %v4711 = vld [vmem:[%s4706 + $0x20] sm:$0xff]
          %v4712 = vld [vmem:[%s4706 + $0x28] sm:$0xff]
          %v4713 = vld [vmem:[%s4706 + $0x30] sm:$0xff]
          %v4714 = vld [vmem:[%s4706 + $0x38] sm:$0xff]
          %v4715 = vld [vmem:[%s4706 + $0x40] sm:$0xff]
          %v4716 = vld [vmem:[%s4706 + $0x48] sm:$0xff]
          %v4717 = vld [vmem:[%s4706 + $0x50] sm:$0xff]
          %v4718 = vld [vmem:[%s4706 + $0x58] sm:$0xff]
          %v4719 = vld [vmem:[%s4706 + $0x60] sm:$0xff]
          %v4720 = vld [vmem:[%s4706 + $0x68] sm:$0xff]
          %v4721 = vld [vmem:[%s4706 + $0x70] sm:$0xff]
          %v4722 = vld [vmem:[%s4706 + $0x78] sm:$0xff]
          %v4723 = vld [vmem:[%s4706 + $0x80] sm:$0xff]
          %v4724 = vld [vmem:[%s4706 + $0x88] sm:$0xff]
          %v4725 = vld [vmem:[%s4706 + $0x90] sm:$0xff]
          %v4726 = vld [vmem:[%s4706 + $0x98] sm:$0xff]
          %v4727 = vld [vmem:[%s4706 + $0xa0] sm:$0xff]
          %v4728 = vld [vmem:[%s4706 + $0xa8] sm:$0xff]
          %v4729 = vld [vmem:[%s4706 + $0xb0] sm:$0xff]
          %v4730 = vld [vmem:[%s4706 + $0xb8] sm:$0xff]
          %v4731 = vld [vmem:[%s4706 + $0xc0] sm:$0xff]
          %v4732 = vld [vmem:[%s4706 + $0xc8] sm:$0xff]
          %v4733 = vld [vmem:[%s4706 + $0xd0] sm:$0xff]
          %v4734 = vld [vmem:[%s4706 + $0xd8] sm:$0xff]
          %v4735 = vld [vmem:[%s4706 + $0xe0] sm:$0xff]
          %v4736 = vld [vmem:[%s4706 + $0xe8] sm:$0xff]
          %v4737 = vld [vmem:[%s4706 + $0xf0] sm:$0xff]
          %v4738 = vld [vmem:[%s4706 + $0xf8] sm:$0xff]
          %v4739 = vld [vmem:[%s4706 + $0x100] sm:$0xff]
          %v4740 = vld [vmem:[%s4706 + $0x108] sm:$0xff]
          %v4741 = vld [vmem:[%s4706 + $0x110] sm:$0xff]
          %v4742 = vld [vmem:[%s4706 + $0x118] sm:$0xff]
          %v4743 = vld [vmem:[%s4706 + $0x120] sm:$0xff]
          %v4744 = vld [vmem:[%s4706 + $0x128] sm:$0xff]
          %v4745 = vld [vmem:[%s4706 + $0x130] sm:$0xff]
          %v4746 = vld [vmem:[%s4706 + $0x138] sm:$0xff]
          %v4747 = vld [vmem:[%s4706 + $0x140] sm:$0xff]
          %v4748 = vld [vmem:[%s4706 + $0x148] sm:$0xff]
          %v4749 = vld [vmem:[%s4706 + $0x150] sm:$0xff]
          %v4750 = vld [vmem:[%s4706 + $0x158] sm:$0xff]
          %v4751 = vld [vmem:[%s4706 + $0x160] sm:$0xff]
          %v4752 = vld [vmem:[%s4706 + $0x168] sm:$0xff]
          %v4753 = vld [vmem:[%s4706 + $0x170] sm:$0xff]
          %v4754 = vld [vmem:[%s4706 + $0x178] sm:$0xff]
          %4755 = vmatprep.subr.mxu0 0.0
          %4756 = vmatpush1.msra.mxu0 %v4707
          %4757 = vmatprep.subr.mxu0 0.0
          %4758 = vmatpush1.msra.mxu0 %v4708
          %4759 = vmatprep.subr.mxu0 0.0
          %4760 = vmatpush1.msra.mxu0 %v4709
          %4761 = vmatprep.subr.mxu0 0.0
          %4762 = vmatpush1.msra.mxu0 %v4710
          %4763 = vmatprep.subr.mxu0 0.0
          %4764 = vmatpush1.msra.mxu0 %v4711
          %4765 = vmatprep.subr.mxu0 0.0
          %4766 = vmatpush1.msra.mxu0 %v4712
          %4767 = vmatprep.subr.mxu0 0.0
          %4768 = vmatpush1.msra.mxu0 %v4713
          %4769 = vmatprep.subr.mxu0 0.0
          %4770 = vmatpush1.msra.mxu0 %v4714
          %4771 = vmatprep.subr.mxu0 0.0
          %4772 = vmatpush1.msra.mxu0 %v4715
          %4773 = vmatprep.subr.mxu0 0.0
          %4774 = vmatpush1.msra.mxu0 %v4716
          %4775 = vmatprep.subr.mxu0 0.0
          %4776 = vmatpush1.msra.mxu0 %v4717
          %4777 = vmatprep.subr.mxu0 0.0
          %4778 = vmatpush1.msra.mxu0 %v4718
          %4779 = vmatprep.subr.mxu0 0.0
          %4780 = vmatpush1.msra.mxu0 %v4719
          %4781 = vmatprep.subr.mxu0 0.0
          %4782 = vmatpush1.msra.mxu0 %v4720
          %4783 = vmatprep.subr.mxu0 0.0
          %4784 = vmatpush1.msra.mxu0 %v4721
          %4785 = vmatprep.subr.mxu0 0.0
          %4786 = vmatpush1.msra.mxu0 %v4722
          %4787 = vmatprep.subr.mxu0 0.0
          %4788 = vmatpush1.msra.mxu0 %v4723
          %4789 = vmatprep.subr.mxu0 0.0
          %4790 = vmatpush1.msra.mxu0 %v4724
          %4791 = vmatprep.subr.mxu0 0.0
          %4792 = vmatpush1.msra.mxu0 %v4725
          %4793 = vmatprep.subr.mxu0 0.0
          %4794 = vmatpush1.msra.mxu0 %v4726
          %4795 = vmatprep.subr.mxu0 0.0
          %4796 = vmatpush1.msra.mxu0 %v4727
          %4797 = vmatprep.subr.mxu0 0.0
          %4798 = vmatpush1.msra.mxu0 %v4728
          %4799 = vmatprep.subr.mxu0 0.0
          %4800 = vmatpush1.msra.mxu0 %v4729
          %4801 = vmatprep.subr.mxu0 0.0
          %4802 = vmatpush1.msra.mxu0 %v4730
          %4803 = vmatprep.subr.mxu0 0.0
          %4804 = vmatpush1.msra.mxu0 %v4731
          %4805 = vmatprep.subr.mxu0 0.0
          %4806 = vmatpush1.msra.mxu0 %v4732
          %4807 = vmatprep.subr.mxu0 0.0
          %4808 = vmatpush1.msra.mxu0 %v4733
          %4809 = vmatprep.subr.mxu0 0.0
          %4810 = vmatpush1.msra.mxu0 %v4734
          %4811 = vmatprep.subr.mxu0 0.0
          %4812 = vmatpush1.msra.mxu0 %v4735
          %4813 = vmatprep.subr.mxu0 0.0
          %4814 = vmatpush1.msra.mxu0 %v4736
          %4815 = vmatprep.subr.mxu0 0.0
          %4816 = vmatpush1.msra.mxu0 %v4737
          %4817 = vmatprep.subr.mxu0 0.0
          %4818 = vmatpush1.msra.mxu0 %v4738
          %4819 = vmatprep.mubr.f32.mxu0 %v3463
          %4820 = vmatmul.mubr.f32.gmra.mrb[0].mxu0 %v3355
          %v4821 = vpop.f32.mrb[0].mxu0
          %v4822 = vadd.f32 0.0, %v4821
          %v4823 = vpop.f32.mrb[0].mxu0
          %4824 = vmatprep.mubr.f32.mxu0 %v3465
          %4825 = vmatmul.mubr.f32.gmra.mrb[0].mxu0 %v3356
          %v4826 = vpop.f32.mrb[0].mxu0
          %v4827 = vadd.f32 0.0, %v4826
          %v4828 = vpop.f32.mrb[0].mxu0
          %4829 = vmatprep.mubr.f32.mxu0 %v3468
          %4830 = vmatmul.mubr.f32.gmra.mrb[0].mxu0 %v3358
          %v4831 = vpop.f32.mrb[0].mxu0
          %v4832 = vadd.f32 0.0, %v4831
          %v4833 = vpop.f32.mrb[0].mxu0
          %4834 = vmatprep.mubr.f32.mxu0 %v3470
          %4835 = vmatmul.mubr.f32.gmra.mrb[0].mxu0 %v3359
          %v4836 = vpop.f32.mrb[0].mxu0
          %v4837 = vadd.f32 0.0, %v4836
          %v4838 = vpop.f32.mrb[0].mxu0
          %4839 = vmatprep.mubr.f32.mxu0 %v3473
          %4840 = vmatmul.mubr.f32.gmra.mrb[0].mxu0 %v3361
          %v4841 = vpop.f32.mrb[0].mxu0
          %v4842 = vadd.f32 0.0, %v4841
          %v4843 = vpop.f32.mrb[0].mxu0
          %4844 = vmatprep.mubr.f32.mxu0 %v3475
          %4845 = vmatmul.mubr.f32.gmra.mrb[0].mxu0 %v3362
          %v4846 = vpop.f32.mrb[0].mxu0
          %v4847 = vadd.f32 0.0, %v4846
          %v4848 = vpop.f32.mrb[0].mxu0
          %4849 = vmatprep.mubr.f32.mxu0 %v3478
          %4850 = vmatmul.mubr.f32.gmra.mrb[0].mxu0 %v3364
          %v4851 = vpop.f32.mrb[0].mxu0
          %v4852 = vadd.f32 0.0, %v4851
          %v4853 = vpop.f32.mrb[0].mxu0
          %4854 = vmatprep.mubr.f32.mxu0 %v3480
          %4855 = vmatmul.mubr.f32.gmra.mrb[0].mxu0 %v3365
          %v4856 = vpop.f32.mrb[0].mxu0
          %v4857 = vadd.f32 0.0, %v4856
          %v4858 = vpop.f32.mrb[0].mxu0
          %4859 = vmatprep.mubr.f32.mxu0 %v3483
          %4860 = vmatmul.mubr.f32.gmra.mrb[0].mxu0 %v3367
          %v4861 = vpop.f32.mrb[0].mxu0
          %v4862 = vadd.f32 0.0, %v4861
          %v4863 = vpop.f32.mrb[0].mxu0
          %4864 = vmatprep.mubr.f32.mxu0 %v3485
          %4865 = vmatmul.mubr.f32.gmra.mrb[0].mxu0 %v3368
          %v4866 = vpop.f32.mrb[0].mxu0
          %v4867 = vadd.f32 0.0, %v4866
          %v4868 = vpop.f32.mrb[0].mxu0
          %4869 = vmatprep.mubr.f32.mxu0 %v3488
          %4870 = vmatmul.mubr.f32.gmra.mrb[0].mxu0 %v3370
          %v4871 = vpop.f32.mrb[0].mxu0
          %v4872 = vadd.f32 0.0, %v4871
          %v4873 = vpop.f32.mrb[0].mxu0
          %4874 = vmatprep.mubr.f32.mxu0 %v3490
          %4875 = vmatmul.mubr.f32.gmra.mrb[0].mxu0 %v3371
          %v4876 = vpop.f32.mrb[0].mxu0
          %v4877 = vadd.f32 0.0, %v4876
          %v4878 = vpop.f32.mrb[0].mxu0
          %4879 = vmatprep.mubr.f32.mxu0 %v3493
          %4880 = vmatmul.mubr.f32.gmra.mrb[0].mxu0 %v3373
          %v4881 = vpop.f32.mrb[0].mxu0
          %v4882 = vadd.f32 0.0, %v4881
          %v4883 = vpop.f32.mrb[0].mxu0
          %4884 = vmatprep.mubr.f32.mxu0 %v3495
          %4885 = vmatmul.mubr.f32.gmra.mrb[0].mxu0 %v3374
          %v4886 = vpop.f32.mrb[0].mxu0
          %v4887 = vadd.f32 0.0, %v4886
          %v4888 = vpop.f32.mrb[0].mxu0
          %4889 = vmatprep.mubr.f32.mxu0 %v3498
          %4890 = vmatmul.mubr.f32.gmra.mrb[0].mxu0 %v3376
          %v4891 = vpop.f32.mrb[0].mxu0
          %v4892 = vadd.f32 0.0, %v4891
          %v4893 = vpop.f32.mrb[0].mxu0
          %4894 = vmatprep.mubr.f32.mxu0 %v3500
          %4895 = vmatmul.mubr.f32.gmra.mrb[0].mxu0 %v3377
          %v4896 = vpop.f32.mrb[0].mxu0
          %v4897 = vadd.f32 0.0, %v4896
          %v4898 = vpop.f32.mrb[0].mxu0
          %4899 = vmatprep.mubr.f32.mxu0 %v3503
          %4900 = vmatmul.mubr.f32.gmra.mrb[0].mxu0 %v3379
          %v4901 = vpop.f32.mrb[0].mxu0
          %v4902 = vadd.f32 0.0, %v4901
          %v4903 = vpop.f32.mrb[0].mxu0
          %4904 = vmatprep.mubr.f32.mxu0 %v3505
          %4905 = vmatmul.mubr.f32.gmra.mrb[0].mxu0 %v3380
          %v4906 = vpop.f32.mrb[0].mxu0
          %v4907 = vadd.f32 0.0, %v4906
          %v4908 = vpop.f32.mrb[0].mxu0
          %4909 = vmatprep.mubr.f32.mxu0 %v3508
          %4910 = vmatmul.mubr.f32.gmra.mrb[0].mxu0 %v3382
          %v4911 = vpop.f32.mrb[0].mxu0
          %v4912 = vadd.f32 0.0, %v4911
          %v4913 = vpop.f32.mrb[0].mxu0
          %4914 = vmatprep.mubr.f32.mxu0 %v3510
          %4915 = vmatmul.mubr.f32.gmra.mrb[0].mxu0 %v3383
          %v4916 = vpop.f32.mrb[0].mxu0
          %v4917 = vadd.f32 0.0, %v4916
          %v4918 = vpop.f32.mrb[0].mxu0
          %4919 = vmatprep.mubr.f32.mxu0 %v3513
          %4920 = vmatmul.mubr.f32.gmra.mrb[0].mxu0 %v3385
          %v4921 = vpop.f32.mrb[0].mxu0
          %v4922 = vadd.f32 0.0, %v4921
          %v4923 = vpop.f32.mrb[0].mxu0
          %4924 = vmatprep.mubr.f32.mxu0 %v3515
          %4925 = vmatmul.mubr.f32.gmra.mrb[0].mxu0 %v3386
          %v4926 = vpop.f32.mrb[0].mxu0
          %v4927 = vadd.f32 0.0, %v4926
          %v4928 = vpop.f32.mrb[0].mxu0
          %4929 = vmatprep.mubr.f32.mxu0 %v3518
          %4930 = vmatmul.mubr.f32.gmra.mrb[0].mxu0 %v3388
          %v4931 = vpop.f32.mrb[0].mxu0
          %v4932 = vadd.f32 0.0, %v4931
          %v4933 = vpop.f32.mrb[0].mxu0
          %4934 = vmatprep.mubr.f32.mxu0 %v3520
          %4935 = vmatmul.mubr.f32.gmra.mrb[0].mxu0 %v3389
          %v4936 = vpop.f32.mrb[0].mxu0
          %v4937 = vadd.f32 0.0, %v4936
          %v4938 = vpop.f32.mrb[0].mxu0
          %4939 = vmatprep.mubr.f32.mxu0 %v3523
          %4940 = vmatmul.mubr.f32.gmra.mrb[0].mxu0 %v3391
          %v4941 = vpop.f32.mrb[0].mxu0
          %v4942 = vadd.f32 0.0, %v4941
          %v4943 = vpop.f32.mrb[0].mxu0
          %4944 = vmatprep.mubr.f32.mxu0 %v3525
          %4945 = vmatmul.mubr.f32.gmra.mrb[0].mxu0 %v3392
          %v4946 = vpop.f32.mrb[0].mxu0
          %v4947 = vadd.f32 0.0, %v4946
          %v4948 = vpop.f32.mrb[0].mxu0
          %4949 = vmatprep.mubr.f32.mxu0 %v3528
          %4950 = vmatmul.mubr.f32.gmra.mrb[0].mxu0 %v3394
          %v4951 = vpop.f32.mrb[0].mxu0
          %v4952 = vadd.f32 0.0, %v4951
          %v4953 = vpop.f32.mrb[0].mxu0
          %4954 = vmatprep.mubr.f32.mxu0 %v3530
          %4955 = vmatmul.mubr.f32.gmra.mrb[0].mxu0 %v3395
          %v4956 = vpop.f32.mrb[0].mxu0
          %v4957 = vadd.f32 0.0, %v4956
          %v4958 = vpop.f32.mrb[0].mxu0
          %4959 = vmatprep.mubr.f32.mxu0 %v3728
          %4960 = vmatmul.mubr.f32.gmra.mrb[0].mxu0 %v3397
          %v4961 = vpop.f32.mrb[0].mxu0
          %v4962 = vadd.f32 0.0, %v4961
          %v4963 = vpop.f32.mrb[0].mxu0
          %4964 = vmatprep.mubr.f32.mxu0 %v3730
          %4965 = vmatmul.mubr.f32.gmra.mrb[0].mxu0 %v3398
          %v4966 = vpop.f32.mrb[0].mxu0
          %v4967 = vadd.f32 0.0, %v4966
          %v4968 = vpop.f32.mrb[0].mxu0
          %4969 = vmatprep.mubr.f32.mxu0 %v4694
          %4970 = vmatmul.mubr.f32.gmra.mrb[0].mxu0 %v3400
          %v4971 = vpop.f32.mrb[0].mxu0
          %v4972 = vadd.f32 0.0, %v4971
          %v4973 = vpop.f32.mrb[0].mxu0
          %4974 = vmatprep.mubr.f32.mxu0 %v4696
          %4975 = vmatmul.mubr.f32.gmra.mrb[0].mxu0 %v3401
          %v4976 = vpop.f32.mrb[0].mxu0
          %v4977 = vadd.f32 0.0, %v4976
          %v4978 = vpop.f32.mrb[0].mxu0
          %4979 = vdwg.mxu0
          %4980 = vmatprep.subr.mxu0 0.0
          %4981 = vmatpush1.msra.mxu0 %v4739
          %4982 = vmatprep.subr.mxu0 0.0
          %4983 = vmatpush1.msra.mxu0 %v4740
          %4984 = vmatprep.subr.mxu0 0.0
          %4985 = vmatpush1.msra.mxu0 %v4741
          %4986 = vmatprep.subr.mxu0 0.0
          %4987 = vmatpush1.msra.mxu0 %v4742
          %4988 = vmatprep.subr.mxu0 0.0
          %4989 = vmatpush1.msra.mxu0 %v4743
          %4990 = vmatprep.subr.mxu0 0.0
          %4991 = vmatpush1.msra.mxu0 %v4744
          %4992 = vmatprep.subr.mxu0 0.0
          %4993 = vmatpush1.msra.mxu0 %v4745
          %4994 = vmatprep.subr.mxu0 0.0
          %4995 = vmatpush1.msra.mxu0 %v4746
          %4996 = vmatprep.subr.mxu0 0.0
          %4997 = vmatpush1.msra.mxu0 %v4747
          %4998 = vmatprep.subr.mxu0 0.0
          %4999 = vmatpush1.msra.mxu0 %v4748
          %5000 = vmatprep.subr.mxu0 0.0
          %5001 = vmatpush1.msra.mxu0 %v4749
          %5002 = vmatprep.subr.mxu0 0.0
          %5003 = vmatpush1.msra.mxu0 %v4750
          %5004 = vmatprep.subr.mxu0 0.0
          %5005 = vmatpush1.msra.mxu0 %v4751
          %5006 = vmatprep.subr.mxu0 0.0
          %5007 = vmatpush1.msra.mxu0 %v4752
          %5008 = vmatprep.subr.mxu0 0.0
          %5009 = vmatpush1.msra.mxu0 %v4753
          %5010 = vmatprep.subr.mxu0 0.0
          %5011 = vmatpush1.msra.mxu0 %v4754
          %5012 = vmatprep.subr.mxu0 0.0
          %5013 = vmatpush1.msra.mxu0 0.0
          %5014 = vmatprep.subr.mxu0 0.0
          %5015 = vmatpush1.msra.mxu0 0.0
          %5016 = vmatprep.subr.mxu0 0.0
          %5017 = vmatpush1.msra.mxu0 0.0
          %5018 = vmatprep.subr.mxu0 0.0
          %5019 = vmatpush1.msra.mxu0 0.0
          %5020 = vmatprep.subr.mxu0 0.0
          %5021 = vmatpush1.msra.mxu0 0.0
          %5022 = vmatprep.subr.mxu0 0.0
          %5023 = vmatpush1.msra.mxu0 0.0
          %5024 = vmatprep.subr.mxu0 0.0
          %5025 = vmatpush1.msra.mxu0 0.0
          %5026 = vmatprep.subr.mxu0 0.0
          %5027 = vmatpush1.msra.mxu0 0.0
          %5028 = vmatprep.subr.mxu0 0.0
          %5029 = vmatpush1.msra.mxu0 0.0
          %5030 = vmatprep.subr.mxu0 0.0
          %5031 = vmatpush1.msra.mxu0 0.0
          %5032 = vmatprep.subr.mxu0 0.0
          %5033 = vmatpush1.msra.mxu0 0.0
          %5034 = vmatprep.subr.mxu0 0.0
          %5035 = vmatpush1.msra.mxu0 0.0
          %5036 = vmatprep.subr.mxu0 0.0
          %5037 = vmatpush1.msra.mxu0 0.0
          %5038 = vmatprep.subr.mxu0 0.0
          %5039 = vmatpush1.msra.mxu0 0.0
          %5040 = vmatprep.subr.mxu0 0.0
          %5041 = vmatpush1.msra.mxu0 0.0
          %5042 = vmatprep.subr.mxu0 0.0
          %5043 = vmatpush1.msra.mxu0 0.0
          %5044 = vmatprep.mubr.f32.mxu0 0.0
          %5045 = vmatmul.mubr.f32.gmra.mrb[0].mxu0 %v3575
          %v5046 = vpop.f32.mrb[0].mxu0
          %v5047 = vadd.f32 %v4822, %v5046
          %v5048 = vpop.f32.mrb[0].mxu0
          %5049 = vmatprep.mubr.f32.mxu0 0.0
          %5050 = vmatmul.mubr.f32.gmra.mrb[0].mxu0 %v3577
          %v5051 = vpop.f32.mrb[0].mxu0
          %v5052 = vadd.f32 %v4827, %v5051
          %v5053 = vpop.f32.mrb[0].mxu0
          %5054 = vmatprep.mubr.f32.mxu0 0.0
          %5055 = vmatmul.mubr.f32.gmra.mrb[0].mxu0 %v3580
          %v5056 = vpop.f32.mrb[0].mxu0
          %v5057 = vadd.f32 %v4832, %v5056
          %v5058 = vpop.f32.mrb[0].mxu0
          %5059 = vmatprep.mubr.f32.mxu0 0.0
          %5060 = vmatmul.mubr.f32.gmra.mrb[0].mxu0 %v3582
          %v5061 = vpop.f32.mrb[0].mxu0
          %v5062 = vadd.f32 %v4837, %v5061
          %v5063 = vpop.f32.mrb[0].mxu0
          %5064 = vmatprep.mubr.f32.mxu0 0.0
          %5065 = vmatmul.mubr.f32.gmra.mrb[0].mxu0 %v3585
          %v5066 = vpop.f32.mrb[0].mxu0
          %v5067 = vadd.f32 %v4842, %v5066
          %v5068 = vpop.f32.mrb[0].mxu0
          %5069 = vmatprep.mubr.f32.mxu0 0.0
          %5070 = vmatmul.mubr.f32.gmra.mrb[0].mxu0 %v3587
          %v5071 = vpop.f32.mrb[0].mxu0
          %v5072 = vadd.f32 %v4847, %v5071
          %v5073 = vpop.f32.mrb[0].mxu0
          %5074 = vmatprep.mubr.f32.mxu0 0.0
          %5075 = vmatmul.mubr.f32.gmra.mrb[0].mxu0 %v3590
          %v5076 = vpop.f32.mrb[0].mxu0
          %v5077 = vadd.f32 %v4852, %v5076
          %v5078 = vpop.f32.mrb[0].mxu0
          %5079 = vmatprep.mubr.f32.mxu0 0.0
          %5080 = vmatmul.mubr.f32.gmra.mrb[0].mxu0 %v3592
          %v5081 = vpop.f32.mrb[0].mxu0
          %v5082 = vadd.f32 %v4857, %v5081
          %v5083 = vpop.f32.mrb[0].mxu0
          %5084 = vmatprep.mubr.f32.mxu0 0.0
          %5085 = vmatmul.mubr.f32.gmra.mrb[0].mxu0 %v3595
          %v5086 = vpop.f32.mrb[0].mxu0
          %v5087 = vadd.f32 %v4862, %v5086
          %v5088 = vpop.f32.mrb[0].mxu0
          %5089 = vmatprep.mubr.f32.mxu0 0.0
          %5090 = vmatmul.mubr.f32.gmra.mrb[0].mxu0 %v3597
          %v5091 = vpop.f32.mrb[0].mxu0
          %v5092 = vadd.f32 %v4867, %v5091
          %v5093 = vpop.f32.mrb[0].mxu0
          %5094 = vmatprep.mubr.f32.mxu0 0.0
          %5095 = vmatmul.mubr.f32.gmra.mrb[0].mxu0 %v3600
          %v5096 = vpop.f32.mrb[0].mxu0
          %v5097 = vadd.f32 %v4872, %v5096
          %v5098 = vpop.f32.mrb[0].mxu0
          %5099 = vmatprep.mubr.f32.mxu0 0.0
          %5100 = vmatmul.mubr.f32.gmra.mrb[0].mxu0 %v3602
          %v5101 = vpop.f32.mrb[0].mxu0
          %v5102 = vadd.f32 %v4877, %v5101
          %v5103 = vpop.f32.mrb[0].mxu0
          %5104 = vmatprep.mubr.f32.mxu0 0.0
          %5105 = vmatmul.mubr.f32.gmra.mrb[0].mxu0 %v3605
          %v5106 = vpop.f32.mrb[0].mxu0
          %v5107 = vadd.f32 %v4882, %v5106
          %v5108 = vpop.f32.mrb[0].mxu0
          %5109 = vmatprep.mubr.f32.mxu0 0.0
          %5110 = vmatmul.mubr.f32.gmra.mrb[0].mxu0 %v3607
          %v5111 = vpop.f32.mrb[0].mxu0
          %v5112 = vadd.f32 %v4887, %v5111
          %v5113 = vpop.f32.mrb[0].mxu0
          %5114 = vmatprep.mubr.f32.mxu0 0.0
          %5115 = vmatmul.mubr.f32.gmra.mrb[0].mxu0 %v3610
          %v5116 = vpop.f32.mrb[0].mxu0
          %v5117 = vadd.f32 %v4892, %v5116
          %v5118 = vpop.f32.mrb[0].mxu0
          %5119 = vmatprep.mubr.f32.mxu0 0.0
          %5120 = vmatmul.mubr.f32.gmra.mrb[0].mxu0 %v3612
          %v5121 = vpop.f32.mrb[0].mxu0
          %v5122 = vadd.f32 %v4897, %v5121
          %v5123 = vpop.f32.mrb[0].mxu0
          %5124 = vmatprep.mubr.f32.mxu0 0.0
          %5125 = vmatmul.mubr.f32.gmra.mrb[0].mxu0 %v3615
          %v5126 = vpop.f32.mrb[0].mxu0
          %v5127 = vadd.f32 %v4902, %v5126
          %v5128 = vpop.f32.mrb[0].mxu0
          %5129 = vmatprep.mubr.f32.mxu0 0.0
          %5130 = vmatmul.mubr.f32.gmra.mrb[0].mxu0 %v3617
          %v5131 = vpop.f32.mrb[0].mxu0
          %v5132 = vadd.f32 %v4907, %v5131
          %v5133 = vpop.f32.mrb[0].mxu0
          %5134 = vmatprep.mubr.f32.mxu0 0.0
          %5135 = vmatmul.mubr.f32.gmra.mrb[0].mxu0 %v3620
          %v5136 = vpop.f32.mrb[0].mxu0
          %v5137 = vadd.f32 %v4912, %v5136
          %v5138 = vpop.f32.mrb[0].mxu0
          %5139 = vmatprep.mubr.f32.mxu0 0.0
          %5140 = vmatmul.mubr.f32.gmra.mrb[0].mxu0 %v3622
          %v5141 = vpop.f32.mrb[0].mxu0
          %v5142 = vadd.f32 %v4917, %v5141
          %v5143 = vpop.f32.mrb[0].mxu0
          %5144 = vmatprep.mubr.f32.mxu0 0.0
          %5145 = vmatmul.mubr.f32.gmra.mrb[0].mxu0 %v3625
          %v5146 = vpop.f32.mrb[0].mxu0
          %v5147 = vadd.f32 %v4922, %v5146
          %v5148 = vpop.f32.mrb[0].mxu0
          %5149 = vmatprep.mubr.f32.mxu0 0.0
          %5150 = vmatmul.mubr.f32.gmra.mrb[0].mxu0 %v3627
          %v5151 = vpop.f32.mrb[0].mxu0
          %v5152 = vadd.f32 %v4927, %v5151
          %v5153 = vpop.f32.mrb[0].mxu0
          %5154 = vmatprep.mubr.f32.mxu0 0.0
          %5155 = vmatmul.mubr.f32.gmra.mrb[0].mxu0 %v3630
          %v5156 = vpop.f32.mrb[0].mxu0
          %v5157 = vadd.f32 %v4932, %v5156
          %v5158 = vpop.f32.mrb[0].mxu0
          %5159 = vmatprep.mubr.f32.mxu0 0.0
          %5160 = vmatmul.mubr.f32.gmra.mrb[0].mxu0 %v3632
          %v5161 = vpop.f32.mrb[0].mxu0
          %v5162 = vadd.f32 %v4937, %v5161
          %v5163 = vpop.f32.mrb[0].mxu0
          %5164 = vmatprep.mubr.f32.mxu0 0.0
          %5165 = vmatmul.mubr.f32.gmra.mrb[0].mxu0 %v3635
          %v5166 = vpop.f32.mrb[0].mxu0
          %v5167 = vadd.f32 %v4942, %v5166
          %v5168 = vpop.f32.mrb[0].mxu0
          %5169 = vmatprep.mubr.f32.mxu0 0.0
          %5170 = vmatmul.mubr.f32.gmra.mrb[0].mxu0 %v3637
          %v5171 = vpop.f32.mrb[0].mxu0
          %v5172 = vadd.f32 %v4947, %v5171
          %v5173 = vpop.f32.mrb[0].mxu0
          %5174 = vmatprep.mubr.f32.mxu0 0.0
          %5175 = vmatmul.mubr.f32.gmra.mrb[0].mxu0 %v3640
          %v5176 = vpop.f32.mrb[0].mxu0
          %v5177 = vadd.f32 %v4952, %v5176
          %v5178 = vpop.f32.mrb[0].mxu0
          %5179 = vmatprep.mubr.f32.mxu0 0.0
          %5180 = vmatmul.mubr.f32.gmra.mrb[0].mxu0 %v3642
          %v5181 = vpop.f32.mrb[0].mxu0
          %v5182 = vadd.f32 %v4957, %v5181
          %v5183 = vpop.f32.mrb[0].mxu0
          %5184 = vmatprep.mubr.f32.mxu0 0.0
          %5185 = vmatmul.mubr.f32.gmra.mrb[0].mxu0 %v3735
          %v5186 = vpop.f32.mrb[0].mxu0
          %v5187 = vadd.f32 %v4962, %v5186
          %v5188 = vpop.f32.mrb[0].mxu0
          %5189 = vmatprep.mubr.f32.mxu0 0.0
          %5190 = vmatmul.mubr.f32.gmra.mrb[0].mxu0 %v3737
          %v5191 = vpop.f32.mrb[0].mxu0
          %v5192 = vadd.f32 %v4967, %v5191
          %v5193 = vpop.f32.mrb[0].mxu0
          %5194 = vmatprep.mubr.f32.mxu0 0.0
          %5195 = vmatmul.mubr.f32.gmra.mrb[0].mxu0 %v4701
          %v5196 = vpop.f32.mrb[0].mxu0
          %v5197 = vadd.f32 %v4972, %v5196
          %v5198 = vpop.f32.mrb[0].mxu0
          %5199 = vmatprep.mubr.f32.mxu0 0.0
          %5200 = vmatmul.mubr.f32.gmra.mrb[0].mxu0 %v4703
          %v5201 = vpop.f32.mrb[0].mxu0
          %v5202 = vadd.f32 %v4977, %v5201
          %v5203 = vpop.f32.mrb[0].mxu0
          %5204 = vdwg.mxu0
          %v5205 = vadd.f32 %v4531, %v5047
          %v5206 = vadd.f32 %v4536, %v5052
          %v5207 = vadd.f32 %v4541, %v5057
          %v5208 = vadd.f32 %v4546, %v5062
          %v5209 = vadd.f32 %v4551, %v5067
          %v5210 = vadd.f32 %v4556, %v5072
          %v5211 = vadd.f32 %v4561, %v5077
          %v5212 = vadd.f32 %v4566, %v5082
          %v5213 = vadd.f32 %v4571, %v5087
          %v5214 = vadd.f32 %v4576, %v5092
          %v5215 = vadd.f32 %v4581, %v5097
          %v5216 = vadd.f32 %v4586, %v5102
          %v5217 = vadd.f32 %v4591, %v5107
          %v5218 = vadd.f32 %v4596, %v5112
          %v5219 = vadd.f32 %v4601, %v5117
          %v5220 = vadd.f32 %v4606, %v5122
          %v5221 = vadd.f32 %v4611, %v5127
          %v5222 = vadd.f32 %v4616, %v5132
          %v5223 = vadd.f32 %v4621, %v5137
          %v5224 = vadd.f32 %v4626, %v5142
          %v5225 = vadd.f32 %v4631, %v5147
          %v5226 = vadd.f32 %v4636, %v5152
          %v5227 = vadd.f32 %v4641, %v5157
          %v5228 = vadd.f32 %v4646, %v5162
          %v5229 = vadd.f32 %v4651, %v5167
          %v5230 = vadd.f32 %v4656, %v5172
          %v5231 = vadd.f32 %v4661, %v5177
          %v5232 = vadd.f32 %v4666, %v5182
          %v5233 = vadd.f32 %v4671, %v5187
          %v5234 = vadd.f32 %v4676, %v5192
          %v5235 = vadd.f32 %v4681, %v5197
          %v5236 = vadd.f32 %v4686, %v5202
          %v5237 = vmax.f32 %v5205, 0.0
          %v5238 = vmax.f32 %v5206, 0.0
          %v5239 = vmax.f32 %v5207, 0.0
          %v5240 = vmax.f32 %v5208, 0.0
          %v5241 = vmax.f32 %v5209, 0.0
          %v5242 = vmax.f32 %v5210, 0.0
          %v5243 = vmax.f32 %v5211, 0.0
          %v5244 = vmax.f32 %v5212, 0.0
          %v5245 = vmax.f32 %v5213, 0.0
          %v5246 = vmax.f32 %v5214, 0.0
          %v5247 = vmax.f32 %v5215, 0.0
          %v5248 = vmax.f32 %v5216, 0.0
          %v5249 = vmax.f32 %v5217, 0.0
          %v5250 = vmax.f32 %v5218, 0.0
          %v5251 = vmax.f32 %v5219, 0.0
          %v5252 = vmax.f32 %v5220, 0.0
          %v5253 = vmax.f32 %v5221, 0.0
          %v5254 = vmax.f32 %v5222, 0.0
          %v5255 = vmax.f32 %v5223, 0.0
          %v5256 = vmax.f32 %v5224, 0.0
          %v5257 = vmax.f32 %v5225, 0.0
          %v5258 = vmax.f32 %v5226, 0.0
          %v5259 = vmax.f32 %v5227, 0.0
          %v5260 = vmax.f32 %v5228, 0.0
          %v5261 = vmax.f32 %v5229, 0.0
          %v5262 = vmax.f32 %v5230, 0.0
          %v5263 = vmax.f32 %v5231, 0.0
          %v5264 = vmax.f32 %v5232, 0.0
          %v5265 = vmax.f32 %v5233, 0.0
          %v5266 = vmax.f32 %v5234, 0.0
          %v5267 = vmax.f32 %v5235, 0.0
          %v5268 = vmax.f32 %v5236, 0.0
          %5269 = vst [vmem:[%s3310 + $0x1] sm:$0xff] %v5237
          %5270 = vst [vmem:[%s3310 + $0x9] sm:$0xff] %v5238
          %5271 = vst [vmem:[%s3310 + $0x19] sm:$0xff] %v5239
          %5272 = vst [vmem:[%s3310 + $0x21] sm:$0xff] %v5240
          %5273 = vst [vmem:[%s3310 + $0x31] sm:$0xff] %v5241
          %5274 = vst [vmem:[%s3310 + $0x39] sm:$0xff] %v5242
          %5275 = vst [vmem:[%s3310 + $0x49] sm:$0xff] %v5243
          %5276 = vst [vmem:[%s3310 + $0x51] sm:$0xff] %v5244
          %5277 = vst [vmem:[%s3310 + $0x61] sm:$0xff] %v5245
          %5278 = vst [vmem:[%s3310 + $0x69] sm:$0xff] %v5246
          %5279 = vst [vmem:[%s3310 + $0x79] sm:$0xff] %v5247
          %5280 = vst [vmem:[%s3310 + $0x81] sm:$0xff] %v5248
          %5281 = vst [vmem:[%s3310 + $0x91] sm:$0xff] %v5249
          %5282 = vst [vmem:[%s3310 + $0x99] sm:$0xff] %v5250
          %5283 = vst [vmem:[%s3310 + $0xa9] sm:$0xff] %v5251
          %5284 = vst [vmem:[%s3310 + $0xb1] sm:$0xff] %v5252
          %5285 = vst [vmem:[%s3310 + $0xc1] sm:$0xff] %v5253
          %5286 = vst [vmem:[%s3310 + $0xc9] sm:$0xff] %v5254
          %5287 = vst [vmem:[%s3310 + $0xd9] sm:$0xff] %v5255
          %5288 = vst [vmem:[%s3310 + $0xe1] sm:$0xff] %v5256
          %5289 = vst [vmem:[%s3310 + $0xf1] sm:$0xff] %v5257
          %5290 = vst [vmem:[%s3310 + $0xf9] sm:$0xff] %v5258
          %5291 = vst [vmem:[%s3310 + $0x109] sm:$0xff] %v5259
          %5292 = vst [vmem:[%s3310 + $0x111] sm:$0xff] %v5260
          %5293 = vst [vmem:[%s3310 + $0x121] sm:$0xff] %v5261
          %5294 = vst [vmem:[%s3310 + $0x129] sm:$0xff] %v5262
          %5295 = vst [vmem:[%s3310 + $0x139] sm:$0xff] %v5263
          %5296 = vst [vmem:[%s3310 + $0x141] sm:$0xff] %v5264
          %5297 = vst [vmem:[%s3310 + $0x151] sm:$0xff] %v5265
          %5298 = vst [vmem:[%s3310 + $0x159] sm:$0xff] %v5266
          %5299 = vst [vmem:[%s3310 + $0x169] sm:$0xff] %v5267
          %5300 = vst [vmem:[%s3310 + $0x171] sm:$0xff] %v5268
          %v5301 = vld [vmem:[#allocation3] sm:$0xff]
          %v5302 = vld [vmem:[#allocation3 + $0x8] sm:$0xff]
          %v5303 = vld [vmem:[#allocation3 + $0x10] sm:$0x3]
          %v5304 = vld [vmem:[#allocation3 + $0x18] sm:$0xff]
          %v5305 = vld [vmem:[#allocation3 + $0x20] sm:$0xff]
          %v5306 = vld [vmem:[#allocation3 + $0x28] sm:$0x3]
          %v5307 = vld [vmem:[#allocation3 + $0x30] sm:$0xff]
          %v5308 = vld [vmem:[#allocation3 + $0x38] sm:$0xff]
          %v5309 = vld [vmem:[#allocation3 + $0x40] sm:$0x3]
          %v5310 = vld [vmem:[#allocation3 + $0x48] sm:$0xff]
          %v5311 = vld [vmem:[#allocation3 + $0x50] sm:$0xff]
          %v5312 = vld [vmem:[#allocation3 + $0x58] sm:$0x3]
          %v5313 = vld [vmem:[#allocation3 + $0x60] sm:$0xff]
          %v5314 = vld [vmem:[#allocation3 + $0x68] sm:$0xff]
          %v5315 = vld [vmem:[#allocation3 + $0x70] sm:$0x3]
          %v5316 = vld [vmem:[#allocation3 + $0x78] sm:$0xff]
          %v5317 = vld [vmem:[#allocation3 + $0x80] sm:$0xff]
          %v5318 = vld [vmem:[#allocation3 + $0x88] sm:$0x3]
          %v5319 = vld [vmem:[#allocation3 + $0x90] sm:$0xff]
          %v5320 = vld [vmem:[#allocation3 + $0x98] sm:$0xff]
          %v5321 = vld [vmem:[#allocation3 + $0xa0] sm:$0x3]
          %v5322 = vld [vmem:[#allocation3 + $0xa8] sm:$0xff]
          %v5323 = vld [vmem:[#allocation3 + $0xb0] sm:$0xff]
          %v5324 = vld [vmem:[#allocation3 + $0xb8] sm:$0x3]
          %v5325 = vld [vmem:[#allocation3 + $0xc0] sm:$0xff]
          %v5326 = vld [vmem:[#allocation3 + $0xc8] sm:$0xff]
          %v5327 = vld [vmem:[#allocation3 + $0xd0] sm:$0x3]
          %v5328 = vld [vmem:[#allocation3 + $0xd8] sm:$0xff]
          %v5329 = vld [vmem:[#allocation3 + $0xe0] sm:$0xff]
          %v5330 = vld [vmem:[#allocation3 + $0xe8] sm:$0x3]
          %v5331 = vld [vmem:[#allocation3 + $0xf0] sm:$0xff]
          %v5332 = vld [vmem:[#allocation3 + $0xf8] sm:$0xff]
          %v5333 = vld [vmem:[#allocation3 + $0x100] sm:$0x3]
          %v5334 = vld [vmem:[#allocation3 + $0x108] sm:$0xff]
          %v5335 = vld [vmem:[#allocation3 + $0x110] sm:$0xff]
          %v5336 = vld [vmem:[#allocation3 + $0x118] sm:$0x3]
          %v5337 = vld [vmem:[#allocation3 + $0x120] sm:$0xff]
          %v5338 = vld [vmem:[#allocation3 + $0x128] sm:$0xff]
          %v5339 = vld [vmem:[#allocation3 + $0x130] sm:$0x3]
          %v5340 = vld [vmem:[#allocation3 + $0x138] sm:$0xff]
          %v5341 = vld [vmem:[#allocation3 + $0x140] sm:$0xff]
          %v5342 = vld [vmem:[#allocation3 + $0x148] sm:$0x3]
          %v5343 = vld [vmem:[#allocation3 + $0x150] sm:$0xff]
          %v5344 = vld [vmem:[#allocation3 + $0x158] sm:$0xff]
          %v5345 = vld [vmem:[#allocation3 + $0x160] sm:$0x3]
          %v5346 = vld [vmem:[#allocation3 + $0x168] sm:$0xff]
          %v5347 = vld [vmem:[#allocation3 + $0x170] sm:$0xff]
          %v5348 = vld [vmem:[#allocation3 + $0x178] sm:$0x3]
          %v5349 = vld [vmem:[#allocation3 + $0x180] sm:$0xff]
          %v5350 = vld [vmem:[#allocation3 + $0x188] sm:$0xff]
          %v5351 = vld [vmem:[#allocation3 + $0x190] sm:$0x3]
          %v5352 = vld [vmem:[#allocation3 + $0x198] sm:$0xff]
          %v5353 = vld [vmem:[#allocation3 + $0x1a0] sm:$0xff]
          %v5354 = vld [vmem:[#allocation3 + $0x1a8] sm:$0x3]
          %v5403 = vrot.slane %v5301, 1
          %v5404 = vrot.slane %v5302, 1
          %v5405 = vsel %vm555, %v5403, %v5404
          %v5406 = vrot.slane %v5303, 1
          %v5407 = vsel %vm555, %v5404, %v5406
          %v5408 = vrot.slane %v5304, 1
          %v5409 = vrot.slane %v5305, 1
          %v5410 = vsel %vm555, %v5408, %v5409
          %v5411 = vrot.slane %v5306, 1
          %v5412 = vsel %vm555, %v5409, %v5411
          %v5413 = vrot.slane %v5307, 1
          %v5414 = vrot.slane %v5308, 1
          %v5415 = vsel %vm555, %v5413, %v5414
          %v5416 = vrot.slane %v5309, 1
          %v5417 = vsel %vm555, %v5414, %v5416
          %v5418 = vrot.slane %v5310, 1
          %v5419 = vrot.slane %v5311, 1
          %v5420 = vsel %vm555, %v5418, %v5419
          %v5421 = vrot.slane %v5312, 1
          %v5422 = vsel %vm555, %v5419, %v5421
          %v5423 = vrot.slane %v5313, 1
          %v5424 = vrot.slane %v5314, 1
          %v5425 = vsel %vm555, %v5423, %v5424
          %v5426 = vrot.slane %v5315, 1
          %v5427 = vsel %vm555, %v5424, %v5426
          %v5428 = vrot.slane %v5316, 1
          %v5429 = vrot.slane %v5317, 1
          %v5430 = vsel %vm555, %v5428, %v5429
          %v5431 = vrot.slane %v5318, 1
          %v5432 = vsel %vm555, %v5429, %v5431
          %v5433 = vrot.slane %v5319, 1
          %v5434 = vrot.slane %v5320, 1
          %v5435 = vsel %vm555, %v5433, %v5434
          %v5436 = vrot.slane %v5321, 1
          %v5437 = vsel %vm555, %v5434, %v5436
          %v5438 = vrot.slane %v5322, 1
          %v5439 = vrot.slane %v5323, 1
          %v5440 = vsel %vm555, %v5438, %v5439
          %v5441 = vrot.slane %v5324, 1
          %v5442 = vsel %vm555, %v5439, %v5441
          %v5443 = vrot.slane %v5325, 1
          %v5444 = vrot.slane %v5326, 1
          %v5445 = vsel %vm555, %v5443, %v5444
          %v5446 = vrot.slane %v5327, 1
          %v5447 = vsel %vm555, %v5444, %v5446
          %v5448 = vrot.slane %v5328, 1
          %v5449 = vrot.slane %v5329, 1
          %v5450 = vsel %vm555, %v5448, %v5449
          %v5451 = vrot.slane %v5330, 1
          %v5452 = vsel %vm555, %v5449, %v5451
          %v5453 = vrot.slane %v5331, 1
          %v5454 = vrot.slane %v5332, 1
          %v5455 = vsel %vm555, %v5453, %v5454
          %v5456 = vrot.slane %v5333, 1
          %v5457 = vsel %vm555, %v5454, %v5456
          %v5458 = vrot.slane %v5334, 1
          %v5459 = vrot.slane %v5335, 1
          %v5460 = vsel %vm555, %v5458, %v5459
          %v5461 = vrot.slane %v5336, 1
          %v5462 = vsel %vm555, %v5459, %v5461
          %v5463 = vrot.slane %v5337, 1
          %v5464 = vrot.slane %v5338, 1
          %v5465 = vsel %vm555, %v5463, %v5464
          %v5466 = vrot.slane %v5339, 1
          %v5467 = vsel %vm555, %v5464, %v5466
          %v5468 = vrot.slane %v5340, 1
          %v5469 = vrot.slane %v5341, 1
          %v5470 = vsel %vm555, %v5468, %v5469
          %v5471 = vrot.slane %v5342, 1
          %v5472 = vsel %vm555, %v5469, %v5471
          %v5473 = vrot.slane %v5343, 1
          %v5474 = vrot.slane %v5344, 1
          %v5475 = vsel %vm555, %v5473, %v5474
          %v5476 = vrot.slane %v5345, 1
          %v5477 = vsel %vm555, %v5474, %v5476
          %v5478 = vrot.slane %v5346, 1
          %v5479 = vrot.slane %v5347, 1
          %v5480 = vsel %vm555, %v5478, %v5479
          %v5481 = vrot.slane %v5348, 1
          %v5482 = vsel %vm555, %v5479, %v5481
          %v5515 = vrot.slane %v5301, 2
          %v5516 = vrot.slane %v5302, 2
          %v5517 = vsel %vm1221, %v5515, %v5516
          %v5518 = vrot.slane %v5303, 2
          %v5519 = vsel %vm1221, %v5516, %v5518
          %v5520 = vrot.slane %v5304, 2
          %v5521 = vrot.slane %v5305, 2
          %v5522 = vsel %vm1221, %v5520, %v5521
          %v5523 = vrot.slane %v5306, 2
          %v5524 = vsel %vm1221, %v5521, %v5523
          %v5525 = vrot.slane %v5307, 2
          %v5526 = vrot.slane %v5308, 2
          %v5527 = vsel %vm1221, %v5525, %v5526
          %v5528 = vrot.slane %v5309, 2
          %v5529 = vsel %vm1221, %v5526, %v5528
          %v5530 = vrot.slane %v5310, 2
          %v5531 = vrot.slane %v5311, 2
          %v5532 = vsel %vm1221, %v5530, %v5531
          %v5533 = vrot.slane %v5312, 2
          %v5534 = vsel %vm1221, %v5531, %v5533
          %v5535 = vrot.slane %v5313, 2
          %v5536 = vrot.slane %v5314, 2
          %v5537 = vsel %vm1221, %v5535, %v5536
          %v5538 = vrot.slane %v5315, 2
          %v5539 = vsel %vm1221, %v5536, %v5538
          %v5540 = vrot.slane %v5316, 2
          %v5541 = vrot.slane %v5317, 2
          %v5542 = vsel %vm1221, %v5540, %v5541
          %v5543 = vrot.slane %v5318, 2
          %v5544 = vsel %vm1221, %v5541, %v5543
          %v5545 = vrot.slane %v5319, 2
          %v5546 = vrot.slane %v5320, 2
          %v5547 = vsel %vm1221, %v5545, %v5546
          %v5548 = vrot.slane %v5321, 2
          %v5549 = vsel %vm1221, %v5546, %v5548
          %v5550 = vrot.slane %v5322, 2
          %v5551 = vrot.slane %v5323, 2
          %v5552 = vsel %vm1221, %v5550, %v5551
          %v5553 = vrot.slane %v5324, 2
          %v5554 = vsel %vm1221, %v5551, %v5553
          %v5555 = vrot.slane %v5325, 2
          %v5556 = vrot.slane %v5326, 2
          %v5557 = vsel %vm1221, %v5555, %v5556
          %v5558 = vrot.slane %v5327, 2
          %v5559 = vsel %vm1221, %v5556, %v5558
          %v5560 = vrot.slane %v5328, 2
          %v5561 = vrot.slane %v5329, 2
          %v5562 = vsel %vm1221, %v5560, %v5561
          %v5563 = vrot.slane %v5330, 2
          %v5564 = vsel %vm1221, %v5561, %v5563
          %v5565 = vrot.slane %v5331, 2
          %v5566 = vrot.slane %v5332, 2
          %v5567 = vsel %vm1221, %v5565, %v5566
          %v5568 = vrot.slane %v5333, 2
          %v5569 = vsel %vm1221, %v5566, %v5568
          %v5570 = vrot.slane %v5334, 2
          %v5571 = vrot.slane %v5335, 2
          %v5572 = vsel %vm1221, %v5570, %v5571
          %v5573 = vrot.slane %v5336, 2
          %v5574 = vsel %vm1221, %v5571, %v5573
          %v5575 = vrot.slane %v5337, 2
          %v5576 = vrot.slane %v5338, 2
          %v5577 = vsel %vm1221, %v5575, %v5576
          %v5578 = vrot.slane %v5339, 2
          %v5579 = vsel %vm1221, %v5576, %v5578
          %v5580 = vrot.slane %v5340, 2
          %v5581 = vrot.slane %v5341, 2
          %v5582 = vsel %vm1221, %v5580, %v5581
          %v5583 = vrot.slane %v5342, 2
          %v5584 = vsel %vm1221, %v5581, %v5583
          %v5585 = vrot.slane %v5343, 2
          %v5586 = vrot.slane %v5344, 2
          %v5587 = vsel %vm1221, %v5585, %v5586
          %v5588 = vrot.slane %v5345, 2
          %v5589 = vsel %vm1221, %v5586, %v5588
          %v5590 = vrot.slane %v5346, 2
          %v5591 = vrot.slane %v5347, 2
          %v5592 = vsel %vm1221, %v5590, %v5591
          %v5593 = vrot.slane %v5348, 2
          %v5594 = vsel %vm1221, %v5591, %v5593
          %v5627 = vld [vmem:[#allocation5] sm:$0xff]
          %v5628 = vld [vmem:[#allocation5 + $0x8] sm:$0xff]
          %v5629 = vld [vmem:[#allocation5 + $0x10] sm:$0xff]
          %v5630 = vld [vmem:[#allocation5 + $0x18] sm:$0xff]
          %v5631 = vld [vmem:[#allocation5 + $0x20] sm:$0xff]
          %v5632 = vld [vmem:[#allocation5 + $0x28] sm:$0xff]
          %v5633 = vld [vmem:[#allocation5 + $0x30] sm:$0xff]
          %v5634 = vld [vmem:[#allocation5 + $0x38] sm:$0xff]
          %v5635 = vld [vmem:[#allocation5 + $0x40] sm:$0xff]
          %v5636 = vld [vmem:[#allocation5 + $0x48] sm:$0xff]
          %v5637 = vld [vmem:[#allocation5 + $0x50] sm:$0xff]
          %v5638 = vld [vmem:[#allocation5 + $0x58] sm:$0xff]
          %v5639 = vld [vmem:[#allocation5 + $0x60] sm:$0xff]
          %v5640 = vld [vmem:[#allocation5 + $0x68] sm:$0xff]
          %v5641 = vld [vmem:[#allocation5 + $0x70] sm:$0xff]
          %v5642 = vld [vmem:[#allocation5 + $0x78] sm:$0xff]
          %v5643 = vld [vmem:[#allocation5 + $0x80] sm:$0xff]
          %v5644 = vld [vmem:[#allocation5 + $0x88] sm:$0xff]
          %v5645 = vld [vmem:[#allocation5 + $0x90] sm:$0xff]
          %v5646 = vld [vmem:[#allocation5 + $0x98] sm:$0xff]
          %v5647 = vld [vmem:[#allocation5 + $0xa0] sm:$0xff]
          %v5648 = vld [vmem:[#allocation5 + $0xa8] sm:$0xff]
          %v5649 = vld [vmem:[#allocation5 + $0xb0] sm:$0xff]
          %v5650 = vld [vmem:[#allocation5 + $0xb8] sm:$0xff]
          %v5651 = vld [vmem:[#allocation5 + $0xc0] sm:$0xff]
          %v5652 = vld [vmem:[#allocation5 + $0xc8] sm:$0xff]
          %v5653 = vld [vmem:[#allocation5 + $0xd0] sm:$0xff]
          %v5654 = vld [vmem:[#allocation5 + $0xd8] sm:$0xff]
          %v5655 = vld [vmem:[#allocation5 + $0xe0] sm:$0xff]
          %v5656 = vld [vmem:[#allocation5 + $0xe8] sm:$0xff]
          %v5657 = vld [vmem:[#allocation5 + $0xf0] sm:$0xff]
          %v5658 = vld [vmem:[#allocation5 + $0xf8] sm:$0xff]
          %v5659 = vld [vmem:[#allocation5 + $0x100] sm:$0xff]
          %v5660 = vld [vmem:[#allocation5 + $0x108] sm:$0xff]
          %v5661 = vld [vmem:[#allocation5 + $0x110] sm:$0xff]
          %v5662 = vld [vmem:[#allocation5 + $0x118] sm:$0xff]
          %v5663 = vld [vmem:[#allocation5 + $0x120] sm:$0xff]
          %v5664 = vld [vmem:[#allocation5 + $0x128] sm:$0xff]
          %v5665 = vld [vmem:[#allocation5 + $0x130] sm:$0xff]
          %v5666 = vld [vmem:[#allocation5 + $0x138] sm:$0xff]
          %v5667 = vld [vmem:[#allocation5 + $0x140] sm:$0xff]
          %v5668 = vld [vmem:[#allocation5 + $0x148] sm:$0xff]
          %v5669 = vld [vmem:[#allocation5 + $0x150] sm:$0xff]
          %v5670 = vld [vmem:[#allocation5 + $0x158] sm:$0xff]
          %v5671 = vld [vmem:[#allocation5 + $0x160] sm:$0xff]
          %v5672 = vld [vmem:[#allocation5 + $0x168] sm:$0xff]
          %v5673 = vld [vmem:[#allocation5 + $0x170] sm:$0xff]
          %v5674 = vld [vmem:[#allocation5 + $0x178] sm:$0xff]
          %v5678 = vrot.slane %v5349, 1
          %v5679 = vrot.slane %v5350, 1
          %v5680 = vsel %vm555, %v5678, %v5679
          %v5681 = vrot.slane %v5351, 1
          %v5682 = vsel %vm555, %v5679, %v5681
          %v5685 = vrot.slane %v5349, 2
          %v5686 = vrot.slane %v5350, 2
          %v5687 = vsel %vm1221, %v5685, %v5686
          %v5688 = vrot.slane %v5351, 2
          %v5689 = vsel %vm1221, %v5686, %v5688
          %s5692 = scalar_lea.vmem [#allocation5], 384
          %v5693 = vld [vmem:[%s5692] sm:$0xff]
          %v5694 = vld [vmem:[%s5692 + $0x8] sm:$0xff]
          %v5695 = vld [vmem:[%s5692 + $0x10] sm:$0xff]
          %v5696 = vld [vmem:[%s5692 + $0x18] sm:$0xff]
          %v5697 = vld [vmem:[%s5692 + $0x20] sm:$0xff]
          %v5698 = vld [vmem:[%s5692 + $0x28] sm:$0xff]
          %v5699 = vld [vmem:[%s5692 + $0x30] sm:$0xff]
          %v5700 = vld [vmem:[%s5692 + $0x38] sm:$0xff]
          %v5701 = vld [vmem:[%s5692 + $0x40] sm:$0xff]
          %v5702 = vld [vmem:[%s5692 + $0x48] sm:$0xff]
          %v5703 = vld [vmem:[%s5692 + $0x50] sm:$0xff]
          %v5704 = vld [vmem:[%s5692 + $0x58] sm:$0xff]
          %v5705 = vld [vmem:[%s5692 + $0x60] sm:$0xff]
          %v5706 = vld [vmem:[%s5692 + $0x68] sm:$0xff]
          %v5707 = vld [vmem:[%s5692 + $0x70] sm:$0xff]
          %v5708 = vld [vmem:[%s5692 + $0x78] sm:$0xff]
          %v5709 = vld [vmem:[%s5692 + $0x80] sm:$0xff]
          %v5710 = vld [vmem:[%s5692 + $0x88] sm:$0xff]
          %v5711 = vld [vmem:[%s5692 + $0x90] sm:$0xff]
          %v5712 = vld [vmem:[%s5692 + $0x98] sm:$0xff]
          %v5713 = vld [vmem:[%s5692 + $0xa0] sm:$0xff]
          %v5714 = vld [vmem:[%s5692 + $0xa8] sm:$0xff]
          %v5715 = vld [vmem:[%s5692 + $0xb0] sm:$0xff]
          %v5716 = vld [vmem:[%s5692 + $0xb8] sm:$0xff]
          %v5717 = vld [vmem:[%s5692 + $0xc0] sm:$0xff]
          %v5718 = vld [vmem:[%s5692 + $0xc8] sm:$0xff]
          %v5719 = vld [vmem:[%s5692 + $0xd0] sm:$0xff]
          %v5720 = vld [vmem:[%s5692 + $0xd8] sm:$0xff]
          %v5721 = vld [vmem:[%s5692 + $0xe0] sm:$0xff]
          %v5722 = vld [vmem:[%s5692 + $0xe8] sm:$0xff]
          %v5723 = vld [vmem:[%s5692 + $0xf0] sm:$0xff]
          %v5724 = vld [vmem:[%s5692 + $0xf8] sm:$0xff]
          %v5725 = vld [vmem:[%s5692 + $0x100] sm:$0xff]
          %v5726 = vld [vmem:[%s5692 + $0x108] sm:$0xff]
          %v5727 = vld [vmem:[%s5692 + $0x110] sm:$0xff]
          %v5728 = vld [vmem:[%s5692 + $0x118] sm:$0xff]
          %v5729 = vld [vmem:[%s5692 + $0x120] sm:$0xff]
          %v5730 = vld [vmem:[%s5692 + $0x128] sm:$0xff]
          %v5731 = vld [vmem:[%s5692 + $0x130] sm:$0xff]
          %v5732 = vld [vmem:[%s5692 + $0x138] sm:$0xff]
          %v5733 = vld [vmem:[%s5692 + $0x140] sm:$0xff]
          %v5734 = vld [vmem:[%s5692 + $0x148] sm:$0xff]
          %v5735 = vld [vmem:[%s5692 + $0x150] sm:$0xff]
          %v5736 = vld [vmem:[%s5692 + $0x158] sm:$0xff]
          %v5737 = vld [vmem:[%s5692 + $0x160] sm:$0xff]
          %v5738 = vld [vmem:[%s5692 + $0x168] sm:$0xff]
          %v5739 = vld [vmem:[%s5692 + $0x170] sm:$0xff]
          %v5740 = vld [vmem:[%s5692 + $0x178] sm:$0xff]
          %5741 = vmatprep.subr.mxu0 0.0
          %5742 = vmatpush1.msra.mxu0 %v5693
          %5743 = vmatprep.subr.mxu0 0.0
          %5744 = vmatpush1.msra.mxu0 %v5694
          %5745 = vmatprep.subr.mxu0 0.0
          %5746 = vmatpush1.msra.mxu0 %v5695
          %5747 = vmatprep.subr.mxu0 0.0
          %5748 = vmatpush1.msra.mxu0 %v5696
          %5749 = vmatprep.subr.mxu0 0.0
          %5750 = vmatpush1.msra.mxu0 %v5697
          %5751 = vmatprep.subr.mxu0 0.0
          %5752 = vmatpush1.msra.mxu0 %v5698
          %5753 = vmatprep.subr.mxu0 0.0
          %5754 = vmatpush1.msra.mxu0 %v5699
          %5755 = vmatprep.subr.mxu0 0.0
          %5756 = vmatpush1.msra.mxu0 %v5700
          %5757 = vmatprep.subr.mxu0 0.0
          %5758 = vmatpush1.msra.mxu0 %v5701
          %5759 = vmatprep.subr.mxu0 0.0
          %5760 = vmatpush1.msra.mxu0 %v5702
          %5761 = vmatprep.subr.mxu0 0.0
          %5762 = vmatpush1.msra.mxu0 %v5703
          %5763 = vmatprep.subr.mxu0 0.0
          %5764 = vmatpush1.msra.mxu0 %v5704
          %5765 = vmatprep.subr.mxu0 0.0
          %5766 = vmatpush1.msra.mxu0 %v5705
          %5767 = vmatprep.subr.mxu0 0.0
          %5768 = vmatpush1.msra.mxu0 %v5706
          %5769 = vmatprep.subr.mxu0 0.0
          %5770 = vmatpush1.msra.mxu0 %v5707
          %5771 = vmatprep.subr.mxu0 0.0
          %5772 = vmatpush1.msra.mxu0 %v5708
          %5773 = vmatprep.subr.mxu0 0.0
          %5774 = vmatpush1.msra.mxu0 %v5709
          %5775 = vmatprep.subr.mxu0 0.0
          %5776 = vmatpush1.msra.mxu0 %v5710
          %5777 = vmatprep.subr.mxu0 0.0
          %5778 = vmatpush1.msra.mxu0 %v5711
          %5779 = vmatprep.subr.mxu0 0.0
          %5780 = vmatpush1.msra.mxu0 %v5712
          %5781 = vmatprep.subr.mxu0 0.0
          %5782 = vmatpush1.msra.mxu0 %v5713
          %5783 = vmatprep.subr.mxu0 0.0
          %5784 = vmatpush1.msra.mxu0 %v5714
          %5785 = vmatprep.subr.mxu0 0.0
          %5786 = vmatpush1.msra.mxu0 %v5715
          %5787 = vmatprep.subr.mxu0 0.0
          %5788 = vmatpush1.msra.mxu0 %v5716
          %5789 = vmatprep.subr.mxu0 0.0
          %5790 = vmatpush1.msra.mxu0 %v5717
          %5791 = vmatprep.subr.mxu0 0.0
          %5792 = vmatpush1.msra.mxu0 %v5718
          %5793 = vmatprep.subr.mxu0 0.0
          %5794 = vmatpush1.msra.mxu0 %v5719
          %5795 = vmatprep.subr.mxu0 0.0
          %5796 = vmatpush1.msra.mxu0 %v5720
          %5797 = vmatprep.subr.mxu0 0.0
          %5798 = vmatpush1.msra.mxu0 %v5721
          %5799 = vmatprep.subr.mxu0 0.0
          %5800 = vmatpush1.msra.mxu0 %v5722
          %5801 = vmatprep.subr.mxu0 0.0
          %5802 = vmatpush1.msra.mxu0 %v5723
          %5803 = vmatprep.subr.mxu0 0.0
          %5804 = vmatpush1.msra.mxu0 %v5724
          %5805 = vmatprep.mubr.f32.mxu0 %v5410
          %5806 = vmatmul.mubr.f32.gmra.mrb[0].mxu0 %v5304
          %v5807 = vpop.f32.mrb[0].mxu0
          %v5808 = vadd.f32 0.0, %v5807
          %v5809 = vpop.f32.mrb[0].mxu0
          %5810 = vmatprep.mubr.f32.mxu0 %v5412
          %5811 = vmatmul.mubr.f32.gmra.mrb[0].mxu0 %v5305
          %v5812 = vpop.f32.mrb[0].mxu0
          %v5813 = vadd.f32 0.0, %v5812
          %v5814 = vpop.f32.mrb[0].mxu0
          %5815 = vmatprep.mubr.f32.mxu0 %v5415
          %5816 = vmatmul.mubr.f32.gmra.mrb[0].mxu0 %v5307
          %v5817 = vpop.f32.mrb[0].mxu0
          %v5818 = vadd.f32 0.0, %v5817
          %v5819 = vpop.f32.mrb[0].mxu0
          %5820 = vmatprep.mubr.f32.mxu0 %v5417
          %5821 = vmatmul.mubr.f32.gmra.mrb[0].mxu0 %v5308
          %v5822 = vpop.f32.mrb[0].mxu0
          %v5823 = vadd.f32 0.0, %v5822
          %v5824 = vpop.f32.mrb[0].mxu0
          %5825 = vmatprep.mubr.f32.mxu0 %v5420
          %5826 = vmatmul.mubr.f32.gmra.mrb[0].mxu0 %v5310
          %v5827 = vpop.f32.mrb[0].mxu0
          %v5828 = vadd.f32 0.0, %v5827
          %v5829 = vpop.f32.mrb[0].mxu0
          %5830 = vmatprep.mubr.f32.mxu0 %v5422
          %5831 = vmatmul.mubr.f32.gmra.mrb[0].mxu0 %v5311
          %v5832 = vpop.f32.mrb[0].mxu0
          %v5833 = vadd.f32 0.0, %v5832
          %v5834 = vpop.f32.mrb[0].mxu0
          %5835 = vmatprep.mubr.f32.mxu0 %v5425
          %5836 = vmatmul.mubr.f32.gmra.mrb[0].mxu0 %v5313
          %v5837 = vpop.f32.mrb[0].mxu0
          %v5838 = vadd.f32 0.0, %v5837
          %v5839 = vpop.f32.mrb[0].mxu0
          %5840 = vmatprep.mubr.f32.mxu0 %v5427
          %5841 = vmatmul.mubr.f32.gmra.mrb[0].mxu0 %v5314
          %v5842 = vpop.f32.mrb[0].mxu0
          %v5843 = vadd.f32 0.0, %v5842
          %v5844 = vpop.f32.mrb[0].mxu0
          %5845 = vmatprep.mubr.f32.mxu0 %v5430
          %5846 = vmatmul.mubr.f32.gmra.mrb[0].mxu0 %v5316
          %v5847 = vpop.f32.mrb[0].mxu0
          %v5848 = vadd.f32 0.0, %v5847
          %v5849 = vpop.f32.mrb[0].mxu0
          %5850 = vmatprep.mubr.f32.mxu0 %v5432
          %5851 = vmatmul.mubr.f32.gmra.mrb[0].mxu0 %v5317
          %v5852 = vpop.f32.mrb[0].mxu0
          %v5853 = vadd.f32 0.0, %v5852
          %v5854 = vpop.f32.mrb[0].mxu0
          %5855 = vmatprep.mubr.f32.mxu0 %v5435
          %5856 = vmatmul.mubr.f32.gmra.mrb[0].mxu0 %v5319
          %v5857 = vpop.f32.mrb[0].mxu0
          %v5858 = vadd.f32 0.0, %v5857
          %v5859 = vpop.f32.mrb[0].mxu0
          %5860 = vmatprep.mubr.f32.mxu0 %v5437
          %5861 = vmatmul.mubr.f32.gmra.mrb[0].mxu0 %v5320
          %v5862 = vpop.f32.mrb[0].mxu0
          %v5863 = vadd.f32 0.0, %v5862
          %v5864 = vpop.f32.mrb[0].mxu0
          %5865 = vmatprep.mubr.f32.mxu0 %v5440
          %5866 = vmatmul.mubr.f32.gmra.mrb[0].mxu0 %v5322
          %v5867 = vpop.f32.mrb[0].mxu0
          %v5868 = vadd.f32 0.0, %v5867
          %v5869 = vpop.f32.mrb[0].mxu0
          %5870 = vmatprep.mubr.f32.mxu0 %v5442
          %5871 = vmatmul.mubr.f32.gmra.mrb[0].mxu0 %v5323
          %v5872 = vpop.f32.mrb[0].mxu0
          %v5873 = vadd.f32 0.0, %v5872
          %v5874 = vpop.f32.mrb[0].mxu0
          %5875 = vmatprep.mubr.f32.mxu0 %v5445
          %5876 = vmatmul.mubr.f32.gmra.mrb[0].mxu0 %v5325
          %v5877 = vpop.f32.mrb[0].mxu0
          %v5878 = vadd.f32 0.0, %v5877
          %v5879 = vpop.f32.mrb[0].mxu0
          %5880 = vmatprep.mubr.f32.mxu0 %v5447
          %5881 = vmatmul.mubr.f32.gmra.mrb[0].mxu0 %v5326
          %v5882 = vpop.f32.mrb[0].mxu0
          %v5883 = vadd.f32 0.0, %v5882
          %v5884 = vpop.f32.mrb[0].mxu0
          %5885 = vmatprep.mubr.f32.mxu0 %v5450
          %5886 = vmatmul.mubr.f32.gmra.mrb[0].mxu0 %v5328
          %v5887 = vpop.f32.mrb[0].mxu0
          %v5888 = vadd.f32 0.0, %v5887
          %v5889 = vpop.f32.mrb[0].mxu0
          %5890 = vmatprep.mubr.f32.mxu0 %v5452
          %5891 = vmatmul.mubr.f32.gmra.mrb[0].mxu0 %v5329
          %v5892 = vpop.f32.mrb[0].mxu0
          %v5893 = vadd.f32 0.0, %v5892
          %v5894 = vpop.f32.mrb[0].mxu0
          %5895 = vmatprep.mubr.f32.mxu0 %v5455
          %5896 = vmatmul.mubr.f32.gmra.mrb[0].mxu0 %v5331
          %v5897 = vpop.f32.mrb[0].mxu0
          %v5898 = vadd.f32 0.0, %v5897
          %v5899 = vpop.f32.mrb[0].mxu0
          %5900 = vmatprep.mubr.f32.mxu0 %v5457
          %5901 = vmatmul.mubr.f32.gmra.mrb[0].mxu0 %v5332
          %v5902 = vpop.f32.mrb[0].mxu0
          %v5903 = vadd.f32 0.0, %v5902
          %v5904 = vpop.f32.mrb[0].mxu0
          %5905 = vmatprep.mubr.f32.mxu0 %v5460
          %5906 = vmatmul.mubr.f32.gmra.mrb[0].mxu0 %v5334
          %v5907 = vpop.f32.mrb[0].mxu0
          %v5908 = vadd.f32 0.0, %v5907
          %v5909 = vpop.f32.mrb[0].mxu0
          %5910 = vmatprep.mubr.f32.mxu0 %v5462
          %5911 = vmatmul.mubr.f32.gmra.mrb[0].mxu0 %v5335
          %v5912 = vpop.f32.mrb[0].mxu0
          %v5913 = vadd.f32 0.0, %v5912
          %v5914 = vpop.f32.mrb[0].mxu0
          %5915 = vmatprep.mubr.f32.mxu0 %v5465
          %5916 = vmatmul.mubr.f32.gmra.mrb[0].mxu0 %v5337
          %v5917 = vpop.f32.mrb[0].mxu0
          %v5918 = vadd.f32 0.0, %v5917
          %v5919 = vpop.f32.mrb[0].mxu0
          %5920 = vmatprep.mubr.f32.mxu0 %v5467
          %5921 = vmatmul.mubr.f32.gmra.mrb[0].mxu0 %v5338
          %v5922 = vpop.f32.mrb[0].mxu0
          %v5923 = vadd.f32 0.0, %v5922
          %v5924 = vpop.f32.mrb[0].mxu0
          %5925 = vmatprep.mubr.f32.mxu0 %v5470
          %5926 = vmatmul.mubr.f32.gmra.mrb[0].mxu0 %v5340
          %v5927 = vpop.f32.mrb[0].mxu0
          %v5928 = vadd.f32 0.0, %v5927
          %v5929 = vpop.f32.mrb[0].mxu0
          %5930 = vmatprep.mubr.f32.mxu0 %v5472
          %5931 = vmatmul.mubr.f32.gmra.mrb[0].mxu0 %v5341
          %v5932 = vpop.f32.mrb[0].mxu0
          %v5933 = vadd.f32 0.0, %v5932
          %v5934 = vpop.f32.mrb[0].mxu0
          %5935 = vmatprep.mubr.f32.mxu0 %v5475
          %5936 = vmatmul.mubr.f32.gmra.mrb[0].mxu0 %v5343
          %v5937 = vpop.f32.mrb[0].mxu0
          %v5938 = vadd.f32 0.0, %v5937
          %v5939 = vpop.f32.mrb[0].mxu0
          %5940 = vmatprep.mubr.f32.mxu0 %v5477
          %5941 = vmatmul.mubr.f32.gmra.mrb[0].mxu0 %v5344
          %v5942 = vpop.f32.mrb[0].mxu0
          %v5943 = vadd.f32 0.0, %v5942
          %v5944 = vpop.f32.mrb[0].mxu0
          %5945 = vmatprep.mubr.f32.mxu0 %v5480
          %5946 = vmatmul.mubr.f32.gmra.mrb[0].mxu0 %v5346
          %v5947 = vpop.f32.mrb[0].mxu0
          %v5948 = vadd.f32 0.0, %v5947
          %v5949 = vpop.f32.mrb[0].mxu0
          %5950 = vmatprep.mubr.f32.mxu0 %v5482
          %5951 = vmatmul.mubr.f32.gmra.mrb[0].mxu0 %v5347
          %v5952 = vpop.f32.mrb[0].mxu0
          %v5953 = vadd.f32 0.0, %v5952
          %v5954 = vpop.f32.mrb[0].mxu0
          %5955 = vmatprep.mubr.f32.mxu0 %v5680
          %5956 = vmatmul.mubr.f32.gmra.mrb[0].mxu0 %v5349
          %v5957 = vpop.f32.mrb[0].mxu0
          %v5958 = vadd.f32 0.0, %v5957
          %v5959 = vpop.f32.mrb[0].mxu0
          %5960 = vmatprep.mubr.f32.mxu0 %v5682
          %5961 = vmatmul.mubr.f32.gmra.mrb[0].mxu0 %v5350
          %v5962 = vpop.f32.mrb[0].mxu0
          %v5963 = vadd.f32 0.0, %v5962
          %v5964 = vpop.f32.mrb[0].mxu0
          %5965 = vdwg.mxu0
          %5966 = vmatprep.subr.mxu0 0.0
          %5967 = vmatpush1.msra.mxu0 %v5725
          %5968 = vmatprep.subr.mxu0 0.0
          %5969 = vmatpush1.msra.mxu0 %v5726
          %5970 = vmatprep.subr.mxu0 0.0
          %5971 = vmatpush1.msra.mxu0 %v5727
          %5972 = vmatprep.subr.mxu0 0.0
          %5973 = vmatpush1.msra.mxu0 %v5728
          %5974 = vmatprep.subr.mxu0 0.0
          %5975 = vmatpush1.msra.mxu0 %v5729
          %5976 = vmatprep.subr.mxu0 0.0
          %5977 = vmatpush1.msra.mxu0 %v5730
          %5978 = vmatprep.subr.mxu0 0.0
          %5979 = vmatpush1.msra.mxu0 %v5731
          %5980 = vmatprep.subr.mxu0 0.0
          %5981 = vmatpush1.msra.mxu0 %v5732
          %5982 = vmatprep.subr.mxu0 0.0
          %5983 = vmatpush1.msra.mxu0 %v5733
          %5984 = vmatprep.subr.mxu0 0.0
          %5985 = vmatpush1.msra.mxu0 %v5734
          %5986 = vmatprep.subr.mxu0 0.0
          %5987 = vmatpush1.msra.mxu0 %v5735
          %5988 = vmatprep.subr.mxu0 0.0
          %5989 = vmatpush1.msra.mxu0 %v5736
          %5990 = vmatprep.subr.mxu0 0.0
          %5991 = vmatpush1.msra.mxu0 %v5737
          %5992 = vmatprep.subr.mxu0 0.0
          %5993 = vmatpush1.msra.mxu0 %v5738
          %5994 = vmatprep.subr.mxu0 0.0
          %5995 = vmatpush1.msra.mxu0 %v5739
          %5996 = vmatprep.subr.mxu0 0.0
          %5997 = vmatpush1.msra.mxu0 %v5740
          %5998 = vmatprep.subr.mxu0 0.0
          %5999 = vmatpush1.msra.mxu0 0.0
          %6000 = vmatprep.subr.mxu0 0.0
          %6001 = vmatpush1.msra.mxu0 0.0
          %6002 = vmatprep.subr.mxu0 0.0
          %6003 = vmatpush1.msra.mxu0 0.0
          %6004 = vmatprep.subr.mxu0 0.0
          %6005 = vmatpush1.msra.mxu0 0.0
          %6006 = vmatprep.subr.mxu0 0.0
          %6007 = vmatpush1.msra.mxu0 0.0
          %6008 = vmatprep.subr.mxu0 0.0
          %6009 = vmatpush1.msra.mxu0 0.0
          %6010 = vmatprep.subr.mxu0 0.0
          %6011 = vmatpush1.msra.mxu0 0.0
          %6012 = vmatprep.subr.mxu0 0.0
          %6013 = vmatpush1.msra.mxu0 0.0
          %6014 = vmatprep.subr.mxu0 0.0
          %6015 = vmatpush1.msra.mxu0 0.0
          %6016 = vmatprep.subr.mxu0 0.0
          %6017 = vmatpush1.msra.mxu0 0.0
          %6018 = vmatprep.subr.mxu0 0.0
          %6019 = vmatpush1.msra.mxu0 0.0
          %6020 = vmatprep.subr.mxu0 0.0
          %6021 = vmatpush1.msra.mxu0 0.0
          %6022 = vmatprep.subr.mxu0 0.0
          %6023 = vmatpush1.msra.mxu0 0.0
          %6024 = vmatprep.subr.mxu0 0.0
          %6025 = vmatpush1.msra.mxu0 0.0
          %6026 = vmatprep.subr.mxu0 0.0
          %6027 = vmatpush1.msra.mxu0 0.0
          %6028 = vmatprep.subr.mxu0 0.0
          %6029 = vmatpush1.msra.mxu0 0.0
          %6030 = vmatprep.mubr.f32.mxu0 0.0
          %6031 = vmatmul.mubr.f32.gmra.mrb[0].mxu0 %v5522
          %v6032 = vpop.f32.mrb[0].mxu0
          %v6033 = vadd.f32 %v5808, %v6032
          %v6034 = vpop.f32.mrb[0].mxu0
          %6035 = vmatprep.mubr.f32.mxu0 0.0
          %6036 = vmatmul.mubr.f32.gmra.mrb[0].mxu0 %v5524
          %v6037 = vpop.f32.mrb[0].mxu0
          %v6038 = vadd.f32 %v5813, %v6037
          %v6039 = vpop.f32.mrb[0].mxu0
          %6040 = vmatprep.mubr.f32.mxu0 0.0
          %6041 = vmatmul.mubr.f32.gmra.mrb[0].mxu0 %v5527
          %v6042 = vpop.f32.mrb[0].mxu0
          %v6043 = vadd.f32 %v5818, %v6042
          %v6044 = vpop.f32.mrb[0].mxu0
          %6045 = vmatprep.mubr.f32.mxu0 0.0
          %6046 = vmatmul.mubr.f32.gmra.mrb[0].mxu0 %v5529
          %v6047 = vpop.f32.mrb[0].mxu0
          %v6048 = vadd.f32 %v5823, %v6047
          %v6049 = vpop.f32.mrb[0].mxu0
          %6050 = vmatprep.mubr.f32.mxu0 0.0
          %6051 = vmatmul.mubr.f32.gmra.mrb[0].mxu0 %v5532
          %v6052 = vpop.f32.mrb[0].mxu0
          %v6053 = vadd.f32 %v5828, %v6052
          %v6054 = vpop.f32.mrb[0].mxu0
          %6055 = vmatprep.mubr.f32.mxu0 0.0
          %6056 = vmatmul.mubr.f32.gmra.mrb[0].mxu0 %v5534
          %v6057 = vpop.f32.mrb[0].mxu0
          %v6058 = vadd.f32 %v5833, %v6057
          %v6059 = vpop.f32.mrb[0].mxu0
          %6060 = vmatprep.mubr.f32.mxu0 0.0
          %6061 = vmatmul.mubr.f32.gmra.mrb[0].mxu0 %v5537
          %v6062 = vpop.f32.mrb[0].mxu0
          %v6063 = vadd.f32 %v5838, %v6062
          %v6064 = vpop.f32.mrb[0].mxu0
          %6065 = vmatprep.mubr.f32.mxu0 0.0
          %6066 = vmatmul.mubr.f32.gmra.mrb[0].mxu0 %v5539
          %v6067 = vpop.f32.mrb[0].mxu0
          %v6068 = vadd.f32 %v5843, %v6067
          %v6069 = vpop.f32.mrb[0].mxu0
          %6070 = vmatprep.mubr.f32.mxu0 0.0
          %6071 = vmatmul.mubr.f32.gmra.mrb[0].mxu0 %v5542
          %v6072 = vpop.f32.mrb[0].mxu0
          %v6073 = vadd.f32 %v5848, %v6072
          %v6074 = vpop.f32.mrb[0].mxu0
          %6075 = vmatprep.mubr.f32.mxu0 0.0
          %6076 = vmatmul.mubr.f32.gmra.mrb[0].mxu0 %v5544
          %v6077 = vpop.f32.mrb[0].mxu0
          %v6078 = vadd.f32 %v5853, %v6077
          %v6079 = vpop.f32.mrb[0].mxu0
          %6080 = vmatprep.mubr.f32.mxu0 0.0
          %6081 = vmatmul.mubr.f32.gmra.mrb[0].mxu0 %v5547
          %v6082 = vpop.f32.mrb[0].mxu0
          %v6083 = vadd.f32 %v5858, %v6082
          %v6084 = vpop.f32.mrb[0].mxu0
          %6085 = vmatprep.mubr.f32.mxu0 0.0
          %6086 = vmatmul.mubr.f32.gmra.mrb[0].mxu0 %v5549
          %v6087 = vpop.f32.mrb[0].mxu0
          %v6088 = vadd.f32 %v5863, %v6087
          %v6089 = vpop.f32.mrb[0].mxu0
          %6090 = vmatprep.mubr.f32.mxu0 0.0
          %6091 = vmatmul.mubr.f32.gmra.mrb[0].mxu0 %v5552
          %v6092 = vpop.f32.mrb[0].mxu0
          %v6093 = vadd.f32 %v5868, %v6092
          %v6094 = vpop.f32.mrb[0].mxu0
          %6095 = vmatprep.mubr.f32.mxu0 0.0
          %6096 = vmatmul.mubr.f32.gmra.mrb[0].mxu0 %v5554
          %v6097 = vpop.f32.mrb[0].mxu0
          %v6098 = vadd.f32 %v5873, %v6097
          %v6099 = vpop.f32.mrb[0].mxu0
          %6100 = vmatprep.mubr.f32.mxu0 0.0
          %6101 = vmatmul.mubr.f32.gmra.mrb[0].mxu0 %v5557
          %v6102 = vpop.f32.mrb[0].mxu0
          %v6103 = vadd.f32 %v5878, %v6102
          %v6104 = vpop.f32.mrb[0].mxu0
          %6105 = vmatprep.mubr.f32.mxu0 0.0
          %6106 = vmatmul.mubr.f32.gmra.mrb[0].mxu0 %v5559
          %v6107 = vpop.f32.mrb[0].mxu0
          %v6108 = vadd.f32 %v5883, %v6107
          %v6109 = vpop.f32.mrb[0].mxu0
          %6110 = vmatprep.mubr.f32.mxu0 0.0
          %6111 = vmatmul.mubr.f32.gmra.mrb[0].mxu0 %v5562
          %v6112 = vpop.f32.mrb[0].mxu0
          %v6113 = vadd.f32 %v5888, %v6112
          %v6114 = vpop.f32.mrb[0].mxu0
          %6115 = vmatprep.mubr.f32.mxu0 0.0
          %6116 = vmatmul.mubr.f32.gmra.mrb[0].mxu0 %v5564
          %v6117 = vpop.f32.mrb[0].mxu0
          %v6118 = vadd.f32 %v5893, %v6117
          %v6119 = vpop.f32.mrb[0].mxu0
          %6120 = vmatprep.mubr.f32.mxu0 0.0
          %6121 = vmatmul.mubr.f32.gmra.mrb[0].mxu0 %v5567
          %v6122 = vpop.f32.mrb[0].mxu0
          %v6123 = vadd.f32 %v5898, %v6122
          %v6124 = vpop.f32.mrb[0].mxu0
          %6125 = vmatprep.mubr.f32.mxu0 0.0
          %6126 = vmatmul.mubr.f32.gmra.mrb[0].mxu0 %v5569
          %v6127 = vpop.f32.mrb[0].mxu0
          %v6128 = vadd.f32 %v5903, %v6127
          %v6129 = vpop.f32.mrb[0].mxu0
          %6130 = vmatprep.mubr.f32.mxu0 0.0
          %6131 = vmatmul.mubr.f32.gmra.mrb[0].mxu0 %v5572
          %v6132 = vpop.f32.mrb[0].mxu0
          %v6133 = vadd.f32 %v5908, %v6132
          %v6134 = vpop.f32.mrb[0].mxu0
          %6135 = vmatprep.mubr.f32.mxu0 0.0
          %6136 = vmatmul.mubr.f32.gmra.mrb[0].mxu0 %v5574
          %v6137 = vpop.f32.mrb[0].mxu0
          %v6138 = vadd.f32 %v5913, %v6137
          %v6139 = vpop.f32.mrb[0].mxu0
          %6140 = vmatprep.mubr.f32.mxu0 0.0
          %6141 = vmatmul.mubr.f32.gmra.mrb[0].mxu0 %v5577
          %v6142 = vpop.f32.mrb[0].mxu0
          %v6143 = vadd.f32 %v5918, %v6142
          %v6144 = vpop.f32.mrb[0].mxu0
          %6145 = vmatprep.mubr.f32.mxu0 0.0
          %6146 = vmatmul.mubr.f32.gmra.mrb[0].mxu0 %v5579
          %v6147 = vpop.f32.mrb[0].mxu0
          %v6148 = vadd.f32 %v5923, %v6147
          %v6149 = vpop.f32.mrb[0].mxu0
          %6150 = vmatprep.mubr.f32.mxu0 0.0
          %6151 = vmatmul.mubr.f32.gmra.mrb[0].mxu0 %v5582
          %v6152 = vpop.f32.mrb[0].mxu0
          %v6153 = vadd.f32 %v5928, %v6152
          %v6154 = vpop.f32.mrb[0].mxu0
          %6155 = vmatprep.mubr.f32.mxu0 0.0
          %6156 = vmatmul.mubr.f32.gmra.mrb[0].mxu0 %v5584
          %v6157 = vpop.f32.mrb[0].mxu0
          %v6158 = vadd.f32 %v5933, %v6157
          %v6159 = vpop.f32.mrb[0].mxu0
          %6160 = vmatprep.mubr.f32.mxu0 0.0
          %6161 = vmatmul.mubr.f32.gmra.mrb[0].mxu0 %v5587
          %v6162 = vpop.f32.mrb[0].mxu0
          %v6163 = vadd.f32 %v5938, %v6162
          %v6164 = vpop.f32.mrb[0].mxu0
          %6165 = vmatprep.mubr.f32.mxu0 0.0
          %6166 = vmatmul.mubr.f32.gmra.mrb[0].mxu0 %v5589
          %v6167 = vpop.f32.mrb[0].mxu0
          %v6168 = vadd.f32 %v5943, %v6167
          %v6169 = vpop.f32.mrb[0].mxu0
          %6170 = vmatprep.mubr.f32.mxu0 0.0
          %6171 = vmatmul.mubr.f32.gmra.mrb[0].mxu0 %v5592
          %v6172 = vpop.f32.mrb[0].mxu0
          %v6173 = vadd.f32 %v5948, %v6172
          %v6174 = vpop.f32.mrb[0].mxu0
          %6175 = vmatprep.mubr.f32.mxu0 0.0
          %6176 = vmatmul.mubr.f32.gmra.mrb[0].mxu0 %v5594
          %v6177 = vpop.f32.mrb[0].mxu0
          %v6178 = vadd.f32 %v5953, %v6177
          %v6179 = vpop.f32.mrb[0].mxu0
          %6180 = vmatprep.mubr.f32.mxu0 0.0
          %6181 = vmatmul.mubr.f32.gmra.mrb[0].mxu0 %v5687
          %v6182 = vpop.f32.mrb[0].mxu0
          %v6183 = vadd.f32 %v5958, %v6182
          %v6184 = vpop.f32.mrb[0].mxu0
          %6185 = vmatprep.mubr.f32.mxu0 0.0
          %6186 = vmatmul.mubr.f32.gmra.mrb[0].mxu0 %v5689
          %v6187 = vpop.f32.mrb[0].mxu0
          %v6188 = vadd.f32 %v5963, %v6187
          %v6189 = vpop.f32.mrb[0].mxu0
          %6190 = vdwg.mxu0
          %6191 = vmatprep.subr.mxu0 0.0
          %6192 = vmatpush1.msra.mxu0 %v5627
          %6193 = vmatprep.subr.mxu0 0.0
          %6194 = vmatpush1.msra.mxu0 %v5628
          %6195 = vmatprep.subr.mxu0 0.0
          %6196 = vmatpush1.msra.mxu0 %v5629
          %6197 = vmatprep.subr.mxu0 0.0
          %6198 = vmatpush1.msra.mxu0 %v5630
          %6199 = vmatprep.subr.mxu0 0.0
          %6200 = vmatpush1.msra.mxu0 %v5631
          %6201 = vmatprep.subr.mxu0 0.0
          %6202 = vmatpush1.msra.mxu0 %v5632
          %6203 = vmatprep.subr.mxu0 0.0
          %6204 = vmatpush1.msra.mxu0 %v5633
          %6205 = vmatprep.subr.mxu0 0.0
          %6206 = vmatpush1.msra.mxu0 %v5634
          %6207 = vmatprep.subr.mxu0 0.0
          %6208 = vmatpush1.msra.mxu0 %v5635
          %6209 = vmatprep.subr.mxu0 0.0
          %6210 = vmatpush1.msra.mxu0 %v5636
          %6211 = vmatprep.subr.mxu0 0.0
          %6212 = vmatpush1.msra.mxu0 %v5637
          %6213 = vmatprep.subr.mxu0 0.0
          %6214 = vmatpush1.msra.mxu0 %v5638
          %6215 = vmatprep.subr.mxu0 0.0
          %6216 = vmatpush1.msra.mxu0 %v5639
          %6217 = vmatprep.subr.mxu0 0.0
          %6218 = vmatpush1.msra.mxu0 %v5640
          %6219 = vmatprep.subr.mxu0 0.0
          %6220 = vmatpush1.msra.mxu0 %v5641
          %6221 = vmatprep.subr.mxu0 0.0
          %6222 = vmatpush1.msra.mxu0 %v5642
          %6223 = vmatprep.subr.mxu0 0.0
          %6224 = vmatpush1.msra.mxu0 %v5643
          %6225 = vmatprep.subr.mxu0 0.0
          %6226 = vmatpush1.msra.mxu0 %v5644
          %6227 = vmatprep.subr.mxu0 0.0
          %6228 = vmatpush1.msra.mxu0 %v5645
          %6229 = vmatprep.subr.mxu0 0.0
          %6230 = vmatpush1.msra.mxu0 %v5646
          %6231 = vmatprep.subr.mxu0 0.0
          %6232 = vmatpush1.msra.mxu0 %v5647
          %6233 = vmatprep.subr.mxu0 0.0
          %6234 = vmatpush1.msra.mxu0 %v5648
          %6235 = vmatprep.subr.mxu0 0.0
          %6236 = vmatpush1.msra.mxu0 %v5649
          %6237 = vmatprep.subr.mxu0 0.0
          %6238 = vmatpush1.msra.mxu0 %v5650
          %6239 = vmatprep.subr.mxu0 0.0
          %6240 = vmatpush1.msra.mxu0 %v5651
          %6241 = vmatprep.subr.mxu0 0.0
          %6242 = vmatpush1.msra.mxu0 %v5652
          %6243 = vmatprep.subr.mxu0 0.0
          %6244 = vmatpush1.msra.mxu0 %v5653
          %6245 = vmatprep.subr.mxu0 0.0
          %6246 = vmatpush1.msra.mxu0 %v5654
          %6247 = vmatprep.subr.mxu0 0.0
          %6248 = vmatpush1.msra.mxu0 %v5655
          %6249 = vmatprep.subr.mxu0 0.0
          %6250 = vmatpush1.msra.mxu0 %v5656
          %6251 = vmatprep.subr.mxu0 0.0
          %6252 = vmatpush1.msra.mxu0 %v5657
          %6253 = vmatprep.subr.mxu0 0.0
          %6254 = vmatpush1.msra.mxu0 %v5658
          %6255 = vmatprep.mubr.f32.mxu0 %v5405
          %6256 = vmatmul.mubr.f32.gmra.mrb[0].mxu0 %v5301
          %v6257 = vpop.f32.mrb[0].mxu0
          %v6258 = vadd.f32 %v6033, %v6257
          %v6259 = vpop.f32.mrb[0].mxu0
          %6260 = vmatprep.mubr.f32.mxu0 %v5407
          %6261 = vmatmul.mubr.f32.gmra.mrb[0].mxu0 %v5302
          %v6262 = vpop.f32.mrb[0].mxu0
          %v6263 = vadd.f32 %v6038, %v6262
          %v6264 = vpop.f32.mrb[0].mxu0
          %6265 = vmatprep.mubr.f32.mxu0 %v5410
          %6266 = vmatmul.mubr.f32.gmra.mrb[0].mxu0 %v5304
          %v6267 = vpop.f32.mrb[0].mxu0
          %v6268 = vadd.f32 %v6043, %v6267
          %v6269 = vpop.f32.mrb[0].mxu0
          %6270 = vmatprep.mubr.f32.mxu0 %v5412
          %6271 = vmatmul.mubr.f32.gmra.mrb[0].mxu0 %v5305
          %v6272 = vpop.f32.mrb[0].mxu0
          %v6273 = vadd.f32 %v6048, %v6272
          %v6274 = vpop.f32.mrb[0].mxu0
          %6275 = vmatprep.mubr.f32.mxu0 %v5415
          %6276 = vmatmul.mubr.f32.gmra.mrb[0].mxu0 %v5307
          %v6277 = vpop.f32.mrb[0].mxu0
          %v6278 = vadd.f32 %v6053, %v6277
          %v6279 = vpop.f32.mrb[0].mxu0
          %6280 = vmatprep.mubr.f32.mxu0 %v5417
          %6281 = vmatmul.mubr.f32.gmra.mrb[0].mxu0 %v5308
          %v6282 = vpop.f32.mrb[0].mxu0
          %v6283 = vadd.f32 %v6058, %v6282
          %v6284 = vpop.f32.mrb[0].mxu0
          %6285 = vmatprep.mubr.f32.mxu0 %v5420
          %6286 = vmatmul.mubr.f32.gmra.mrb[0].mxu0 %v5310
          %v6287 = vpop.f32.mrb[0].mxu0
          %v6288 = vadd.f32 %v6063, %v6287
          %v6289 = vpop.f32.mrb[0].mxu0
          %6290 = vmatprep.mubr.f32.mxu0 %v5422
          %6291 = vmatmul.mubr.f32.gmra.mrb[0].mxu0 %v5311
          %v6292 = vpop.f32.mrb[0].mxu0
          %v6293 = vadd.f32 %v6068, %v6292
          %v6294 = vpop.f32.mrb[0].mxu0
          %6295 = vmatprep.mubr.f32.mxu0 %v5425
          %6296 = vmatmul.mubr.f32.gmra.mrb[0].mxu0 %v5313
          %v6297 = vpop.f32.mrb[0].mxu0
          %v6298 = vadd.f32 %v6073, %v6297
          %v6299 = vpop.f32.mrb[0].mxu0
          %6300 = vmatprep.mubr.f32.mxu0 %v5427
          %6301 = vmatmul.mubr.f32.gmra.mrb[0].mxu0 %v5314
          %v6302 = vpop.f32.mrb[0].mxu0
          %v6303 = vadd.f32 %v6078, %v6302
          %v6304 = vpop.f32.mrb[0].mxu0
          %6305 = vmatprep.mubr.f32.mxu0 %v5430
          %6306 = vmatmul.mubr.f32.gmra.mrb[0].mxu0 %v5316
          %v6307 = vpop.f32.mrb[0].mxu0
          %v6308 = vadd.f32 %v6083, %v6307
          %v6309 = vpop.f32.mrb[0].mxu0
          %6310 = vmatprep.mubr.f32.mxu0 %v5432
          %6311 = vmatmul.mubr.f32.gmra.mrb[0].mxu0 %v5317
          %v6312 = vpop.f32.mrb[0].mxu0
          %v6313 = vadd.f32 %v6088, %v6312
          %v6314 = vpop.f32.mrb[0].mxu0
          %6315 = vmatprep.mubr.f32.mxu0 %v5435
          %6316 = vmatmul.mubr.f32.gmra.mrb[0].mxu0 %v5319
          %v6317 = vpop.f32.mrb[0].mxu0
          %v6318 = vadd.f32 %v6093, %v6317
          %v6319 = vpop.f32.mrb[0].mxu0
          %6320 = vmatprep.mubr.f32.mxu0 %v5437
          %6321 = vmatmul.mubr.f32.gmra.mrb[0].mxu0 %v5320
          %v6322 = vpop.f32.mrb[0].mxu0
          %v6323 = vadd.f32 %v6098, %v6322
          %v6324 = vpop.f32.mrb[0].mxu0
          %6325 = vmatprep.mubr.f32.mxu0 %v5440
          %6326 = vmatmul.mubr.f32.gmra.mrb[0].mxu0 %v5322
          %v6327 = vpop.f32.mrb[0].mxu0
          %v6328 = vadd.f32 %v6103, %v6327
          %v6329 = vpop.f32.mrb[0].mxu0
          %6330 = vmatprep.mubr.f32.mxu0 %v5442
          %6331 = vmatmul.mubr.f32.gmra.mrb[0].mxu0 %v5323
          %v6332 = vpop.f32.mrb[0].mxu0
          %v6333 = vadd.f32 %v6108, %v6332
          %v6334 = vpop.f32.mrb[0].mxu0
          %6335 = vmatprep.mubr.f32.mxu0 %v5445
          %6336 = vmatmul.mubr.f32.gmra.mrb[0].mxu0 %v5325
          %v6337 = vpop.f32.mrb[0].mxu0
          %v6338 = vadd.f32 %v6113, %v6337
          %v6339 = vpop.f32.mrb[0].mxu0
          %6340 = vmatprep.mubr.f32.mxu0 %v5447
          %6341 = vmatmul.mubr.f32.gmra.mrb[0].mxu0 %v5326
          %v6342 = vpop.f32.mrb[0].mxu0
          %v6343 = vadd.f32 %v6118, %v6342
          %v6344 = vpop.f32.mrb[0].mxu0
          %6345 = vmatprep.mubr.f32.mxu0 %v5450
          %6346 = vmatmul.mubr.f32.gmra.mrb[0].mxu0 %v5328
          %v6347 = vpop.f32.mrb[0].mxu0
          %v6348 = vadd.f32 %v6123, %v6347
          %v6349 = vpop.f32.mrb[0].mxu0
          %6350 = vmatprep.mubr.f32.mxu0 %v5452
          %6351 = vmatmul.mubr.f32.gmra.mrb[0].mxu0 %v5329
          %v6352 = vpop.f32.mrb[0].mxu0
          %v6353 = vadd.f32 %v6128, %v6352
          %v6354 = vpop.f32.mrb[0].mxu0
          %6355 = vmatprep.mubr.f32.mxu0 %v5455
          %6356 = vmatmul.mubr.f32.gmra.mrb[0].mxu0 %v5331
          %v6357 = vpop.f32.mrb[0].mxu0
          %v6358 = vadd.f32 %v6133, %v6357
          %v6359 = vpop.f32.mrb[0].mxu0
          %6360 = vmatprep.mubr.f32.mxu0 %v5457
          %6361 = vmatmul.mubr.f32.gmra.mrb[0].mxu0 %v5332
          %v6362 = vpop.f32.mrb[0].mxu0
          %v6363 = vadd.f32 %v6138, %v6362
          %v6364 = vpop.f32.mrb[0].mxu0
          %6365 = vmatprep.mubr.f32.mxu0 %v5460
          %6366 = vmatmul.mubr.f32.gmra.mrb[0].mxu0 %v5334
          %v6367 = vpop.f32.mrb[0].mxu0
          %v6368 = vadd.f32 %v6143, %v6367
          %v6369 = vpop.f32.mrb[0].mxu0
          %6370 = vmatprep.mubr.f32.mxu0 %v5462
          %6371 = vmatmul.mubr.f32.gmra.mrb[0].mxu0 %v5335
          %v6372 = vpop.f32.mrb[0].mxu0
          %v6373 = vadd.f32 %v6148, %v6372
          %v6374 = vpop.f32.mrb[0].mxu0
          %6375 = vmatprep.mubr.f32.mxu0 %v5465
          %6376 = vmatmul.mubr.f32.gmra.mrb[0].mxu0 %v5337
          %v6377 = vpop.f32.mrb[0].mxu0
          %v6378 = vadd.f32 %v6153, %v6377
          %v6379 = vpop.f32.mrb[0].mxu0
          %6380 = vmatprep.mubr.f32.mxu0 %v5467
          %6381 = vmatmul.mubr.f32.gmra.mrb[0].mxu0 %v5338
          %v6382 = vpop.f32.mrb[0].mxu0
          %v6383 = vadd.f32 %v6158, %v6382
          %v6384 = vpop.f32.mrb[0].mxu0
          %6385 = vmatprep.mubr.f32.mxu0 %v5470
          %6386 = vmatmul.mubr.f32.gmra.mrb[0].mxu0 %v5340
          %v6387 = vpop.f32.mrb[0].mxu0
          %v6388 = vadd.f32 %v6163, %v6387
          %v6389 = vpop.f32.mrb[0].mxu0
          %6390 = vmatprep.mubr.f32.mxu0 %v5472
          %6391 = vmatmul.mubr.f32.gmra.mrb[0].mxu0 %v5341
          %v6392 = vpop.f32.mrb[0].mxu0
          %v6393 = vadd.f32 %v6168, %v6392
          %v6394 = vpop.f32.mrb[0].mxu0
          %6395 = vmatprep.mubr.f32.mxu0 %v5475
          %6396 = vmatmul.mubr.f32.gmra.mrb[0].mxu0 %v5343
          %v6397 = vpop.f32.mrb[0].mxu0
          %v6398 = vadd.f32 %v6173, %v6397
          %v6399 = vpop.f32.mrb[0].mxu0
          %6400 = vmatprep.mubr.f32.mxu0 %v5477
          %6401 = vmatmul.mubr.f32.gmra.mrb[0].mxu0 %v5344
          %v6402 = vpop.f32.mrb[0].mxu0
          %v6403 = vadd.f32 %v6178, %v6402
          %v6404 = vpop.f32.mrb[0].mxu0
          %6405 = vmatprep.mubr.f32.mxu0 %v5480
          %6406 = vmatmul.mubr.f32.gmra.mrb[0].mxu0 %v5346
          %v6407 = vpop.f32.mrb[0].mxu0
          %v6408 = vadd.f32 %v6183, %v6407
          %v6409 = vpop.f32.mrb[0].mxu0
          %6410 = vmatprep.mubr.f32.mxu0 %v5482
          %6411 = vmatmul.mubr.f32.gmra.mrb[0].mxu0 %v5347
          %v6412 = vpop.f32.mrb[0].mxu0
          %v6413 = vadd.f32 %v6188, %v6412
          %v6414 = vpop.f32.mrb[0].mxu0
          %6415 = vdwg.mxu0
          %6416 = vmatprep.subr.mxu0 0.0
          %6417 = vmatpush1.msra.mxu0 %v5659
          %6418 = vmatprep.subr.mxu0 0.0
          %6419 = vmatpush1.msra.mxu0 %v5660
          %6420 = vmatprep.subr.mxu0 0.0
          %6421 = vmatpush1.msra.mxu0 %v5661
          %6422 = vmatprep.subr.mxu0 0.0
          %6423 = vmatpush1.msra.mxu0 %v5662
          %6424 = vmatprep.subr.mxu0 0.0
          %6425 = vmatpush1.msra.mxu0 %v5663
          %6426 = vmatprep.subr.mxu0 0.0
          %6427 = vmatpush1.msra.mxu0 %v5664
          %6428 = vmatprep.subr.mxu0 0.0
          %6429 = vmatpush1.msra.mxu0 %v5665
          %6430 = vmatprep.subr.mxu0 0.0
          %6431 = vmatpush1.msra.mxu0 %v5666
          %6432 = vmatprep.subr.mxu0 0.0
          %6433 = vmatpush1.msra.mxu0 %v5667
          %6434 = vmatprep.subr.mxu0 0.0
          %6435 = vmatpush1.msra.mxu0 %v5668
          %6436 = vmatprep.subr.mxu0 0.0
          %6437 = vmatpush1.msra.mxu0 %v5669
          %6438 = vmatprep.subr.mxu0 0.0
          %6439 = vmatpush1.msra.mxu0 %v5670
          %6440 = vmatprep.subr.mxu0 0.0
          %6441 = vmatpush1.msra.mxu0 %v5671
          %6442 = vmatprep.subr.mxu0 0.0
          %6443 = vmatpush1.msra.mxu0 %v5672
          %6444 = vmatprep.subr.mxu0 0.0
          %6445 = vmatpush1.msra.mxu0 %v5673
          %6446 = vmatprep.subr.mxu0 0.0
          %6447 = vmatpush1.msra.mxu0 %v5674
          %6448 = vmatprep.subr.mxu0 0.0
          %6449 = vmatpush1.msra.mxu0 0.0
          %6450 = vmatprep.subr.mxu0 0.0
          %6451 = vmatpush1.msra.mxu0 0.0
          %6452 = vmatprep.subr.mxu0 0.0
          %6453 = vmatpush1.msra.mxu0 0.0
          %6454 = vmatprep.subr.mxu0 0.0
          %6455 = vmatpush1.msra.mxu0 0.0
          %6456 = vmatprep.subr.mxu0 0.0
          %6457 = vmatpush1.msra.mxu0 0.0
          %6458 = vmatprep.subr.mxu0 0.0
          %6459 = vmatpush1.msra.mxu0 0.0
          %6460 = vmatprep.subr.mxu0 0.0
          %6461 = vmatpush1.msra.mxu0 0.0
          %6462 = vmatprep.subr.mxu0 0.0
          %6463 = vmatpush1.msra.mxu0 0.0
          %6464 = vmatprep.subr.mxu0 0.0
          %6465 = vmatpush1.msra.mxu0 0.0
          %6466 = vmatprep.subr.mxu0 0.0
          %6467 = vmatpush1.msra.mxu0 0.0
          %6468 = vmatprep.subr.mxu0 0.0
          %6469 = vmatpush1.msra.mxu0 0.0
          %6470 = vmatprep.subr.mxu0 0.0
          %6471 = vmatpush1.msra.mxu0 0.0
          %6472 = vmatprep.subr.mxu0 0.0
          %6473 = vmatpush1.msra.mxu0 0.0
          %6474 = vmatprep.subr.mxu0 0.0
          %6475 = vmatpush1.msra.mxu0 0.0
          %6476 = vmatprep.subr.mxu0 0.0
          %6477 = vmatpush1.msra.mxu0 0.0
          %6478 = vmatprep.subr.mxu0 0.0
          %6479 = vmatpush1.msra.mxu0 0.0
          %6480 = vmatprep.mubr.f32.mxu0 0.0
          %6481 = vmatmul.mubr.f32.gmra.mrb[0].mxu0 %v5517
          %v6482 = vpop.f32.mrb[0].mxu0
          %v6483 = vadd.f32 %v6258, %v6482
          %v6484 = vpop.f32.mrb[0].mxu0
          %6485 = vmatprep.mubr.f32.mxu0 0.0
          %6486 = vmatmul.mubr.f32.gmra.mrb[0].mxu0 %v5519
          %v6487 = vpop.f32.mrb[0].mxu0
          %v6488 = vadd.f32 %v6263, %v6487
          %v6489 = vpop.f32.mrb[0].mxu0
          %6490 = vmatprep.mubr.f32.mxu0 0.0
          %6491 = vmatmul.mubr.f32.gmra.mrb[0].mxu0 %v5522
          %v6492 = vpop.f32.mrb[0].mxu0
          %v6493 = vadd.f32 %v6268, %v6492
          %v6494 = vpop.f32.mrb[0].mxu0
          %6495 = vmatprep.mubr.f32.mxu0 0.0
          %6496 = vmatmul.mubr.f32.gmra.mrb[0].mxu0 %v5524
          %v6497 = vpop.f32.mrb[0].mxu0
          %v6498 = vadd.f32 %v6273, %v6497
          %v6499 = vpop.f32.mrb[0].mxu0
          %6500 = vmatprep.mubr.f32.mxu0 0.0
          %6501 = vmatmul.mubr.f32.gmra.mrb[0].mxu0 %v5527
          %v6502 = vpop.f32.mrb[0].mxu0
          %v6503 = vadd.f32 %v6278, %v6502
          %v6504 = vpop.f32.mrb[0].mxu0
          %6505 = vmatprep.mubr.f32.mxu0 0.0
          %6506 = vmatmul.mubr.f32.gmra.mrb[0].mxu0 %v5529
          %v6507 = vpop.f32.mrb[0].mxu0
          %v6508 = vadd.f32 %v6283, %v6507
          %v6509 = vpop.f32.mrb[0].mxu0
          %6510 = vmatprep.mubr.f32.mxu0 0.0
          %6511 = vmatmul.mubr.f32.gmra.mrb[0].mxu0 %v5532
          %v6512 = vpop.f32.mrb[0].mxu0
          %v6513 = vadd.f32 %v6288, %v6512
          %v6514 = vpop.f32.mrb[0].mxu0
          %6515 = vmatprep.mubr.f32.mxu0 0.0
          %6516 = vmatmul.mubr.f32.gmra.mrb[0].mxu0 %v5534
          %v6517 = vpop.f32.mrb[0].mxu0
          %v6518 = vadd.f32 %v6293, %v6517
          %v6519 = vpop.f32.mrb[0].mxu0
          %6520 = vmatprep.mubr.f32.mxu0 0.0
          %6521 = vmatmul.mubr.f32.gmra.mrb[0].mxu0 %v5537
          %v6522 = vpop.f32.mrb[0].mxu0
          %v6523 = vadd.f32 %v6298, %v6522
          %v6524 = vpop.f32.mrb[0].mxu0
          %6525 = vmatprep.mubr.f32.mxu0 0.0
          %6526 = vmatmul.mubr.f32.gmra.mrb[0].mxu0 %v5539
          %v6527 = vpop.f32.mrb[0].mxu0
          %v6528 = vadd.f32 %v6303, %v6527
          %v6529 = vpop.f32.mrb[0].mxu0
          %6530 = vmatprep.mubr.f32.mxu0 0.0
          %6531 = vmatmul.mubr.f32.gmra.mrb[0].mxu0 %v5542
          %v6532 = vpop.f32.mrb[0].mxu0
          %v6533 = vadd.f32 %v6308, %v6532
          %v6534 = vpop.f32.mrb[0].mxu0
          %6535 = vmatprep.mubr.f32.mxu0 0.0
          %6536 = vmatmul.mubr.f32.gmra.mrb[0].mxu0 %v5544
          %v6537 = vpop.f32.mrb[0].mxu0
          %v6538 = vadd.f32 %v6313, %v6537
          %v6539 = vpop.f32.mrb[0].mxu0
          %6540 = vmatprep.mubr.f32.mxu0 0.0
          %6541 = vmatmul.mubr.f32.gmra.mrb[0].mxu0 %v5547
          %v6542 = vpop.f32.mrb[0].mxu0
          %v6543 = vadd.f32 %v6318, %v6542
          %v6544 = vpop.f32.mrb[0].mxu0
          %6545 = vmatprep.mubr.f32.mxu0 0.0
          %6546 = vmatmul.mubr.f32.gmra.mrb[0].mxu0 %v5549
          %v6547 = vpop.f32.mrb[0].mxu0
          %v6548 = vadd.f32 %v6323, %v6547
          %v6549 = vpop.f32.mrb[0].mxu0
          %6550 = vmatprep.mubr.f32.mxu0 0.0
          %6551 = vmatmul.mubr.f32.gmra.mrb[0].mxu0 %v5552
          %v6552 = vpop.f32.mrb[0].mxu0
          %v6553 = vadd.f32 %v6328, %v6552
          %v6554 = vpop.f32.mrb[0].mxu0
          %6555 = vmatprep.mubr.f32.mxu0 0.0
          %6556 = vmatmul.mubr.f32.gmra.mrb[0].mxu0 %v5554
          %v6557 = vpop.f32.mrb[0].mxu0
          %v6558 = vadd.f32 %v6333, %v6557
          %v6559 = vpop.f32.mrb[0].mxu0
          %6560 = vmatprep.mubr.f32.mxu0 0.0
          %6561 = vmatmul.mubr.f32.gmra.mrb[0].mxu0 %v5557
          %v6562 = vpop.f32.mrb[0].mxu0
          %v6563 = vadd.f32 %v6338, %v6562
          %v6564 = vpop.f32.mrb[0].mxu0
          %6565 = vmatprep.mubr.f32.mxu0 0.0
          %6566 = vmatmul.mubr.f32.gmra.mrb[0].mxu0 %v5559
          %v6567 = vpop.f32.mrb[0].mxu0
          %v6568 = vadd.f32 %v6343, %v6567
          %v6569 = vpop.f32.mrb[0].mxu0
          %6570 = vmatprep.mubr.f32.mxu0 0.0
          %6571 = vmatmul.mubr.f32.gmra.mrb[0].mxu0 %v5562
          %v6572 = vpop.f32.mrb[0].mxu0
          %v6573 = vadd.f32 %v6348, %v6572
          %v6574 = vpop.f32.mrb[0].mxu0
          %6575 = vmatprep.mubr.f32.mxu0 0.0
          %6576 = vmatmul.mubr.f32.gmra.mrb[0].mxu0 %v5564
          %v6577 = vpop.f32.mrb[0].mxu0
          %v6578 = vadd.f32 %v6353, %v6577
          %v6579 = vpop.f32.mrb[0].mxu0
          %6580 = vmatprep.mubr.f32.mxu0 0.0
          %6581 = vmatmul.mubr.f32.gmra.mrb[0].mxu0 %v5567
          %v6582 = vpop.f32.mrb[0].mxu0
          %v6583 = vadd.f32 %v6358, %v6582
          %v6584 = vpop.f32.mrb[0].mxu0
          %6585 = vmatprep.mubr.f32.mxu0 0.0
          %6586 = vmatmul.mubr.f32.gmra.mrb[0].mxu0 %v5569
          %v6587 = vpop.f32.mrb[0].mxu0
          %v6588 = vadd.f32 %v6363, %v6587
          %v6589 = vpop.f32.mrb[0].mxu0
          %6590 = vmatprep.mubr.f32.mxu0 0.0
          %6591 = vmatmul.mubr.f32.gmra.mrb[0].mxu0 %v5572
          %v6592 = vpop.f32.mrb[0].mxu0
          %v6593 = vadd.f32 %v6368, %v6592
          %v6594 = vpop.f32.mrb[0].mxu0
          %6595 = vmatprep.mubr.f32.mxu0 0.0
          %6596 = vmatmul.mubr.f32.gmra.mrb[0].mxu0 %v5574
          %v6597 = vpop.f32.mrb[0].mxu0
          %v6598 = vadd.f32 %v6373, %v6597
          %v6599 = vpop.f32.mrb[0].mxu0
          %6600 = vmatprep.mubr.f32.mxu0 0.0
          %6601 = vmatmul.mubr.f32.gmra.mrb[0].mxu0 %v5577
          %v6602 = vpop.f32.mrb[0].mxu0
          %v6603 = vadd.f32 %v6378, %v6602
          %v6604 = vpop.f32.mrb[0].mxu0
          %6605 = vmatprep.mubr.f32.mxu0 0.0
          %6606 = vmatmul.mubr.f32.gmra.mrb[0].mxu0 %v5579
          %v6607 = vpop.f32.mrb[0].mxu0
          %v6608 = vadd.f32 %v6383, %v6607
          %v6609 = vpop.f32.mrb[0].mxu0
          %6610 = vmatprep.mubr.f32.mxu0 0.0
          %6611 = vmatmul.mubr.f32.gmra.mrb[0].mxu0 %v5582
          %v6612 = vpop.f32.mrb[0].mxu0
          %v6613 = vadd.f32 %v6388, %v6612
          %v6614 = vpop.f32.mrb[0].mxu0
          %6615 = vmatprep.mubr.f32.mxu0 0.0
          %6616 = vmatmul.mubr.f32.gmra.mrb[0].mxu0 %v5584
          %v6617 = vpop.f32.mrb[0].mxu0
          %v6618 = vadd.f32 %v6393, %v6617
          %v6619 = vpop.f32.mrb[0].mxu0
          %6620 = vmatprep.mubr.f32.mxu0 0.0
          %6621 = vmatmul.mubr.f32.gmra.mrb[0].mxu0 %v5587
          %v6622 = vpop.f32.mrb[0].mxu0
          %v6623 = vadd.f32 %v6398, %v6622
          %v6624 = vpop.f32.mrb[0].mxu0
          %6625 = vmatprep.mubr.f32.mxu0 0.0
          %6626 = vmatmul.mubr.f32.gmra.mrb[0].mxu0 %v5589
          %v6627 = vpop.f32.mrb[0].mxu0
          %v6628 = vadd.f32 %v6403, %v6627
          %v6629 = vpop.f32.mrb[0].mxu0
          %6630 = vmatprep.mubr.f32.mxu0 0.0
          %6631 = vmatmul.mubr.f32.gmra.mrb[0].mxu0 %v5592
          %v6632 = vpop.f32.mrb[0].mxu0
          %v6633 = vadd.f32 %v6408, %v6632
          %v6634 = vpop.f32.mrb[0].mxu0
          %6635 = vmatprep.mubr.f32.mxu0 0.0
          %6636 = vmatmul.mubr.f32.gmra.mrb[0].mxu0 %v5594
          %v6637 = vpop.f32.mrb[0].mxu0
          %v6638 = vadd.f32 %v6413, %v6637
          %v6639 = vpop.f32.mrb[0].mxu0
          %6640 = vdwg.mxu0
          %v6644 = vrot.slane %v5352, 1
          %v6645 = vrot.slane %v5353, 1
          %v6646 = vsel %vm555, %v6644, %v6645
          %v6647 = vrot.slane %v5354, 1
          %v6648 = vsel %vm555, %v6645, %v6647
          %v6651 = vrot.slane %v5352, 2
          %v6652 = vrot.slane %v5353, 2
          %v6653 = vsel %vm1221, %v6651, %v6652
          %v6654 = vrot.slane %v5354, 2
          %v6655 = vsel %vm1221, %v6652, %v6654
          %s6658 = scalar_lea.vmem [#allocation5], 768
          %v6659 = vld [vmem:[%s6658] sm:$0xff]
          %v6660 = vld [vmem:[%s6658 + $0x8] sm:$0xff]
          %v6661 = vld [vmem:[%s6658 + $0x10] sm:$0xff]
          %v6662 = vld [vmem:[%s6658 + $0x18] sm:$0xff]
          %v6663 = vld [vmem:[%s6658 + $0x20] sm:$0xff]
          %v6664 = vld [vmem:[%s6658 + $0x28] sm:$0xff]
          %v6665 = vld [vmem:[%s6658 + $0x30] sm:$0xff]
          %v6666 = vld [vmem:[%s6658 + $0x38] sm:$0xff]
          %v6667 = vld [vmem:[%s6658 + $0x40] sm:$0xff]
          %v6668 = vld [vmem:[%s6658 + $0x48] sm:$0xff]
          %v6669 = vld [vmem:[%s6658 + $0x50] sm:$0xff]
          %v6670 = vld [vmem:[%s6658 + $0x58] sm:$0xff]
          %v6671 = vld [vmem:[%s6658 + $0x60] sm:$0xff]
          %v6672 = vld [vmem:[%s6658 + $0x68] sm:$0xff]
          %v6673 = vld [vmem:[%s6658 + $0x70] sm:$0xff]
          %v6674 = vld [vmem:[%s6658 + $0x78] sm:$0xff]
          %v6675 = vld [vmem:[%s6658 + $0x80] sm:$0xff]
          %v6676 = vld [vmem:[%s6658 + $0x88] sm:$0xff]
          %v6677 = vld [vmem:[%s6658 + $0x90] sm:$0xff]
          %v6678 = vld [vmem:[%s6658 + $0x98] sm:$0xff]
          %v6679 = vld [vmem:[%s6658 + $0xa0] sm:$0xff]
          %v6680 = vld [vmem:[%s6658 + $0xa8] sm:$0xff]
          %v6681 = vld [vmem:[%s6658 + $0xb0] sm:$0xff]
          %v6682 = vld [vmem:[%s6658 + $0xb8] sm:$0xff]
          %v6683 = vld [vmem:[%s6658 + $0xc0] sm:$0xff]
          %v6684 = vld [vmem:[%s6658 + $0xc8] sm:$0xff]
          %v6685 = vld [vmem:[%s6658 + $0xd0] sm:$0xff]
          %v6686 = vld [vmem:[%s6658 + $0xd8] sm:$0xff]
          %v6687 = vld [vmem:[%s6658 + $0xe0] sm:$0xff]
          %v6688 = vld [vmem:[%s6658 + $0xe8] sm:$0xff]
          %v6689 = vld [vmem:[%s6658 + $0xf0] sm:$0xff]
          %v6690 = vld [vmem:[%s6658 + $0xf8] sm:$0xff]
          %v6691 = vld [vmem:[%s6658 + $0x100] sm:$0xff]
          %v6692 = vld [vmem:[%s6658 + $0x108] sm:$0xff]
          %v6693 = vld [vmem:[%s6658 + $0x110] sm:$0xff]
          %v6694 = vld [vmem:[%s6658 + $0x118] sm:$0xff]
          %v6695 = vld [vmem:[%s6658 + $0x120] sm:$0xff]
          %v6696 = vld [vmem:[%s6658 + $0x128] sm:$0xff]
          %v6697 = vld [vmem:[%s6658 + $0x130] sm:$0xff]
          %v6698 = vld [vmem:[%s6658 + $0x138] sm:$0xff]
          %v6699 = vld [vmem:[%s6658 + $0x140] sm:$0xff]
          %v6700 = vld [vmem:[%s6658 + $0x148] sm:$0xff]
          %v6701 = vld [vmem:[%s6658 + $0x150] sm:$0xff]
          %v6702 = vld [vmem:[%s6658 + $0x158] sm:$0xff]
          %v6703 = vld [vmem:[%s6658 + $0x160] sm:$0xff]
          %v6704 = vld [vmem:[%s6658 + $0x168] sm:$0xff]
          %v6705 = vld [vmem:[%s6658 + $0x170] sm:$0xff]
          %v6706 = vld [vmem:[%s6658 + $0x178] sm:$0xff]
          %6707 = vmatprep.subr.mxu0 0.0
          %6708 = vmatpush1.msra.mxu0 %v6659
          %6709 = vmatprep.subr.mxu0 0.0
          %6710 = vmatpush1.msra.mxu0 %v6660
          %6711 = vmatprep.subr.mxu0 0.0
          %6712 = vmatpush1.msra.mxu0 %v6661
          %6713 = vmatprep.subr.mxu0 0.0
          %6714 = vmatpush1.msra.mxu0 %v6662
          %6715 = vmatprep.subr.mxu0 0.0
          %6716 = vmatpush1.msra.mxu0 %v6663
          %6717 = vmatprep.subr.mxu0 0.0
          %6718 = vmatpush1.msra.mxu0 %v6664
          %6719 = vmatprep.subr.mxu0 0.0
          %6720 = vmatpush1.msra.mxu0 %v6665
          %6721 = vmatprep.subr.mxu0 0.0
          %6722 = vmatpush1.msra.mxu0 %v6666
          %6723 = vmatprep.subr.mxu0 0.0
          %6724 = vmatpush1.msra.mxu0 %v6667
          %6725 = vmatprep.subr.mxu0 0.0
          %6726 = vmatpush1.msra.mxu0 %v6668
          %6727 = vmatprep.subr.mxu0 0.0
          %6728 = vmatpush1.msra.mxu0 %v6669
          %6729 = vmatprep.subr.mxu0 0.0
          %6730 = vmatpush1.msra.mxu0 %v6670
          %6731 = vmatprep.subr.mxu0 0.0
          %6732 = vmatpush1.msra.mxu0 %v6671
          %6733 = vmatprep.subr.mxu0 0.0
          %6734 = vmatpush1.msra.mxu0 %v6672
          %6735 = vmatprep.subr.mxu0 0.0
          %6736 = vmatpush1.msra.mxu0 %v6673
          %6737 = vmatprep.subr.mxu0 0.0
          %6738 = vmatpush1.msra.mxu0 %v6674
          %6739 = vmatprep.subr.mxu0 0.0
          %6740 = vmatpush1.msra.mxu0 %v6675
          %6741 = vmatprep.subr.mxu0 0.0
          %6742 = vmatpush1.msra.mxu0 %v6676
          %6743 = vmatprep.subr.mxu0 0.0
          %6744 = vmatpush1.msra.mxu0 %v6677
          %6745 = vmatprep.subr.mxu0 0.0
          %6746 = vmatpush1.msra.mxu0 %v6678
          %6747 = vmatprep.subr.mxu0 0.0
          %6748 = vmatpush1.msra.mxu0 %v6679
          %6749 = vmatprep.subr.mxu0 0.0
          %6750 = vmatpush1.msra.mxu0 %v6680
          %6751 = vmatprep.subr.mxu0 0.0
          %6752 = vmatpush1.msra.mxu0 %v6681
          %6753 = vmatprep.subr.mxu0 0.0
          %6754 = vmatpush1.msra.mxu0 %v6682
          %6755 = vmatprep.subr.mxu0 0.0
          %6756 = vmatpush1.msra.mxu0 %v6683
          %6757 = vmatprep.subr.mxu0 0.0
          %6758 = vmatpush1.msra.mxu0 %v6684
          %6759 = vmatprep.subr.mxu0 0.0
          %6760 = vmatpush1.msra.mxu0 %v6685
          %6761 = vmatprep.subr.mxu0 0.0
          %6762 = vmatpush1.msra.mxu0 %v6686
          %6763 = vmatprep.subr.mxu0 0.0
          %6764 = vmatpush1.msra.mxu0 %v6687
          %6765 = vmatprep.subr.mxu0 0.0
          %6766 = vmatpush1.msra.mxu0 %v6688
          %6767 = vmatprep.subr.mxu0 0.0
          %6768 = vmatpush1.msra.mxu0 %v6689
          %6769 = vmatprep.subr.mxu0 0.0
          %6770 = vmatpush1.msra.mxu0 %v6690
          %6771 = vmatprep.mubr.f32.mxu0 %v5415
          %6772 = vmatmul.mubr.f32.gmra.mrb[0].mxu0 %v5307
          %v6773 = vpop.f32.mrb[0].mxu0
          %v6774 = vadd.f32 0.0, %v6773
          %v6775 = vpop.f32.mrb[0].mxu0
          %6776 = vmatprep.mubr.f32.mxu0 %v5417
          %6777 = vmatmul.mubr.f32.gmra.mrb[0].mxu0 %v5308
          %v6778 = vpop.f32.mrb[0].mxu0
          %v6779 = vadd.f32 0.0, %v6778
          %v6780 = vpop.f32.mrb[0].mxu0
          %6781 = vmatprep.mubr.f32.mxu0 %v5420
          %6782 = vmatmul.mubr.f32.gmra.mrb[0].mxu0 %v5310
          %v6783 = vpop.f32.mrb[0].mxu0
          %v6784 = vadd.f32 0.0, %v6783
          %v6785 = vpop.f32.mrb[0].mxu0
          %6786 = vmatprep.mubr.f32.mxu0 %v5422
          %6787 = vmatmul.mubr.f32.gmra.mrb[0].mxu0 %v5311
          %v6788 = vpop.f32.mrb[0].mxu0
          %v6789 = vadd.f32 0.0, %v6788
          %v6790 = vpop.f32.mrb[0].mxu0
          %6791 = vmatprep.mubr.f32.mxu0 %v5425
          %6792 = vmatmul.mubr.f32.gmra.mrb[0].mxu0 %v5313
          %v6793 = vpop.f32.mrb[0].mxu0
          %v6794 = vadd.f32 0.0, %v6793
          %v6795 = vpop.f32.mrb[0].mxu0
          %6796 = vmatprep.mubr.f32.mxu0 %v5427
          %6797 = vmatmul.mubr.f32.gmra.mrb[0].mxu0 %v5314
          %v6798 = vpop.f32.mrb[0].mxu0
          %v6799 = vadd.f32 0.0, %v6798
          %v6800 = vpop.f32.mrb[0].mxu0
          %6801 = vmatprep.mubr.f32.mxu0 %v5430
          %6802 = vmatmul.mubr.f32.gmra.mrb[0].mxu0 %v5316
          %v6803 = vpop.f32.mrb[0].mxu0
          %v6804 = vadd.f32 0.0, %v6803
          %v6805 = vpop.f32.mrb[0].mxu0
          %6806 = vmatprep.mubr.f32.mxu0 %v5432
          %6807 = vmatmul.mubr.f32.gmra.mrb[0].mxu0 %v5317
          %v6808 = vpop.f32.mrb[0].mxu0
          %v6809 = vadd.f32 0.0, %v6808
          %v6810 = vpop.f32.mrb[0].mxu0
          %6811 = vmatprep.mubr.f32.mxu0 %v5435
          %6812 = vmatmul.mubr.f32.gmra.mrb[0].mxu0 %v5319
          %v6813 = vpop.f32.mrb[0].mxu0
          %v6814 = vadd.f32 0.0, %v6813
          %v6815 = vpop.f32.mrb[0].mxu0
          %6816 = vmatprep.mubr.f32.mxu0 %v5437
          %6817 = vmatmul.mubr.f32.gmra.mrb[0].mxu0 %v5320
          %v6818 = vpop.f32.mrb[0].mxu0
          %v6819 = vadd.f32 0.0, %v6818
          %v6820 = vpop.f32.mrb[0].mxu0
          %6821 = vmatprep.mubr.f32.mxu0 %v5440
          %6822 = vmatmul.mubr.f32.gmra.mrb[0].mxu0 %v5322
          %v6823 = vpop.f32.mrb[0].mxu0
          %v6824 = vadd.f32 0.0, %v6823
          %v6825 = vpop.f32.mrb[0].mxu0
          %6826 = vmatprep.mubr.f32.mxu0 %v5442
          %6827 = vmatmul.mubr.f32.gmra.mrb[0].mxu0 %v5323
          %v6828 = vpop.f32.mrb[0].mxu0
          %v6829 = vadd.f32 0.0, %v6828
          %v6830 = vpop.f32.mrb[0].mxu0
          %6831 = vmatprep.mubr.f32.mxu0 %v5445
          %6832 = vmatmul.mubr.f32.gmra.mrb[0].mxu0 %v5325
          %v6833 = vpop.f32.mrb[0].mxu0
          %v6834 = vadd.f32 0.0, %v6833
          %v6835 = vpop.f32.mrb[0].mxu0
          %6836 = vmatprep.mubr.f32.mxu0 %v5447
          %6837 = vmatmul.mubr.f32.gmra.mrb[0].mxu0 %v5326
          %v6838 = vpop.f32.mrb[0].mxu0
          %v6839 = vadd.f32 0.0, %v6838
          %v6840 = vpop.f32.mrb[0].mxu0
          %6841 = vmatprep.mubr.f32.mxu0 %v5450
          %6842 = vmatmul.mubr.f32.gmra.mrb[0].mxu0 %v5328
          %v6843 = vpop.f32.mrb[0].mxu0
          %v6844 = vadd.f32 0.0, %v6843
          %v6845 = vpop.f32.mrb[0].mxu0
          %6846 = vmatprep.mubr.f32.mxu0 %v5452
          %6847 = vmatmul.mubr.f32.gmra.mrb[0].mxu0 %v5329
          %v6848 = vpop.f32.mrb[0].mxu0
          %v6849 = vadd.f32 0.0, %v6848
          %v6850 = vpop.f32.mrb[0].mxu0
          %6851 = vmatprep.mubr.f32.mxu0 %v5455
          %6852 = vmatmul.mubr.f32.gmra.mrb[0].mxu0 %v5331
          %v6853 = vpop.f32.mrb[0].mxu0
          %v6854 = vadd.f32 0.0, %v6853
          %v6855 = vpop.f32.mrb[0].mxu0
          %6856 = vmatprep.mubr.f32.mxu0 %v5457
          %6857 = vmatmul.mubr.f32.gmra.mrb[0].mxu0 %v5332
          %v6858 = vpop.f32.mrb[0].mxu0
          %v6859 = vadd.f32 0.0, %v6858
          %v6860 = vpop.f32.mrb[0].mxu0
          %6861 = vmatprep.mubr.f32.mxu0 %v5460
          %6862 = vmatmul.mubr.f32.gmra.mrb[0].mxu0 %v5334
          %v6863 = vpop.f32.mrb[0].mxu0
          %v6864 = vadd.f32 0.0, %v6863
          %v6865 = vpop.f32.mrb[0].mxu0
          %6866 = vmatprep.mubr.f32.mxu0 %v5462
          %6867 = vmatmul.mubr.f32.gmra.mrb[0].mxu0 %v5335
          %v6868 = vpop.f32.mrb[0].mxu0
          %v6869 = vadd.f32 0.0, %v6868
          %v6870 = vpop.f32.mrb[0].mxu0
          %6871 = vmatprep.mubr.f32.mxu0 %v5465
          %6872 = vmatmul.mubr.f32.gmra.mrb[0].mxu0 %v5337
          %v6873 = vpop.f32.mrb[0].mxu0
          %v6874 = vadd.f32 0.0, %v6873
          %v6875 = vpop.f32.mrb[0].mxu0
          %6876 = vmatprep.mubr.f32.mxu0 %v5467
          %6877 = vmatmul.mubr.f32.gmra.mrb[0].mxu0 %v5338
          %v6878 = vpop.f32.mrb[0].mxu0
          %v6879 = vadd.f32 0.0, %v6878
          %v6880 = vpop.f32.mrb[0].mxu0
          %6881 = vmatprep.mubr.f32.mxu0 %v5470
          %6882 = vmatmul.mubr.f32.gmra.mrb[0].mxu0 %v5340
          %v6883 = vpop.f32.mrb[0].mxu0
          %v6884 = vadd.f32 0.0, %v6883
          %v6885 = vpop.f32.mrb[0].mxu0
          %6886 = vmatprep.mubr.f32.mxu0 %v5472
          %6887 = vmatmul.mubr.f32.gmra.mrb[0].mxu0 %v5341
          %v6888 = vpop.f32.mrb[0].mxu0
          %v6889 = vadd.f32 0.0, %v6888
          %v6890 = vpop.f32.mrb[0].mxu0
          %6891 = vmatprep.mubr.f32.mxu0 %v5475
          %6892 = vmatmul.mubr.f32.gmra.mrb[0].mxu0 %v5343
          %v6893 = vpop.f32.mrb[0].mxu0
          %v6894 = vadd.f32 0.0, %v6893
          %v6895 = vpop.f32.mrb[0].mxu0
          %6896 = vmatprep.mubr.f32.mxu0 %v5477
          %6897 = vmatmul.mubr.f32.gmra.mrb[0].mxu0 %v5344
          %v6898 = vpop.f32.mrb[0].mxu0
          %v6899 = vadd.f32 0.0, %v6898
          %v6900 = vpop.f32.mrb[0].mxu0
          %6901 = vmatprep.mubr.f32.mxu0 %v5480
          %6902 = vmatmul.mubr.f32.gmra.mrb[0].mxu0 %v5346
          %v6903 = vpop.f32.mrb[0].mxu0
          %v6904 = vadd.f32 0.0, %v6903
          %v6905 = vpop.f32.mrb[0].mxu0
          %6906 = vmatprep.mubr.f32.mxu0 %v5482
          %6907 = vmatmul.mubr.f32.gmra.mrb[0].mxu0 %v5347
          %v6908 = vpop.f32.mrb[0].mxu0
          %v6909 = vadd.f32 0.0, %v6908
          %v6910 = vpop.f32.mrb[0].mxu0
          %6911 = vmatprep.mubr.f32.mxu0 %v5680
          %6912 = vmatmul.mubr.f32.gmra.mrb[0].mxu0 %v5349
          %v6913 = vpop.f32.mrb[0].mxu0
          %v6914 = vadd.f32 0.0, %v6913
          %v6915 = vpop.f32.mrb[0].mxu0
          %6916 = vmatprep.mubr.f32.mxu0 %v5682
          %6917 = vmatmul.mubr.f32.gmra.mrb[0].mxu0 %v5350
          %v6918 = vpop.f32.mrb[0].mxu0
          %v6919 = vadd.f32 0.0, %v6918
          %v6920 = vpop.f32.mrb[0].mxu0
          %6921 = vmatprep.mubr.f32.mxu0 %v6646
          %6922 = vmatmul.mubr.f32.gmra.mrb[0].mxu0 %v5352
          %v6923 = vpop.f32.mrb[0].mxu0
          %v6924 = vadd.f32 0.0, %v6923
          %v6925 = vpop.f32.mrb[0].mxu0
          %6926 = vmatprep.mubr.f32.mxu0 %v6648
          %6927 = vmatmul.mubr.f32.gmra.mrb[0].mxu0 %v5353
          %v6928 = vpop.f32.mrb[0].mxu0
          %v6929 = vadd.f32 0.0, %v6928
          %v6930 = vpop.f32.mrb[0].mxu0
          %6931 = vdwg.mxu0
          %6932 = vmatprep.subr.mxu0 0.0
          %6933 = vmatpush1.msra.mxu0 %v6691
          %6934 = vmatprep.subr.mxu0 0.0
          %6935 = vmatpush1.msra.mxu0 %v6692
          %6936 = vmatprep.subr.mxu0 0.0
          %6937 = vmatpush1.msra.mxu0 %v6693
          %6938 = vmatprep.subr.mxu0 0.0
          %6939 = vmatpush1.msra.mxu0 %v6694
          %6940 = vmatprep.subr.mxu0 0.0
          %6941 = vmatpush1.msra.mxu0 %v6695
          %6942 = vmatprep.subr.mxu0 0.0
          %6943 = vmatpush1.msra.mxu0 %v6696
          %6944 = vmatprep.subr.mxu0 0.0
          %6945 = vmatpush1.msra.mxu0 %v6697
          %6946 = vmatprep.subr.mxu0 0.0
          %6947 = vmatpush1.msra.mxu0 %v6698
          %6948 = vmatprep.subr.mxu0 0.0
          %6949 = vmatpush1.msra.mxu0 %v6699
          %6950 = vmatprep.subr.mxu0 0.0
          %6951 = vmatpush1.msra.mxu0 %v6700
          %6952 = vmatprep.subr.mxu0 0.0
          %6953 = vmatpush1.msra.mxu0 %v6701
          %6954 = vmatprep.subr.mxu0 0.0
          %6955 = vmatpush1.msra.mxu0 %v6702
          %6956 = vmatprep.subr.mxu0 0.0
          %6957 = vmatpush1.msra.mxu0 %v6703
          %6958 = vmatprep.subr.mxu0 0.0
          %6959 = vmatpush1.msra.mxu0 %v6704
          %6960 = vmatprep.subr.mxu0 0.0
          %6961 = vmatpush1.msra.mxu0 %v6705
          %6962 = vmatprep.subr.mxu0 0.0
          %6963 = vmatpush1.msra.mxu0 %v6706
          %6964 = vmatprep.subr.mxu0 0.0
          %6965 = vmatpush1.msra.mxu0 0.0
          %6966 = vmatprep.subr.mxu0 0.0
          %6967 = vmatpush1.msra.mxu0 0.0
          %6968 = vmatprep.subr.mxu0 0.0
          %6969 = vmatpush1.msra.mxu0 0.0
          %6970 = vmatprep.subr.mxu0 0.0
          %6971 = vmatpush1.msra.mxu0 0.0
          %6972 = vmatprep.subr.mxu0 0.0
          %6973 = vmatpush1.msra.mxu0 0.0
          %6974 = vmatprep.subr.mxu0 0.0
          %6975 = vmatpush1.msra.mxu0 0.0
          %6976 = vmatprep.subr.mxu0 0.0
          %6977 = vmatpush1.msra.mxu0 0.0
          %6978 = vmatprep.subr.mxu0 0.0
          %6979 = vmatpush1.msra.mxu0 0.0
          %6980 = vmatprep.subr.mxu0 0.0
          %6981 = vmatpush1.msra.mxu0 0.0
          %6982 = vmatprep.subr.mxu0 0.0
          %6983 = vmatpush1.msra.mxu0 0.0
          %6984 = vmatprep.subr.mxu0 0.0
          %6985 = vmatpush1.msra.mxu0 0.0
          %6986 = vmatprep.subr.mxu0 0.0
          %6987 = vmatpush1.msra.mxu0 0.0
          %6988 = vmatprep.subr.mxu0 0.0
          %6989 = vmatpush1.msra.mxu0 0.0
          %6990 = vmatprep.subr.mxu0 0.0
          %6991 = vmatpush1.msra.mxu0 0.0
          %6992 = vmatprep.subr.mxu0 0.0
          %6993 = vmatpush1.msra.mxu0 0.0
          %6994 = vmatprep.subr.mxu0 0.0
          %6995 = vmatpush1.msra.mxu0 0.0
          %6996 = vmatprep.mubr.f32.mxu0 0.0
          %6997 = vmatmul.mubr.f32.gmra.mrb[0].mxu0 %v5527
          %v6998 = vpop.f32.mrb[0].mxu0
          %v6999 = vadd.f32 %v6774, %v6998
          %v7000 = vpop.f32.mrb[0].mxu0
          %7001 = vmatprep.mubr.f32.mxu0 0.0
          %7002 = vmatmul.mubr.f32.gmra.mrb[0].mxu0 %v5529
          %v7003 = vpop.f32.mrb[0].mxu0
          %v7004 = vadd.f32 %v6779, %v7003
          %v7005 = vpop.f32.mrb[0].mxu0
          %7006 = vmatprep.mubr.f32.mxu0 0.0
          %7007 = vmatmul.mubr.f32.gmra.mrb[0].mxu0 %v5532
          %v7008 = vpop.f32.mrb[0].mxu0
          %v7009 = vadd.f32 %v6784, %v7008
          %v7010 = vpop.f32.mrb[0].mxu0
          %7011 = vmatprep.mubr.f32.mxu0 0.0
          %7012 = vmatmul.mubr.f32.gmra.mrb[0].mxu0 %v5534
          %v7013 = vpop.f32.mrb[0].mxu0
          %v7014 = vadd.f32 %v6789, %v7013
          %v7015 = vpop.f32.mrb[0].mxu0
          %7016 = vmatprep.mubr.f32.mxu0 0.0
          %7017 = vmatmul.mubr.f32.gmra.mrb[0].mxu0 %v5537
          %v7018 = vpop.f32.mrb[0].mxu0
          %v7019 = vadd.f32 %v6794, %v7018
          %v7020 = vpop.f32.mrb[0].mxu0
          %7021 = vmatprep.mubr.f32.mxu0 0.0
          %7022 = vmatmul.mubr.f32.gmra.mrb[0].mxu0 %v5539
          %v7023 = vpop.f32.mrb[0].mxu0
          %v7024 = vadd.f32 %v6799, %v7023
          %v7025 = vpop.f32.mrb[0].mxu0
          %7026 = vmatprep.mubr.f32.mxu0 0.0
          %7027 = vmatmul.mubr.f32.gmra.mrb[0].mxu0 %v5542
          %v7028 = vpop.f32.mrb[0].mxu0
          %v7029 = vadd.f32 %v6804, %v7028
          %v7030 = vpop.f32.mrb[0].mxu0
          %7031 = vmatprep.mubr.f32.mxu0 0.0
          %7032 = vmatmul.mubr.f32.gmra.mrb[0].mxu0 %v5544
          %v7033 = vpop.f32.mrb[0].mxu0
          %v7034 = vadd.f32 %v6809, %v7033
          %v7035 = vpop.f32.mrb[0].mxu0
          %7036 = vmatprep.mubr.f32.mxu0 0.0
          %7037 = vmatmul.mubr.f32.gmra.mrb[0].mxu0 %v5547
          %v7038 = vpop.f32.mrb[0].mxu0
          %v7039 = vadd.f32 %v6814, %v7038
          %v7040 = vpop.f32.mrb[0].mxu0
          %7041 = vmatprep.mubr.f32.mxu0 0.0
          %7042 = vmatmul.mubr.f32.gmra.mrb[0].mxu0 %v5549
          %v7043 = vpop.f32.mrb[0].mxu0
          %v7044 = vadd.f32 %v6819, %v7043
          %v7045 = vpop.f32.mrb[0].mxu0
          %7046 = vmatprep.mubr.f32.mxu0 0.0
          %7047 = vmatmul.mubr.f32.gmra.mrb[0].mxu0 %v5552
          %v7048 = vpop.f32.mrb[0].mxu0
          %v7049 = vadd.f32 %v6824, %v7048
          %v7050 = vpop.f32.mrb[0].mxu0
          %7051 = vmatprep.mubr.f32.mxu0 0.0
          %7052 = vmatmul.mubr.f32.gmra.mrb[0].mxu0 %v5554
          %v7053 = vpop.f32.mrb[0].mxu0
          %v7054 = vadd.f32 %v6829, %v7053
          %v7055 = vpop.f32.mrb[0].mxu0
          %7056 = vmatprep.mubr.f32.mxu0 0.0
          %7057 = vmatmul.mubr.f32.gmra.mrb[0].mxu0 %v5557
          %v7058 = vpop.f32.mrb[0].mxu0
          %v7059 = vadd.f32 %v6834, %v7058
          %v7060 = vpop.f32.mrb[0].mxu0
          %7061 = vmatprep.mubr.f32.mxu0 0.0
          %7062 = vmatmul.mubr.f32.gmra.mrb[0].mxu0 %v5559
          %v7063 = vpop.f32.mrb[0].mxu0
          %v7064 = vadd.f32 %v6839, %v7063
          %v7065 = vpop.f32.mrb[0].mxu0
          %7066 = vmatprep.mubr.f32.mxu0 0.0
          %7067 = vmatmul.mubr.f32.gmra.mrb[0].mxu0 %v5562
          %v7068 = vpop.f32.mrb[0].mxu0
          %v7069 = vadd.f32 %v6844, %v7068
          %v7070 = vpop.f32.mrb[0].mxu0
          %7071 = vmatprep.mubr.f32.mxu0 0.0
          %7072 = vmatmul.mubr.f32.gmra.mrb[0].mxu0 %v5564
          %v7073 = vpop.f32.mrb[0].mxu0
          %v7074 = vadd.f32 %v6849, %v7073
          %v7075 = vpop.f32.mrb[0].mxu0
          %7076 = vmatprep.mubr.f32.mxu0 0.0
          %7077 = vmatmul.mubr.f32.gmra.mrb[0].mxu0 %v5567
          %v7078 = vpop.f32.mrb[0].mxu0
          %v7079 = vadd.f32 %v6854, %v7078
          %v7080 = vpop.f32.mrb[0].mxu0
          %7081 = vmatprep.mubr.f32.mxu0 0.0
          %7082 = vmatmul.mubr.f32.gmra.mrb[0].mxu0 %v5569
          %v7083 = vpop.f32.mrb[0].mxu0
          %v7084 = vadd.f32 %v6859, %v7083
          %v7085 = vpop.f32.mrb[0].mxu0
          %7086 = vmatprep.mubr.f32.mxu0 0.0
          %7087 = vmatmul.mubr.f32.gmra.mrb[0].mxu0 %v5572
          %v7088 = vpop.f32.mrb[0].mxu0
          %v7089 = vadd.f32 %v6864, %v7088
          %v7090 = vpop.f32.mrb[0].mxu0
          %7091 = vmatprep.mubr.f32.mxu0 0.0
          %7092 = vmatmul.mubr.f32.gmra.mrb[0].mxu0 %v5574
          %v7093 = vpop.f32.mrb[0].mxu0
          %v7094 = vadd.f32 %v6869, %v7093
          %v7095 = vpop.f32.mrb[0].mxu0
          %7096 = vmatprep.mubr.f32.mxu0 0.0
          %7097 = vmatmul.mubr.f32.gmra.mrb[0].mxu0 %v5577
          %v7098 = vpop.f32.mrb[0].mxu0
          %v7099 = vadd.f32 %v6874, %v7098
          %v7100 = vpop.f32.mrb[0].mxu0
          %7101 = vmatprep.mubr.f32.mxu0 0.0
          %7102 = vmatmul.mubr.f32.gmra.mrb[0].mxu0 %v5579
          %v7103 = vpop.f32.mrb[0].mxu0
          %v7104 = vadd.f32 %v6879, %v7103
          %v7105 = vpop.f32.mrb[0].mxu0
          %7106 = vmatprep.mubr.f32.mxu0 0.0
          %7107 = vmatmul.mubr.f32.gmra.mrb[0].mxu0 %v5582
          %v7108 = vpop.f32.mrb[0].mxu0
          %v7109 = vadd.f32 %v6884, %v7108
          %v7110 = vpop.f32.mrb[0].mxu0
          %7111 = vmatprep.mubr.f32.mxu0 0.0
          %7112 = vmatmul.mubr.f32.gmra.mrb[0].mxu0 %v5584
          %v7113 = vpop.f32.mrb[0].mxu0
          %v7114 = vadd.f32 %v6889, %v7113
          %v7115 = vpop.f32.mrb[0].mxu0
          %7116 = vmatprep.mubr.f32.mxu0 0.0
          %7117 = vmatmul.mubr.f32.gmra.mrb[0].mxu0 %v5587
          %v7118 = vpop.f32.mrb[0].mxu0
          %v7119 = vadd.f32 %v6894, %v7118
          %v7120 = vpop.f32.mrb[0].mxu0
          %7121 = vmatprep.mubr.f32.mxu0 0.0
          %7122 = vmatmul.mubr.f32.gmra.mrb[0].mxu0 %v5589
          %v7123 = vpop.f32.mrb[0].mxu0
          %v7124 = vadd.f32 %v6899, %v7123
          %v7125 = vpop.f32.mrb[0].mxu0
          %7126 = vmatprep.mubr.f32.mxu0 0.0
          %7127 = vmatmul.mubr.f32.gmra.mrb[0].mxu0 %v5592
          %v7128 = vpop.f32.mrb[0].mxu0
          %v7129 = vadd.f32 %v6904, %v7128
          %v7130 = vpop.f32.mrb[0].mxu0
          %7131 = vmatprep.mubr.f32.mxu0 0.0
          %7132 = vmatmul.mubr.f32.gmra.mrb[0].mxu0 %v5594
          %v7133 = vpop.f32.mrb[0].mxu0
          %v7134 = vadd.f32 %v6909, %v7133
          %v7135 = vpop.f32.mrb[0].mxu0
          %7136 = vmatprep.mubr.f32.mxu0 0.0
          %7137 = vmatmul.mubr.f32.gmra.mrb[0].mxu0 %v5687
          %v7138 = vpop.f32.mrb[0].mxu0
          %v7139 = vadd.f32 %v6914, %v7138
          %v7140 = vpop.f32.mrb[0].mxu0
          %7141 = vmatprep.mubr.f32.mxu0 0.0
          %7142 = vmatmul.mubr.f32.gmra.mrb[0].mxu0 %v5689
          %v7143 = vpop.f32.mrb[0].mxu0
          %v7144 = vadd.f32 %v6919, %v7143
          %v7145 = vpop.f32.mrb[0].mxu0
          %7146 = vmatprep.mubr.f32.mxu0 0.0
          %7147 = vmatmul.mubr.f32.gmra.mrb[0].mxu0 %v6653
          %v7148 = vpop.f32.mrb[0].mxu0
          %v7149 = vadd.f32 %v6924, %v7148
          %v7150 = vpop.f32.mrb[0].mxu0
          %7151 = vmatprep.mubr.f32.mxu0 0.0
          %7152 = vmatmul.mubr.f32.gmra.mrb[0].mxu0 %v6655
          %v7153 = vpop.f32.mrb[0].mxu0
          %v7154 = vadd.f32 %v6929, %v7153
          %v7155 = vpop.f32.mrb[0].mxu0
          %7156 = vdwg.mxu0
          %v7157 = vadd.f32 %v6483, %v6999
          %v7158 = vadd.f32 %v6488, %v7004
          %v7159 = vadd.f32 %v6493, %v7009
          %v7160 = vadd.f32 %v6498, %v7014
          %v7161 = vadd.f32 %v6503, %v7019
          %v7162 = vadd.f32 %v6508, %v7024
          %v7163 = vadd.f32 %v6513, %v7029
          %v7164 = vadd.f32 %v6518, %v7034
          %v7165 = vadd.f32 %v6523, %v7039
          %v7166 = vadd.f32 %v6528, %v7044
          %v7167 = vadd.f32 %v6533, %v7049
          %v7168 = vadd.f32 %v6538, %v7054
          %v7169 = vadd.f32 %v6543, %v7059
          %v7170 = vadd.f32 %v6548, %v7064
          %v7171 = vadd.f32 %v6553, %v7069
          %v7172 = vadd.f32 %v6558, %v7074
          %v7173 = vadd.f32 %v6563, %v7079
          %v7174 = vadd.f32 %v6568, %v7084
          %v7175 = vadd.f32 %v6573, %v7089
          %v7176 = vadd.f32 %v6578, %v7094
          %v7177 = vadd.f32 %v6583, %v7099
          %v7178 = vadd.f32 %v6588, %v7104
          %v7179 = vadd.f32 %v6593, %v7109
          %v7180 = vadd.f32 %v6598, %v7114
          %v7181 = vadd.f32 %v6603, %v7119
          %v7182 = vadd.f32 %v6608, %v7124
          %v7183 = vadd.f32 %v6613, %v7129
          %v7184 = vadd.f32 %v6618, %v7134
          %v7185 = vadd.f32 %v6623, %v7139
          %v7186 = vadd.f32 %v6628, %v7144
          %v7187 = vadd.f32 %v6633, %v7149
          %v7188 = vadd.f32 %v6638, %v7154
          %v7189 = vld [vmem:[#allocation4] sm:$0xff]
          %v7190 = vld [vmem:[#allocation4 + $0x8] sm:$0xff]
          %v7191 = vld [vmem:[#allocation4 + $0x10] sm:$0xff]
          %v7192 = vld [vmem:[#allocation4 + $0x18] sm:$0xff]
          %v7193 = vld [vmem:[#allocation4 + $0x20] sm:$0xff]
          %v7194 = vld [vmem:[#allocation4 + $0x28] sm:$0xff]
          %v7195 = vld [vmem:[#allocation4 + $0x30] sm:$0xff]
          %v7196 = vld [vmem:[#allocation4 + $0x38] sm:$0xff]
          %v7197 = vld [vmem:[#allocation4 + $0x40] sm:$0xff]
          %v7198 = vld [vmem:[#allocation4 + $0x48] sm:$0xff]
          %v7199 = vld [vmem:[#allocation4 + $0x50] sm:$0xff]
          %v7200 = vld [vmem:[#allocation4 + $0x58] sm:$0xff]
          %v7201 = vld [vmem:[#allocation4 + $0x60] sm:$0xff]
          %v7202 = vld [vmem:[#allocation4 + $0x68] sm:$0xff]
          %v7203 = vld [vmem:[#allocation4 + $0x70] sm:$0xff]
          %v7204 = vld [vmem:[#allocation4 + $0x78] sm:$0xff]
          %v7205 = vld [vmem:[#allocation4 + $0x80] sm:$0xff]
          %v7206 = vld [vmem:[#allocation4 + $0x88] sm:$0xff]
          %v7207 = vld [vmem:[#allocation4 + $0x90] sm:$0xff]
          %v7208 = vld [vmem:[#allocation4 + $0x98] sm:$0xff]
          %v7209 = vld [vmem:[#allocation4 + $0xa0] sm:$0xff]
          %v7210 = vld [vmem:[#allocation4 + $0xa8] sm:$0xff]
          %v7211 = vld [vmem:[#allocation4 + $0xb0] sm:$0xff]
          %v7212 = vld [vmem:[#allocation4 + $0xb8] sm:$0xff]
          %v7213 = vld [vmem:[#allocation4 + $0xc0] sm:$0xff]
          %v7214 = vld [vmem:[#allocation4 + $0xc8] sm:$0xff]
          %v7215 = vld [vmem:[#allocation4 + $0xd0] sm:$0xff]
          %v7216 = vld [vmem:[#allocation4 + $0xd8] sm:$0xff]
          %v7217 = vld [vmem:[#allocation4 + $0xe0] sm:$0xff]
          %v7218 = vld [vmem:[#allocation4 + $0xe8] sm:$0xff]
          %v7219 = vld [vmem:[#allocation4 + $0xf0] sm:$0xff]
          %v7220 = vld [vmem:[#allocation4 + $0xf8] sm:$0xff]
          %v7221 = vadd.f32 %v7157, %v7189
          %v7222 = vadd.f32 %v7158, %v7190
          %v7223 = vadd.f32 %v7159, %v7191
          %v7224 = vadd.f32 %v7160, %v7192
          %v7225 = vadd.f32 %v7161, %v7193
          %v7226 = vadd.f32 %v7162, %v7194
          %v7227 = vadd.f32 %v7163, %v7195
          %v7228 = vadd.f32 %v7164, %v7196
          %v7229 = vadd.f32 %v7165, %v7197
          %v7230 = vadd.f32 %v7166, %v7198
          %v7231 = vadd.f32 %v7167, %v7199
          %v7232 = vadd.f32 %v7168, %v7200
          %v7233 = vadd.f32 %v7169, %v7201
          %v7234 = vadd.f32 %v7170, %v7202
          %v7235 = vadd.f32 %v7171, %v7203
          %v7236 = vadd.f32 %v7172, %v7204
          %v7237 = vadd.f32 %v7173, %v7205
          %v7238 = vadd.f32 %v7174, %v7206
          %v7239 = vadd.f32 %v7175, %v7207
          %v7240 = vadd.f32 %v7176, %v7208
          %v7241 = vadd.f32 %v7177, %v7209
          %v7242 = vadd.f32 %v7178, %v7210
          %v7243 = vadd.f32 %v7179, %v7211
          %v7244 = vadd.f32 %v7180, %v7212
          %v7245 = vadd.f32 %v7181, %v7213
          %v7246 = vadd.f32 %v7182, %v7214
          %v7247 = vadd.f32 %v7183, %v7215
          %v7248 = vadd.f32 %v7184, %v7216
          %v7249 = vadd.f32 %v7185, %v7217
          %v7250 = vadd.f32 %v7186, %v7218
          %v7251 = vadd.f32 %v7187, %v7219
          %v7252 = vadd.f32 %v7188, %v7220
          %v7253 = vmax.f32 %v7221, 0.0
          %v7254 = vmax.f32 %v7222, 0.0
          %v7255 = vmax.f32 %v7223, 0.0
          %v7256 = vmax.f32 %v7224, 0.0
          %v7257 = vmax.f32 %v7225, 0.0
          %v7258 = vmax.f32 %v7226, 0.0
          %v7259 = vmax.f32 %v7227, 0.0
          %v7260 = vmax.f32 %v7228, 0.0
          %v7261 = vmax.f32 %v7229, 0.0
          %v7262 = vmax.f32 %v7230, 0.0
          %v7263 = vmax.f32 %v7231, 0.0
          %v7264 = vmax.f32 %v7232, 0.0
          %v7265 = vmax.f32 %v7233, 0.0
          %v7266 = vmax.f32 %v7234, 0.0
          %v7267 = vmax.f32 %v7235, 0.0
          %v7268 = vmax.f32 %v7236, 0.0
          %v7269 = vmax.f32 %v7237, 0.0
          %v7270 = vmax.f32 %v7238, 0.0
          %v7271 = vmax.f32 %v7239, 0.0
          %v7272 = vmax.f32 %v7240, 0.0
          %v7273 = vmax.f32 %v7241, 0.0
          %v7274 = vmax.f32 %v7242, 0.0
          %v7275 = vmax.f32 %v7243, 0.0
          %v7276 = vmax.f32 %v7244, 0.0
          %v7277 = vmax.f32 %v7245, 0.0
          %v7278 = vmax.f32 %v7246, 0.0
          %v7279 = vmax.f32 %v7247, 0.0
          %v7280 = vmax.f32 %v7248, 0.0
          %v7281 = vmax.f32 %v7249, 0.0
          %v7282 = vmax.f32 %v7250, 0.0
          %v7283 = vmax.f32 %v7251, 0.0
          %v7284 = vmax.f32 %v7252, 0.0
          %7285 = vst [vmem:[%s3310 + $0x1] sm:$0xff] %v7253
          %7286 = vst [vmem:[%s3310 + $0x9] sm:$0xff] %v7254
          %7287 = vst [vmem:[%s3310 + $0x19] sm:$0xff] %v7255
          %7288 = vst [vmem:[%s3310 + $0x21] sm:$0xff] %v7256
          %7289 = vst [vmem:[%s3310 + $0x31] sm:$0xff] %v7257
          %7290 = vst [vmem:[%s3310 + $0x39] sm:$0xff] %v7258
          %7291 = vst [vmem:[%s3310 + $0x49] sm:$0xff] %v7259
          %7292 = vst [vmem:[%s3310 + $0x51] sm:$0xff] %v7260
          %7293 = vst [vmem:[%s3310 + $0x61] sm:$0xff] %v7261
          %7294 = vst [vmem:[%s3310 + $0x69] sm:$0xff] %v7262
          %7295 = vst [vmem:[%s3310 + $0x79] sm:$0xff] %v7263
          %7296 = vst [vmem:[%s3310 + $0x81] sm:$0xff] %v7264
          %7297 = vst [vmem:[%s3310 + $0x91] sm:$0xff] %v7265
          %7298 = vst [vmem:[%s3310 + $0x99] sm:$0xff] %v7266
          %7299 = vst [vmem:[%s3310 + $0xa9] sm:$0xff] %v7267
          %7300 = vst [vmem:[%s3310 + $0xb1] sm:$0xff] %v7268
          %7301 = vst [vmem:[%s3310 + $0xc1] sm:$0xff] %v7269
          %7302 = vst [vmem:[%s3310 + $0xc9] sm:$0xff] %v7270
          %7303 = vst [vmem:[%s3310 + $0xd9] sm:$0xff] %v7271
          %7304 = vst [vmem:[%s3310 + $0xe1] sm:$0xff] %v7272
          %7305 = vst [vmem:[%s3310 + $0xf1] sm:$0xff] %v7273
          %7306 = vst [vmem:[%s3310 + $0xf9] sm:$0xff] %v7274
          %7307 = vst [vmem:[%s3310 + $0x109] sm:$0xff] %v7275
          %7308 = vst [vmem:[%s3310 + $0x111] sm:$0xff] %v7276
          %7309 = vst [vmem:[%s3310 + $0x121] sm:$0xff] %v7277
          %7310 = vst [vmem:[%s3310 + $0x129] sm:$0xff] %v7278
          %7311 = vst [vmem:[%s3310 + $0x139] sm:$0xff] %v7279
          %7312 = vst [vmem:[%s3310 + $0x141] sm:$0xff] %v7280
          %7313 = vst [vmem:[%s3310 + $0x151] sm:$0xff] %v7281
          %7314 = vst [vmem:[%s3310 + $0x159] sm:$0xff] %v7282
          %7315 = vst [vmem:[%s3310 + $0x169] sm:$0xff] %v7283
          %7316 = vst [vmem:[%s3310 + $0x171] sm:$0xff] %v7284
        $region49: #{drrn_forward.1} parent=39 // loop_footer
          %s3348 = sadd.s32 1, %s3344
        $region50: #{drrn_forward.1} parent=39 // loop_footer_branch
          %3343 = sbr.rel target = $region46
        $region51: #{drrn_forward.1} parent=39 // loop_exit
          _
        %v7317 = vld [vmem:[#allocation3] sm:$0xff]
        %v7318 = vld [vmem:[#allocation3 + $0x8] sm:$0xff]
        %v7319 = vld [vmem:[#allocation3 + $0x10] sm:$0x3]
        %v7320 = vld [vmem:[#allocation3 + $0x18] sm:$0xff]
        %v7321 = vld [vmem:[#allocation3 + $0x20] sm:$0xff]
        %v7322 = vld [vmem:[#allocation3 + $0x28] sm:$0x3]
        %v7323 = vld [vmem:[#allocation3 + $0x30] sm:$0xff]
        %v7324 = vld [vmem:[#allocation3 + $0x38] sm:$0xff]
        %v7325 = vld [vmem:[#allocation3 + $0x40] sm:$0x3]
        %v7326 = vld [vmem:[#allocation3 + $0x48] sm:$0xff]
        %v7327 = vld [vmem:[#allocation3 + $0x50] sm:$0xff]
        %v7328 = vld [vmem:[#allocation3 + $0x58] sm:$0x3]
        %v7329 = vld [vmem:[#allocation3 + $0x60] sm:$0xff]
        %v7330 = vld [vmem:[#allocation3 + $0x68] sm:$0xff]
        %v7331 = vld [vmem:[#allocation3 + $0x70] sm:$0x3]
        %v7332 = vld [vmem:[#allocation3 + $0x78] sm:$0xff]
        %v7333 = vld [vmem:[#allocation3 + $0x80] sm:$0xff]
        %v7334 = vld [vmem:[#allocation3 + $0x88] sm:$0x3]
        %v7335 = vld [vmem:[#allocation3 + $0x90] sm:$0xff]
        %v7336 = vld [vmem:[#allocation3 + $0x98] sm:$0xff]
        %v7337 = vld [vmem:[#allocation3 + $0xa0] sm:$0x3]
        %v7338 = vld [vmem:[#allocation3 + $0xa8] sm:$0xff]
        %v7339 = vld [vmem:[#allocation3 + $0xb0] sm:$0xff]
        %v7340 = vld [vmem:[#allocation3 + $0xb8] sm:$0x3]
        %v7341 = vld [vmem:[#allocation3 + $0xc0] sm:$0xff]
        %v7342 = vld [vmem:[#allocation3 + $0xc8] sm:$0xff]
        %v7343 = vld [vmem:[#allocation3 + $0xd0] sm:$0x3]
        %v7344 = vld [vmem:[#allocation3 + $0xd8] sm:$0xff]
        %v7345 = vld [vmem:[#allocation3 + $0xe0] sm:$0xff]
        %v7346 = vld [vmem:[#allocation3 + $0xe8] sm:$0x3]
        %v7347 = vld [vmem:[#allocation3 + $0xf0] sm:$0xff]
        %v7348 = vld [vmem:[#allocation3 + $0xf8] sm:$0xff]
        %v7349 = vld [vmem:[#allocation3 + $0x100] sm:$0x3]
        %v7350 = vld [vmem:[#allocation3 + $0x108] sm:$0xff]
        %v7351 = vld [vmem:[#allocation3 + $0x110] sm:$0xff]
        %v7352 = vld [vmem:[#allocation3 + $0x118] sm:$0x3]
        %v7353 = vld [vmem:[#allocation3 + $0x120] sm:$0xff]
        %v7354 = vld [vmem:[#allocation3 + $0x128] sm:$0xff]
        %v7355 = vld [vmem:[#allocation3 + $0x130] sm:$0x3]
        %v7356 = vld [vmem:[#allocation3 + $0x138] sm:$0xff]
        %v7357 = vld [vmem:[#allocation3 + $0x140] sm:$0xff]
        %v7358 = vld [vmem:[#allocation3 + $0x148] sm:$0x3]
        %v7359 = vld [vmem:[#allocation3 + $0x150] sm:$0xff]
        %v7360 = vld [vmem:[#allocation3 + $0x158] sm:$0xff]
        %v7361 = vld [vmem:[#allocation3 + $0x160] sm:$0x3]
        %v7362 = vld [vmem:[#allocation3 + $0x168] sm:$0xff]
        %v7363 = vld [vmem:[#allocation3 + $0x170] sm:$0xff]
        %v7364 = vld [vmem:[#allocation3 + $0x178] sm:$0x3]
        %v7365 = vld [vmem:[#allocation3 + $0x180] sm:$0xff]
        %v7366 = vld [vmem:[#allocation3 + $0x188] sm:$0xff]
        %v7367 = vld [vmem:[#allocation3 + $0x190] sm:$0x3]
        %v7368 = vld [vmem:[#allocation3 + $0x198] sm:$0xff]
        %v7369 = vld [vmem:[#allocation3 + $0x1a0] sm:$0xff]
        %v7370 = vld [vmem:[#allocation3 + $0x1a8] sm:$0x3]
        %v7419 = vrot.slane %v7317, 1
        %v7420 = vrot.slane %v7318, 1
        %v7421 = vsel %vm555, %v7419, %v7420
        %v7422 = vrot.slane %v7319, 1
        %v7423 = vsel %vm555, %v7420, %v7422
        %v7424 = vrot.slane %v7320, 1
        %v7425 = vrot.slane %v7321, 1
        %v7426 = vsel %vm555, %v7424, %v7425
        %v7427 = vrot.slane %v7322, 1
        %v7428 = vsel %vm555, %v7425, %v7427
        %v7429 = vrot.slane %v7323, 1
        %v7430 = vrot.slane %v7324, 1
        %v7431 = vsel %vm555, %v7429, %v7430
        %v7432 = vrot.slane %v7325, 1
        %v7433 = vsel %vm555, %v7430, %v7432
        %v7434 = vrot.slane %v7326, 1
        %v7435 = vrot.slane %v7327, 1
        %v7436 = vsel %vm555, %v7434, %v7435
        %v7437 = vrot.slane %v7328, 1
        %v7438 = vsel %vm555, %v7435, %v7437
        %v7439 = vrot.slane %v7329, 1
        %v7440 = vrot.slane %v7330, 1
        %v7441 = vsel %vm555, %v7439, %v7440
        %v7442 = vrot.slane %v7331, 1
        %v7443 = vsel %vm555, %v7440, %v7442
        %v7444 = vrot.slane %v7332, 1
        %v7445 = vrot.slane %v7333, 1
        %v7446 = vsel %vm555, %v7444, %v7445
        %v7447 = vrot.slane %v7334, 1
        %v7448 = vsel %vm555, %v7445, %v7447
        %v7449 = vrot.slane %v7335, 1
        %v7450 = vrot.slane %v7336, 1
        %v7451 = vsel %vm555, %v7449, %v7450
        %v7452 = vrot.slane %v7337, 1
        %v7453 = vsel %vm555, %v7450, %v7452
        %v7454 = vrot.slane %v7338, 1
        %v7455 = vrot.slane %v7339, 1
        %v7456 = vsel %vm555, %v7454, %v7455
        %v7457 = vrot.slane %v7340, 1
        %v7458 = vsel %vm555, %v7455, %v7457
        %v7459 = vrot.slane %v7341, 1
        %v7460 = vrot.slane %v7342, 1
        %v7461 = vsel %vm555, %v7459, %v7460
        %v7462 = vrot.slane %v7343, 1
        %v7463 = vsel %vm555, %v7460, %v7462
        %v7464 = vrot.slane %v7344, 1
        %v7465 = vrot.slane %v7345, 1
        %v7466 = vsel %vm555, %v7464, %v7465
        %v7467 = vrot.slane %v7346, 1
        %v7468 = vsel %vm555, %v7465, %v7467
        %v7469 = vrot.slane %v7347, 1
        %v7470 = vrot.slane %v7348, 1
        %v7471 = vsel %vm555, %v7469, %v7470
        %v7472 = vrot.slane %v7349, 1
        %v7473 = vsel %vm555, %v7470, %v7472
        %v7474 = vrot.slane %v7350, 1
        %v7475 = vrot.slane %v7351, 1
        %v7476 = vsel %vm555, %v7474, %v7475
        %v7477 = vrot.slane %v7352, 1
        %v7478 = vsel %vm555, %v7475, %v7477
        %v7479 = vrot.slane %v7353, 1
        %v7480 = vrot.slane %v7354, 1
        %v7481 = vsel %vm555, %v7479, %v7480
        %v7482 = vrot.slane %v7355, 1
        %v7483 = vsel %vm555, %v7480, %v7482
        %v7484 = vrot.slane %v7356, 1
        %v7485 = vrot.slane %v7357, 1
        %v7486 = vsel %vm555, %v7484, %v7485
        %v7487 = vrot.slane %v7358, 1
        %v7488 = vsel %vm555, %v7485, %v7487
        %v7489 = vrot.slane %v7359, 1
        %v7490 = vrot.slane %v7360, 1
        %v7491 = vsel %vm555, %v7489, %v7490
        %v7492 = vrot.slane %v7361, 1
        %v7493 = vsel %vm555, %v7490, %v7492
        %v7494 = vrot.slane %v7362, 1
        %v7495 = vrot.slane %v7363, 1
        %v7496 = vsel %vm555, %v7494, %v7495
        %v7497 = vrot.slane %v7364, 1
        %v7498 = vsel %vm555, %v7495, %v7497
        %v7531 = vrot.slane %v7317, 2
        %v7532 = vrot.slane %v7318, 2
        %v7533 = vsel %vm1221, %v7531, %v7532
        %v7534 = vrot.slane %v7319, 2
        %v7535 = vsel %vm1221, %v7532, %v7534
        %v7536 = vrot.slane %v7320, 2
        %v7537 = vrot.slane %v7321, 2
        %v7538 = vsel %vm1221, %v7536, %v7537
        %v7539 = vrot.slane %v7322, 2
        %v7540 = vsel %vm1221, %v7537, %v7539
        %v7541 = vrot.slane %v7323, 2
        %v7542 = vrot.slane %v7324, 2
        %v7543 = vsel %vm1221, %v7541, %v7542
        %v7544 = vrot.slane %v7325, 2
        %v7545 = vsel %vm1221, %v7542, %v7544
        %v7546 = vrot.slane %v7326, 2
        %v7547 = vrot.slane %v7327, 2
        %v7548 = vsel %vm1221, %v7546, %v7547
        %v7549 = vrot.slane %v7328, 2
        %v7550 = vsel %vm1221, %v7547, %v7549
        %v7551 = vrot.slane %v7329, 2
        %v7552 = vrot.slane %v7330, 2
        %v7553 = vsel %vm1221, %v7551, %v7552
        %v7554 = vrot.slane %v7331, 2
        %v7555 = vsel %vm1221, %v7552, %v7554
        %v7556 = vrot.slane %v7332, 2
        %v7557 = vrot.slane %v7333, 2
        %v7558 = vsel %vm1221, %v7556, %v7557
        %v7559 = vrot.slane %v7334, 2
        %v7560 = vsel %vm1221, %v7557, %v7559
        %v7561 = vrot.slane %v7335, 2
        %v7562 = vrot.slane %v7336, 2
        %v7563 = vsel %vm1221, %v7561, %v7562
        %v7564 = vrot.slane %v7337, 2
        %v7565 = vsel %vm1221, %v7562, %v7564
        %v7566 = vrot.slane %v7338, 2
        %v7567 = vrot.slane %v7339, 2
        %v7568 = vsel %vm1221, %v7566, %v7567
        %v7569 = vrot.slane %v7340, 2
        %v7570 = vsel %vm1221, %v7567, %v7569
        %v7571 = vrot.slane %v7341, 2
        %v7572 = vrot.slane %v7342, 2
        %v7573 = vsel %vm1221, %v7571, %v7572
        %v7574 = vrot.slane %v7343, 2
        %v7575 = vsel %vm1221, %v7572, %v7574
        %v7576 = vrot.slane %v7344, 2
        %v7577 = vrot.slane %v7345, 2
        %v7578 = vsel %vm1221, %v7576, %v7577
        %v7579 = vrot.slane %v7346, 2
        %v7580 = vsel %vm1221, %v7577, %v7579
        %v7581 = vrot.slane %v7347, 2
        %v7582 = vrot.slane %v7348, 2
        %v7583 = vsel %vm1221, %v7581, %v7582
        %v7584 = vrot.slane %v7349, 2
        %v7585 = vsel %vm1221, %v7582, %v7584
        %v7586 = vrot.slane %v7350, 2
        %v7587 = vrot.slane %v7351, 2
        %v7588 = vsel %vm1221, %v7586, %v7587
        %v7589 = vrot.slane %v7352, 2
        %v7590 = vsel %vm1221, %v7587, %v7589
        %v7591 = vrot.slane %v7353, 2
        %v7592 = vrot.slane %v7354, 2
        %v7593 = vsel %vm1221, %v7591, %v7592
        %v7594 = vrot.slane %v7355, 2
        %v7595 = vsel %vm1221, %v7592, %v7594
        %v7596 = vrot.slane %v7356, 2
        %v7597 = vrot.slane %v7357, 2
        %v7598 = vsel %vm1221, %v7596, %v7597
        %v7599 = vrot.slane %v7358, 2
        %v7600 = vsel %vm1221, %v7597, %v7599
        %v7601 = vrot.slane %v7359, 2
        %v7602 = vrot.slane %v7360, 2
        %v7603 = vsel %vm1221, %v7601, %v7602
        %v7604 = vrot.slane %v7361, 2
        %v7605 = vsel %vm1221, %v7602, %v7604
        %v7606 = vrot.slane %v7362, 2
        %v7607 = vrot.slane %v7363, 2
        %v7608 = vsel %vm1221, %v7606, %v7607
        %v7609 = vrot.slane %v7364, 2
        %v7610 = vsel %vm1221, %v7607, %v7609
        %v7643 = vld [vmem:[%s4] sm:$0xff]
        %v7644 = vld [vmem:[%s4 + $0x8] sm:$0xff]
        %v7645 = vld [vmem:[%s4 + $0x10] sm:$0xff]
        %v7646 = vld [vmem:[%s4 + $0x18] sm:$0xff]
        %v7647 = vld [vmem:[%s4 + $0x20] sm:$0xff]
        %v7648 = vld [vmem:[%s4 + $0x28] sm:$0xff]
        %v7649 = vld [vmem:[%s4 + $0x30] sm:$0xff]
        %v7650 = vld [vmem:[%s4 + $0x38] sm:$0xff]
        %v7651 = vld [vmem:[%s4 + $0x40] sm:$0xff]
        %v7652 = vld [vmem:[%s4 + $0x48] sm:$0xff]
        %v7653 = vld [vmem:[%s4 + $0x50] sm:$0xff]
        %v7654 = vld [vmem:[%s4 + $0x58] sm:$0xff]
        %v7655 = vld [vmem:[%s4 + $0x60] sm:$0xff]
        %v7656 = vld [vmem:[%s4 + $0x68] sm:$0xff]
        %v7657 = vld [vmem:[%s4 + $0x70] sm:$0xff]
        %v7658 = vld [vmem:[%s4 + $0x78] sm:$0xff]
        %v7659 = vld [vmem:[%s4 + $0x80] sm:$0xff]
        %v7660 = vld [vmem:[%s4 + $0x88] sm:$0xff]
        %v7661 = vld [vmem:[%s4 + $0x90] sm:$0xff]
        %v7662 = vld [vmem:[%s4 + $0x98] sm:$0xff]
        %v7663 = vld [vmem:[%s4 + $0xa0] sm:$0xff]
        %v7664 = vld [vmem:[%s4 + $0xa8] sm:$0xff]
        %v7665 = vld [vmem:[%s4 + $0xb0] sm:$0xff]
        %v7666 = vld [vmem:[%s4 + $0xb8] sm:$0xff]
        %v7667 = vld [vmem:[%s4 + $0xc0] sm:$0xff]
        %v7668 = vld [vmem:[%s4 + $0xc8] sm:$0xff]
        %v7669 = vld [vmem:[%s4 + $0xd0] sm:$0xff]
        %v7670 = vld [vmem:[%s4 + $0xd8] sm:$0xff]
        %v7671 = vld [vmem:[%s4 + $0xe0] sm:$0xff]
        %v7672 = vld [vmem:[%s4 + $0xe8] sm:$0xff]
        %v7673 = vld [vmem:[%s4 + $0xf0] sm:$0xff]
        %v7674 = vld [vmem:[%s4 + $0xf8] sm:$0xff]
        %v7675 = vld [vmem:[%s4 + $0x100] sm:$0xff]
        %v7676 = vld [vmem:[%s4 + $0x108] sm:$0xff]
        %v7677 = vld [vmem:[%s4 + $0x110] sm:$0xff]
        %v7678 = vld [vmem:[%s4 + $0x118] sm:$0xff]
        %v7679 = vld [vmem:[%s4 + $0x120] sm:$0xff]
        %v7680 = vld [vmem:[%s4 + $0x128] sm:$0xff]
        %v7681 = vld [vmem:[%s4 + $0x130] sm:$0xff]
        %v7682 = vld [vmem:[%s4 + $0x138] sm:$0xff]
        %v7683 = vld [vmem:[%s4 + $0x140] sm:$0xff]
        %v7684 = vld [vmem:[%s4 + $0x148] sm:$0xff]
        %v7685 = vld [vmem:[%s4 + $0x150] sm:$0xff]
        %v7686 = vld [vmem:[%s4 + $0x158] sm:$0xff]
        %v7687 = vld [vmem:[%s4 + $0x160] sm:$0xff]
        %v7688 = vld [vmem:[%s4 + $0x168] sm:$0xff]
        %v7689 = vld [vmem:[%s4 + $0x170] sm:$0xff]
        %v7690 = vld [vmem:[%s4 + $0x178] sm:$0xff]
        %v7694 = vrot.slane %v7365, 1
        %v7695 = vrot.slane %v7366, 1
        %v7696 = vsel %vm555, %v7694, %v7695
        %v7697 = vrot.slane %v7367, 1
        %v7698 = vsel %vm555, %v7695, %v7697
        %v7701 = vrot.slane %v7365, 2
        %v7702 = vrot.slane %v7366, 2
        %v7703 = vsel %vm1221, %v7701, %v7702
        %v7704 = vrot.slane %v7367, 2
        %v7705 = vsel %vm1221, %v7702, %v7704
        %s7708 = scalar_lea.vmem %s4, 384
        %v7709 = vld [vmem:[%s7708] sm:$0xff]
        %v7710 = vld [vmem:[%s7708 + $0x8] sm:$0xff]
        %v7711 = vld [vmem:[%s7708 + $0x10] sm:$0xff]
        %v7712 = vld [vmem:[%s7708 + $0x18] sm:$0xff]
        %v7713 = vld [vmem:[%s7708 + $0x20] sm:$0xff]
        %v7714 = vld [vmem:[%s7708 + $0x28] sm:$0xff]
        %v7715 = vld [vmem:[%s7708 + $0x30] sm:$0xff]
        %v7716 = vld [vmem:[%s7708 + $0x38] sm:$0xff]
        %v7717 = vld [vmem:[%s7708 + $0x40] sm:$0xff]
        %v7718 = vld [vmem:[%s7708 + $0x48] sm:$0xff]
        %v7719 = vld [vmem:[%s7708 + $0x50] sm:$0xff]
        %v7720 = vld [vmem:[%s7708 + $0x58] sm:$0xff]
        %v7721 = vld [vmem:[%s7708 + $0x60] sm:$0xff]
        %v7722 = vld [vmem:[%s7708 + $0x68] sm:$0xff]
        %v7723 = vld [vmem:[%s7708 + $0x70] sm:$0xff]
        %v7724 = vld [vmem:[%s7708 + $0x78] sm:$0xff]
        %v7725 = vld [vmem:[%s7708 + $0x80] sm:$0xff]
        %v7726 = vld [vmem:[%s7708 + $0x88] sm:$0xff]
        %v7727 = vld [vmem:[%s7708 + $0x90] sm:$0xff]
        %v7728 = vld [vmem:[%s7708 + $0x98] sm:$0xff]
        %v7729 = vld [vmem:[%s7708 + $0xa0] sm:$0xff]
        %v7730 = vld [vmem:[%s7708 + $0xa8] sm:$0xff]
        %v7731 = vld [vmem:[%s7708 + $0xb0] sm:$0xff]
        %v7732 = vld [vmem:[%s7708 + $0xb8] sm:$0xff]
        %v7733 = vld [vmem:[%s7708 + $0xc0] sm:$0xff]
        %v7734 = vld [vmem:[%s7708 + $0xc8] sm:$0xff]
        %v7735 = vld [vmem:[%s7708 + $0xd0] sm:$0xff]
        %v7736 = vld [vmem:[%s7708 + $0xd8] sm:$0xff]
        %v7737 = vld [vmem:[%s7708 + $0xe0] sm:$0xff]
        %v7738 = vld [vmem:[%s7708 + $0xe8] sm:$0xff]
        %v7739 = vld [vmem:[%s7708 + $0xf0] sm:$0xff]
        %v7740 = vld [vmem:[%s7708 + $0xf8] sm:$0xff]
        %v7741 = vld [vmem:[%s7708 + $0x100] sm:$0xff]
        %v7742 = vld [vmem:[%s7708 + $0x108] sm:$0xff]
        %v7743 = vld [vmem:[%s7708 + $0x110] sm:$0xff]
        %v7744 = vld [vmem:[%s7708 + $0x118] sm:$0xff]
        %v7745 = vld [vmem:[%s7708 + $0x120] sm:$0xff]
        %v7746 = vld [vmem:[%s7708 + $0x128] sm:$0xff]
        %v7747 = vld [vmem:[%s7708 + $0x130] sm:$0xff]
        %v7748 = vld [vmem:[%s7708 + $0x138] sm:$0xff]
        %v7749 = vld [vmem:[%s7708 + $0x140] sm:$0xff]
        %v7750 = vld [vmem:[%s7708 + $0x148] sm:$0xff]
        %v7751 = vld [vmem:[%s7708 + $0x150] sm:$0xff]
        %v7752 = vld [vmem:[%s7708 + $0x158] sm:$0xff]
        %v7753 = vld [vmem:[%s7708 + $0x160] sm:$0xff]
        %v7754 = vld [vmem:[%s7708 + $0x168] sm:$0xff]
        %v7755 = vld [vmem:[%s7708 + $0x170] sm:$0xff]
        %v7756 = vld [vmem:[%s7708 + $0x178] sm:$0xff]
        %7757 = vmatprep.subr.mxu0 0.0
        %7758 = vmatpush1.msra.mxu0 %v7709
        %7759 = vmatprep.subr.mxu0 0.0
        %7760 = vmatpush1.msra.mxu0 %v7710
        %7761 = vmatprep.subr.mxu0 0.0
        %7762 = vmatpush1.msra.mxu0 %v7711
        %7763 = vmatprep.subr.mxu0 0.0
        %7764 = vmatpush1.msra.mxu0 %v7712
        %7765 = vmatprep.subr.mxu0 0.0
        %7766 = vmatpush1.msra.mxu0 %v7713
        %7767 = vmatprep.subr.mxu0 0.0
        %7768 = vmatpush1.msra.mxu0 %v7714
        %7769 = vmatprep.subr.mxu0 0.0
        %7770 = vmatpush1.msra.mxu0 %v7715
        %7771 = vmatprep.subr.mxu0 0.0
        %7772 = vmatpush1.msra.mxu0 %v7716
        %7773 = vmatprep.subr.mxu0 0.0
        %7774 = vmatpush1.msra.mxu0 %v7717
        %7775 = vmatprep.subr.mxu0 0.0
        %7776 = vmatpush1.msra.mxu0 %v7718
        %7777 = vmatprep.subr.mxu0 0.0
        %7778 = vmatpush1.msra.mxu0 %v7719
        %7779 = vmatprep.subr.mxu0 0.0
        %7780 = vmatpush1.msra.mxu0 %v7720
        %7781 = vmatprep.subr.mxu0 0.0
        %7782 = vmatpush1.msra.mxu0 %v7721
        %7783 = vmatprep.subr.mxu0 0.0
        %7784 = vmatpush1.msra.mxu0 %v7722
        %7785 = vmatprep.subr.mxu0 0.0
        %7786 = vmatpush1.msra.mxu0 %v7723
        %7787 = vmatprep.subr.mxu0 0.0
        %7788 = vmatpush1.msra.mxu0 %v7724
        %7789 = vmatprep.subr.mxu0 0.0
        %7790 = vmatpush1.msra.mxu0 %v7725
        %7791 = vmatprep.subr.mxu0 0.0
        %7792 = vmatpush1.msra.mxu0 %v7726
        %7793 = vmatprep.subr.mxu0 0.0
        %7794 = vmatpush1.msra.mxu0 %v7727
        %7795 = vmatprep.subr.mxu0 0.0
        %7796 = vmatpush1.msra.mxu0 %v7728
        %7797 = vmatprep.subr.mxu0 0.0
        %7798 = vmatpush1.msra.mxu0 %v7729
        %7799 = vmatprep.subr.mxu0 0.0
        %7800 = vmatpush1.msra.mxu0 %v7730
        %7801 = vmatprep.subr.mxu0 0.0
        %7802 = vmatpush1.msra.mxu0 %v7731
        %7803 = vmatprep.subr.mxu0 0.0
        %7804 = vmatpush1.msra.mxu0 %v7732
        %7805 = vmatprep.subr.mxu0 0.0
        %7806 = vmatpush1.msra.mxu0 %v7733
        %7807 = vmatprep.subr.mxu0 0.0
        %7808 = vmatpush1.msra.mxu0 %v7734
        %7809 = vmatprep.subr.mxu0 0.0
        %7810 = vmatpush1.msra.mxu0 %v7735
        %7811 = vmatprep.subr.mxu0 0.0
        %7812 = vmatpush1.msra.mxu0 %v7736
        %7813 = vmatprep.subr.mxu0 0.0
        %7814 = vmatpush1.msra.mxu0 %v7737
        %7815 = vmatprep.subr.mxu0 0.0
        %7816 = vmatpush1.msra.mxu0 %v7738
        %7817 = vmatprep.subr.mxu0 0.0
        %7818 = vmatpush1.msra.mxu0 %v7739
        %7819 = vmatprep.subr.mxu0 0.0
        %7820 = vmatpush1.msra.mxu0 %v7740
        %7821 = vmatprep.mubr.f32.mxu0 %v7426
        %7822 = vmatmul.mubr.f32.gmra.mrb[0].mxu0 %v7320
        %v7823 = vpop.f32.mrb[0].mxu0
        %v7824 = vadd.f32 0.0, %v7823
        %v7825 = vpop.f32.mrb[0].mxu0
        %7826 = vmatprep.mubr.f32.mxu0 %v7428
        %7827 = vmatmul.mubr.f32.gmra.mrb[0].mxu0 %v7321
        %v7828 = vpop.f32.mrb[0].mxu0
        %v7829 = vadd.f32 0.0, %v7828
        %v7830 = vpop.f32.mrb[0].mxu0
        %7831 = vmatprep.mubr.f32.mxu0 %v7431
        %7832 = vmatmul.mubr.f32.gmra.mrb[0].mxu0 %v7323
        %v7833 = vpop.f32.mrb[0].mxu0
        %v7834 = vadd.f32 0.0, %v7833
        %v7835 = vpop.f32.mrb[0].mxu0
        %7836 = vmatprep.mubr.f32.mxu0 %v7433
        %7837 = vmatmul.mubr.f32.gmra.mrb[0].mxu0 %v7324
        %v7838 = vpop.f32.mrb[0].mxu0
        %v7839 = vadd.f32 0.0, %v7838
        %v7840 = vpop.f32.mrb[0].mxu0
        %7841 = vmatprep.mubr.f32.mxu0 %v7436
        %7842 = vmatmul.mubr.f32.gmra.mrb[0].mxu0 %v7326
        %v7843 = vpop.f32.mrb[0].mxu0
        %v7844 = vadd.f32 0.0, %v7843
        %v7845 = vpop.f32.mrb[0].mxu0
        %7846 = vmatprep.mubr.f32.mxu0 %v7438
        %7847 = vmatmul.mubr.f32.gmra.mrb[0].mxu0 %v7327
        %v7848 = vpop.f32.mrb[0].mxu0
        %v7849 = vadd.f32 0.0, %v7848
        %v7850 = vpop.f32.mrb[0].mxu0
        %7851 = vmatprep.mubr.f32.mxu0 %v7441
        %7852 = vmatmul.mubr.f32.gmra.mrb[0].mxu0 %v7329
        %v7853 = vpop.f32.mrb[0].mxu0
        %v7854 = vadd.f32 0.0, %v7853
        %v7855 = vpop.f32.mrb[0].mxu0
        %7856 = vmatprep.mubr.f32.mxu0 %v7443
        %7857 = vmatmul.mubr.f32.gmra.mrb[0].mxu0 %v7330
        %v7858 = vpop.f32.mrb[0].mxu0
        %v7859 = vadd.f32 0.0, %v7858
        %v7860 = vpop.f32.mrb[0].mxu0
        %7861 = vmatprep.mubr.f32.mxu0 %v7446
        %7862 = vmatmul.mubr.f32.gmra.mrb[0].mxu0 %v7332
        %v7863 = vpop.f32.mrb[0].mxu0
        %v7864 = vadd.f32 0.0, %v7863
        %v7865 = vpop.f32.mrb[0].mxu0
        %7866 = vmatprep.mubr.f32.mxu0 %v7448
        %7867 = vmatmul.mubr.f32.gmra.mrb[0].mxu0 %v7333
        %v7868 = vpop.f32.mrb[0].mxu0
        %v7869 = vadd.f32 0.0, %v7868
        %v7870 = vpop.f32.mrb[0].mxu0
        %7871 = vmatprep.mubr.f32.mxu0 %v7451
        %7872 = vmatmul.mubr.f32.gmra.mrb[0].mxu0 %v7335
        %v7873 = vpop.f32.mrb[0].mxu0
        %v7874 = vadd.f32 0.0, %v7873
        %v7875 = vpop.f32.mrb[0].mxu0
        %7876 = vmatprep.mubr.f32.mxu0 %v7453
        %7877 = vmatmul.mubr.f32.gmra.mrb[0].mxu0 %v7336
        %v7878 = vpop.f32.mrb[0].mxu0
        %v7879 = vadd.f32 0.0, %v7878
        %v7880 = vpop.f32.mrb[0].mxu0
        %7881 = vmatprep.mubr.f32.mxu0 %v7456
        %7882 = vmatmul.mubr.f32.gmra.mrb[0].mxu0 %v7338
        %v7883 = vpop.f32.mrb[0].mxu0
        %v7884 = vadd.f32 0.0, %v7883
        %v7885 = vpop.f32.mrb[0].mxu0
        %7886 = vmatprep.mubr.f32.mxu0 %v7458
        %7887 = vmatmul.mubr.f32.gmra.mrb[0].mxu0 %v7339
        %v7888 = vpop.f32.mrb[0].mxu0
        %v7889 = vadd.f32 0.0, %v7888
        %v7890 = vpop.f32.mrb[0].mxu0
        %7891 = vmatprep.mubr.f32.mxu0 %v7461
        %7892 = vmatmul.mubr.f32.gmra.mrb[0].mxu0 %v7341
        %v7893 = vpop.f32.mrb[0].mxu0
        %v7894 = vadd.f32 0.0, %v7893
        %v7895 = vpop.f32.mrb[0].mxu0
        %7896 = vmatprep.mubr.f32.mxu0 %v7463
        %7897 = vmatmul.mubr.f32.gmra.mrb[0].mxu0 %v7342
        %v7898 = vpop.f32.mrb[0].mxu0
        %v7899 = vadd.f32 0.0, %v7898
        %v7900 = vpop.f32.mrb[0].mxu0
        %7901 = vmatprep.mubr.f32.mxu0 %v7466
        %7902 = vmatmul.mubr.f32.gmra.mrb[0].mxu0 %v7344
        %v7903 = vpop.f32.mrb[0].mxu0
        %v7904 = vadd.f32 0.0, %v7903
        %v7905 = vpop.f32.mrb[0].mxu0
        %7906 = vmatprep.mubr.f32.mxu0 %v7468
        %7907 = vmatmul.mubr.f32.gmra.mrb[0].mxu0 %v7345
        %v7908 = vpop.f32.mrb[0].mxu0
        %v7909 = vadd.f32 0.0, %v7908
        %v7910 = vpop.f32.mrb[0].mxu0
        %7911 = vmatprep.mubr.f32.mxu0 %v7471
        %7912 = vmatmul.mubr.f32.gmra.mrb[0].mxu0 %v7347
        %v7913 = vpop.f32.mrb[0].mxu0
        %v7914 = vadd.f32 0.0, %v7913
        %v7915 = vpop.f32.mrb[0].mxu0
        %7916 = vmatprep.mubr.f32.mxu0 %v7473
        %7917 = vmatmul.mubr.f32.gmra.mrb[0].mxu0 %v7348
        %v7918 = vpop.f32.mrb[0].mxu0
        %v7919 = vadd.f32 0.0, %v7918
        %v7920 = vpop.f32.mrb[0].mxu0
        %7921 = vmatprep.mubr.f32.mxu0 %v7476
        %7922 = vmatmul.mubr.f32.gmra.mrb[0].mxu0 %v7350
        %v7923 = vpop.f32.mrb[0].mxu0
        %v7924 = vadd.f32 0.0, %v7923
        %v7925 = vpop.f32.mrb[0].mxu0
        %7926 = vmatprep.mubr.f32.mxu0 %v7478
        %7927 = vmatmul.mubr.f32.gmra.mrb[0].mxu0 %v7351
        %v7928 = vpop.f32.mrb[0].mxu0
        %v7929 = vadd.f32 0.0, %v7928
        %v7930 = vpop.f32.mrb[0].mxu0
        %7931 = vmatprep.mubr.f32.mxu0 %v7481
        %7932 = vmatmul.mubr.f32.gmra.mrb[0].mxu0 %v7353
        %v7933 = vpop.f32.mrb[0].mxu0
        %v7934 = vadd.f32 0.0, %v7933
        %v7935 = vpop.f32.mrb[0].mxu0
        %7936 = vmatprep.mubr.f32.mxu0 %v7483
        %7937 = vmatmul.mubr.f32.gmra.mrb[0].mxu0 %v7354
        %v7938 = vpop.f32.mrb[0].mxu0
        %v7939 = vadd.f32 0.0, %v7938
        %v7940 = vpop.f32.mrb[0].mxu0
        %7941 = vmatprep.mubr.f32.mxu0 %v7486
        %7942 = vmatmul.mubr.f32.gmra.mrb[0].mxu0 %v7356
        %v7943 = vpop.f32.mrb[0].mxu0
        %v7944 = vadd.f32 0.0, %v7943
        %v7945 = vpop.f32.mrb[0].mxu0
        %7946 = vmatprep.mubr.f32.mxu0 %v7488
        %7947 = vmatmul.mubr.f32.gmra.mrb[0].mxu0 %v7357
        %v7948 = vpop.f32.mrb[0].mxu0
        %v7949 = vadd.f32 0.0, %v7948
        %v7950 = vpop.f32.mrb[0].mxu0
        %7951 = vmatprep.mubr.f32.mxu0 %v7491
        %7952 = vmatmul.mubr.f32.gmra.mrb[0].mxu0 %v7359
        %v7953 = vpop.f32.mrb[0].mxu0
        %v7954 = vadd.f32 0.0, %v7953
        %v7955 = vpop.f32.mrb[0].mxu0
        %7956 = vmatprep.mubr.f32.mxu0 %v7493
        %7957 = vmatmul.mubr.f32.gmra.mrb[0].mxu0 %v7360
        %v7958 = vpop.f32.mrb[0].mxu0
        %v7959 = vadd.f32 0.0, %v7958
        %v7960 = vpop.f32.mrb[0].mxu0
        %7961 = vmatprep.mubr.f32.mxu0 %v7496
        %7962 = vmatmul.mubr.f32.gmra.mrb[0].mxu0 %v7362
        %v7963 = vpop.f32.mrb[0].mxu0
        %v7964 = vadd.f32 0.0, %v7963
        %v7965 = vpop.f32.mrb[0].mxu0
        %7966 = vmatprep.mubr.f32.mxu0 %v7498
        %7967 = vmatmul.mubr.f32.gmra.mrb[0].mxu0 %v7363
        %v7968 = vpop.f32.mrb[0].mxu0
        %v7969 = vadd.f32 0.0, %v7968
        %v7970 = vpop.f32.mrb[0].mxu0
        %7971 = vmatprep.mubr.f32.mxu0 %v7696
        %7972 = vmatmul.mubr.f32.gmra.mrb[0].mxu0 %v7365
        %v7973 = vpop.f32.mrb[0].mxu0
        %v7974 = vadd.f32 0.0, %v7973
        %v7975 = vpop.f32.mrb[0].mxu0
        %7976 = vmatprep.mubr.f32.mxu0 %v7698
        %7977 = vmatmul.mubr.f32.gmra.mrb[0].mxu0 %v7366
        %v7978 = vpop.f32.mrb[0].mxu0
        %v7979 = vadd.f32 0.0, %v7978
        %v7980 = vpop.f32.mrb[0].mxu0
        %7981 = vdwg.mxu0
        %7982 = vmatprep.subr.mxu0 0.0
        %7983 = vmatpush1.msra.mxu0 %v7741
        %7984 = vmatprep.subr.mxu0 0.0
        %7985 = vmatpush1.msra.mxu0 %v7742
        %7986 = vmatprep.subr.mxu0 0.0
        %7987 = vmatpush1.msra.mxu0 %v7743
        %7988 = vmatprep.subr.mxu0 0.0
        %7989 = vmatpush1.msra.mxu0 %v7744
        %7990 = vmatprep.subr.mxu0 0.0
        %7991 = vmatpush1.msra.mxu0 %v7745
        %7992 = vmatprep.subr.mxu0 0.0
        %7993 = vmatpush1.msra.mxu0 %v7746
        %7994 = vmatprep.subr.mxu0 0.0
        %7995 = vmatpush1.msra.mxu0 %v7747
        %7996 = vmatprep.subr.mxu0 0.0
        %7997 = vmatpush1.msra.mxu0 %v7748
        %7998 = vmatprep.subr.mxu0 0.0
        %7999 = vmatpush1.msra.mxu0 %v7749
        %8000 = vmatprep.subr.mxu0 0.0
        %8001 = vmatpush1.msra.mxu0 %v7750
        %8002 = vmatprep.subr.mxu0 0.0
        %8003 = vmatpush1.msra.mxu0 %v7751
        %8004 = vmatprep.subr.mxu0 0.0
        %8005 = vmatpush1.msra.mxu0 %v7752
        %8006 = vmatprep.subr.mxu0 0.0
        %8007 = vmatpush1.msra.mxu0 %v7753
        %8008 = vmatprep.subr.mxu0 0.0
        %8009 = vmatpush1.msra.mxu0 %v7754
        %8010 = vmatprep.subr.mxu0 0.0
        %8011 = vmatpush1.msra.mxu0 %v7755
        %8012 = vmatprep.subr.mxu0 0.0
        %8013 = vmatpush1.msra.mxu0 %v7756
        %8014 = vmatprep.subr.mxu0 0.0
        %8015 = vmatpush1.msra.mxu0 0.0
        %8016 = vmatprep.subr.mxu0 0.0
        %8017 = vmatpush1.msra.mxu0 0.0
        %8018 = vmatprep.subr.mxu0 0.0
        %8019 = vmatpush1.msra.mxu0 0.0
        %8020 = vmatprep.subr.mxu0 0.0
        %8021 = vmatpush1.msra.mxu0 0.0
        %8022 = vmatprep.subr.mxu0 0.0
        %8023 = vmatpush1.msra.mxu0 0.0
        %8024 = vmatprep.subr.mxu0 0.0
        %8025 = vmatpush1.msra.mxu0 0.0
        %8026 = vmatprep.subr.mxu0 0.0
        %8027 = vmatpush1.msra.mxu0 0.0
        %8028 = vmatprep.subr.mxu0 0.0
        %8029 = vmatpush1.msra.mxu0 0.0
        %8030 = vmatprep.subr.mxu0 0.0
        %8031 = vmatpush1.msra.mxu0 0.0
        %8032 = vmatprep.subr.mxu0 0.0
        %8033 = vmatpush1.msra.mxu0 0.0
        %8034 = vmatprep.subr.mxu0 0.0
        %8035 = vmatpush1.msra.mxu0 0.0
        %8036 = vmatprep.subr.mxu0 0.0
        %8037 = vmatpush1.msra.mxu0 0.0
        %8038 = vmatprep.subr.mxu0 0.0
        %8039 = vmatpush1.msra.mxu0 0.0
        %8040 = vmatprep.subr.mxu0 0.0
        %8041 = vmatpush1.msra.mxu0 0.0
        %8042 = vmatprep.subr.mxu0 0.0
        %8043 = vmatpush1.msra.mxu0 0.0
        %8044 = vmatprep.subr.mxu0 0.0
        %8045 = vmatpush1.msra.mxu0 0.0
        %8046 = vmatprep.mubr.f32.mxu0 0.0
        %8047 = vmatmul.mubr.f32.gmra.mrb[0].mxu0 %v7538
        %v8048 = vpop.f32.mrb[0].mxu0
        %v8049 = vadd.f32 %v7824, %v8048
        %v8050 = vpop.f32.mrb[0].mxu0
        %8051 = vmatprep.mubr.f32.mxu0 0.0
        %8052 = vmatmul.mubr.f32.gmra.mrb[0].mxu0 %v7540
        %v8053 = vpop.f32.mrb[0].mxu0
        %v8054 = vadd.f32 %v7829, %v8053
        %v8055 = vpop.f32.mrb[0].mxu0
        %8056 = vmatprep.mubr.f32.mxu0 0.0
        %8057 = vmatmul.mubr.f32.gmra.mrb[0].mxu0 %v7543
        %v8058 = vpop.f32.mrb[0].mxu0
        %v8059 = vadd.f32 %v7834, %v8058
        %v8060 = vpop.f32.mrb[0].mxu0
        %8061 = vmatprep.mubr.f32.mxu0 0.0
        %8062 = vmatmul.mubr.f32.gmra.mrb[0].mxu0 %v7545
        %v8063 = vpop.f32.mrb[0].mxu0
        %v8064 = vadd.f32 %v7839, %v8063
        %v8065 = vpop.f32.mrb[0].mxu0
        %8066 = vmatprep.mubr.f32.mxu0 0.0
        %8067 = vmatmul.mubr.f32.gmra.mrb[0].mxu0 %v7548
        %v8068 = vpop.f32.mrb[0].mxu0
        %v8069 = vadd.f32 %v7844, %v8068
        %v8070 = vpop.f32.mrb[0].mxu0
        %8071 = vmatprep.mubr.f32.mxu0 0.0
        %8072 = vmatmul.mubr.f32.gmra.mrb[0].mxu0 %v7550
        %v8073 = vpop.f32.mrb[0].mxu0
        %v8074 = vadd.f32 %v7849, %v8073
        %v8075 = vpop.f32.mrb[0].mxu0
        %8076 = vmatprep.mubr.f32.mxu0 0.0
        %8077 = vmatmul.mubr.f32.gmra.mrb[0].mxu0 %v7553
        %v8078 = vpop.f32.mrb[0].mxu0
        %v8079 = vadd.f32 %v7854, %v8078
        %v8080 = vpop.f32.mrb[0].mxu0
        %8081 = vmatprep.mubr.f32.mxu0 0.0
        %8082 = vmatmul.mubr.f32.gmra.mrb[0].mxu0 %v7555
        %v8083 = vpop.f32.mrb[0].mxu0
        %v8084 = vadd.f32 %v7859, %v8083
        %v8085 = vpop.f32.mrb[0].mxu0
        %8086 = vmatprep.mubr.f32.mxu0 0.0
        %8087 = vmatmul.mubr.f32.gmra.mrb[0].mxu0 %v7558
        %v8088 = vpop.f32.mrb[0].mxu0
        %v8089 = vadd.f32 %v7864, %v8088
        %v8090 = vpop.f32.mrb[0].mxu0
        %8091 = vmatprep.mubr.f32.mxu0 0.0
        %8092 = vmatmul.mubr.f32.gmra.mrb[0].mxu0 %v7560
        %v8093 = vpop.f32.mrb[0].mxu0
        %v8094 = vadd.f32 %v7869, %v8093
        %v8095 = vpop.f32.mrb[0].mxu0
        %8096 = vmatprep.mubr.f32.mxu0 0.0
        %8097 = vmatmul.mubr.f32.gmra.mrb[0].mxu0 %v7563
        %v8098 = vpop.f32.mrb[0].mxu0
        %v8099 = vadd.f32 %v7874, %v8098
        %v8100 = vpop.f32.mrb[0].mxu0
        %8101 = vmatprep.mubr.f32.mxu0 0.0
        %8102 = vmatmul.mubr.f32.gmra.mrb[0].mxu0 %v7565
        %v8103 = vpop.f32.mrb[0].mxu0
        %v8104 = vadd.f32 %v7879, %v8103
        %v8105 = vpop.f32.mrb[0].mxu0
        %8106 = vmatprep.mubr.f32.mxu0 0.0
        %8107 = vmatmul.mubr.f32.gmra.mrb[0].mxu0 %v7568
        %v8108 = vpop.f32.mrb[0].mxu0
        %v8109 = vadd.f32 %v7884, %v8108
        %v8110 = vpop.f32.mrb[0].mxu0
        %8111 = vmatprep.mubr.f32.mxu0 0.0
        %8112 = vmatmul.mubr.f32.gmra.mrb[0].mxu0 %v7570
        %v8113 = vpop.f32.mrb[0].mxu0
        %v8114 = vadd.f32 %v7889, %v8113
        %v8115 = vpop.f32.mrb[0].mxu0
        %8116 = vmatprep.mubr.f32.mxu0 0.0
        %8117 = vmatmul.mubr.f32.gmra.mrb[0].mxu0 %v7573
        %v8118 = vpop.f32.mrb[0].mxu0
        %v8119 = vadd.f32 %v7894, %v8118
        %v8120 = vpop.f32.mrb[0].mxu0
        %8121 = vmatprep.mubr.f32.mxu0 0.0
        %8122 = vmatmul.mubr.f32.gmra.mrb[0].mxu0 %v7575
        %v8123 = vpop.f32.mrb[0].mxu0
        %v8124 = vadd.f32 %v7899, %v8123
        %v8125 = vpop.f32.mrb[0].mxu0
        %8126 = vmatprep.mubr.f32.mxu0 0.0
        %8127 = vmatmul.mubr.f32.gmra.mrb[0].mxu0 %v7578
        %v8128 = vpop.f32.mrb[0].mxu0
        %v8129 = vadd.f32 %v7904, %v8128
        %v8130 = vpop.f32.mrb[0].mxu0
        %8131 = vmatprep.mubr.f32.mxu0 0.0
        %8132 = vmatmul.mubr.f32.gmra.mrb[0].mxu0 %v7580
        %v8133 = vpop.f32.mrb[0].mxu0
        %v8134 = vadd.f32 %v7909, %v8133
        %v8135 = vpop.f32.mrb[0].mxu0
        %8136 = vmatprep.mubr.f32.mxu0 0.0
        %8137 = vmatmul.mubr.f32.gmra.mrb[0].mxu0 %v7583
        %v8138 = vpop.f32.mrb[0].mxu0
        %v8139 = vadd.f32 %v7914, %v8138
        %v8140 = vpop.f32.mrb[0].mxu0
        %8141 = vmatprep.mubr.f32.mxu0 0.0
        %8142 = vmatmul.mubr.f32.gmra.mrb[0].mxu0 %v7585
        %v8143 = vpop.f32.mrb[0].mxu0
        %v8144 = vadd.f32 %v7919, %v8143
        %v8145 = vpop.f32.mrb[0].mxu0
        %8146 = vmatprep.mubr.f32.mxu0 0.0
        %8147 = vmatmul.mubr.f32.gmra.mrb[0].mxu0 %v7588
        %v8148 = vpop.f32.mrb[0].mxu0
        %v8149 = vadd.f32 %v7924, %v8148
        %v8150 = vpop.f32.mrb[0].mxu0
        %8151 = vmatprep.mubr.f32.mxu0 0.0
        %8152 = vmatmul.mubr.f32.gmra.mrb[0].mxu0 %v7590
        %v8153 = vpop.f32.mrb[0].mxu0
        %v8154 = vadd.f32 %v7929, %v8153
        %v8155 = vpop.f32.mrb[0].mxu0
        %8156 = vmatprep.mubr.f32.mxu0 0.0
        %8157 = vmatmul.mubr.f32.gmra.mrb[0].mxu0 %v7593
        %v8158 = vpop.f32.mrb[0].mxu0
        %v8159 = vadd.f32 %v7934, %v8158
        %v8160 = vpop.f32.mrb[0].mxu0
        %8161 = vmatprep.mubr.f32.mxu0 0.0
        %8162 = vmatmul.mubr.f32.gmra.mrb[0].mxu0 %v7595
        %v8163 = vpop.f32.mrb[0].mxu0
        %v8164 = vadd.f32 %v7939, %v8163
        %v8165 = vpop.f32.mrb[0].mxu0
        %8166 = vmatprep.mubr.f32.mxu0 0.0
        %8167 = vmatmul.mubr.f32.gmra.mrb[0].mxu0 %v7598
        %v8168 = vpop.f32.mrb[0].mxu0
        %v8169 = vadd.f32 %v7944, %v8168
        %v8170 = vpop.f32.mrb[0].mxu0
        %8171 = vmatprep.mubr.f32.mxu0 0.0
        %8172 = vmatmul.mubr.f32.gmra.mrb[0].mxu0 %v7600
        %v8173 = vpop.f32.mrb[0].mxu0
        %v8174 = vadd.f32 %v7949, %v8173
        %v8175 = vpop.f32.mrb[0].mxu0
        %8176 = vmatprep.mubr.f32.mxu0 0.0
        %8177 = vmatmul.mubr.f32.gmra.mrb[0].mxu0 %v7603
        %v8178 = vpop.f32.mrb[0].mxu0
        %v8179 = vadd.f32 %v7954, %v8178
        %v8180 = vpop.f32.mrb[0].mxu0
        %8181 = vmatprep.mubr.f32.mxu0 0.0
        %8182 = vmatmul.mubr.f32.gmra.mrb[0].mxu0 %v7605
        %v8183 = vpop.f32.mrb[0].mxu0
        %v8184 = vadd.f32 %v7959, %v8183
        %v8185 = vpop.f32.mrb[0].mxu0
        %8186 = vmatprep.mubr.f32.mxu0 0.0
        %8187 = vmatmul.mubr.f32.gmra.mrb[0].mxu0 %v7608
        %v8188 = vpop.f32.mrb[0].mxu0
        %v8189 = vadd.f32 %v7964, %v8188
        %v8190 = vpop.f32.mrb[0].mxu0
        %8191 = vmatprep.mubr.f32.mxu0 0.0
        %8192 = vmatmul.mubr.f32.gmra.mrb[0].mxu0 %v7610
        %v8193 = vpop.f32.mrb[0].mxu0
        %v8194 = vadd.f32 %v7969, %v8193
        %v8195 = vpop.f32.mrb[0].mxu0
        %8196 = vmatprep.mubr.f32.mxu0 0.0
        %8197 = vmatmul.mubr.f32.gmra.mrb[0].mxu0 %v7703
        %v8198 = vpop.f32.mrb[0].mxu0
        %v8199 = vadd.f32 %v7974, %v8198
        %v8200 = vpop.f32.mrb[0].mxu0
        %8201 = vmatprep.mubr.f32.mxu0 0.0
        %8202 = vmatmul.mubr.f32.gmra.mrb[0].mxu0 %v7705
        %v8203 = vpop.f32.mrb[0].mxu0
        %v8204 = vadd.f32 %v7979, %v8203
        %v8205 = vpop.f32.mrb[0].mxu0
        %8206 = vdwg.mxu0
        %8207 = vmatprep.subr.mxu0 0.0
        %8208 = vmatpush1.msra.mxu0 %v7643
        %8209 = vmatprep.subr.mxu0 0.0
        %8210 = vmatpush1.msra.mxu0 %v7644
        %8211 = vmatprep.subr.mxu0 0.0
        %8212 = vmatpush1.msra.mxu0 %v7645
        %8213 = vmatprep.subr.mxu0 0.0
        %8214 = vmatpush1.msra.mxu0 %v7646
        %8215 = vmatprep.subr.mxu0 0.0
        %8216 = vmatpush1.msra.mxu0 %v7647
        %8217 = vmatprep.subr.mxu0 0.0
        %8218 = vmatpush1.msra.mxu0 %v7648
        %8219 = vmatprep.subr.mxu0 0.0
        %8220 = vmatpush1.msra.mxu0 %v7649
        %8221 = vmatprep.subr.mxu0 0.0
        %8222 = vmatpush1.msra.mxu0 %v7650
        %8223 = vmatprep.subr.mxu0 0.0
        %8224 = vmatpush1.msra.mxu0 %v7651
        %8225 = vmatprep.subr.mxu0 0.0
        %8226 = vmatpush1.msra.mxu0 %v7652
        %8227 = vmatprep.subr.mxu0 0.0
        %8228 = vmatpush1.msra.mxu0 %v7653
        %8229 = vmatprep.subr.mxu0 0.0
        %8230 = vmatpush1.msra.mxu0 %v7654
        %8231 = vmatprep.subr.mxu0 0.0
        %8232 = vmatpush1.msra.mxu0 %v7655
        %8233 = vmatprep.subr.mxu0 0.0
        %8234 = vmatpush1.msra.mxu0 %v7656
        %8235 = vmatprep.subr.mxu0 0.0
        %8236 = vmatpush1.msra.mxu0 %v7657
        %8237 = vmatprep.subr.mxu0 0.0
        %8238 = vmatpush1.msra.mxu0 %v7658
        %8239 = vmatprep.subr.mxu0 0.0
        %8240 = vmatpush1.msra.mxu0 %v7659
        %8241 = vmatprep.subr.mxu0 0.0
        %8242 = vmatpush1.msra.mxu0 %v7660
        %8243 = vmatprep.subr.mxu0 0.0
        %8244 = vmatpush1.msra.mxu0 %v7661
        %8245 = vmatprep.subr.mxu0 0.0
        %8246 = vmatpush1.msra.mxu0 %v7662
        %8247 = vmatprep.subr.mxu0 0.0
        %8248 = vmatpush1.msra.mxu0 %v7663
        %8249 = vmatprep.subr.mxu0 0.0
        %8250 = vmatpush1.msra.mxu0 %v7664
        %8251 = vmatprep.subr.mxu0 0.0
        %8252 = vmatpush1.msra.mxu0 %v7665
        %8253 = vmatprep.subr.mxu0 0.0
        %8254 = vmatpush1.msra.mxu0 %v7666
        %8255 = vmatprep.subr.mxu0 0.0
        %8256 = vmatpush1.msra.mxu0 %v7667
        %8257 = vmatprep.subr.mxu0 0.0
        %8258 = vmatpush1.msra.mxu0 %v7668
        %8259 = vmatprep.subr.mxu0 0.0
        %8260 = vmatpush1.msra.mxu0 %v7669
        %8261 = vmatprep.subr.mxu0 0.0
        %8262 = vmatpush1.msra.mxu0 %v7670
        %8263 = vmatprep.subr.mxu0 0.0
        %8264 = vmatpush1.msra.mxu0 %v7671
        %8265 = vmatprep.subr.mxu0 0.0
        %8266 = vmatpush1.msra.mxu0 %v7672
        %8267 = vmatprep.subr.mxu0 0.0
        %8268 = vmatpush1.msra.mxu0 %v7673
        %8269 = vmatprep.subr.mxu0 0.0
        %8270 = vmatpush1.msra.mxu0 %v7674
        %8271 = vmatprep.mubr.f32.mxu0 %v7421
        %8272 = vmatmul.mubr.f32.gmra.mrb[0].mxu0 %v7317
        %v8273 = vpop.f32.mrb[0].mxu0
        %v8274 = vadd.f32 %v8049, %v8273
        %v8275 = vpop.f32.mrb[0].mxu0
        %8276 = vmatprep.mubr.f32.mxu0 %v7423
        %8277 = vmatmul.mubr.f32.gmra.mrb[0].mxu0 %v7318
        %v8278 = vpop.f32.mrb[0].mxu0
        %v8279 = vadd.f32 %v8054, %v8278
        %v8280 = vpop.f32.mrb[0].mxu0
        %8281 = vmatprep.mubr.f32.mxu0 %v7426
        %8282 = vmatmul.mubr.f32.gmra.mrb[0].mxu0 %v7320
        %v8283 = vpop.f32.mrb[0].mxu0
        %v8284 = vadd.f32 %v8059, %v8283
        %v8285 = vpop.f32.mrb[0].mxu0
        %8286 = vmatprep.mubr.f32.mxu0 %v7428
        %8287 = vmatmul.mubr.f32.gmra.mrb[0].mxu0 %v7321
        %v8288 = vpop.f32.mrb[0].mxu0
        %v8289 = vadd.f32 %v8064, %v8288
        %v8290 = vpop.f32.mrb[0].mxu0
        %8291 = vmatprep.mubr.f32.mxu0 %v7431
        %8292 = vmatmul.mubr.f32.gmra.mrb[0].mxu0 %v7323
        %v8293 = vpop.f32.mrb[0].mxu0
        %v8294 = vadd.f32 %v8069, %v8293
        %v8295 = vpop.f32.mrb[0].mxu0
        %8296 = vmatprep.mubr.f32.mxu0 %v7433
        %8297 = vmatmul.mubr.f32.gmra.mrb[0].mxu0 %v7324
        %v8298 = vpop.f32.mrb[0].mxu0
        %v8299 = vadd.f32 %v8074, %v8298
        %v8300 = vpop.f32.mrb[0].mxu0
        %8301 = vmatprep.mubr.f32.mxu0 %v7436
        %8302 = vmatmul.mubr.f32.gmra.mrb[0].mxu0 %v7326
        %v8303 = vpop.f32.mrb[0].mxu0
        %v8304 = vadd.f32 %v8079, %v8303
        %v8305 = vpop.f32.mrb[0].mxu0
        %8306 = vmatprep.mubr.f32.mxu0 %v7438
        %8307 = vmatmul.mubr.f32.gmra.mrb[0].mxu0 %v7327
        %v8308 = vpop.f32.mrb[0].mxu0
        %v8309 = vadd.f32 %v8084, %v8308
        %v8310 = vpop.f32.mrb[0].mxu0
        %8311 = vmatprep.mubr.f32.mxu0 %v7441
        %8312 = vmatmul.mubr.f32.gmra.mrb[0].mxu0 %v7329
        %v8313 = vpop.f32.mrb[0].mxu0
        %v8314 = vadd.f32 %v8089, %v8313
        %v8315 = vpop.f32.mrb[0].mxu0
        %8316 = vmatprep.mubr.f32.mxu0 %v7443
        %8317 = vmatmul.mubr.f32.gmra.mrb[0].mxu0 %v7330
        %v8318 = vpop.f32.mrb[0].mxu0
        %v8319 = vadd.f32 %v8094, %v8318
        %v8320 = vpop.f32.mrb[0].mxu0
        %8321 = vmatprep.mubr.f32.mxu0 %v7446
        %8322 = vmatmul.mubr.f32.gmra.mrb[0].mxu0 %v7332
        %v8323 = vpop.f32.mrb[0].mxu0
        %v8324 = vadd.f32 %v8099, %v8323
        %v8325 = vpop.f32.mrb[0].mxu0
        %8326 = vmatprep.mubr.f32.mxu0 %v7448
        %8327 = vmatmul.mubr.f32.gmra.mrb[0].mxu0 %v7333
        %v8328 = vpop.f32.mrb[0].mxu0
        %v8329 = vadd.f32 %v8104, %v8328
        %v8330 = vpop.f32.mrb[0].mxu0
        %8331 = vmatprep.mubr.f32.mxu0 %v7451
        %8332 = vmatmul.mubr.f32.gmra.mrb[0].mxu0 %v7335
        %v8333 = vpop.f32.mrb[0].mxu0
        %v8334 = vadd.f32 %v8109, %v8333
        %v8335 = vpop.f32.mrb[0].mxu0
        %8336 = vmatprep.mubr.f32.mxu0 %v7453
        %8337 = vmatmul.mubr.f32.gmra.mrb[0].mxu0 %v7336
        %v8338 = vpop.f32.mrb[0].mxu0
        %v8339 = vadd.f32 %v8114, %v8338
        %v8340 = vpop.f32.mrb[0].mxu0
        %8341 = vmatprep.mubr.f32.mxu0 %v7456
        %8342 = vmatmul.mubr.f32.gmra.mrb[0].mxu0 %v7338
        %v8343 = vpop.f32.mrb[0].mxu0
        %v8344 = vadd.f32 %v8119, %v8343
        %v8345 = vpop.f32.mrb[0].mxu0
        %8346 = vmatprep.mubr.f32.mxu0 %v7458
        %8347 = vmatmul.mubr.f32.gmra.mrb[0].mxu0 %v7339
        %v8348 = vpop.f32.mrb[0].mxu0
        %v8349 = vadd.f32 %v8124, %v8348
        %v8350 = vpop.f32.mrb[0].mxu0
        %8351 = vmatprep.mubr.f32.mxu0 %v7461
        %8352 = vmatmul.mubr.f32.gmra.mrb[0].mxu0 %v7341
        %v8353 = vpop.f32.mrb[0].mxu0
        %v8354 = vadd.f32 %v8129, %v8353
        %v8355 = vpop.f32.mrb[0].mxu0
        %8356 = vmatprep.mubr.f32.mxu0 %v7463
        %8357 = vmatmul.mubr.f32.gmra.mrb[0].mxu0 %v7342
        %v8358 = vpop.f32.mrb[0].mxu0
        %v8359 = vadd.f32 %v8134, %v8358
        %v8360 = vpop.f32.mrb[0].mxu0
        %8361 = vmatprep.mubr.f32.mxu0 %v7466
        %8362 = vmatmul.mubr.f32.gmra.mrb[0].mxu0 %v7344
        %v8363 = vpop.f32.mrb[0].mxu0
        %v8364 = vadd.f32 %v8139, %v8363
        %v8365 = vpop.f32.mrb[0].mxu0
        %8366 = vmatprep.mubr.f32.mxu0 %v7468
        %8367 = vmatmul.mubr.f32.gmra.mrb[0].mxu0 %v7345
        %v8368 = vpop.f32.mrb[0].mxu0
        %v8369 = vadd.f32 %v8144, %v8368
        %v8370 = vpop.f32.mrb[0].mxu0
        %8371 = vmatprep.mubr.f32.mxu0 %v7471
        %8372 = vmatmul.mubr.f32.gmra.mrb[0].mxu0 %v7347
        %v8373 = vpop.f32.mrb[0].mxu0
        %v8374 = vadd.f32 %v8149, %v8373
        %v8375 = vpop.f32.mrb[0].mxu0
        %8376 = vmatprep.mubr.f32.mxu0 %v7473
        %8377 = vmatmul.mubr.f32.gmra.mrb[0].mxu0 %v7348
        %v8378 = vpop.f32.mrb[0].mxu0
        %v8379 = vadd.f32 %v8154, %v8378
        %v8380 = vpop.f32.mrb[0].mxu0
        %8381 = vmatprep.mubr.f32.mxu0 %v7476
        %8382 = vmatmul.mubr.f32.gmra.mrb[0].mxu0 %v7350
        %v8383 = vpop.f32.mrb[0].mxu0
        %v8384 = vadd.f32 %v8159, %v8383
        %v8385 = vpop.f32.mrb[0].mxu0
        %8386 = vmatprep.mubr.f32.mxu0 %v7478
        %8387 = vmatmul.mubr.f32.gmra.mrb[0].mxu0 %v7351
        %v8388 = vpop.f32.mrb[0].mxu0
        %v8389 = vadd.f32 %v8164, %v8388
        %v8390 = vpop.f32.mrb[0].mxu0
        %8391 = vmatprep.mubr.f32.mxu0 %v7481
        %8392 = vmatmul.mubr.f32.gmra.mrb[0].mxu0 %v7353
        %v8393 = vpop.f32.mrb[0].mxu0
        %v8394 = vadd.f32 %v8169, %v8393
        %v8395 = vpop.f32.mrb[0].mxu0
        %8396 = vmatprep.mubr.f32.mxu0 %v7483
        %8397 = vmatmul.mubr.f32.gmra.mrb[0].mxu0 %v7354
        %v8398 = vpop.f32.mrb[0].mxu0
        %v8399 = vadd.f32 %v8174, %v8398
        %v8400 = vpop.f32.mrb[0].mxu0
        %8401 = vmatprep.mubr.f32.mxu0 %v7486
        %8402 = vmatmul.mubr.f32.gmra.mrb[0].mxu0 %v7356
        %v8403 = vpop.f32.mrb[0].mxu0
        %v8404 = vadd.f32 %v8179, %v8403
        %v8405 = vpop.f32.mrb[0].mxu0
        %8406 = vmatprep.mubr.f32.mxu0 %v7488
        %8407 = vmatmul.mubr.f32.gmra.mrb[0].mxu0 %v7357
        %v8408 = vpop.f32.mrb[0].mxu0
        %v8409 = vadd.f32 %v8184, %v8408
        %v8410 = vpop.f32.mrb[0].mxu0
        %8411 = vmatprep.mubr.f32.mxu0 %v7491
        %8412 = vmatmul.mubr.f32.gmra.mrb[0].mxu0 %v7359
        %v8413 = vpop.f32.mrb[0].mxu0
        %v8414 = vadd.f32 %v8189, %v8413
        %v8415 = vpop.f32.mrb[0].mxu0
        %8416 = vmatprep.mubr.f32.mxu0 %v7493
        %8417 = vmatmul.mubr.f32.gmra.mrb[0].mxu0 %v7360
        %v8418 = vpop.f32.mrb[0].mxu0
        %v8419 = vadd.f32 %v8194, %v8418
        %v8420 = vpop.f32.mrb[0].mxu0
        %8421 = vmatprep.mubr.f32.mxu0 %v7496
        %8422 = vmatmul.mubr.f32.gmra.mrb[0].mxu0 %v7362
        %v8423 = vpop.f32.mrb[0].mxu0
        %v8424 = vadd.f32 %v8199, %v8423
        %v8425 = vpop.f32.mrb[0].mxu0
        %8426 = vmatprep.mubr.f32.mxu0 %v7498
        %8427 = vmatmul.mubr.f32.gmra.mrb[0].mxu0 %v7363
        %v8428 = vpop.f32.mrb[0].mxu0
        %v8429 = vadd.f32 %v8204, %v8428
        %v8430 = vpop.f32.mrb[0].mxu0
        %8431 = vdwg.mxu0
        %8432 = vmatprep.subr.mxu0 0.0
        %8433 = vmatpush1.msra.mxu0 %v7675
        %8434 = vmatprep.subr.mxu0 0.0
        %8435 = vmatpush1.msra.mxu0 %v7676
        %8436 = vmatprep.subr.mxu0 0.0
        %8437 = vmatpush1.msra.mxu0 %v7677
        %8438 = vmatprep.subr.mxu0 0.0
        %8439 = vmatpush1.msra.mxu0 %v7678
        %8440 = vmatprep.subr.mxu0 0.0
        %8441 = vmatpush1.msra.mxu0 %v7679
        %8442 = vmatprep.subr.mxu0 0.0
        %8443 = vmatpush1.msra.mxu0 %v7680
        %8444 = vmatprep.subr.mxu0 0.0
        %8445 = vmatpush1.msra.mxu0 %v7681
        %8446 = vmatprep.subr.mxu0 0.0
        %8447 = vmatpush1.msra.mxu0 %v7682
        %8448 = vmatprep.subr.mxu0 0.0
        %8449 = vmatpush1.msra.mxu0 %v7683
        %8450 = vmatprep.subr.mxu0 0.0
        %8451 = vmatpush1.msra.mxu0 %v7684
        %8452 = vmatprep.subr.mxu0 0.0
        %8453 = vmatpush1.msra.mxu0 %v7685
        %8454 = vmatprep.subr.mxu0 0.0
        %8455 = vmatpush1.msra.mxu0 %v7686
        %8456 = vmatprep.subr.mxu0 0.0
        %8457 = vmatpush1.msra.mxu0 %v7687
        %8458 = vmatprep.subr.mxu0 0.0
        %8459 = vmatpush1.msra.mxu0 %v7688
        %8460 = vmatprep.subr.mxu0 0.0
        %8461 = vmatpush1.msra.mxu0 %v7689
        %8462 = vmatprep.subr.mxu0 0.0
        %8463 = vmatpush1.msra.mxu0 %v7690
        %8464 = vmatprep.subr.mxu0 0.0
        %8465 = vmatpush1.msra.mxu0 0.0
        %8466 = vmatprep.subr.mxu0 0.0
        %8467 = vmatpush1.msra.mxu0 0.0
        %8468 = vmatprep.subr.mxu0 0.0
        %8469 = vmatpush1.msra.mxu0 0.0
        %8470 = vmatprep.subr.mxu0 0.0
        %8471 = vmatpush1.msra.mxu0 0.0
        %8472 = vmatprep.subr.mxu0 0.0
        %8473 = vmatpush1.msra.mxu0 0.0
        %8474 = vmatprep.subr.mxu0 0.0
        %8475 = vmatpush1.msra.mxu0 0.0
        %8476 = vmatprep.subr.mxu0 0.0
        %8477 = vmatpush1.msra.mxu0 0.0
        %8478 = vmatprep.subr.mxu0 0.0
        %8479 = vmatpush1.msra.mxu0 0.0
        %8480 = vmatprep.subr.mxu0 0.0
        %8481 = vmatpush1.msra.mxu0 0.0
        %8482 = vmatprep.subr.mxu0 0.0
        %8483 = vmatpush1.msra.mxu0 0.0
        %8484 = vmatprep.subr.mxu0 0.0
        %8485 = vmatpush1.msra.mxu0 0.0
        %8486 = vmatprep.subr.mxu0 0.0
        %8487 = vmatpush1.msra.mxu0 0.0
        %8488 = vmatprep.subr.mxu0 0.0
        %8489 = vmatpush1.msra.mxu0 0.0
        %8490 = vmatprep.subr.mxu0 0.0
        %8491 = vmatpush1.msra.mxu0 0.0
        %8492 = vmatprep.subr.mxu0 0.0
        %8493 = vmatpush1.msra.mxu0 0.0
        %8494 = vmatprep.subr.mxu0 0.0
        %8495 = vmatpush1.msra.mxu0 0.0
        %8496 = vmatprep.mubr.f32.mxu0 0.0
        %8497 = vmatmul.mubr.f32.gmra.mrb[0].mxu0 %v7533
        %v8498 = vpop.f32.mrb[0].mxu0
        %v8499 = vadd.f32 %v8274, %v8498
        %v8500 = vpop.f32.mrb[0].mxu0
        %8501 = vmatprep.mubr.f32.mxu0 0.0
        %8502 = vmatmul.mubr.f32.gmra.mrb[0].mxu0 %v7535
        %v8503 = vpop.f32.mrb[0].mxu0
        %v8504 = vadd.f32 %v8279, %v8503
        %v8505 = vpop.f32.mrb[0].mxu0
        %8506 = vmatprep.mubr.f32.mxu0 0.0
        %8507 = vmatmul.mubr.f32.gmra.mrb[0].mxu0 %v7538
        %v8508 = vpop.f32.mrb[0].mxu0
        %v8509 = vadd.f32 %v8284, %v8508
        %v8510 = vpop.f32.mrb[0].mxu0
        %8511 = vmatprep.mubr.f32.mxu0 0.0
        %8512 = vmatmul.mubr.f32.gmra.mrb[0].mxu0 %v7540
        %v8513 = vpop.f32.mrb[0].mxu0
        %v8514 = vadd.f32 %v8289, %v8513
        %v8515 = vpop.f32.mrb[0].mxu0
        %8516 = vmatprep.mubr.f32.mxu0 0.0
        %8517 = vmatmul.mubr.f32.gmra.mrb[0].mxu0 %v7543
        %v8518 = vpop.f32.mrb[0].mxu0
        %v8519 = vadd.f32 %v8294, %v8518
        %v8520 = vpop.f32.mrb[0].mxu0
        %8521 = vmatprep.mubr.f32.mxu0 0.0
        %8522 = vmatmul.mubr.f32.gmra.mrb[0].mxu0 %v7545
        %v8523 = vpop.f32.mrb[0].mxu0
        %v8524 = vadd.f32 %v8299, %v8523
        %v8525 = vpop.f32.mrb[0].mxu0
        %8526 = vmatprep.mubr.f32.mxu0 0.0
        %8527 = vmatmul.mubr.f32.gmra.mrb[0].mxu0 %v7548
        %v8528 = vpop.f32.mrb[0].mxu0
        %v8529 = vadd.f32 %v8304, %v8528
        %v8530 = vpop.f32.mrb[0].mxu0
        %8531 = vmatprep.mubr.f32.mxu0 0.0
        %8532 = vmatmul.mubr.f32.gmra.mrb[0].mxu0 %v7550
        %v8533 = vpop.f32.mrb[0].mxu0
        %v8534 = vadd.f32 %v8309, %v8533
        %v8535 = vpop.f32.mrb[0].mxu0
        %8536 = vmatprep.mubr.f32.mxu0 0.0
        %8537 = vmatmul.mubr.f32.gmra.mrb[0].mxu0 %v7553
        %v8538 = vpop.f32.mrb[0].mxu0
        %v8539 = vadd.f32 %v8314, %v8538
        %v8540 = vpop.f32.mrb[0].mxu0
        %8541 = vmatprep.mubr.f32.mxu0 0.0
        %8542 = vmatmul.mubr.f32.gmra.mrb[0].mxu0 %v7555
        %v8543 = vpop.f32.mrb[0].mxu0
        %v8544 = vadd.f32 %v8319, %v8543
        %v8545 = vpop.f32.mrb[0].mxu0
        %8546 = vmatprep.mubr.f32.mxu0 0.0
        %8547 = vmatmul.mubr.f32.gmra.mrb[0].mxu0 %v7558
        %v8548 = vpop.f32.mrb[0].mxu0
        %v8549 = vadd.f32 %v8324, %v8548
        %v8550 = vpop.f32.mrb[0].mxu0
        %8551 = vmatprep.mubr.f32.mxu0 0.0
        %8552 = vmatmul.mubr.f32.gmra.mrb[0].mxu0 %v7560
        %v8553 = vpop.f32.mrb[0].mxu0
        %v8554 = vadd.f32 %v8329, %v8553
        %v8555 = vpop.f32.mrb[0].mxu0
        %8556 = vmatprep.mubr.f32.mxu0 0.0
        %8557 = vmatmul.mubr.f32.gmra.mrb[0].mxu0 %v7563
        %v8558 = vpop.f32.mrb[0].mxu0
        %v8559 = vadd.f32 %v8334, %v8558
        %v8560 = vpop.f32.mrb[0].mxu0
        %8561 = vmatprep.mubr.f32.mxu0 0.0
        %8562 = vmatmul.mubr.f32.gmra.mrb[0].mxu0 %v7565
        %v8563 = vpop.f32.mrb[0].mxu0
        %v8564 = vadd.f32 %v8339, %v8563
        %v8565 = vpop.f32.mrb[0].mxu0
        %8566 = vmatprep.mubr.f32.mxu0 0.0
        %8567 = vmatmul.mubr.f32.gmra.mrb[0].mxu0 %v7568
        %v8568 = vpop.f32.mrb[0].mxu0
        %v8569 = vadd.f32 %v8344, %v8568
        %v8570 = vpop.f32.mrb[0].mxu0
        %8571 = vmatprep.mubr.f32.mxu0 0.0
        %8572 = vmatmul.mubr.f32.gmra.mrb[0].mxu0 %v7570
        %v8573 = vpop.f32.mrb[0].mxu0
        %v8574 = vadd.f32 %v8349, %v8573
        %v8575 = vpop.f32.mrb[0].mxu0
        %8576 = vmatprep.mubr.f32.mxu0 0.0
        %8577 = vmatmul.mubr.f32.gmra.mrb[0].mxu0 %v7573
        %v8578 = vpop.f32.mrb[0].mxu0
        %v8579 = vadd.f32 %v8354, %v8578
        %v8580 = vpop.f32.mrb[0].mxu0
        %8581 = vmatprep.mubr.f32.mxu0 0.0
        %8582 = vmatmul.mubr.f32.gmra.mrb[0].mxu0 %v7575
        %v8583 = vpop.f32.mrb[0].mxu0
        %v8584 = vadd.f32 %v8359, %v8583
        %v8585 = vpop.f32.mrb[0].mxu0
        %8586 = vmatprep.mubr.f32.mxu0 0.0
        %8587 = vmatmul.mubr.f32.gmra.mrb[0].mxu0 %v7578
        %v8588 = vpop.f32.mrb[0].mxu0
        %v8589 = vadd.f32 %v8364, %v8588
        %v8590 = vpop.f32.mrb[0].mxu0
        %8591 = vmatprep.mubr.f32.mxu0 0.0
        %8592 = vmatmul.mubr.f32.gmra.mrb[0].mxu0 %v7580
        %v8593 = vpop.f32.mrb[0].mxu0
        %v8594 = vadd.f32 %v8369, %v8593
        %v8595 = vpop.f32.mrb[0].mxu0
        %8596 = vmatprep.mubr.f32.mxu0 0.0
        %8597 = vmatmul.mubr.f32.gmra.mrb[0].mxu0 %v7583
        %v8598 = vpop.f32.mrb[0].mxu0
        %v8599 = vadd.f32 %v8374, %v8598
        %v8600 = vpop.f32.mrb[0].mxu0
        %8601 = vmatprep.mubr.f32.mxu0 0.0
        %8602 = vmatmul.mubr.f32.gmra.mrb[0].mxu0 %v7585
        %v8603 = vpop.f32.mrb[0].mxu0
        %v8604 = vadd.f32 %v8379, %v8603
        %v8605 = vpop.f32.mrb[0].mxu0
        %8606 = vmatprep.mubr.f32.mxu0 0.0
        %8607 = vmatmul.mubr.f32.gmra.mrb[0].mxu0 %v7588
        %v8608 = vpop.f32.mrb[0].mxu0
        %v8609 = vadd.f32 %v8384, %v8608
        %v8610 = vpop.f32.mrb[0].mxu0
        %8611 = vmatprep.mubr.f32.mxu0 0.0
        %8612 = vmatmul.mubr.f32.gmra.mrb[0].mxu0 %v7590
        %v8613 = vpop.f32.mrb[0].mxu0
        %v8614 = vadd.f32 %v8389, %v8613
        %v8615 = vpop.f32.mrb[0].mxu0
        %8616 = vmatprep.mubr.f32.mxu0 0.0
        %8617 = vmatmul.mubr.f32.gmra.mrb[0].mxu0 %v7593
        %v8618 = vpop.f32.mrb[0].mxu0
        %v8619 = vadd.f32 %v8394, %v8618
        %v8620 = vpop.f32.mrb[0].mxu0
        %8621 = vmatprep.mubr.f32.mxu0 0.0
        %8622 = vmatmul.mubr.f32.gmra.mrb[0].mxu0 %v7595
        %v8623 = vpop.f32.mrb[0].mxu0
        %v8624 = vadd.f32 %v8399, %v8623
        %v8625 = vpop.f32.mrb[0].mxu0
        %8626 = vmatprep.mubr.f32.mxu0 0.0
        %8627 = vmatmul.mubr.f32.gmra.mrb[0].mxu0 %v7598
        %v8628 = vpop.f32.mrb[0].mxu0
        %v8629 = vadd.f32 %v8404, %v8628
        %v8630 = vpop.f32.mrb[0].mxu0
        %8631 = vmatprep.mubr.f32.mxu0 0.0
        %8632 = vmatmul.mubr.f32.gmra.mrb[0].mxu0 %v7600
        %v8633 = vpop.f32.mrb[0].mxu0
        %v8634 = vadd.f32 %v8409, %v8633
        %v8635 = vpop.f32.mrb[0].mxu0
        %8636 = vmatprep.mubr.f32.mxu0 0.0
        %8637 = vmatmul.mubr.f32.gmra.mrb[0].mxu0 %v7603
        %v8638 = vpop.f32.mrb[0].mxu0
        %v8639 = vadd.f32 %v8414, %v8638
        %v8640 = vpop.f32.mrb[0].mxu0
        %8641 = vmatprep.mubr.f32.mxu0 0.0
        %8642 = vmatmul.mubr.f32.gmra.mrb[0].mxu0 %v7605
        %v8643 = vpop.f32.mrb[0].mxu0
        %v8644 = vadd.f32 %v8419, %v8643
        %v8645 = vpop.f32.mrb[0].mxu0
        %8646 = vmatprep.mubr.f32.mxu0 0.0
        %8647 = vmatmul.mubr.f32.gmra.mrb[0].mxu0 %v7608
        %v8648 = vpop.f32.mrb[0].mxu0
        %v8649 = vadd.f32 %v8424, %v8648
        %v8650 = vpop.f32.mrb[0].mxu0
        %8651 = vmatprep.mubr.f32.mxu0 0.0
        %8652 = vmatmul.mubr.f32.gmra.mrb[0].mxu0 %v7610
        %v8653 = vpop.f32.mrb[0].mxu0
        %v8654 = vadd.f32 %v8429, %v8653
        %v8655 = vpop.f32.mrb[0].mxu0
        %8656 = vdwg.mxu0
        %v8660 = vrot.slane %v7368, 1
        %v8661 = vrot.slane %v7369, 1
        %v8662 = vsel %vm555, %v8660, %v8661
        %v8663 = vrot.slane %v7370, 1
        %v8664 = vsel %vm555, %v8661, %v8663
        %v8667 = vrot.slane %v7368, 2
        %v8668 = vrot.slane %v7369, 2
        %v8669 = vsel %vm1221, %v8667, %v8668
        %v8670 = vrot.slane %v7370, 2
        %v8671 = vsel %vm1221, %v8668, %v8670
        %s8674 = scalar_lea.vmem %s4, 768
        %v8675 = vld [vmem:[%s8674] sm:$0xff]
        %v8676 = vld [vmem:[%s8674 + $0x8] sm:$0xff]
        %v8677 = vld [vmem:[%s8674 + $0x10] sm:$0xff]
        %v8678 = vld [vmem:[%s8674 + $0x18] sm:$0xff]
        %v8679 = vld [vmem:[%s8674 + $0x20] sm:$0xff]
        %v8680 = vld [vmem:[%s8674 + $0x28] sm:$0xff]
        %v8681 = vld [vmem:[%s8674 + $0x30] sm:$0xff]
        %v8682 = vld [vmem:[%s8674 + $0x38] sm:$0xff]
        %v8683 = vld [vmem:[%s8674 + $0x40] sm:$0xff]
        %v8684 = vld [vmem:[%s8674 + $0x48] sm:$0xff]
        %v8685 = vld [vmem:[%s8674 + $0x50] sm:$0xff]
        %v8686 = vld [vmem:[%s8674 + $0x58] sm:$0xff]
        %v8687 = vld [vmem:[%s8674 + $0x60] sm:$0xff]
        %v8688 = vld [vmem:[%s8674 + $0x68] sm:$0xff]
        %v8689 = vld [vmem:[%s8674 + $0x70] sm:$0xff]
        %v8690 = vld [vmem:[%s8674 + $0x78] sm:$0xff]
        %v8691 = vld [vmem:[%s8674 + $0x80] sm:$0xff]
        %v8692 = vld [vmem:[%s8674 + $0x88] sm:$0xff]
        %v8693 = vld [vmem:[%s8674 + $0x90] sm:$0xff]
        %v8694 = vld [vmem:[%s8674 + $0x98] sm:$0xff]
        %v8695 = vld [vmem:[%s8674 + $0xa0] sm:$0xff]
        %v8696 = vld [vmem:[%s8674 + $0xa8] sm:$0xff]
        %v8697 = vld [vmem:[%s8674 + $0xb0] sm:$0xff]
        %v8698 = vld [vmem:[%s8674 + $0xb8] sm:$0xff]
        %v8699 = vld [vmem:[%s8674 + $0xc0] sm:$0xff]
        %v8700 = vld [vmem:[%s8674 + $0xc8] sm:$0xff]
        %v8701 = vld [vmem:[%s8674 + $0xd0] sm:$0xff]
        %v8702 = vld [vmem:[%s8674 + $0xd8] sm:$0xff]
        %v8703 = vld [vmem:[%s8674 + $0xe0] sm:$0xff]
        %v8704 = vld [vmem:[%s8674 + $0xe8] sm:$0xff]
        %v8705 = vld [vmem:[%s8674 + $0xf0] sm:$0xff]
        %v8706 = vld [vmem:[%s8674 + $0xf8] sm:$0xff]
        %v8707 = vld [vmem:[%s8674 + $0x100] sm:$0xff]
        %v8708 = vld [vmem:[%s8674 + $0x108] sm:$0xff]
        %v8709 = vld [vmem:[%s8674 + $0x110] sm:$0xff]
        %v8710 = vld [vmem:[%s8674 + $0x118] sm:$0xff]
        %v8711 = vld [vmem:[%s8674 + $0x120] sm:$0xff]
        %v8712 = vld [vmem:[%s8674 + $0x128] sm:$0xff]
        %v8713 = vld [vmem:[%s8674 + $0x130] sm:$0xff]
        %v8714 = vld [vmem:[%s8674 + $0x138] sm:$0xff]
        %v8715 = vld [vmem:[%s8674 + $0x140] sm:$0xff]
        %v8716 = vld [vmem:[%s8674 + $0x148] sm:$0xff]
        %v8717 = vld [vmem:[%s8674 + $0x150] sm:$0xff]
        %v8718 = vld [vmem:[%s8674 + $0x158] sm:$0xff]
        %v8719 = vld [vmem:[%s8674 + $0x160] sm:$0xff]
        %v8720 = vld [vmem:[%s8674 + $0x168] sm:$0xff]
        %v8721 = vld [vmem:[%s8674 + $0x170] sm:$0xff]
        %v8722 = vld [vmem:[%s8674 + $0x178] sm:$0xff]
        %8723 = vmatprep.subr.mxu0 0.0
        %8724 = vmatpush1.msra.mxu0 %v8675
        %8725 = vmatprep.subr.mxu0 0.0
        %8726 = vmatpush1.msra.mxu0 %v8676
        %8727 = vmatprep.subr.mxu0 0.0
        %8728 = vmatpush1.msra.mxu0 %v8677
        %8729 = vmatprep.subr.mxu0 0.0
        %8730 = vmatpush1.msra.mxu0 %v8678
        %8731 = vmatprep.subr.mxu0 0.0
        %8732 = vmatpush1.msra.mxu0 %v8679
        %8733 = vmatprep.subr.mxu0 0.0
        %8734 = vmatpush1.msra.mxu0 %v8680
        %8735 = vmatprep.subr.mxu0 0.0
        %8736 = vmatpush1.msra.mxu0 %v8681
        %8737 = vmatprep.subr.mxu0 0.0
        %8738 = vmatpush1.msra.mxu0 %v8682
        %8739 = vmatprep.subr.mxu0 0.0
        %8740 = vmatpush1.msra.mxu0 %v8683
        %8741 = vmatprep.subr.mxu0 0.0
        %8742 = vmatpush1.msra.mxu0 %v8684
        %8743 = vmatprep.subr.mxu0 0.0
        %8744 = vmatpush1.msra.mxu0 %v8685
        %8745 = vmatprep.subr.mxu0 0.0
        %8746 = vmatpush1.msra.mxu0 %v8686
        %8747 = vmatprep.subr.mxu0 0.0
        %8748 = vmatpush1.msra.mxu0 %v8687
        %8749 = vmatprep.subr.mxu0 0.0
        %8750 = vmatpush1.msra.mxu0 %v8688
        %8751 = vmatprep.subr.mxu0 0.0
        %8752 = vmatpush1.msra.mxu0 %v8689
        %8753 = vmatprep.subr.mxu0 0.0
        %8754 = vmatpush1.msra.mxu0 %v8690
        %8755 = vmatprep.subr.mxu0 0.0
        %8756 = vmatpush1.msra.mxu0 %v8691
        %8757 = vmatprep.subr.mxu0 0.0
        %8758 = vmatpush1.msra.mxu0 %v8692
        %8759 = vmatprep.subr.mxu0 0.0
        %8760 = vmatpush1.msra.mxu0 %v8693
        %8761 = vmatprep.subr.mxu0 0.0
        %8762 = vmatpush1.msra.mxu0 %v8694
        %8763 = vmatprep.subr.mxu0 0.0
        %8764 = vmatpush1.msra.mxu0 %v8695
        %8765 = vmatprep.subr.mxu0 0.0
        %8766 = vmatpush1.msra.mxu0 %v8696
        %8767 = vmatprep.subr.mxu0 0.0
        %8768 = vmatpush1.msra.mxu0 %v8697
        %8769 = vmatprep.subr.mxu0 0.0
        %8770 = vmatpush1.msra.mxu0 %v8698
        %8771 = vmatprep.subr.mxu0 0.0
        %8772 = vmatpush1.msra.mxu0 %v8699
        %8773 = vmatprep.subr.mxu0 0.0
        %8774 = vmatpush1.msra.mxu0 %v8700
        %8775 = vmatprep.subr.mxu0 0.0
        %8776 = vmatpush1.msra.mxu0 %v8701
        %8777 = vmatprep.subr.mxu0 0.0
        %8778 = vmatpush1.msra.mxu0 %v8702
        %8779 = vmatprep.subr.mxu0 0.0
        %8780 = vmatpush1.msra.mxu0 %v8703
        %8781 = vmatprep.subr.mxu0 0.0
        %8782 = vmatpush1.msra.mxu0 %v8704
        %8783 = vmatprep.subr.mxu0 0.0
        %8784 = vmatpush1.msra.mxu0 %v8705
        %8785 = vmatprep.subr.mxu0 0.0
        %8786 = vmatpush1.msra.mxu0 %v8706
        %8787 = vmatprep.mubr.f32.mxu0 %v7431
        %8788 = vmatmul.mubr.f32.gmra.mrb[0].mxu0 %v7323
        %v8789 = vpop.f32.mrb[0].mxu0
        %v8790 = vadd.f32 0.0, %v8789
        %v8791 = vpop.f32.mrb[0].mxu0
        %8792 = vmatprep.mubr.f32.mxu0 %v7433
        %8793 = vmatmul.mubr.f32.gmra.mrb[0].mxu0 %v7324
        %v8794 = vpop.f32.mrb[0].mxu0
        %v8795 = vadd.f32 0.0, %v8794
        %v8796 = vpop.f32.mrb[0].mxu0
        %8797 = vmatprep.mubr.f32.mxu0 %v7436
        %8798 = vmatmul.mubr.f32.gmra.mrb[0].mxu0 %v7326
        %v8799 = vpop.f32.mrb[0].mxu0
        %v8800 = vadd.f32 0.0, %v8799
        %v8801 = vpop.f32.mrb[0].mxu0
        %8802 = vmatprep.mubr.f32.mxu0 %v7438
        %8803 = vmatmul.mubr.f32.gmra.mrb[0].mxu0 %v7327
        %v8804 = vpop.f32.mrb[0].mxu0
        %v8805 = vadd.f32 0.0, %v8804
        %v8806 = vpop.f32.mrb[0].mxu0
        %8807 = vmatprep.mubr.f32.mxu0 %v7441
        %8808 = vmatmul.mubr.f32.gmra.mrb[0].mxu0 %v7329
        %v8809 = vpop.f32.mrb[0].mxu0
        %v8810 = vadd.f32 0.0, %v8809
        %v8811 = vpop.f32.mrb[0].mxu0
        %8812 = vmatprep.mubr.f32.mxu0 %v7443
        %8813 = vmatmul.mubr.f32.gmra.mrb[0].mxu0 %v7330
        %v8814 = vpop.f32.mrb[0].mxu0
        %v8815 = vadd.f32 0.0, %v8814
        %v8816 = vpop.f32.mrb[0].mxu0
        %8817 = vmatprep.mubr.f32.mxu0 %v7446
        %8818 = vmatmul.mubr.f32.gmra.mrb[0].mxu0 %v7332
        %v8819 = vpop.f32.mrb[0].mxu0
        %v8820 = vadd.f32 0.0, %v8819
        %v8821 = vpop.f32.mrb[0].mxu0
        %8822 = vmatprep.mubr.f32.mxu0 %v7448
        %8823 = vmatmul.mubr.f32.gmra.mrb[0].mxu0 %v7333
        %v8824 = vpop.f32.mrb[0].mxu0
        %v8825 = vadd.f32 0.0, %v8824
        %v8826 = vpop.f32.mrb[0].mxu0
        %8827 = vmatprep.mubr.f32.mxu0 %v7451
        %8828 = vmatmul.mubr.f32.gmra.mrb[0].mxu0 %v7335
        %v8829 = vpop.f32.mrb[0].mxu0
        %v8830 = vadd.f32 0.0, %v8829
        %v8831 = vpop.f32.mrb[0].mxu0
        %8832 = vmatprep.mubr.f32.mxu0 %v7453
        %8833 = vmatmul.mubr.f32.gmra.mrb[0].mxu0 %v7336
        %v8834 = vpop.f32.mrb[0].mxu0
        %v8835 = vadd.f32 0.0, %v8834
        %v8836 = vpop.f32.mrb[0].mxu0
        %8837 = vmatprep.mubr.f32.mxu0 %v7456
        %8838 = vmatmul.mubr.f32.gmra.mrb[0].mxu0 %v7338
        %v8839 = vpop.f32.mrb[0].mxu0
        %v8840 = vadd.f32 0.0, %v8839
        %v8841 = vpop.f32.mrb[0].mxu0
        %8842 = vmatprep.mubr.f32.mxu0 %v7458
        %8843 = vmatmul.mubr.f32.gmra.mrb[0].mxu0 %v7339
        %v8844 = vpop.f32.mrb[0].mxu0
        %v8845 = vadd.f32 0.0, %v8844
        %v8846 = vpop.f32.mrb[0].mxu0
        %8847 = vmatprep.mubr.f32.mxu0 %v7461
        %8848 = vmatmul.mubr.f32.gmra.mrb[0].mxu0 %v7341
        %v8849 = vpop.f32.mrb[0].mxu0
        %v8850 = vadd.f32 0.0, %v8849
        %v8851 = vpop.f32.mrb[0].mxu0
        %8852 = vmatprep.mubr.f32.mxu0 %v7463
        %8853 = vmatmul.mubr.f32.gmra.mrb[0].mxu0 %v7342
        %v8854 = vpop.f32.mrb[0].mxu0
        %v8855 = vadd.f32 0.0, %v8854
        %v8856 = vpop.f32.mrb[0].mxu0
        %8857 = vmatprep.mubr.f32.mxu0 %v7466
        %8858 = vmatmul.mubr.f32.gmra.mrb[0].mxu0 %v7344
        %v8859 = vpop.f32.mrb[0].mxu0
        %v8860 = vadd.f32 0.0, %v8859
        %v8861 = vpop.f32.mrb[0].mxu0
        %8862 = vmatprep.mubr.f32.mxu0 %v7468
        %8863 = vmatmul.mubr.f32.gmra.mrb[0].mxu0 %v7345
        %v8864 = vpop.f32.mrb[0].mxu0
        %v8865 = vadd.f32 0.0, %v8864
        %v8866 = vpop.f32.mrb[0].mxu0
        %8867 = vmatprep.mubr.f32.mxu0 %v7471
        %8868 = vmatmul.mubr.f32.gmra.mrb[0].mxu0 %v7347
        %v8869 = vpop.f32.mrb[0].mxu0
        %v8870 = vadd.f32 0.0, %v8869
        %v8871 = vpop.f32.mrb[0].mxu0
        %8872 = vmatprep.mubr.f32.mxu0 %v7473
        %8873 = vmatmul.mubr.f32.gmra.mrb[0].mxu0 %v7348
        %v8874 = vpop.f32.mrb[0].mxu0
        %v8875 = vadd.f32 0.0, %v8874
        %v8876 = vpop.f32.mrb[0].mxu0
        %8877 = vmatprep.mubr.f32.mxu0 %v7476
        %8878 = vmatmul.mubr.f32.gmra.mrb[0].mxu0 %v7350
        %v8879 = vpop.f32.mrb[0].mxu0
        %v8880 = vadd.f32 0.0, %v8879
        %v8881 = vpop.f32.mrb[0].mxu0
        %8882 = vmatprep.mubr.f32.mxu0 %v7478
        %8883 = vmatmul.mubr.f32.gmra.mrb[0].mxu0 %v7351
        %v8884 = vpop.f32.mrb[0].mxu0
        %v8885 = vadd.f32 0.0, %v8884
        %v8886 = vpop.f32.mrb[0].mxu0
        %8887 = vmatprep.mubr.f32.mxu0 %v7481
        %8888 = vmatmul.mubr.f32.gmra.mrb[0].mxu0 %v7353
        %v8889 = vpop.f32.mrb[0].mxu0
        %v8890 = vadd.f32 0.0, %v8889
        %v8891 = vpop.f32.mrb[0].mxu0
        %8892 = vmatprep.mubr.f32.mxu0 %v7483
        %8893 = vmatmul.mubr.f32.gmra.mrb[0].mxu0 %v7354
        %v8894 = vpop.f32.mrb[0].mxu0
        %v8895 = vadd.f32 0.0, %v8894
        %v8896 = vpop.f32.mrb[0].mxu0
        %8897 = vmatprep.mubr.f32.mxu0 %v7486
        %8898 = vmatmul.mubr.f32.gmra.mrb[0].mxu0 %v7356
        %v8899 = vpop.f32.mrb[0].mxu0
        %v8900 = vadd.f32 0.0, %v8899
        %v8901 = vpop.f32.mrb[0].mxu0
        %8902 = vmatprep.mubr.f32.mxu0 %v7488
        %8903 = vmatmul.mubr.f32.gmra.mrb[0].mxu0 %v7357
        %v8904 = vpop.f32.mrb[0].mxu0
        %v8905 = vadd.f32 0.0, %v8904
        %v8906 = vpop.f32.mrb[0].mxu0
        %8907 = vmatprep.mubr.f32.mxu0 %v7491
        %8908 = vmatmul.mubr.f32.gmra.mrb[0].mxu0 %v7359
        %v8909 = vpop.f32.mrb[0].mxu0
        %v8910 = vadd.f32 0.0, %v8909
        %v8911 = vpop.f32.mrb[0].mxu0
        %8912 = vmatprep.mubr.f32.mxu0 %v7493
        %8913 = vmatmul.mubr.f32.gmra.mrb[0].mxu0 %v7360
        %v8914 = vpop.f32.mrb[0].mxu0
        %v8915 = vadd.f32 0.0, %v8914
        %v8916 = vpop.f32.mrb[0].mxu0
        %8917 = vmatprep.mubr.f32.mxu0 %v7496
        %8918 = vmatmul.mubr.f32.gmra.mrb[0].mxu0 %v7362
        %v8919 = vpop.f32.mrb[0].mxu0
        %v8920 = vadd.f32 0.0, %v8919
        %v8921 = vpop.f32.mrb[0].mxu0
        %8922 = vmatprep.mubr.f32.mxu0 %v7498
        %8923 = vmatmul.mubr.f32.gmra.mrb[0].mxu0 %v7363
        %v8924 = vpop.f32.mrb[0].mxu0
        %v8925 = vadd.f32 0.0, %v8924
        %v8926 = vpop.f32.mrb[0].mxu0
        %8927 = vmatprep.mubr.f32.mxu0 %v7696
        %8928 = vmatmul.mubr.f32.gmra.mrb[0].mxu0 %v7365
        %v8929 = vpop.f32.mrb[0].mxu0
        %v8930 = vadd.f32 0.0, %v8929
        %v8931 = vpop.f32.mrb[0].mxu0
        %8932 = vmatprep.mubr.f32.mxu0 %v7698
        %8933 = vmatmul.mubr.f32.gmra.mrb[0].mxu0 %v7366
        %v8934 = vpop.f32.mrb[0].mxu0
        %v8935 = vadd.f32 0.0, %v8934
        %v8936 = vpop.f32.mrb[0].mxu0
        %8937 = vmatprep.mubr.f32.mxu0 %v8662
        %8938 = vmatmul.mubr.f32.gmra.mrb[0].mxu0 %v7368
        %v8939 = vpop.f32.mrb[0].mxu0
        %v8940 = vadd.f32 0.0, %v8939
        %v8941 = vpop.f32.mrb[0].mxu0
        %8942 = vmatprep.mubr.f32.mxu0 %v8664
        %8943 = vmatmul.mubr.f32.gmra.mrb[0].mxu0 %v7369
        %v8944 = vpop.f32.mrb[0].mxu0
        %v8945 = vadd.f32 0.0, %v8944
        %v8946 = vpop.f32.mrb[0].mxu0
        %8947 = vdwg.mxu0
        %8948 = vmatprep.subr.mxu0 0.0
        %8949 = vmatpush1.msra.mxu0 %v8707
        %8950 = vmatprep.subr.mxu0 0.0
        %8951 = vmatpush1.msra.mxu0 %v8708
        %8952 = vmatprep.subr.mxu0 0.0
        %8953 = vmatpush1.msra.mxu0 %v8709
        %8954 = vmatprep.subr.mxu0 0.0
        %8955 = vmatpush1.msra.mxu0 %v8710
        %8956 = vmatprep.subr.mxu0 0.0
        %8957 = vmatpush1.msra.mxu0 %v8711
        %8958 = vmatprep.subr.mxu0 0.0
        %8959 = vmatpush1.msra.mxu0 %v8712
        %8960 = vmatprep.subr.mxu0 0.0
        %8961 = vmatpush1.msra.mxu0 %v8713
        %8962 = vmatprep.subr.mxu0 0.0
        %8963 = vmatpush1.msra.mxu0 %v8714
        %8964 = vmatprep.subr.mxu0 0.0
        %8965 = vmatpush1.msra.mxu0 %v8715
        %8966 = vmatprep.subr.mxu0 0.0
        %8967 = vmatpush1.msra.mxu0 %v8716
        %8968 = vmatprep.subr.mxu0 0.0
        %8969 = vmatpush1.msra.mxu0 %v8717
        %8970 = vmatprep.subr.mxu0 0.0
        %8971 = vmatpush1.msra.mxu0 %v8718
        %8972 = vmatprep.subr.mxu0 0.0
        %8973 = vmatpush1.msra.mxu0 %v8719
        %8974 = vmatprep.subr.mxu0 0.0
        %8975 = vmatpush1.msra.mxu0 %v8720
        %8976 = vmatprep.subr.mxu0 0.0
        %8977 = vmatpush1.msra.mxu0 %v8721
        %8978 = vmatprep.subr.mxu0 0.0
        %8979 = vmatpush1.msra.mxu0 %v8722
        %8980 = vmatprep.subr.mxu0 0.0
        %8981 = vmatpush1.msra.mxu0 0.0
        %8982 = vmatprep.subr.mxu0 0.0
        %8983 = vmatpush1.msra.mxu0 0.0
        %8984 = vmatprep.subr.mxu0 0.0
        %8985 = vmatpush1.msra.mxu0 0.0
        %8986 = vmatprep.subr.mxu0 0.0
        %8987 = vmatpush1.msra.mxu0 0.0
        %8988 = vmatprep.subr.mxu0 0.0
        %8989 = vmatpush1.msra.mxu0 0.0
        %8990 = vmatprep.subr.mxu0 0.0
        %8991 = vmatpush1.msra.mxu0 0.0
        %8992 = vmatprep.subr.mxu0 0.0
        %8993 = vmatpush1.msra.mxu0 0.0
        %8994 = vmatprep.subr.mxu0 0.0
        %8995 = vmatpush1.msra.mxu0 0.0
        %8996 = vmatprep.subr.mxu0 0.0
        %8997 = vmatpush1.msra.mxu0 0.0
        %8998 = vmatprep.subr.mxu0 0.0
        %8999 = vmatpush1.msra.mxu0 0.0
        %9000 = vmatprep.subr.mxu0 0.0
        %9001 = vmatpush1.msra.mxu0 0.0
        %9002 = vmatprep.subr.mxu0 0.0
        %9003 = vmatpush1.msra.mxu0 0.0
        %9004 = vmatprep.subr.mxu0 0.0
        %9005 = vmatpush1.msra.mxu0 0.0
        %9006 = vmatprep.subr.mxu0 0.0
        %9007 = vmatpush1.msra.mxu0 0.0
        %9008 = vmatprep.subr.mxu0 0.0
        %9009 = vmatpush1.msra.mxu0 0.0
        %9010 = vmatprep.subr.mxu0 0.0
        %9011 = vmatpush1.msra.mxu0 0.0
        %9012 = vmatprep.mubr.f32.mxu0 0.0
        %9013 = vmatmul.mubr.f32.gmra.mrb[0].mxu0 %v7543
        %v9014 = vpop.f32.mrb[0].mxu0
        %v9015 = vadd.f32 %v8790, %v9014
        %v9016 = vpop.f32.mrb[0].mxu0
        %9017 = vmatprep.mubr.f32.mxu0 0.0
        %9018 = vmatmul.mubr.f32.gmra.mrb[0].mxu0 %v7545
        %v9019 = vpop.f32.mrb[0].mxu0
        %v9020 = vadd.f32 %v8795, %v9019
        %v9021 = vpop.f32.mrb[0].mxu0
        %9022 = vmatprep.mubr.f32.mxu0 0.0
        %9023 = vmatmul.mubr.f32.gmra.mrb[0].mxu0 %v7548
        %v9024 = vpop.f32.mrb[0].mxu0
        %v9025 = vadd.f32 %v8800, %v9024
        %v9026 = vpop.f32.mrb[0].mxu0
        %9027 = vmatprep.mubr.f32.mxu0 0.0
        %9028 = vmatmul.mubr.f32.gmra.mrb[0].mxu0 %v7550
        %v9029 = vpop.f32.mrb[0].mxu0
        %v9030 = vadd.f32 %v8805, %v9029
        %v9031 = vpop.f32.mrb[0].mxu0
        %9032 = vmatprep.mubr.f32.mxu0 0.0
        %9033 = vmatmul.mubr.f32.gmra.mrb[0].mxu0 %v7553
        %v9034 = vpop.f32.mrb[0].mxu0
        %v9035 = vadd.f32 %v8810, %v9034
        %v9036 = vpop.f32.mrb[0].mxu0
        %9037 = vmatprep.mubr.f32.mxu0 0.0
        %9038 = vmatmul.mubr.f32.gmra.mrb[0].mxu0 %v7555
        %v9039 = vpop.f32.mrb[0].mxu0
        %v9040 = vadd.f32 %v8815, %v9039
        %v9041 = vpop.f32.mrb[0].mxu0
        %9042 = vmatprep.mubr.f32.mxu0 0.0
        %9043 = vmatmul.mubr.f32.gmra.mrb[0].mxu0 %v7558
        %v9044 = vpop.f32.mrb[0].mxu0
        %v9045 = vadd.f32 %v8820, %v9044
        %v9046 = vpop.f32.mrb[0].mxu0
        %9047 = vmatprep.mubr.f32.mxu0 0.0
        %9048 = vmatmul.mubr.f32.gmra.mrb[0].mxu0 %v7560
        %v9049 = vpop.f32.mrb[0].mxu0
        %v9050 = vadd.f32 %v8825, %v9049
        %v9051 = vpop.f32.mrb[0].mxu0
        %9052 = vmatprep.mubr.f32.mxu0 0.0
        %9053 = vmatmul.mubr.f32.gmra.mrb[0].mxu0 %v7563
        %v9054 = vpop.f32.mrb[0].mxu0
        %v9055 = vadd.f32 %v8830, %v9054
        %v9056 = vpop.f32.mrb[0].mxu0
        %9057 = vmatprep.mubr.f32.mxu0 0.0
        %9058 = vmatmul.mubr.f32.gmra.mrb[0].mxu0 %v7565
        %v9059 = vpop.f32.mrb[0].mxu0
        %v9060 = vadd.f32 %v8835, %v9059
        %v9061 = vpop.f32.mrb[0].mxu0
        %9062 = vmatprep.mubr.f32.mxu0 0.0
        %9063 = vmatmul.mubr.f32.gmra.mrb[0].mxu0 %v7568
        %v9064 = vpop.f32.mrb[0].mxu0
        %v9065 = vadd.f32 %v8840, %v9064
        %v9066 = vpop.f32.mrb[0].mxu0
        %9067 = vmatprep.mubr.f32.mxu0 0.0
        %9068 = vmatmul.mubr.f32.gmra.mrb[0].mxu0 %v7570
        %v9069 = vpop.f32.mrb[0].mxu0
        %v9070 = vadd.f32 %v8845, %v9069
        %v9071 = vpop.f32.mrb[0].mxu0
        %9072 = vmatprep.mubr.f32.mxu0 0.0
        %9073 = vmatmul.mubr.f32.gmra.mrb[0].mxu0 %v7573
        %v9074 = vpop.f32.mrb[0].mxu0
        %v9075 = vadd.f32 %v8850, %v9074
        %v9076 = vpop.f32.mrb[0].mxu0
        %9077 = vmatprep.mubr.f32.mxu0 0.0
        %9078 = vmatmul.mubr.f32.gmra.mrb[0].mxu0 %v7575
        %v9079 = vpop.f32.mrb[0].mxu0
        %v9080 = vadd.f32 %v8855, %v9079
        %v9081 = vpop.f32.mrb[0].mxu0
        %9082 = vmatprep.mubr.f32.mxu0 0.0
        %9083 = vmatmul.mubr.f32.gmra.mrb[0].mxu0 %v7578
        %v9084 = vpop.f32.mrb[0].mxu0
        %v9085 = vadd.f32 %v8860, %v9084
        %v9086 = vpop.f32.mrb[0].mxu0
        %9087 = vmatprep.mubr.f32.mxu0 0.0
        %9088 = vmatmul.mubr.f32.gmra.mrb[0].mxu0 %v7580
        %v9089 = vpop.f32.mrb[0].mxu0
        %v9090 = vadd.f32 %v8865, %v9089
        %v9091 = vpop.f32.mrb[0].mxu0
        %9092 = vmatprep.mubr.f32.mxu0 0.0
        %9093 = vmatmul.mubr.f32.gmra.mrb[0].mxu0 %v7583
        %v9094 = vpop.f32.mrb[0].mxu0
        %v9095 = vadd.f32 %v8870, %v9094
        %v9096 = vpop.f32.mrb[0].mxu0
        %9097 = vmatprep.mubr.f32.mxu0 0.0
        %9098 = vmatmul.mubr.f32.gmra.mrb[0].mxu0 %v7585
        %v9099 = vpop.f32.mrb[0].mxu0
        %v9100 = vadd.f32 %v8875, %v9099
        %v9101 = vpop.f32.mrb[0].mxu0
        %9102 = vmatprep.mubr.f32.mxu0 0.0
        %9103 = vmatmul.mubr.f32.gmra.mrb[0].mxu0 %v7588
        %v9104 = vpop.f32.mrb[0].mxu0
        %v9105 = vadd.f32 %v8880, %v9104
        %v9106 = vpop.f32.mrb[0].mxu0
        %9107 = vmatprep.mubr.f32.mxu0 0.0
        %9108 = vmatmul.mubr.f32.gmra.mrb[0].mxu0 %v7590
        %v9109 = vpop.f32.mrb[0].mxu0
        %v9110 = vadd.f32 %v8885, %v9109
        %v9111 = vpop.f32.mrb[0].mxu0
        %9112 = vmatprep.mubr.f32.mxu0 0.0
        %9113 = vmatmul.mubr.f32.gmra.mrb[0].mxu0 %v7593
        %v9114 = vpop.f32.mrb[0].mxu0
        %v9115 = vadd.f32 %v8890, %v9114
        %v9116 = vpop.f32.mrb[0].mxu0
        %9117 = vmatprep.mubr.f32.mxu0 0.0
        %9118 = vmatmul.mubr.f32.gmra.mrb[0].mxu0 %v7595
        %v9119 = vpop.f32.mrb[0].mxu0
        %v9120 = vadd.f32 %v8895, %v9119
        %v9121 = vpop.f32.mrb[0].mxu0
        %9122 = vmatprep.mubr.f32.mxu0 0.0
        %9123 = vmatmul.mubr.f32.gmra.mrb[0].mxu0 %v7598
        %v9124 = vpop.f32.mrb[0].mxu0
        %v9125 = vadd.f32 %v8900, %v9124
        %v9126 = vpop.f32.mrb[0].mxu0
        %9127 = vmatprep.mubr.f32.mxu0 0.0
        %9128 = vmatmul.mubr.f32.gmra.mrb[0].mxu0 %v7600
        %v9129 = vpop.f32.mrb[0].mxu0
        %v9130 = vadd.f32 %v8905, %v9129
        %v9131 = vpop.f32.mrb[0].mxu0
        %9132 = vmatprep.mubr.f32.mxu0 0.0
        %9133 = vmatmul.mubr.f32.gmra.mrb[0].mxu0 %v7603
        %v9134 = vpop.f32.mrb[0].mxu0
        %v9135 = vadd.f32 %v8910, %v9134
        %v9136 = vpop.f32.mrb[0].mxu0
        %9137 = vmatprep.mubr.f32.mxu0 0.0
        %9138 = vmatmul.mubr.f32.gmra.mrb[0].mxu0 %v7605
        %v9139 = vpop.f32.mrb[0].mxu0
        %v9140 = vadd.f32 %v8915, %v9139
        %v9141 = vpop.f32.mrb[0].mxu0
        %9142 = vmatprep.mubr.f32.mxu0 0.0
        %9143 = vmatmul.mubr.f32.gmra.mrb[0].mxu0 %v7608
        %v9144 = vpop.f32.mrb[0].mxu0
        %v9145 = vadd.f32 %v8920, %v9144
        %v9146 = vpop.f32.mrb[0].mxu0
        %9147 = vmatprep.mubr.f32.mxu0 0.0
        %9148 = vmatmul.mubr.f32.gmra.mrb[0].mxu0 %v7610
        %v9149 = vpop.f32.mrb[0].mxu0
        %v9150 = vadd.f32 %v8925, %v9149
        %v9151 = vpop.f32.mrb[0].mxu0
        %9152 = vmatprep.mubr.f32.mxu0 0.0
        %9153 = vmatmul.mubr.f32.gmra.mrb[0].mxu0 %v7703
        %v9154 = vpop.f32.mrb[0].mxu0
        %v9155 = vadd.f32 %v8930, %v9154
        %v9156 = vpop.f32.mrb[0].mxu0
        %9157 = vmatprep.mubr.f32.mxu0 0.0
        %9158 = vmatmul.mubr.f32.gmra.mrb[0].mxu0 %v7705
        %v9159 = vpop.f32.mrb[0].mxu0
        %v9160 = vadd.f32 %v8935, %v9159
        %v9161 = vpop.f32.mrb[0].mxu0
        %9162 = vmatprep.mubr.f32.mxu0 0.0
        %9163 = vmatmul.mubr.f32.gmra.mrb[0].mxu0 %v8669
        %v9164 = vpop.f32.mrb[0].mxu0
        %v9165 = vadd.f32 %v8940, %v9164
        %v9166 = vpop.f32.mrb[0].mxu0
        %9167 = vmatprep.mubr.f32.mxu0 0.0
        %9168 = vmatmul.mubr.f32.gmra.mrb[0].mxu0 %v8671
        %v9169 = vpop.f32.mrb[0].mxu0
        %v9170 = vadd.f32 %v8945, %v9169
        %v9171 = vpop.f32.mrb[0].mxu0
        %9172 = vdwg.mxu0
        %v9173 = vadd.f32 %v8499, %v9015
        %v9174 = vadd.f32 %v8504, %v9020
        %v9175 = vadd.f32 %v8509, %v9025
        %v9176 = vadd.f32 %v8514, %v9030
        %v9177 = vadd.f32 %v8519, %v9035
        %v9178 = vadd.f32 %v8524, %v9040
        %v9179 = vadd.f32 %v8529, %v9045
        %v9180 = vadd.f32 %v8534, %v9050
        %v9181 = vadd.f32 %v8539, %v9055
        %v9182 = vadd.f32 %v8544, %v9060
        %v9183 = vadd.f32 %v8549, %v9065
        %v9184 = vadd.f32 %v8554, %v9070
        %v9185 = vadd.f32 %v8559, %v9075
        %v9186 = vadd.f32 %v8564, %v9080
        %v9187 = vadd.f32 %v8569, %v9085
        %v9188 = vadd.f32 %v8574, %v9090
        %v9189 = vadd.f32 %v8579, %v9095
        %v9190 = vadd.f32 %v8584, %v9100
        %v9191 = vadd.f32 %v8589, %v9105
        %v9192 = vadd.f32 %v8594, %v9110
        %v9193 = vadd.f32 %v8599, %v9115
        %v9194 = vadd.f32 %v8604, %v9120
        %v9195 = vadd.f32 %v8609, %v9125
        %v9196 = vadd.f32 %v8614, %v9130
        %v9197 = vadd.f32 %v8619, %v9135
        %v9198 = vadd.f32 %v8624, %v9140
        %v9199 = vadd.f32 %v8629, %v9145
        %v9200 = vadd.f32 %v8634, %v9150
        %v9201 = vadd.f32 %v8639, %v9155
        %v9202 = vadd.f32 %v8644, %v9160
        %v9203 = vadd.f32 %v8649, %v9165
        %v9204 = vadd.f32 %v8654, %v9170
        %v9205 = vadd.f32 %v9173, %v350
        %v9206 = vadd.f32 %v9174, %v351
        %v9207 = vadd.f32 %v9175, %v352
        %v9208 = vadd.f32 %v9176, %v353
        %v9209 = vadd.f32 %v9177, %v354
        %v9210 = vadd.f32 %v9178, %v355
        %v9211 = vadd.f32 %v9179, %v356
        %v9212 = vadd.f32 %v9180, %v357
        %v9213 = vadd.f32 %v9181, %v358
        %v9214 = vadd.f32 %v9182, %v359
        %v9215 = vadd.f32 %v9183, %v360
        %v9216 = vadd.f32 %v9184, %v361
        %v9217 = vadd.f32 %v9185, %v362
        %v9218 = vadd.f32 %v9186, %v363
        %v9219 = vadd.f32 %v9187, %v364
        %v9220 = vadd.f32 %v9188, %v365
        %v9221 = vadd.f32 %v9189, %v366
        %v9222 = vadd.f32 %v9190, %v367
        %v9223 = vadd.f32 %v9191, %v368
        %v9224 = vadd.f32 %v9192, %v369
        %v9225 = vadd.f32 %v9193, %v370
        %v9226 = vadd.f32 %v9194, %v371
        %v9227 = vadd.f32 %v9195, %v372
        %v9228 = vadd.f32 %v9196, %v373
        %v9229 = vadd.f32 %v9197, %v374
        %v9230 = vadd.f32 %v9198, %v375
        %v9231 = vadd.f32 %v9199, %v376
        %v9232 = vadd.f32 %v9200, %v377
        %v9233 = vadd.f32 %v9201, %v378
        %v9234 = vadd.f32 %v9202, %v379
        %v9235 = vadd.f32 %v9203, %v380
        %v9236 = vadd.f32 %v9204, %v381
        %9237 = vst.msk [vmem:[%s239] sm:$0xff] %vm240, %v9205
        %9238 = vst.msk [vmem:[%s239 + $0x8] sm:$0xff] %vm240, %v9206
        %9239 = vst.msk [vmem:[%s239 + $0x10] sm:$0xff] %vm240, %v9207
        %9240 = vst.msk [vmem:[%s239 + $0x18] sm:$0xff] %vm240, %v9208
        %9241 = vst.msk [vmem:[%s239 + $0x20] sm:$0xff] %vm240, %v9209
        %9242 = vst.msk [vmem:[%s239 + $0x28] sm:$0xff] %vm240, %v9210
        %9243 = vst.msk [vmem:[%s239 + $0x30] sm:$0xff] %vm240, %v9211
        %9244 = vst.msk [vmem:[%s239 + $0x38] sm:$0xff] %vm240, %v9212
        %9245 = vst.msk [vmem:[%s239 + $0x40] sm:$0xff] %vm240, %v9213
        %9246 = vst.msk [vmem:[%s239 + $0x48] sm:$0xff] %vm240, %v9214
        %9247 = vst.msk [vmem:[%s239 + $0x50] sm:$0xff] %vm240, %v9215
        %9248 = vst.msk [vmem:[%s239 + $0x58] sm:$0xff] %vm240, %v9216
        %9249 = vst.msk [vmem:[%s239 + $0x60] sm:$0xff] %vm240, %v9217
        %9250 = vst.msk [vmem:[%s239 + $0x68] sm:$0xff] %vm240, %v9218
        %9251 = vst.msk [vmem:[%s239 + $0x70] sm:$0xff] %vm240, %v9219
        %9252 = vst.msk [vmem:[%s239 + $0x78] sm:$0xff] %vm240, %v9220
        %9253 = vst.msk [vmem:[%s239 + $0x80] sm:$0xff] %vm240, %v9221
        %9254 = vst.msk [vmem:[%s239 + $0x88] sm:$0xff] %vm240, %v9222
        %9255 = vst.msk [vmem:[%s239 + $0x90] sm:$0xff] %vm240, %v9223
        %9256 = vst.msk [vmem:[%s239 + $0x98] sm:$0xff] %vm240, %v9224
        %9257 = vst.msk [vmem:[%s239 + $0xa0] sm:$0xff] %vm240, %v9225
        %9258 = vst.msk [vmem:[%s239 + $0xa8] sm:$0xff] %vm240, %v9226
        %9259 = vst.msk [vmem:[%s239 + $0xb0] sm:$0xff] %vm240, %v9227
        %9260 = vst.msk [vmem:[%s239 + $0xb8] sm:$0xff] %vm240, %v9228
        %9261 = vst.msk [vmem:[%s239 + $0xc0] sm:$0xff] %vm240, %v9229
        %9262 = vst.msk [vmem:[%s239 + $0xc8] sm:$0xff] %vm240, %v9230
        %9263 = vst.msk [vmem:[%s239 + $0xd0] sm:$0xff] %vm240, %v9231
        %9264 = vst.msk [vmem:[%s239 + $0xd8] sm:$0xff] %vm240, %v9232
        %9265 = vst.msk [vmem:[%s239 + $0xe0] sm:$0xff] %vm240, %v9233
        %9266 = vst.msk [vmem:[%s239 + $0xe8] sm:$0xff] %vm240, %v9234
        %9267 = vst.msk [vmem:[%s239 + $0xf0] sm:$0xff] %vm240, %v9235
        %9268 = vst.msk [vmem:[%s239 + $0xf8] sm:$0xff] %vm240, %v9236
        %p9269 = scmp.lt.s32.totalorder %s17, 1
        %s9270 = scalar_select %p9269, %s17, 1
        %s9271 = smul.addr %s9270, 32
        %s9272 = smul.addr %s9271, 8
        %s9273 = scalar_lea.vmem %s5, %s9272
        // Predicated region
        $region52: #{drrn_forward.1} parent=39 // pred_check
          %p9274 = pneg %p145
        $region53: #{drrn_forward.1} parent=39 // pred_check_branch
          %9276 = sbr.rel (%p9274) target = $region55
        $region54: #{drrn_forward.1} parent=39 // pred_region
          _
        $region55: #{drrn_forward.1} parent=39 // pred_fallthru
          _
      $region40: #{drrn_forward.1} parent=5 // pred_fallthru
        _
      %p9277 = scmp.le.s32.totalorder 2, %s12
      // Predicated region
      $region56: #{drrn_forward.1} parent=5 // pred_check
        %p9278 = pneg %p9277
      $region57: #{drrn_forward.1} parent=5 // pred_check_branch
        %9280 = sbr.rel (%p9278) target = $region59
      $region58: #{drrn_forward.1} parent=5 // pred_region
        %s9281 = ssub.s32 %s12, 2
        // Predicated region
        $region60: #{drrn_forward.1} parent=58 // pred_check
          %p9282 = pneg %p151
        $region61: #{drrn_forward.1} parent=58 // pred_check_branch
          %9284 = sbr.rel (%p9282) target = $region63
        $region62: #{drrn_forward.1} parent=58 // pred_region
          %p9285 = scmp.lt.s32.totalorder %s18, 1
          %s9286 = scalar_select %p9285, %s18, 1
          %s9287 = smul.addr %s9286, 32
          %s9288 = smul.addr %s9287, 8
          %s9289 = scalar_lea.vmem %s5, %s9288
        $region63: #{drrn_forward.1} parent=58 // pred_fallthru
          _
      $region59: #{drrn_forward.1} parent=5 // pred_fallthru
        _
    $region6: #{drrn_forward.1} parent=1 // loop_footer
      %s16 = sadd.s32 1, %s12
    $region7: #{drrn_forward.1} parent=1 // loop_footer_branch
      %11 = sbr.rel target = $region3
    $region8: #{drrn_forward.1} parent=1 // loop_exit
      _
    %9290 = vsyncpa [#allocation6], 1
    %s9291 = scalar_lea.sflag [#allocation6], 1
    %9292 = vsyncpa %s9291, 1

</llo_original>
